<compile_context>
chip_gen: v5e
topology: v5e:2x2
jax: 0.10.0
libtpu: 0.0.40
codegen_flags: <defaults>
</compile_context>

<pallas_src>
import math

import numpy as np
import jax
import jax.numpy as jnp
from jax import lax
from jax.experimental import pallas as pl
from jax.experimental.pallas import tpu as pltpu

F32 = jnp.float32
BF16 = jnp.bfloat16


# ---------------------------------------------------------------------------
# small helpers
# ---------------------------------------------------------------------------

def _sigmoid(v):
    # exp on EUP + approx reciprocal (keeps the divide off the VALU).
    return pl.reciprocal(1.0 + jnp.exp(-v), approx=True)


def _silu(v):
    return v * _sigmoid(v)


def _softplus(v):
    return jnp.maximum(v, 0.0) + jnp.log1p(jnp.exp(-jnp.abs(v)))


def _roll_last(x, s):
    """Circular roll along the last (lane) axis by static s (jnp.roll semantics)."""
    n = x.shape[-1]
    s = s % n
    if s == 0:
        return x
    return jnp.concatenate([x[..., n - s:], x[..., :n - s]], axis=-1)


def _pick_grid(B):
    """Grid size G and per-step batch chunk Bc.  Prefer a 2-way parallel axis
    (v7x has 2 TensorCores); keep chunks modest so unrolled loops stay small."""
    if B % 2 == 0 and B >= 2:
        G = 2
        while (B // G) > 8 and B % (G * 2) == 0:
            G *= 2
        return G, B // G
    return 1, B


# ---------------------------------------------------------------------------
# fused CNN kernel: (conv 'same' circular xN) + stride-3 down / up scale conv
# activations are (C, H*W): channels on sublanes, flattened space on lanes
# ---------------------------------------------------------------------------

def _build_taps(x, W, is_c0, is_cl):
    """x: (Cin, P) f32 -> (9*Cin, P) bf16 of circularly shifted taps, t = 3*di+dj.

    Within-row (column) shifts + boundary fix-up are hoisted out of the row-roll
    loop (they commute: the column mask is row-invariant, row rolls move whole rows).
    """
    colshift = [
        jnp.where(is_c0, _roll_last(x, 1 - W), _roll_last(x, 1)),    # dj = 0
        x,                                                           # dj = 1
        jnp.where(is_cl, _roll_last(x, W - 1), _roll_last(x, -1)),   # dj = 2
    ]
    taps = []
    for di in range(3):
        s = (1 - di) * W
        for dj in range(3):
            taps.append(_roll_last(colshift[dj], s))
    return jnp.concatenate(taps, axis=0).astype(BF16)                # single cast


def _make_cnn_kernel(H, W, scaling, n_conv, Bc):
    P = H * W

    def kernel(*refs):
        x_ref = refs[0]
        o_ref = refs[-1]
        wrefs = refs[1:-1]

        col = lax.broadcasted_iota(jnp.int32, (1, P), 1) % W
        is_c0 = col == 0
        is_cl = col == W - 1

        for bi in range(Bc):                                          # unrolled chunk
            x = x_ref[bi].astype(F32)                                 # (Cin, P)

            # conv 'same' circular layers: one matmul each, contraction = 9*Cin
            for li in range(n_conv):
                w2 = wrefs[2 * li][...]                               # (Cout, 9*Cin) bf16
                b = wrefs[2 * li + 1][...]                            # (Cout, 1) f32
                taps = _build_taps(x, W, is_c0, is_cl)                # (9*Cin, P) bf16
                x = jnp.dot(w2, taps, preferred_element_type=F32) + b
                if li < n_conv - 1:
                    x = jnp.maximum(x, 0.0)                           # ReLU

            if scaling == "down":
                # stride-3 conv: gather the 9 taps (exact selection matmuls),
                # stack on sublanes, one weight matmul with contraction 9*Cf.
                sw2 = wrefs[2 * n_conv][...]                          # (Co, 9*Cf) bf16
                sb = wrefs[2 * n_conv + 1][...]                       # (Co, 1) f32
                sel = wrefs[2 * n_conv + 2][...]                      # (9, P, Po) bf16
                xb = x.astype(BF16)
                gath = jnp.concatenate(
                    [jnp.dot(xb, sel[t], preferred_element_type=F32)
                     for t in range(9)], axis=0)                      # (9*Cf, Po)
                o_ref[bi] = jnp.dot(sw2, gath.astype(BF16),
                                    preferred_element_type=F32) + sb
            else:
                # stride-3 transposed conv: one (9*Co, Cf) matmul; the spatial
                # interleave (pixel shuffle) happens in the wrapper with XLA.
                swc = wrefs[2 * n_conv][...]                          # (9*Co, Cf) bf16
                sb = wrefs[2 * n_conv + 1][...]                       # (9*Co, 1) f32
                o_ref[bi] = jnp.dot(swc, x.astype(BF16),
                                    preferred_element_type=F32) + sb

    return kernel


def _make_sel_mats(H, W):
    """sel[t][p, k] = 1 iff p == (3i+di)*W + (3j+dj), k = i*(W//3)+j, t = 3*di+dj."""
    Hs, Ws = H // 3, W // 3
    sel = np.zeros((9, H * W, Hs * Ws), np.float32)
    for di in range(3):
        for dj in range(3):
            t = 3 * di + dj
            for i in range(Hs):
                for j in range(Ws):
                    sel[t, (3 * i + di) * W + (3 * j + dj), i * Ws + j] = 1.0
    return sel


def cnn_forward(x, p, scaling):
    """x: (B, Cin, H, W) -> (B, Co, Ho, Wo); one fused pallas_call, grid over batch chunks."""
    B, Cin, H, W = x.shape
    P = H * W
    G, Bc = _pick_grid(B)

    conv_layers = ([(p["in_w"], p["in_b"])]
                   + [(hl["w"], hl["b"]) for hl in p["hidden"]]
                   + [(p["out_w"], p["out_b"])])
    n_conv = len(conv_layers)

    inputs = [x.reshape(B, Cin, P).astype(F32)]
    in_specs = [pl.BlockSpec((Bc, Cin, P), lambda g: (g, 0, 0))]

    def add_weight(arr):
        inputs.append(arr)
        in_specs.append(pl.BlockSpec(arr.shape, lambda g, n=arr.ndim: (0,) * n))

    for (w, bvec) in conv_layers:
        Cout, Ci = w.shape[0], w.shape[1]
        # (Cout, Cin, 3, 3) -> (Cout, 9*Cin), contraction index = (3*di+dj)*Cin + ci
        add_weight(jnp.transpose(w, (0, 2, 3, 1)).reshape(Cout, 9 * Ci).astype(BF16))
        add_weight(jnp.asarray(bvec, F32).reshape(Cout, 1))

    Cf = conv_layers[-1][0].shape[0]
    if scaling == "down":
        Ho, Wo = H // 3, W // 3
        Po = Ho * Wo
        sw = p["scale_w"]                                    # Conv2d: (Co, Cf, 3, 3)
        Co = sw.shape[0]
        add_weight(jnp.transpose(sw, (0, 2, 3, 1)).reshape(Co, 9 * Cf).astype(BF16))
        add_weight(jnp.asarray(p["scale_b"], F32).reshape(Co, 1))
        add_weight(jnp.asarray(_make_sel_mats(H, W), BF16))  # (9, P, Po)
        out_shape = jax.ShapeDtypeStruct((B, Co, Po), F32)
        out_spec = pl.BlockSpec((Bc, Co, Po), lambda g: (g, 0, 0))
    else:
        tw = p["scale_w"]                                    # ConvTranspose2d: (Cf, Co, 3, 3)
        Co = tw.shape[1]
        # row index = (3*di+dj)*Co + co, column = ci
        add_weight(jnp.transpose(tw, (2, 3, 1, 0)).reshape(9 * Co, Cf).astype(BF16))
        add_weight(jnp.tile(jnp.asarray(p["scale_b"], F32), 9).reshape(9 * Co, 1))
        out_shape = jax.ShapeDtypeStruct((B, 9 * Co, P), F32)
        out_spec = pl.BlockSpec((Bc, 9 * Co, P), lambda g: (g, 0, 0))

    out = pl.pallas_call(
        _make_cnn_kernel(H, W, scaling, n_conv, Bc),
        out_shape=out_shape,
        grid=(G,),
        in_specs=in_specs,
        out_specs=out_spec,
        compiler_params=pltpu.CompilerParams(dimension_semantics=("parallel",)),
    )(*inputs)

    if scaling == "down":
        return out.reshape(B, Co, Ho, Wo)
    # pixel-shuffle the tap-major layout (b, (di dj co), (h w)) -> (b, co, 3h, 3w)
    out = out.reshape(B, 3, 3, Co, H, W)
    out = jnp.transpose(out, (0, 3, 4, 1, 5, 2))
    return out.reshape(B, Co, 3 * H, 3 * W)


# ---------------------------------------------------------------------------
# fused Mamba tower kernel (all layers, one batch chunk per grid step)
# ---------------------------------------------------------------------------

def _mamba_tower_kernel(x_ref, nw_ref, ipw_ref, cw_ref, cb_ref, wf_ref,
                        dpb_ref, at_ref, dv_ref, opw_ref, o_ref, y_scr):
    Bc, L, Dm = x_ref.shape
    nl, K, I = cw_ref.shape
    S = at_ref.shape[1]
    M = Bc * L

    x = x_ref[...].astype(F32).reshape(M, Dm)                         # (M, Dm)
    for l in range(nl):
        # RMSNorm (prologue of the in_proj matmul)
        ms = jnp.mean(x * x, axis=-1, keepdims=True)
        xn = x * lax.rsqrt(ms + 1e-5) * nw_ref[l]                     # (M, Dm)

        # input projection -> (x, z), bf16 operands, f32 accumulation
        xz = jnp.dot(xn.astype(BF16), ipw_ref[l], preferred_element_type=F32)
        xin = xz[:, :I].reshape(Bc, L, I)
        z = xz[:, I:]                                                 # (M, I)

        # depthwise causal conv over the sequence axis (per batch element)
        cw = cw_ref[l]                                                # (K, I)
        acc = xin * cw[K - 1]
        for j in range(K - 1):
            s = K - 1 - j
            if s < L:
                shifted = jnp.concatenate(
                    [jnp.zeros((Bc, s, I), F32), xin[:, :L - s, :]], axis=1)
                acc = acc + shifted * cw[j]
        acc = acc + cb_ref[l]
        xs3 = _silu(acc)                                              # (Bc, L, I)

        # fused x_proj + dt_proj: one (M, I) @ (I, I+2S) matmul;
        # B / C slices are consumed row-wise by the scan (no transposes).
        proj = jnp.dot(xs3.reshape(M, I).astype(BF16), wf_ref[l],
                       preferred_element_type=F32)                    # (M, I+2S)
        dt3 = _softplus(proj[:, :I] + dpb_ref[l]).reshape(Bc, L, I)
        bm3 = proj[:, I:I + S].reshape(Bc, L, S)
        cm3 = proj[:, I + S:].reshape(Bc, L, S)

        a_t = at_ref[l]                                               # (S, I)
        d_v = dv_ref[l]                                               # (1, I)

        # selective scan: only h carried; y rows go straight into VMEM scratch
        h = jnp.zeros((Bc, S, I), F32)
        for t in range(L):
            dt_t = dt3[:, t:t + 1, :]                                 # (Bc, 1, I)
            x_t = xs3[:, t:t + 1, :]                                  # (Bc, 1, I)
            b_t = bm3[:, t, :][:, :, None]                            # (Bc, S, 1)
            h = jnp.exp(dt_t * a_t) * h + b_t * (dt_t * x_t)          # (Bc, S, I)
            y_t = lax.dot_general(cm3[:, t:t + 1, :], h,              # (Bc, 1, I)
                                  (((2,), (1,)), ((0,), (0,))),
                                  preferred_element_type=F32)
            y_scr[:, t, :] = y_t[:, 0, :] + d_v * xs3[:, t, :]

        # gate + output projection + residual
        yg = y_scr[...].reshape(M, I) * _silu(z)
        x = x + jnp.dot(yg.astype(BF16), opw_ref[l], preferred_element_type=F32)

    o_ref[...] = x.reshape(Bc, L, Dm)


def mamba_tower(x, layers):
    """x: (B, L, D) -> (B, L, D). Whole tower in one pallas_call, grid over batch chunks."""
    B, L, Dm = x.shape
    I, S = layers[0]["A_log"].shape
    R = layers[0]["dt_proj_w"].shape[0]
    G, Bc = _pick_grid(B)

    def stack(fn):
        return jnp.stack([fn(lp) for lp in layers], axis=0)

    def fused_xproj(lp):
        xp = lp["x_proj_w"].astype(F32)                               # (I, R+2S)
        dt_w = jnp.dot(xp[:, :R], lp["dt_proj_w"].astype(F32))        # (I, I)
        return jnp.concatenate([dt_w, xp[:, R:]], axis=1).astype(BF16)

    nw = stack(lambda lp: lp["norm_w"].reshape(1, Dm).astype(F32))
    ipw = stack(lambda lp: lp["in_proj_w"].astype(BF16))              # (D, 2I)
    cw = stack(lambda lp: lp["conv_w"].T.astype(F32))                 # (K, I)
    cb = stack(lambda lp: lp["conv_b"].reshape(1, I).astype(F32))
    wf = stack(fused_xproj)                                           # (I, I+2S) bf16
    dpb = stack(lambda lp: lp["dt_proj_b"].reshape(1, I).astype(F32))
    at = stack(lambda lp: (-jnp.exp(lp["A_log"])).T.astype(F32))      # (S, I)
    dv = stack(lambda lp: lp["D"].reshape(1, I).astype(F32))
    opw = stack(lambda lp: lp["out_proj_w"].astype(BF16))             # (I, D)

    weights = [nw, ipw, cw, cb, wf, dpb, at, dv, opw]
    in_specs = [pl.BlockSpec((Bc, L, Dm), lambda g: (g, 0, 0))]
    for w in weights:
        in_specs.append(pl.BlockSpec(w.shape, lambda g, n=w.ndim: (0,) * n))

    return pl.pallas_call(
        _mamba_tower_kernel,
        out_shape=jax.ShapeDtypeStruct((B, L, Dm), F32),
        grid=(G,),
        in_specs=in_specs,
        out_specs=pl.BlockSpec((Bc, L, Dm), lambda g: (g, 0, 0)),
        scratch_shapes=[pltpu.VMEM((Bc, L, I), F32)],
        compiler_params=pltpu.CompilerParams(dimension_semantics=("parallel",)),
    )(x.astype(F32), *weights)


# ---------------------------------------------------------------------------
# Full MambaCNNMOL forward
# ---------------------------------------------------------------------------

def mamba_cnn_mol_forward(x, params):
    # x: (B, C, 1, H, W) -> (B, out, 1, H, W),  H = W = 15
    x = jnp.squeeze(x, axis=2)                                # (B, C, 15, 15)
    x = cnn_forward(x, params["in_cnn"], "down")              # (B, C, 5, 5)
    B, C, h, w = x.shape
    x = x.reshape(B, C, h * w)                                # (B, C, 25): seq=C, d_model=25
    x = mamba_tower(x, params["mamba"])                       # (B, C, 25)
    x = x.reshape(B, C, h, w)
    x = cnn_forward(x, params["out_cnn"], "up")               # (B, out, 15, 15)
    return jnp.expand_dims(x, 2)                              # (B, out, 1, 15, 15)


# ---------------------------------------------------------------------------
# Deterministic parameter init
# ---------------------------------------------------------------------------

def init_params(key, input_size, output_size, hidden_layers, hidden_channels,
                d_model=25, n_layers=3, d_state=16, d_conv=4, expand=2):
    d_inner = expand * d_model
    dt_rank = math.ceil(d_model / 16)
    keys = list(jax.random.split(key, 256))
    idx = [0]

    def rnd(shape, scale=0.1):
        k = keys[idx[0]]
        idx[0] += 1
        return (scale * jax.random.normal(k, shape)).astype(F32)

    def cnn(cin, cout):
        return {
            "in_w": rnd((hidden_channels, cin, 3, 3)),
            "in_b": rnd((hidden_channels,)),
            "hidden": [{"w": rnd((hidden_channels, hidden_channels, 3, 3)),
                        "b": rnd((hidden_channels,))} for _ in range(hidden_layers)],
            "out_w": rnd((cout, hidden_channels, 3, 3)),
            "out_b": rnd((cout,)),
            # down: Conv2d(cout,cout,3,s=3) weight (Cout,Cin,3,3);
            # up: ConvTranspose2d(cout,cout,3,s=3) weight (Cin,Cout,3,3) — same shape here.
            "scale_w": rnd((cout, cout, 3, 3)),
            "scale_b": rnd((cout,)),
        }

    mamba_layers = []
    for _ in range(n_layers):
        mamba_layers.append({
            "norm_w": jnp.ones((d_model,), F32),
            "in_proj_w": rnd((d_model, 2 * d_inner)),
            "conv_w": rnd((d_inner, d_conv)),
            "conv_b": rnd((d_inner,)),
            "x_proj_w": rnd((d_inner, dt_rank + 2 * d_state)),
            "dt_proj_w": rnd((dt_rank, d_inner)),
            "dt_proj_b": rnd((d_inner,)),
            "A_log": jnp.log(jnp.tile(jnp.arange(1, d_state + 1, dtype=F32)[None, :],
                                      (d_inner, 1))),
            "D": jnp.ones((d_inner,), F32),
            "out_proj_w": rnd((d_inner, d_model)),
        })

    return {"in_cnn": cnn(input_size, input_size),
            "out_cnn": cnn(input_size, output_size),
            "mamba": mamba_layers}


if __name__ == "__main__":
    # Spatial size must be 15x15: down-sampled by 3 -> 5x5 -> d_model = 25.
    input_size, output_size = 4, 3
    hidden_layers, hidden_channels = 1, 8
    B, H, W = 2, 15, 15

    key = jax.random.PRNGKey(0)
    kp, kx = jax.random.split(key)
    params = init_params(kp, input_size, output_size, hidden_layers, hidden_channels)
    x = jax.random.normal(kx, (B, input_size, 1, H, W), F32)

    out = jax.jit(mamba_cnn_mol_forward)(x, params)
    out = jax.block_until_ready(out)
    assert out.shape == (B, output_size, 1, H, W), out.shape
    assert jnp.all(jnp.isfinite(out))
    print("KERNEL_OK")
</pallas_src>

<mosaic_0001>
module attributes {stable_mosaic.version = 11 : i64} {
  func.func @_mamba_tower_kernel(%arg0: i32, %arg1: memref<1x4x25xf32, #tpu.memory_space<vmem>>, %arg2: memref<3x1x25xf32, #tpu.memory_space<vmem>>, %arg3: memref<3x25x100xbf16, #tpu.memory_space<vmem>>, %arg4: memref<3x4x50xf32, #tpu.memory_space<vmem>>, %arg5: memref<3x1x50xf32, #tpu.memory_space<vmem>>, %arg6: memref<3x50x82xbf16, #tpu.memory_space<vmem>>, %arg7: memref<3x1x50xf32, #tpu.memory_space<vmem>>, %arg8: memref<3x16x50xf32, #tpu.memory_space<vmem>>, %arg9: memref<3x1x50xf32, #tpu.memory_space<vmem>>, %arg10: memref<3x50x25xbf16, #tpu.memory_space<vmem>>, %arg11: memref<1x4x25xf32, #tpu.memory_space<vmem>>, %arg12: memref<1x4x50xf32, #tpu.memory_space<vmem>>) attributes {dimension_semantics = [#tpu.dimension_semantics<parallel>], iteration_bounds = array<i64: 2>, scalar_prefetch = 0 : i64, scratch_operands = 1 : i64, tpu.core_type = #tpu.core_type<tc>, window_params = [{transform_indices = @transform_0, window_bounds = array<i64: 1, 4, 25>}, {pipeline_mode = #tpu.pipeline_mode<synchronous>, transform_indices = @transform_1, window_bounds = array<i64: 3, 1, 25>}, {pipeline_mode = #tpu.pipeline_mode<synchronous>, transform_indices = @transform_2, window_bounds = array<i64: 3, 25, 100>}, {pipeline_mode = #tpu.pipeline_mode<synchronous>, transform_indices = @transform_3, window_bounds = array<i64: 3, 4, 50>}, {pipeline_mode = #tpu.pipeline_mode<synchronous>, transform_indices = @transform_4, window_bounds = array<i64: 3, 1, 50>}, {pipeline_mode = #tpu.pipeline_mode<synchronous>, transform_indices = @transform_5, window_bounds = array<i64: 3, 50, 82>}, {pipeline_mode = #tpu.pipeline_mode<synchronous>, transform_indices = @transform_6, window_bounds = array<i64: 3, 1, 50>}, {pipeline_mode = #tpu.pipeline_mode<synchronous>, transform_indices = @transform_7, window_bounds = array<i64: 3, 16, 50>}, {pipeline_mode = #tpu.pipeline_mode<synchronous>, transform_indices = @transform_8, window_bounds = array<i64: 3, 1, 50>}, {pipeline_mode = #tpu.pipeline_mode<synchronous>, transform_indices = @transform_9, window_bounds = array<i64: 3, 50, 25>}, {transform_indices = @transform_10, window_bounds = array<i64: 1, 4, 25>}]} {
    %c0 = arith.constant 0 : index
    %c0_0 = arith.constant 0 : index
    %c0_1 = arith.constant 0 : index
    %0 = vector.load %arg1[%c0, %c0_0, %c0_1] : memref<1x4x25xf32, #tpu.memory_space<vmem>>, vector<1x4x25xf32>
    %1 = vector.shape_cast %0 : vector<1x4x25xf32> to vector<4x25xf32>
    %2 = arith.mulf %1, %1 : vector<4x25xf32>
    %cst = arith.constant dense<0.000000e+00> : vector<4xf32>
    %3 = vector.multi_reduction <add>, %2, %cst [1] : vector<4x25xf32> to vector<4xf32>
    %4 = vector.shape_cast %3 : vector<4xf32> to vector<4x1xf32>
    %cst_2 = arith.constant 2.500000e+01 : f32
    %5 = vector.broadcast %cst_2 : f32 to vector<4x1xf32>
    %6 = arith.divf %4, %5 : vector<4x1xf32>
    %cst_3 = arith.constant 9.99999974E-6 : f32
    %7 = vector.broadcast %cst_3 : f32 to vector<4x1xf32>
    %8 = arith.addf %6, %7 : vector<4x1xf32>
    %9 = math.rsqrt %8 : vector<4x1xf32>
    %10 = vector.broadcast %9 : vector<4x1xf32> to vector<4x25xf32>
    %11 = arith.mulf %1, %10 : vector<4x25xf32>
    %c0_4 = arith.constant 0 : index
    %c0_5 = arith.constant 0 : index
    %c0_6 = arith.constant 0 : index
    %12 = vector.load %arg2[%c0_4, %c0_5, %c0_6] : memref<3x1x25xf32, #tpu.memory_space<vmem>>, vector<1x1x25xf32>
    %13 = vector.shape_cast %12 : vector<1x1x25xf32> to vector<1x25xf32>
    %14 = vector.broadcast %13 : vector<1x25xf32> to vector<4x25xf32>
    %15 = arith.mulf %11, %14 : vector<4x25xf32>
    %16 = arith.truncf %15 : vector<4x25xf32> to vector<4x25xbf16>
    %c0_7 = arith.constant 0 : index
    %c0_8 = arith.constant 0 : index
    %c0_9 = arith.constant 0 : index
    %17 = vector.load %arg3[%c0_7, %c0_8, %c0_9] : memref<3x25x100xbf16, #tpu.memory_space<vmem>>, vector<1x25x100xbf16>
    %18 = vector.shape_cast %17 : vector<1x25x100xbf16> to vector<25x100xbf16>
    %cst_10 = arith.constant dense<0.000000e+00> : vector<4x100xf32>
    %19 = tpu.matmul %16, %18, %cst_10 {dimension_numbers = #tpu.dot_dimension_numbers<[1], [0], [0], [1], [0, 0, 1, 1], [], []>} : vector<4x25xbf16>, vector<25x100xbf16>, vector<4x100xf32> -> vector<4x100xf32>
    %20 = vector.extract_strided_slice %19 {offsets = [0, 0], sizes = [4, 50], strides = [1, 1]} : vector<4x100xf32> to vector<4x50xf32>
    %21 = vector.shape_cast %20 : vector<4x50xf32> to vector<1x4x50xf32>
    %22 = vector.extract_strided_slice %19 {offsets = [0, 50], sizes = [4, 50], strides = [1, 1]} : vector<4x100xf32> to vector<4x50xf32>
    %c0_11 = arith.constant 0 : index
    %c0_12 = arith.constant 0 : index
    %c0_13 = arith.constant 0 : index
    %23 = vector.load %arg4[%c0_11, %c0_12, %c0_13] : memref<3x4x50xf32, #tpu.memory_space<vmem>>, vector<1x4x50xf32>
    %24 = vector.shape_cast %23 : vector<1x4x50xf32> to vector<4x50xf32>
    %25 = vector.extract_strided_slice %24 {offsets = [3, 0], sizes = [1, 50], strides = [1, 1]} : vector<4x50xf32> to vector<1x50xf32>
    %26 = vector.shape_cast %25 : vector<1x50xf32> to vector<50xf32>
    %27 = vector.shape_cast %26 : vector<50xf32> to vector<1x1x50xf32>
    %28 = vector.broadcast %27 : vector<1x1x50xf32> to vector<1x4x50xf32>
    %29 = arith.mulf %21, %28 : vector<1x4x50xf32>
    %cst_14 = arith.constant 0.000000e+00 : f32
    %30 = vector.broadcast %cst_14 : f32 to vector<1x3x50xf32>
    %31 = vector.extract_strided_slice %21 {offsets = [0, 0, 0], sizes = [1, 1, 50], strides = [1, 1, 1]} : vector<1x4x50xf32> to vector<1x1x50xf32>
    %32 = tpu.concatenate %30, %31 in 1 : vector<1x3x50xf32>, vector<1x1x50xf32> -> vector<1x4x50xf32>
    %33 = vector.extract_strided_slice %24 {offsets = [0, 0], sizes = [1, 50], strides = [1, 1]} : vector<4x50xf32> to vector<1x50xf32>
    %34 = vector.shape_cast %33 : vector<1x50xf32> to vector<50xf32>
    %35 = vector.shape_cast %34 : vector<50xf32> to vector<1x1x50xf32>
    %36 = vector.broadcast %35 : vector<1x1x50xf32> to vector<1x4x50xf32>
    %37 = arith.mulf %32, %36 : vector<1x4x50xf32>
    %38 = arith.addf %29, %37 : vector<1x4x50xf32>
    %cst_15 = arith.constant 0.000000e+00 : f32
    %39 = vector.broadcast %cst_15 : f32 to vector<1x2x50xf32>
    %40 = vector.extract_strided_slice %21 {offsets = [0, 0, 0], sizes = [1, 2, 50], strides = [1, 1, 1]} : vector<1x4x50xf32> to vector<1x2x50xf32>
    %41 = tpu.concatenate %39, %40 in 1 : vector<1x2x50xf32>, vector<1x2x50xf32> -> vector<1x4x50xf32>
    %42 = vector.extract_strided_slice %24 {offsets = [1, 0], sizes = [1, 50], strides = [1, 1]} : vector<4x50xf32> to vector<1x50xf32>
    %43 = vector.shape_cast %42 : vector<1x50xf32> to vector<50xf32>
    %44 = vector.shape_cast %43 : vector<50xf32> to vector<1x1x50xf32>
    %45 = vector.broadcast %44 : vector<1x1x50xf32> to vector<1x4x50xf32>
    %46 = arith.mulf %41, %45 : vector<1x4x50xf32>
    %47 = arith.addf %38, %46 : vector<1x4x50xf32>
    %cst_16 = arith.constant 0.000000e+00 : f32
    %48 = vector.broadcast %cst_16 : f32 to vector<1x1x50xf32>
    %49 = vector.extract_strided_slice %21 {offsets = [0, 0, 0], sizes = [1, 3, 50], strides = [1, 1, 1]} : vector<1x4x50xf32> to vector<1x3x50xf32>
    %50 = tpu.concatenate %48, %49 in 1 : vector<1x1x50xf32>, vector<1x3x50xf32> -> vector<1x4x50xf32>
    %51 = vector.extract_strided_slice %24 {offsets = [2, 0], sizes = [1, 50], strides = [1, 1]} : vector<4x50xf32> to vector<1x50xf32>
    %52 = vector.shape_cast %51 : vector<1x50xf32> to vector<50xf32>
    %53 = vector.shape_cast %52 : vector<50xf32> to vector<1x1x50xf32>
    %54 = vector.broadcast %53 : vector<1x1x50xf32> to vector<1x4x50xf32>
    %55 = arith.mulf %50, %54 : vector<1x4x50xf32>
    %56 = arith.addf %47, %55 : vector<1x4x50xf32>
    %c0_17 = arith.constant 0 : index
    %c0_18 = arith.constant 0 : index
    %c0_19 = arith.constant 0 : index
    %57 = vector.load %arg5[%c0_17, %c0_18, %c0_19] : memref<3x1x50xf32, #tpu.memory_space<vmem>>, vector<1x1x50xf32>
    %58 = vector.shape_cast %57 : vector<1x1x50xf32> to vector<1x50xf32>
    %59 = vector.shape_cast %58 : vector<1x50xf32> to vector<1x1x50xf32>
    %60 = vector.broadcast %59 : vector<1x1x50xf32> to vector<1x4x50xf32>
    %61 = arith.addf %56, %60 : vector<1x4x50xf32>
    %cst_20 = arith.constant 0.000000e+00 : f32
    %62 = vector.broadcast %cst_20 : f32 to vector<1x4x50xf32>
    %63 = arith.subf %62, %61 : vector<1x4x50xf32>
    %64 = math.exp %63 : vector<1x4x50xf32>
    %cst_21 = arith.constant 1.000000e+00 : f32
    %65 = vector.broadcast %cst_21 : f32 to vector<1x4x50xf32>
    %66 = arith.addf %65, %64 : vector<1x4x50xf32>
    %67 = tpu.reciprocal %66 {approx = true} : vector<1x4x50xf32> -> vector<1x4x50xf32>
    %68 = arith.mulf %61, %67 : vector<1x4x50xf32>
    %69 = vector.shape_cast %68 : vector<1x4x50xf32> to vector<4x50xf32>
    %70 = arith.truncf %69 : vector<4x50xf32> to vector<4x50xbf16>
    %c0_22 = arith.constant 0 : index
    %c0_23 = arith.constant 0 : index
    %c0_24 = arith.constant 0 : index
    %71 = vector.load %arg6[%c0_22, %c0_23, %c0_24] : memref<3x50x82xbf16, #tpu.memory_space<vmem>>, vector<1x50x82xbf16>
    %72 = vector.shape_cast %71 : vector<1x50x82xbf16> to vector<50x82xbf16>
    %cst_25 = arith.constant dense<0.000000e+00> : vector<4x82xf32>
    %73 = tpu.matmul %70, %72, %cst_25 {dimension_numbers = #tpu.dot_dimension_numbers<[1], [0], [0], [1], [0, 0, 1, 1], [], []>} : vector<4x50xbf16>, vector<50x82xbf16>, vector<4x82xf32> -> vector<4x82xf32>
    %74 = vector.extract_strided_slice %73 {offsets = [0, 0], sizes = [4, 50], strides = [1, 1]} : vector<4x82xf32> to vector<4x50xf32>
    %c0_26 = arith.constant 0 : index
    %c0_27 = arith.constant 0 : index
    %c0_28 = arith.constant 0 : index
    %75 = vector.load %arg7[%c0_26, %c0_27, %c0_28] : memref<3x1x50xf32, #tpu.memory_space<vmem>>, vector<1x1x50xf32>
    %76 = vector.shape_cast %75 : vector<1x1x50xf32> to vector<1x50xf32>
    %77 = vector.broadcast %76 : vector<1x50xf32> to vector<4x50xf32>
    %78 = arith.addf %74, %77 : vector<4x50xf32>
    %cst_29 = arith.constant 0.000000e+00 : f32
    %79 = vector.broadcast %cst_29 : f32 to vector<4x50xf32>
    %80 = arith.maximumf %78, %79 : vector<4x50xf32>
    %81 = math.absf %78 : vector<4x50xf32>
    %cst_30 = arith.constant 0.000000e+00 : f32
    %82 = vector.broadcast %cst_30 : f32 to vector<4x50xf32>
    %83 = arith.subf %82, %81 : vector<4x50xf32>
    %84 = math.exp %83 : vector<4x50xf32>
    %85 = math.log1p %84 : vector<4x50xf32>
    %86 = arith.addf %80, %85 : vector<4x50xf32>
    %87 = vector.shape_cast %86 : vector<4x50xf32> to vector<1x4x50xf32>
    %88 = vector.extract_strided_slice %73 {offsets = [0, 50], sizes = [4, 16], strides = [1, 1]} : vector<4x82xf32> to vector<4x16xf32>
    %89 = vector.shape_cast %88 : vector<4x16xf32> to vector<1x4x16xf32>
    %90 = vector.extract_strided_slice %73 {offsets = [0, 66], sizes = [4, 16], strides = [1, 1]} : vector<4x82xf32> to vector<4x16xf32>
    %91 = vector.shape_cast %90 : vector<4x16xf32> to vector<1x4x16xf32>
    %c0_31 = arith.constant 0 : index
    %c0_32 = arith.constant 0 : index
    %c0_33 = arith.constant 0 : index
    %92 = vector.load %arg8[%c0_31, %c0_32, %c0_33] : memref<3x16x50xf32, #tpu.memory_space<vmem>>, vector<1x16x50xf32>
    %93 = vector.shape_cast %92 : vector<1x16x50xf32> to vector<16x50xf32>
    %c0_34 = arith.constant 0 : index
    %c0_35 = arith.constant 0 : index
    %c0_36 = arith.constant 0 : index
    %94 = vector.load %arg9[%c0_34, %c0_35, %c0_36] : memref<3x1x50xf32, #tpu.memory_space<vmem>>, vector<1x1x50xf32>
    %95 = vector.shape_cast %94 : vector<1x1x50xf32> to vector<1x50xf32>
    %cst_37 = arith.constant 0.000000e+00 : f32
    %96 = vector.broadcast %cst_37 : f32 to vector<1x16x50xf32>
    %97 = vector.extract_strided_slice %87 {offsets = [0, 0, 0], sizes = [1, 1, 50], strides = [1, 1, 1]} : vector<1x4x50xf32> to vector<1x1x50xf32>
    %98 = vector.extract_strided_slice %68 {offsets = [0, 0, 0], sizes = [1, 1, 50], strides = [1, 1, 1]} : vector<1x4x50xf32> to vector<1x1x50xf32>
    %99 = vector.extract_strided_slice %89 {offsets = [0, 0, 0], sizes = [1, 1, 16], strides = [1, 1, 1]} : vector<1x4x16xf32> to vector<1x1x16xf32>
    %100 = vector.shape_cast %99 : vector<1x1x16xf32> to vector<1x16xf32>
    %101 = vector.shape_cast %100 : vector<1x16xf32> to vector<1x16x1xf32>
    %102 = vector.shape_cast %93 : vector<16x50xf32> to vector<1x16x50xf32>
    %103 = vector.broadcast %97 : vector<1x1x50xf32> to vector<1x16x50xf32>
    %104 = arith.mulf %103, %102 : vector<1x16x50xf32>
    %105 = math.exp %104 : vector<1x16x50xf32>
    %106 = arith.mulf %105, %96 : vector<1x16x50xf32>
    %107 = arith.mulf %97, %98 : vector<1x1x50xf32>
    %108 = vector.broadcast %101 : vector<1x16x1xf32> to vector<1x16x50xf32>
    %109 = vector.broadcast %107 : vector<1x1x50xf32> to vector<1x16x50xf32>
    %110 = arith.mulf %108, %109 : vector<1x16x50xf32>
    %111 = arith.addf %106, %110 : vector<1x16x50xf32>
    %112 = vector.extract_strided_slice %91 {offsets = [0, 0, 0], sizes = [1, 1, 16], strides = [1, 1, 1]} : vector<1x4x16xf32> to vector<1x1x16xf32>
    %cst_38 = arith.constant dense<0.000000e+00> : vector<1x1x50xf32>
    %113 = tpu.matmul %112, %111, %cst_38 {dimension_numbers = #tpu.dot_dimension_numbers<[2], [1], [1], [2], [0, 0, 0, 1, 1, 2], [0], [0]>} : vector<1x1x16xf32>, vector<1x16x50xf32>, vector<1x1x50xf32> -> vector<1x1x50xf32>
    %114 = vector.shape_cast %113 : vector<1x1x50xf32> to vector<1x50xf32>
    %115 = vector.extract_strided_slice %68 {offsets = [0, 0, 0], sizes = [1, 1, 50], strides = [1, 1, 1]} : vector<1x4x50xf32> to vector<1x1x50xf32>
    %116 = vector.shape_cast %115 : vector<1x1x50xf32> to vector<1x50xf32>
    %117 = arith.mulf %95, %116 : vector<1x50xf32>
    %118 = arith.addf %114, %117 : vector<1x50xf32>
    %c0_39 = arith.constant 0 : index
    %c0_40 = arith.constant 0 : index
    %c0_41 = arith.constant 0 : index
    %119 = vector.load %arg12[%c0_39, %c0_40, %c0_41] : memref<1x4x50xf32, #tpu.memory_space<vmem>>, vector<1x1x50xf32>
    %120 = vector.shape_cast %119 : vector<1x1x50xf32> to vector<1x50xf32>
    %121 = vector.shape_cast %118 : vector<1x50xf32> to vector<1x1x50xf32>
    tpu.vector_store %arg12[%c0_39, %c0_40, %c0_41], %121 {strides = array<i32>} : memref<1x4x50xf32, #tpu.memory_space<vmem>>, vector<1x1x50xf32>,
    %122 = vector.extract_strided_slice %87 {offsets = [0, 1, 0], sizes = [1, 1, 50], strides = [1, 1, 1]} : vector<1x4x50xf32> to vector<1x1x50xf32>
    %123 = vector.extract_strided_slice %68 {offsets = [0, 1, 0], sizes = [1, 1, 50], strides = [1, 1, 1]} : vector<1x4x50xf32> to vector<1x1x50xf32>
    %124 = vector.extract_strided_slice %89 {offsets = [0, 1, 0], sizes = [1, 1, 16], strides = [1, 1, 1]} : vector<1x4x16xf32> to vector<1x1x16xf32>
    %125 = vector.shape_cast %124 : vector<1x1x16xf32> to vector<1x16xf32>
    %126 = vector.shape_cast %125 : vector<1x16xf32> to vector<1x16x1xf32>
    %127 = vector.shape_cast %93 : vector<16x50xf32> to vector<1x16x50xf32>
    %128 = vector.broadcast %122 : vector<1x1x50xf32> to vector<1x16x50xf32>
    %129 = arith.mulf %128, %127 : vector<1x16x50xf32>
    %130 = math.exp %129 : vector<1x16x50xf32>
    %131 = arith.mulf %130, %111 : vector<1x16x50xf32>
    %132 = arith.mulf %122, %123 : vector<1x1x50xf32>
    %133 = vector.broadcast %126 : vector<1x16x1xf32> to vector<1x16x50xf32>
    %134 = vector.broadcast %132 : vector<1x1x50xf32> to vector<1x16x50xf32>
    %135 = arith.mulf %133, %134 : vector<1x16x50xf32>
    %136 = arith.addf %131, %135 : vector<1x16x50xf32>
    %137 = vector.extract_strided_slice %91 {offsets = [0, 1, 0], sizes = [1, 1, 16], strides = [1, 1, 1]} : vector<1x4x16xf32> to vector<1x1x16xf32>
    %cst_42 = arith.constant dense<0.000000e+00> : vector<1x1x50xf32>
    %138 = tpu.matmul %137, %136, %cst_42 {dimension_numbers = #tpu.dot_dimension_numbers<[2], [1], [1], [2], [0, 0, 0, 1, 1, 2], [0], [0]>} : vector<1x1x16xf32>, vector<1x16x50xf32>, vector<1x1x50xf32> -> vector<1x1x50xf32>
    %139 = vector.shape_cast %138 : vector<1x1x50xf32> to vector<1x50xf32>
    %140 = vector.extract_strided_slice %68 {offsets = [0, 1, 0], sizes = [1, 1, 50], strides = [1, 1, 1]} : vector<1x4x50xf32> to vector<1x1x50xf32>
    %141 = vector.shape_cast %140 : vector<1x1x50xf32> to vector<1x50xf32>
    %142 = arith.mulf %95, %141 : vector<1x50xf32>
    %143 = arith.addf %139, %142 : vector<1x50xf32>
    %c0_43 = arith.constant 0 : index
    %c1 = arith.constant 1 : index
    %c0_44 = arith.constant 0 : index
    %144 = vector.load %arg12[%c0_43, %c1, %c0_44] : memref<1x4x50xf32, #tpu.memory_space<vmem>>, vector<1x1x50xf32>
    %145 = vector.shape_cast %144 : vector<1x1x50xf32> to vector<1x50xf32>
    %146 = vector.shape_cast %143 : vector<1x50xf32> to vector<1x1x50xf32>
    tpu.vector_store %arg12[%c0_43, %c1, %c0_44], %146 {strides = array<i32>} : memref<1x4x50xf32, #tpu.memory_space<vmem>>, vector<1x1x50xf32>,
    %147 = vector.extract_strided_slice %87 {offsets = [0, 2, 0], sizes = [1, 1, 50], strides = [1, 1, 1]} : vector<1x4x50xf32> to vector<1x1x50xf32>
    %148 = vector.extract_strided_slice %68 {offsets = [0, 2, 0], sizes = [1, 1, 50], strides = [1, 1, 1]} : vector<1x4x50xf32> to vector<1x1x50xf32>
    %149 = vector.extract_strided_slice %89 {offsets = [0, 2, 0], sizes = [1, 1, 16], strides = [1, 1, 1]} : vector<1x4x16xf32> to vector<1x1x16xf32>
    %150 = vector.shape_cast %149 : vector<1x1x16xf32> to vector<1x16xf32>
    %151 = vector.shape_cast %150 : vector<1x16xf32> to vector<1x16x1xf32>
    %152 = vector.shape_cast %93 : vector<16x50xf32> to vector<1x16x50xf32>
    %153 = vector.broadcast %147 : vector<1x1x50xf32> to vector<1x16x50xf32>
    %154 = arith.mulf %153, %152 : vector<1x16x50xf32>
    %155 = math.exp %154 : vector<1x16x50xf32>
    %156 = arith.mulf %155, %136 : vector<1x16x50xf32>
    %157 = arith.mulf %147, %148 : vector<1x1x50xf32>
    %158 = vector.broadcast %151 : vector<1x16x1xf32> to vector<1x16x50xf32>
    %159 = vector.broadcast %157 : vector<1x1x50xf32> to vector<1x16x50xf32>
    %160 = arith.mulf %158, %159 : vector<1x16x50xf32>
    %161 = arith.addf %156, %160 : vector<1x16x50xf32>
    %162 = vector.extract_strided_slice %91 {offsets = [0, 2, 0], sizes = [1, 1, 16], strides = [1, 1, 1]} : vector<1x4x16xf32> to vector<1x1x16xf32>
    %cst_45 = arith.constant dense<0.000000e+00> : vector<1x1x50xf32>
    %163 = tpu.matmul %162, %161, %cst_45 {dimension_numbers = #tpu.dot_dimension_numbers<[2], [1], [1], [2], [0, 0, 0, 1, 1, 2], [0], [0]>} : vector<1x1x16xf32>, vector<1x16x50xf32>, vector<1x1x50xf32> -> vector<1x1x50xf32>
    %164 = vector.shape_cast %163 : vector<1x1x50xf32> to vector<1x50xf32>
    %165 = vector.extract_strided_slice %68 {offsets = [0, 2, 0], sizes = [1, 1, 50], strides = [1, 1, 1]} : vector<1x4x50xf32> to vector<1x1x50xf32>
    %166 = vector.shape_cast %165 : vector<1x1x50xf32> to vector<1x50xf32>
    %167 = arith.mulf %95, %166 : vector<1x50xf32>
    %168 = arith.addf %164, %167 : vector<1x50xf32>
    %c0_46 = arith.constant 0 : index
    %c2 = arith.constant 2 : index
    %c0_47 = arith.constant 0 : index
    %169 = vector.load %arg12[%c0_46, %c2, %c0_47] : memref<1x4x50xf32, #tpu.memory_space<vmem>>, vector<1x1x50xf32>
    %170 = vector.shape_cast %169 : vector<1x1x50xf32> to vector<1x50xf32>
    %171 = vector.shape_cast %168 : vector<1x50xf32> to vector<1x1x50xf32>
    tpu.vector_store %arg12[%c0_46, %c2, %c0_47], %171 {strides = array<i32>} : memref<1x4x50xf32, #tpu.memory_space<vmem>>, vector<1x1x50xf32>,
    %172 = vector.extract_strided_slice %87 {offsets = [0, 3, 0], sizes = [1, 1, 50], strides = [1, 1, 1]} : vector<1x4x50xf32> to vector<1x1x50xf32>
    %173 = vector.extract_strided_slice %68 {offsets = [0, 3, 0], sizes = [1, 1, 50], strides = [1, 1, 1]} : vector<1x4x50xf32> to vector<1x1x50xf32>
    %174 = vector.extract_strided_slice %89 {offsets = [0, 3, 0], sizes = [1, 1, 16], strides = [1, 1, 1]} : vector<1x4x16xf32> to vector<1x1x16xf32>
    %175 = vector.shape_cast %174 : vector<1x1x16xf32> to vector<1x16xf32>
    %176 = vector.shape_cast %175 : vector<1x16xf32> to vector<1x16x1xf32>
    %177 = vector.shape_cast %93 : vector<16x50xf32> to vector<1x16x50xf32>
    %178 = vector.broadcast %172 : vector<1x1x50xf32> to vector<1x16x50xf32>
    %179 = arith.mulf %178, %177 : vector<1x16x50xf32>
    %180 = math.exp %179 : vector<1x16x50xf32>
    %181 = arith.mulf %180, %161 : vector<1x16x50xf32>
    %182 = arith.mulf %172, %173 : vector<1x1x50xf32>
    %183 = vector.broadcast %176 : vector<1x16x1xf32> to vector<1x16x50xf32>
    %184 = vector.broadcast %182 : vector<1x1x50xf32> to vector<1x16x50xf32>
    %185 = arith.mulf %183, %184 : vector<1x16x50xf32>
    %186 = arith.addf %181, %185 : vector<1x16x50xf32>
    %187 = vector.extract_strided_slice %91 {offsets = [0, 3, 0], sizes = [1, 1, 16], strides = [1, 1, 1]} : vector<1x4x16xf32> to vector<1x1x16xf32>
    %cst_48 = arith.constant dense<0.000000e+00> : vector<1x1x50xf32>
    %188 = tpu.matmul %187, %186, %cst_48 {dimension_numbers = #tpu.dot_dimension_numbers<[2], [1], [1], [2], [0, 0, 0, 1, 1, 2], [0], [0]>} : vector<1x1x16xf32>, vector<1x16x50xf32>, vector<1x1x50xf32> -> vector<1x1x50xf32>
    %189 = vector.shape_cast %188 : vector<1x1x50xf32> to vector<1x50xf32>
    %190 = vector.extract_strided_slice %68 {offsets = [0, 3, 0], sizes = [1, 1, 50], strides = [1, 1, 1]} : vector<1x4x50xf32> to vector<1x1x50xf32>
    %191 = vector.shape_cast %190 : vector<1x1x50xf32> to vector<1x50xf32>
    %192 = arith.mulf %95, %191 : vector<1x50xf32>
    %193 = arith.addf %189, %192 : vector<1x50xf32>
    %c0_49 = arith.constant 0 : index
    %c3 = arith.constant 3 : index
    %c0_50 = arith.constant 0 : index
    %194 = vector.load %arg12[%c0_49, %c3, %c0_50] : memref<1x4x50xf32, #tpu.memory_space<vmem>>, vector<1x1x50xf32>
    %195 = vector.shape_cast %194 : vector<1x1x50xf32> to vector<1x50xf32>
    %196 = vector.shape_cast %193 : vector<1x50xf32> to vector<1x1x50xf32>
    tpu.vector_store %arg12[%c0_49, %c3, %c0_50], %196 {strides = array<i32>} : memref<1x4x50xf32, #tpu.memory_space<vmem>>, vector<1x1x50xf32>,
    %c0_51 = arith.constant 0 : index
    %c0_52 = arith.constant 0 : index
    %c0_53 = arith.constant 0 : index
    %197 = vector.load %arg12[%c0_51, %c0_52, %c0_53] : memref<1x4x50xf32, #tpu.memory_space<vmem>>, vector<1x4x50xf32>
    %198 = vector.shape_cast %197 : vector<1x4x50xf32> to vector<4x50xf32>
    %cst_54 = arith.constant 0.000000e+00 : f32
    %199 = vector.broadcast %cst_54 : f32 to vector<4x50xf32>
    %200 = arith.subf %199, %22 : vector<4x50xf32>
    %201 = math.exp %200 : vector<4x50xf32>
    %cst_55 = arith.constant 1.000000e+00 : f32
    %202 = vector.broadcast %cst_55 : f32 to vector<4x50xf32>
    %203 = arith.addf %202, %201 : vector<4x50xf32>
    %204 = tpu.reciprocal %203 {approx = true} : vector<4x50xf32> -> vector<4x50xf32>
    %205 = arith.mulf %22, %204 : vector<4x50xf32>
    %206 = arith.mulf %198, %205 : vector<4x50xf32>
    %207 = arith.truncf %206 : vector<4x50xf32> to vector<4x50xbf16>
    %c0_56 = arith.constant 0 : index
    %c0_57 = arith.constant 0 : index
    %c0_58 = arith.constant 0 : index
    %208 = vector.load %arg10[%c0_56, %c0_57, %c0_58] : memref<3x50x25xbf16, #tpu.memory_space<vmem>>, vector<1x50x25xbf16>
    %209 = vector.shape_cast %208 : vector<1x50x25xbf16> to vector<50x25xbf16>
    %cst_59 = arith.constant dense<0.000000e+00> : vector<4x25xf32>
    %210 = tpu.matmul %207, %209, %cst_59 {dimension_numbers = #tpu.dot_dimension_numbers<[1], [0], [0], [1], [0, 0, 1, 1], [], []>} : vector<4x50xbf16>, vector<50x25xbf16>, vector<4x25xf32> -> vector<4x25xf32>
    %211 = arith.addf %1, %210 : vector<4x25xf32>
    %212 = arith.mulf %211, %211 : vector<4x25xf32>
    %cst_60 = arith.constant dense<0.000000e+00> : vector<4xf32>
    %213 = vector.multi_reduction <add>, %212, %cst_60 [1] : vector<4x25xf32> to vector<4xf32>
    %214 = vector.shape_cast %213 : vector<4xf32> to vector<4x1xf32>
    %cst_61 = arith.constant 2.500000e+01 : f32
    %215 = vector.broadcast %cst_61 : f32 to vector<4x1xf32>
    %216 = arith.divf %214, %215 : vector<4x1xf32>
    %cst_62 = arith.constant 9.99999974E-6 : f32
    %217 = vector.broadcast %cst_62 : f32 to vector<4x1xf32>
    %218 = arith.addf %216, %217 : vector<4x1xf32>
    %219 = math.rsqrt %218 : vector<4x1xf32>
    %220 = vector.broadcast %219 : vector<4x1xf32> to vector<4x25xf32>
    %221 = arith.mulf %211, %220 : vector<4x25xf32>
    %c1_63 = arith.constant 1 : index
    %c0_64 = arith.constant 0 : index
    %c0_65 = arith.constant 0 : index
    %222 = vector.load %arg2[%c1_63, %c0_64, %c0_65] : memref<3x1x25xf32, #tpu.memory_space<vmem>>, vector<1x1x25xf32>
    %223 = vector.shape_cast %222 : vector<1x1x25xf32> to vector<1x25xf32>
    %224 = vector.broadcast %223 : vector<1x25xf32> to vector<4x25xf32>
    %225 = arith.mulf %221, %224 : vector<4x25xf32>
    %226 = arith.truncf %225 : vector<4x25xf32> to vector<4x25xbf16>
    %c1_66 = arith.constant 1 : index
    %c0_67 = arith.constant 0 : index
    %c0_68 = arith.constant 0 : index
    %227 = vector.load %arg3[%c1_66, %c0_67, %c0_68] : memref<3x25x100xbf16, #tpu.memory_space<vmem>>, vector<1x25x100xbf16>
    %228 = vector.shape_cast %227 : vector<1x25x100xbf16> to vector<25x100xbf16>
    %cst_69 = arith.constant dense<0.000000e+00> : vector<4x100xf32>
    %229 = tpu.matmul %226, %228, %cst_69 {dimension_numbers = #tpu.dot_dimension_numbers<[1], [0], [0], [1], [0, 0, 1, 1], [], []>} : vector<4x25xbf16>, vector<25x100xbf16>, vector<4x100xf32> -> vector<4x100xf32>
    %230 = vector.extract_strided_slice %229 {offsets = [0, 0], sizes = [4, 50], strides = [1, 1]} : vector<4x100xf32> to vector<4x50xf32>
    %231 = vector.shape_cast %230 : vector<4x50xf32> to vector<1x4x50xf32>
    %232 = vector.extract_strided_slice %229 {offsets = [0, 50], sizes = [4, 50], strides = [1, 1]} : vector<4x100xf32> to vector<4x50xf32>
    %c1_70 = arith.constant 1 : index
    %c0_71 = arith.constant 0 : index
    %c0_72 = arith.constant 0 : index
    %233 = vector.load %arg4[%c1_70, %c0_71, %c0_72] : memref<3x4x50xf32, #tpu.memory_space<vmem>>, vector<1x4x50xf32>
    %234 = vector.shape_cast %233 : vector<1x4x50xf32> to vector<4x50xf32>
    %235 = vector.extract_strided_slice %234 {offsets = [3, 0], sizes = [1, 50], strides = [1, 1]} : vector<4x50xf32> to vector<1x50xf32>
    %236 = vector.shape_cast %235 : vector<1x50xf32> to vector<50xf32>
    %237 = vector.shape_cast %236 : vector<50xf32> to vector<1x1x50xf32>
    %238 = vector.broadcast %237 : vector<1x1x50xf32> to vector<1x4x50xf32>
    %239 = arith.mulf %231, %238 : vector<1x4x50xf32>
    %cst_73 = arith.constant 0.000000e+00 : f32
    %240 = vector.broadcast %cst_73 : f32 to vector<1x3x50xf32>
    %241 = vector.extract_strided_slice %231 {offsets = [0, 0, 0], sizes = [1, 1, 50], strides = [1, 1, 1]} : vector<1x4x50xf32> to vector<1x1x50xf32>
    %242 = tpu.concatenate %240, %241 in 1 : vector<1x3x50xf32>, vector<1x1x50xf32> -> vector<1x4x50xf32>
    %243 = vector.extract_strided_slice %234 {offsets = [0, 0], sizes = [1, 50], strides = [1, 1]} : vector<4x50xf32> to vector<1x50xf32>
    %244 = vector.shape_cast %243 : vector<1x50xf32> to vector<50xf32>
    %245 = vector.shape_cast %244 : vector<50xf32> to vector<1x1x50xf32>
    %246 = vector.broadcast %245 : vector<1x1x50xf32> to vector<1x4x50xf32>
    %247 = arith.mulf %242, %246 : vector<1x4x50xf32>
    %248 = arith.addf %239, %247 : vector<1x4x50xf32>
    %cst_74 = arith.constant 0.000000e+00 : f32
    %249 = vector.broadcast %cst_74 : f32 to vector<1x2x50xf32>
    %250 = vector.extract_strided_slice %231 {offsets = [0, 0, 0], sizes = [1, 2, 50], strides = [1, 1, 1]} : vector<1x4x50xf32> to vector<1x2x50xf32>
    %251 = tpu.concatenate %249, %250 in 1 : vector<1x2x50xf32>, vector<1x2x50xf32> -> vector<1x4x50xf32>
    %252 = vector.extract_strided_slice %234 {offsets = [1, 0], sizes = [1, 50], strides = [1, 1]} : vector<4x50xf32> to vector<1x50xf32>
    %253 = vector.shape_cast %252 : vector<1x50xf32> to vector<50xf32>
    %254 = vector.shape_cast %253 : vector<50xf32> to vector<1x1x50xf32>
    %255 = vector.broadcast %254 : vector<1x1x50xf32> to vector<1x4x50xf32>
    %256 = arith.mulf %251, %255 : vector<1x4x50xf32>
    %257 = arith.addf %248, %256 : vector<1x4x50xf32>
    %cst_75 = arith.constant 0.000000e+00 : f32
    %258 = vector.broadcast %cst_75 : f32 to vector<1x1x50xf32>
    %259 = vector.extract_strided_slice %231 {offsets = [0, 0, 0], sizes = [1, 3, 50], strides = [1, 1, 1]} : vector<1x4x50xf32> to vector<1x3x50xf32>
    %260 = tpu.concatenate %258, %259 in 1 : vector<1x1x50xf32>, vector<1x3x50xf32> -> vector<1x4x50xf32>
    %261 = vector.extract_strided_slice %234 {offsets = [2, 0], sizes = [1, 50], strides = [1, 1]} : vector<4x50xf32> to vector<1x50xf32>
    %262 = vector.shape_cast %261 : vector<1x50xf32> to vector<50xf32>
    %263 = vector.shape_cast %262 : vector<50xf32> to vector<1x1x50xf32>
    %264 = vector.broadcast %263 : vector<1x1x50xf32> to vector<1x4x50xf32>
    %265 = arith.mulf %260, %264 : vector<1x4x50xf32>
    %266 = arith.addf %257, %265 : vector<1x4x50xf32>
    %c1_76 = arith.constant 1 : index
    %c0_77 = arith.constant 0 : index
    %c0_78 = arith.constant 0 : index
    %267 = vector.load %arg5[%c1_76, %c0_77, %c0_78] : memref<3x1x50xf32, #tpu.memory_space<vmem>>, vector<1x1x50xf32>
    %268 = vector.shape_cast %267 : vector<1x1x50xf32> to vector<1x50xf32>
    %269 = vector.shape_cast %268 : vector<1x50xf32> to vector<1x1x50xf32>
    %270 = vector.broadcast %269 : vector<1x1x50xf32> to vector<1x4x50xf32>
    %271 = arith.addf %266, %270 : vector<1x4x50xf32>
    %cst_79 = arith.constant 0.000000e+00 : f32
    %272 = vector.broadcast %cst_79 : f32 to vector<1x4x50xf32>
    %273 = arith.subf %272, %271 : vector<1x4x50xf32>
    %274 = math.exp %273 : vector<1x4x50xf32>
    %cst_80 = arith.constant 1.000000e+00 : f32
    %275 = vector.broadcast %cst_80 : f32 to vector<1x4x50xf32>
    %276 = arith.addf %275, %274 : vector<1x4x50xf32>
    %277 = tpu.reciprocal %276 {approx = true} : vector<1x4x50xf32> -> vector<1x4x50xf32>
    %278 = arith.mulf %271, %277 : vector<1x4x50xf32>
    %279 = vector.shape_cast %278 : vector<1x4x50xf32> to vector<4x50xf32>
    %280 = arith.truncf %279 : vector<4x50xf32> to vector<4x50xbf16>
    %c1_81 = arith.constant 1 : index
    %c0_82 = arith.constant 0 : index
    %c0_83 = arith.constant 0 : index
    %281 = vector.load %arg6[%c1_81, %c0_82, %c0_83] : memref<3x50x82xbf16, #tpu.memory_space<vmem>>, vector<1x50x82xbf16>
    %282 = vector.shape_cast %281 : vector<1x50x82xbf16> to vector<50x82xbf16>
    %cst_84 = arith.constant dense<0.000000e+00> : vector<4x82xf32>
    %283 = tpu.matmul %280, %282, %cst_84 {dimension_numbers = #tpu.dot_dimension_numbers<[1], [0], [0], [1], [0, 0, 1, 1], [], []>} : vector<4x50xbf16>, vector<50x82xbf16>, vector<4x82xf32> -> vector<4x82xf32>
    %284 = vector.extract_strided_slice %283 {offsets = [0, 0], sizes = [4, 50], strides = [1, 1]} : vector<4x82xf32> to vector<4x50xf32>
    %c1_85 = arith.constant 1 : index
    %c0_86 = arith.constant 0 : index
    %c0_87 = arith.constant 0 : index
    %285 = vector.load %arg7[%c1_85, %c0_86, %c0_87] : memref<3x1x50xf32, #tpu.memory_space<vmem>>, vector<1x1x50xf32>
    %286 = vector.shape_cast %285 : vector<1x1x50xf32> to vector<1x50xf32>
    %287 = vector.broadcast %286 : vector<1x50xf32> to vector<4x50xf32>
    %288 = arith.addf %284, %287 : vector<4x50xf32>
    %cst_88 = arith.constant 0.000000e+00 : f32
    %289 = vector.broadcast %cst_88 : f32 to vector<4x50xf32>
    %290 = arith.maximumf %288, %289 : vector<4x50xf32>
    %291 = math.absf %288 : vector<4x50xf32>
    %cst_89 = arith.constant 0.000000e+00 : f32
    %292 = vector.broadcast %cst_89 : f32 to vector<4x50xf32>
    %293 = arith.subf %292, %291 : vector<4x50xf32>
    %294 = math.exp %293 : vector<4x50xf32>
    %295 = math.log1p %294 : vector<4x50xf32>
    %296 = arith.addf %290, %295 : vector<4x50xf32>
    %297 = vector.shape_cast %296 : vector<4x50xf32> to vector<1x4x50xf32>
    %298 = vector.extract_strided_slice %283 {offsets = [0, 50], sizes = [4, 16], strides = [1, 1]} : vector<4x82xf32> to vector<4x16xf32>
    %299 = vector.shape_cast %298 : vector<4x16xf32> to vector<1x4x16xf32>
    %300 = vector.extract_strided_slice %283 {offsets = [0, 66], sizes = [4, 16], strides = [1, 1]} : vector<4x82xf32> to vector<4x16xf32>
    %301 = vector.shape_cast %300 : vector<4x16xf32> to vector<1x4x16xf32>
    %c1_90 = arith.constant 1 : index
    %c0_91 = arith.constant 0 : index
    %c0_92 = arith.constant 0 : index
    %302 = vector.load %arg8[%c1_90, %c0_91, %c0_92] : memref<3x16x50xf32, #tpu.memory_space<vmem>>, vector<1x16x50xf32>
    %303 = vector.shape_cast %302 : vector<1x16x50xf32> to vector<16x50xf32>
    %c1_93 = arith.constant 1 : index
    %c0_94 = arith.constant 0 : index
    %c0_95 = arith.constant 0 : index
    %304 = vector.load %arg9[%c1_93, %c0_94, %c0_95] : memref<3x1x50xf32, #tpu.memory_space<vmem>>, vector<1x1x50xf32>
    %305 = vector.shape_cast %304 : vector<1x1x50xf32> to vector<1x50xf32>
    %cst_96 = arith.constant 0.000000e+00 : f32
    %306 = vector.broadcast %cst_96 : f32 to vector<1x16x50xf32>
    %307 = vector.extract_strided_slice %297 {offsets = [0, 0, 0], sizes = [1, 1, 50], strides = [1, 1, 1]} : vector<1x4x50xf32> to vector<1x1x50xf32>
    %308 = vector.extract_strided_slice %278 {offsets = [0, 0, 0], sizes = [1, 1, 50], strides = [1, 1, 1]} : vector<1x4x50xf32> to vector<1x1x50xf32>
    %309 = vector.extract_strided_slice %299 {offsets = [0, 0, 0], sizes = [1, 1, 16], strides = [1, 1, 1]} : vector<1x4x16xf32> to vector<1x1x16xf32>
    %310 = vector.shape_cast %309 : vector<1x1x16xf32> to vector<1x16xf32>
    %311 = vector.shape_cast %310 : vector<1x16xf32> to vector<1x16x1xf32>
    %312 = vector.shape_cast %303 : vector<16x50xf32> to vector<1x16x50xf32>
    %313 = vector.broadcast %307 : vector<1x1x50xf32> to vector<1x16x50xf32>
    %314 = arith.mulf %313, %312 : vector<1x16x50xf32>
    %315 = math.exp %314 : vector<1x16x50xf32>
    %316 = arith.mulf %315, %306 : vector<1x16x50xf32>
    %317 = arith.mulf %307, %308 : vector<1x1x50xf32>
    %318 = vector.broadcast %311 : vector<1x16x1xf32> to vector<1x16x50xf32>
    %319 = vector.broadcast %317 : vector<1x1x50xf32> to vector<1x16x50xf32>
    %320 = arith.mulf %318, %319 : vector<1x16x50xf32>
    %321 = arith.addf %316, %320 : vector<1x16x50xf32>
    %322 = vector.extract_strided_slice %301 {offsets = [0, 0, 0], sizes = [1, 1, 16], strides = [1, 1, 1]} : vector<1x4x16xf32> to vector<1x1x16xf32>
    %cst_97 = arith.constant dense<0.000000e+00> : vector<1x1x50xf32>
    %323 = tpu.matmul %322, %321, %cst_97 {dimension_numbers = #tpu.dot_dimension_numbers<[2], [1], [1], [2], [0, 0, 0, 1, 1, 2], [0], [0]>} : vector<1x1x16xf32>, vector<1x16x50xf32>, vector<1x1x50xf32> -> vector<1x1x50xf32>
    %324 = vector.shape_cast %323 : vector<1x1x50xf32> to vector<1x50xf32>
    %325 = vector.extract_strided_slice %278 {offsets = [0, 0, 0], sizes = [1, 1, 50], strides = [1, 1, 1]} : vector<1x4x50xf32> to vector<1x1x50xf32>
    %326 = vector.shape_cast %325 : vector<1x1x50xf32> to vector<1x50xf32>
    %327 = arith.mulf %305, %326 : vector<1x50xf32>
    %328 = arith.addf %324, %327 : vector<1x50xf32>
    %c0_98 = arith.constant 0 : index
    %c0_99 = arith.constant 0 : index
    %c0_100 = arith.constant 0 : index
    %329 = vector.load %arg12[%c0_98, %c0_99, %c0_100] : memref<1x4x50xf32, #tpu.memory_space<vmem>>, vector<1x1x50xf32>
    %330 = vector.shape_cast %329 : vector<1x1x50xf32> to vector<1x50xf32>
    %331 = vector.shape_cast %328 : vector<1x50xf32> to vector<1x1x50xf32>
    tpu.vector_store %arg12[%c0_98, %c0_99, %c0_100], %331 {strides = array<i32>} : memref<1x4x50xf32, #tpu.memory_space<vmem>>, vector<1x1x50xf32>,
    %332 = vector.extract_strided_slice %297 {offsets = [0, 1, 0], sizes = [1, 1, 50], strides = [1, 1, 1]} : vector<1x4x50xf32> to vector<1x1x50xf32>
    %333 = vector.extract_strided_slice %278 {offsets = [0, 1, 0], sizes = [1, 1, 50], strides = [1, 1, 1]} : vector<1x4x50xf32> to vector<1x1x50xf32>
    %334 = vector.extract_strided_slice %299 {offsets = [0, 1, 0], sizes = [1, 1, 16], strides = [1, 1, 1]} : vector<1x4x16xf32> to vector<1x1x16xf32>
    %335 = vector.shape_cast %334 : vector<1x1x16xf32> to vector<1x16xf32>
    %336 = vector.shape_cast %335 : vector<1x16xf32> to vector<1x16x1xf32>
    %337 = vector.shape_cast %303 : vector<16x50xf32> to vector<1x16x50xf32>
    %338 = vector.broadcast %332 : vector<1x1x50xf32> to vector<1x16x50xf32>
    %339 = arith.mulf %338, %337 : vector<1x16x50xf32>
    %340 = math.exp %339 : vector<1x16x50xf32>
    %341 = arith.mulf %340, %321 : vector<1x16x50xf32>
    %342 = arith.mulf %332, %333 : vector<1x1x50xf32>
    %343 = vector.broadcast %336 : vector<1x16x1xf32> to vector<1x16x50xf32>
    %344 = vector.broadcast %342 : vector<1x1x50xf32> to vector<1x16x50xf32>
    %345 = arith.mulf %343, %344 : vector<1x16x50xf32>
    %346 = arith.addf %341, %345 : vector<1x16x50xf32>
    %347 = vector.extract_strided_slice %301 {offsets = [0, 1, 0], sizes = [1, 1, 16], strides = [1, 1, 1]} : vector<1x4x16xf32> to vector<1x1x16xf32>
    %cst_101 = arith.constant dense<0.000000e+00> : vector<1x1x50xf32>
    %348 = tpu.matmul %347, %346, %cst_101 {dimension_numbers = #tpu.dot_dimension_numbers<[2], [1], [1], [2], [0, 0, 0, 1, 1, 2], [0], [0]>} : vector<1x1x16xf32>, vector<1x16x50xf32>, vector<1x1x50xf32> -> vector<1x1x50xf32>
    %349 = vector.shape_cast %348 : vector<1x1x50xf32> to vector<1x50xf32>
    %350 = vector.extract_strided_slice %278 {offsets = [0, 1, 0], sizes = [1, 1, 50], strides = [1, 1, 1]} : vector<1x4x50xf32> to vector<1x1x50xf32>
    %351 = vector.shape_cast %350 : vector<1x1x50xf32> to vector<1x50xf32>
    %352 = arith.mulf %305, %351 : vector<1x50xf32>
    %353 = arith.addf %349, %352 : vector<1x50xf32>
    %c0_102 = arith.constant 0 : index
    %c1_103 = arith.constant 1 : index
    %c0_104 = arith.constant 0 : index
    %354 = vector.load %arg12[%c0_102, %c1_103, %c0_104] : memref<1x4x50xf32, #tpu.memory_space<vmem>>, vector<1x1x50xf32>
    %355 = vector.shape_cast %354 : vector<1x1x50xf32> to vector<1x50xf32>
    %356 = vector.shape_cast %353 : vector<1x50xf32> to vector<1x1x50xf32>
    tpu.vector_store %arg12[%c0_102, %c1_103, %c0_104], %356 {strides = array<i32>} : memref<1x4x50xf32, #tpu.memory_space<vmem>>, vector<1x1x50xf32>,
    %357 = vector.extract_strided_slice %297 {offsets = [0, 2, 0], sizes = [1, 1, 50], strides = [1, 1, 1]} : vector<1x4x50xf32> to vector<1x1x50xf32>
    %358 = vector.extract_strided_slice %278 {offsets = [0, 2, 0], sizes = [1, 1, 50], strides = [1, 1, 1]} : vector<1x4x50xf32> to vector<1x1x50xf32>
    %359 = vector.extract_strided_slice %299 {offsets = [0, 2, 0], sizes = [1, 1, 16], strides = [1, 1, 1]} : vector<1x4x16xf32> to vector<1x1x16xf32>
    %360 = vector.shape_cast %359 : vector<1x1x16xf32> to vector<1x16xf32>
    %361 = vector.shape_cast %360 : vector<1x16xf32> to vector<1x16x1xf32>
    %362 = vector.shape_cast %303 : vector<16x50xf32> to vector<1x16x50xf32>
    %363 = vector.broadcast %357 : vector<1x1x50xf32> to vector<1x16x50xf32>
    %364 = arith.mulf %363, %362 : vector<1x16x50xf32>
    %365 = math.exp %364 : vector<1x16x50xf32>
    %366 = arith.mulf %365, %346 : vector<1x16x50xf32>
    %367 = arith.mulf %357, %358 : vector<1x1x50xf32>
    %368 = vector.broadcast %361 : vector<1x16x1xf32> to vector<1x16x50xf32>
    %369 = vector.broadcast %367 : vector<1x1x50xf32> to vector<1x16x50xf32>
    %370 = arith.mulf %368, %369 : vector<1x16x50xf32>
    %371 = arith.addf %366, %370 : vector<1x16x50xf32>
    %372 = vector.extract_strided_slice %301 {offsets = [0, 2, 0], sizes = [1, 1, 16], strides = [1, 1, 1]} : vector<1x4x16xf32> to vector<1x1x16xf32>
    %cst_105 = arith.constant dense<0.000000e+00> : vector<1x1x50xf32>
    %373 = tpu.matmul %372, %371, %cst_105 {dimension_numbers = #tpu.dot_dimension_numbers<[2], [1], [1], [2], [0, 0, 0, 1, 1, 2], [0], [0]>} : vector<1x1x16xf32>, vector<1x16x50xf32>, vector<1x1x50xf32> -> vector<1x1x50xf32>
    %374 = vector.shape_cast %373 : vector<1x1x50xf32> to vector<1x50xf32>
    %375 = vector.extract_strided_slice %278 {offsets = [0, 2, 0], sizes = [1, 1, 50], strides = [1, 1, 1]} : vector<1x4x50xf32> to vector<1x1x50xf32>
    %376 = vector.shape_cast %375 : vector<1x1x50xf32> to vector<1x50xf32>
    %377 = arith.mulf %305, %376 : vector<1x50xf32>
    %378 = arith.addf %374, %377 : vector<1x50xf32>
    %c0_106 = arith.constant 0 : index
    %c2_107 = arith.constant 2 : index
    %c0_108 = arith.constant 0 : index
    %379 = vector.load %arg12[%c0_106, %c2_107, %c0_108] : memref<1x4x50xf32, #tpu.memory_space<vmem>>, vector<1x1x50xf32>
    %380 = vector.shape_cast %379 : vector<1x1x50xf32> to vector<1x50xf32>
    %381 = vector.shape_cast %378 : vector<1x50xf32> to vector<1x1x50xf32>
    tpu.vector_store %arg12[%c0_106, %c2_107, %c0_108], %381 {strides = array<i32>} : memref<1x4x50xf32, #tpu.memory_space<vmem>>, vector<1x1x50xf32>,
    %382 = vector.extract_strided_slice %297 {offsets = [0, 3, 0], sizes = [1, 1, 50], strides = [1, 1, 1]} : vector<1x4x50xf32> to vector<1x1x50xf32>
    %383 = vector.extract_strided_slice %278 {offsets = [0, 3, 0], sizes = [1, 1, 50], strides = [1, 1, 1]} : vector<1x4x50xf32> to vector<1x1x50xf32>
    %384 = vector.extract_strided_slice %299 {offsets = [0, 3, 0], sizes = [1, 1, 16], strides = [1, 1, 1]} : vector<1x4x16xf32> to vector<1x1x16xf32>
    %385 = vector.shape_cast %384 : vector<1x1x16xf32> to vector<1x16xf32>
    %386 = vector.shape_cast %385 : vector<1x16xf32> to vector<1x16x1xf32>
    %387 = vector.shape_cast %303 : vector<16x50xf32> to vector<1x16x50xf32>
    %388 = vector.broadcast %382 : vector<1x1x50xf32> to vector<1x16x50xf32>
    %389 = arith.mulf %388, %387 : vector<1x16x50xf32>
    %390 = math.exp %389 : vector<1x16x50xf32>
    %391 = arith.mulf %390, %371 : vector<1x16x50xf32>
    %392 = arith.mulf %382, %383 : vector<1x1x50xf32>
    %393 = vector.broadcast %386 : vector<1x16x1xf32> to vector<1x16x50xf32>
    %394 = vector.broadcast %392 : vector<1x1x50xf32> to vector<1x16x50xf32>
    %395 = arith.mulf %393, %394 : vector<1x16x50xf32>
    %396 = arith.addf %391, %395 : vector<1x16x50xf32>
    %397 = vector.extract_strided_slice %301 {offsets = [0, 3, 0], sizes = [1, 1, 16], strides = [1, 1, 1]} : vector<1x4x16xf32> to vector<1x1x16xf32>
    %cst_109 = arith.constant dense<0.000000e+00> : vector<1x1x50xf32>
    %398 = tpu.matmul %397, %396, %cst_109 {dimension_numbers = #tpu.dot_dimension_numbers<[2], [1], [1], [2], [0, 0, 0, 1, 1, 2], [0], [0]>} : vector<1x1x16xf32>, vector<1x16x50xf32>, vector<1x1x50xf32> -> vector<1x1x50xf32>
    %399 = vector.shape_cast %398 : vector<1x1x50xf32> to vector<1x50xf32>
    %400 = vector.extract_strided_slice %278 {offsets = [0, 3, 0], sizes = [1, 1, 50], strides = [1, 1, 1]} : vector<1x4x50xf32> to vector<1x1x50xf32>
    %401 = vector.shape_cast %400 : vector<1x1x50xf32> to vector<1x50xf32>
    %402 = arith.mulf %305, %401 : vector<1x50xf32>
    %403 = arith.addf %399, %402 : vector<1x50xf32>
    %c0_110 = arith.constant 0 : index
    %c3_111 = arith.constant 3 : index
    %c0_112 = arith.constant 0 : index
    %404 = vector.load %arg12[%c0_110, %c3_111, %c0_112] : memref<1x4x50xf32, #tpu.memory_space<vmem>>, vector<1x1x50xf32>
    %405 = vector.shape_cast %404 : vector<1x1x50xf32> to vector<1x50xf32>
    %406 = vector.shape_cast %403 : vector<1x50xf32> to vector<1x1x50xf32>
    tpu.vector_store %arg12[%c0_110, %c3_111, %c0_112], %406 {strides = array<i32>} : memref<1x4x50xf32, #tpu.memory_space<vmem>>, vector<1x1x50xf32>,
    %c0_113 = arith.constant 0 : index
    %c0_114 = arith.constant 0 : index
    %c0_115 = arith.constant 0 : index
    %407 = vector.load %arg12[%c0_113, %c0_114, %c0_115] : memref<1x4x50xf32, #tpu.memory_space<vmem>>, vector<1x4x50xf32>
    %408 = vector.shape_cast %407 : vector<1x4x50xf32> to vector<4x50xf32>
    %cst_116 = arith.constant 0.000000e+00 : f32
    %409 = vector.broadcast %cst_116 : f32 to vector<4x50xf32>
    %410 = arith.subf %409, %232 : vector<4x50xf32>
    %411 = math.exp %410 : vector<4x50xf32>
    %cst_117 = arith.constant 1.000000e+00 : f32
    %412 = vector.broadcast %cst_117 : f32 to vector<4x50xf32>
    %413 = arith.addf %412, %411 : vector<4x50xf32>
    %414 = tpu.reciprocal %413 {approx = true} : vector<4x50xf32> -> vector<4x50xf32>
    %415 = arith.mulf %232, %414 : vector<4x50xf32>
    %416 = arith.mulf %408, %415 : vector<4x50xf32>
    %417 = arith.truncf %416 : vector<4x50xf32> to vector<4x50xbf16>
    %c1_118 = arith.constant 1 : index
    %c0_119 = arith.constant 0 : index
    %c0_120 = arith.constant 0 : index
    %418 = vector.load %arg10[%c1_118, %c0_119, %c0_120] : memref<3x50x25xbf16, #tpu.memory_space<vmem>>, vector<1x50x25xbf16>
    %419 = vector.shape_cast %418 : vector<1x50x25xbf16> to vector<50x25xbf16>
    %cst_121 = arith.constant dense<0.000000e+00> : vector<4x25xf32>
    %420 = tpu.matmul %417, %419, %cst_121 {dimension_numbers = #tpu.dot_dimension_numbers<[1], [0], [0], [1], [0, 0, 1, 1], [], []>} : vector<4x50xbf16>, vector<50x25xbf16>, vector<4x25xf32> -> vector<4x25xf32>
    %421 = arith.addf %211, %420 : vector<4x25xf32>
    %422 = arith.mulf %421, %421 : vector<4x25xf32>
    %cst_122 = arith.constant dense<0.000000e+00> : vector<4xf32>
    %423 = vector.multi_reduction <add>, %422, %cst_122 [1] : vector<4x25xf32> to vector<4xf32>
    %424 = vector.shape_cast %423 : vector<4xf32> to vector<4x1xf32>
    %cst_123 = arith.constant 2.500000e+01 : f32
    %425 = vector.broadcast %cst_123 : f32 to vector<4x1xf32>
    %426 = arith.divf %424, %425 : vector<4x1xf32>
    %cst_124 = arith.constant 9.99999974E-6 : f32
    %427 = vector.broadcast %cst_124 : f32 to vector<4x1xf32>
    %428 = arith.addf %426, %427 : vector<4x1xf32>
    %429 = math.rsqrt %428 : vector<4x1xf32>
    %430 = vector.broadcast %429 : vector<4x1xf32> to vector<4x25xf32>
    %431 = arith.mulf %421, %430 : vector<4x25xf32>
    %c2_125 = arith.constant 2 : index
    %c0_126 = arith.constant 0 : index
    %c0_127 = arith.constant 0 : index
    %432 = vector.load %arg2[%c2_125, %c0_126, %c0_127] : memref<3x1x25xf32, #tpu.memory_space<vmem>>, vector<1x1x25xf32>
    %433 = vector.shape_cast %432 : vector<1x1x25xf32> to vector<1x25xf32>
    %434 = vector.broadcast %433 : vector<1x25xf32> to vector<4x25xf32>
    %435 = arith.mulf %431, %434 : vector<4x25xf32>
    %436 = arith.truncf %435 : vector<4x25xf32> to vector<4x25xbf16>
    %c2_128 = arith.constant 2 : index
    %c0_129 = arith.constant 0 : index
    %c0_130 = arith.constant 0 : index
    %437 = vector.load %arg3[%c2_128, %c0_129, %c0_130] : memref<3x25x100xbf16, #tpu.memory_space<vmem>>, vector<1x25x100xbf16>
    %438 = vector.shape_cast %437 : vector<1x25x100xbf16> to vector<25x100xbf16>
    %cst_131 = arith.constant dense<0.000000e+00> : vector<4x100xf32>
    %439 = tpu.matmul %436, %438, %cst_131 {dimension_numbers = #tpu.dot_dimension_numbers<[1], [0], [0], [1], [0, 0, 1, 1], [], []>} : vector<4x25xbf16>, vector<25x100xbf16>, vector<4x100xf32> -> vector<4x100xf32>
    %440 = vector.extract_strided_slice %439 {offsets = [0, 0], sizes = [4, 50], strides = [1, 1]} : vector<4x100xf32> to vector<4x50xf32>
    %441 = vector.shape_cast %440 : vector<4x50xf32> to vector<1x4x50xf32>
    %442 = vector.extract_strided_slice %439 {offsets = [0, 50], sizes = [4, 50], strides = [1, 1]} : vector<4x100xf32> to vector<4x50xf32>
    %c2_132 = arith.constant 2 : index
    %c0_133 = arith.constant 0 : index
    %c0_134 = arith.constant 0 : index
    %443 = vector.load %arg4[%c2_132, %c0_133, %c0_134] : memref<3x4x50xf32, #tpu.memory_space<vmem>>, vector<1x4x50xf32>
    %444 = vector.shape_cast %443 : vector<1x4x50xf32> to vector<4x50xf32>
    %445 = vector.extract_strided_slice %444 {offsets = [3, 0], sizes = [1, 50], strides = [1, 1]} : vector<4x50xf32> to vector<1x50xf32>
    %446 = vector.shape_cast %445 : vector<1x50xf32> to vector<50xf32>
    %447 = vector.shape_cast %446 : vector<50xf32> to vector<1x1x50xf32>
    %448 = vector.broadcast %447 : vector<1x1x50xf32> to vector<1x4x50xf32>
    %449 = arith.mulf %441, %448 : vector<1x4x50xf32>
    %cst_135 = arith.constant 0.000000e+00 : f32
    %450 = vector.broadcast %cst_135 : f32 to vector<1x3x50xf32>
    %451 = vector.extract_strided_slice %441 {offsets = [0, 0, 0], sizes = [1, 1, 50], strides = [1, 1, 1]} : vector<1x4x50xf32> to vector<1x1x50xf32>
    %452 = tpu.concatenate %450, %451 in 1 : vector<1x3x50xf32>, vector<1x1x50xf32> -> vector<1x4x50xf32>
    %453 = vector.extract_strided_slice %444 {offsets = [0, 0], sizes = [1, 50], strides = [1, 1]} : vector<4x50xf32> to vector<1x50xf32>
    %454 = vector.shape_cast %453 : vector<1x50xf32> to vector<50xf32>
    %455 = vector.shape_cast %454 : vector<50xf32> to vector<1x1x50xf32>
    %456 = vector.broadcast %455 : vector<1x1x50xf32> to vector<1x4x50xf32>
    %457 = arith.mulf %452, %456 : vector<1x4x50xf32>
    %458 = arith.addf %449, %457 : vector<1x4x50xf32>
    %cst_136 = arith.constant 0.000000e+00 : f32
    %459 = vector.broadcast %cst_136 : f32 to vector<1x2x50xf32>
    %460 = vector.extract_strided_slice %441 {offsets = [0, 0, 0], sizes = [1, 2, 50], strides = [1, 1, 1]} : vector<1x4x50xf32> to vector<1x2x50xf32>
    %461 = tpu.concatenate %459, %460 in 1 : vector<1x2x50xf32>, vector<1x2x50xf32> -> vector<1x4x50xf32>
    %462 = vector.extract_strided_slice %444 {offsets = [1, 0], sizes = [1, 50], strides = [1, 1]} : vector<4x50xf32> to vector<1x50xf32>
    %463 = vector.shape_cast %462 : vector<1x50xf32> to vector<50xf32>
    %464 = vector.shape_cast %463 : vector<50xf32> to vector<1x1x50xf32>
    %465 = vector.broadcast %464 : vector<1x1x50xf32> to vector<1x4x50xf32>
    %466 = arith.mulf %461, %465 : vector<1x4x50xf32>
    %467 = arith.addf %458, %466 : vector<1x4x50xf32>
    %cst_137 = arith.constant 0.000000e+00 : f32
    %468 = vector.broadcast %cst_137 : f32 to vector<1x1x50xf32>
    %469 = vector.extract_strided_slice %441 {offsets = [0, 0, 0], sizes = [1, 3, 50], strides = [1, 1, 1]} : vector<1x4x50xf32> to vector<1x3x50xf32>
    %470 = tpu.concatenate %468, %469 in 1 : vector<1x1x50xf32>, vector<1x3x50xf32> -> vector<1x4x50xf32>
    %471 = vector.extract_strided_slice %444 {offsets = [2, 0], sizes = [1, 50], strides = [1, 1]} : vector<4x50xf32> to vector<1x50xf32>
    %472 = vector.shape_cast %471 : vector<1x50xf32> to vector<50xf32>
    %473 = vector.shape_cast %472 : vector<50xf32> to vector<1x1x50xf32>
    %474 = vector.broadcast %473 : vector<1x1x50xf32> to vector<1x4x50xf32>
    %475 = arith.mulf %470, %474 : vector<1x4x50xf32>
    %476 = arith.addf %467, %475 : vector<1x4x50xf32>
    %c2_138 = arith.constant 2 : index
    %c0_139 = arith.constant 0 : index
    %c0_140 = arith.constant 0 : index
    %477 = vector.load %arg5[%c2_138, %c0_139, %c0_140] : memref<3x1x50xf32, #tpu.memory_space<vmem>>, vector<1x1x50xf32>
    %478 = vector.shape_cast %477 : vector<1x1x50xf32> to vector<1x50xf32>
    %479 = vector.shape_cast %478 : vector<1x50xf32> to vector<1x1x50xf32>
    %480 = vector.broadcast %479 : vector<1x1x50xf32> to vector<1x4x50xf32>
    %481 = arith.addf %476, %480 : vector<1x4x50xf32>
    %cst_141 = arith.constant 0.000000e+00 : f32
    %482 = vector.broadcast %cst_141 : f32 to vector<1x4x50xf32>
    %483 = arith.subf %482, %481 : vector<1x4x50xf32>
    %484 = math.exp %483 : vector<1x4x50xf32>
    %cst_142 = arith.constant 1.000000e+00 : f32
    %485 = vector.broadcast %cst_142 : f32 to vector<1x4x50xf32>
    %486 = arith.addf %485, %484 : vector<1x4x50xf32>
    %487 = tpu.reciprocal %486 {approx = true} : vector<1x4x50xf32> -> vector<1x4x50xf32>
    %488 = arith.mulf %481, %487 : vector<1x4x50xf32>
    %489 = vector.shape_cast %488 : vector<1x4x50xf32> to vector<4x50xf32>
    %490 = arith.truncf %489 : vector<4x50xf32> to vector<4x50xbf16>
    %c2_143 = arith.constant 2 : index
    %c0_144 = arith.constant 0 : index
    %c0_145 = arith.constant 0 : index
    %491 = vector.load %arg6[%c2_143, %c0_144, %c0_145] : memref<3x50x82xbf16, #tpu.memory_space<vmem>>, vector<1x50x82xbf16>
    %492 = vector.shape_cast %491 : vector<1x50x82xbf16> to vector<50x82xbf16>
    %cst_146 = arith.constant dense<0.000000e+00> : vector<4x82xf32>
    %493 = tpu.matmul %490, %492, %cst_146 {dimension_numbers = #tpu.dot_dimension_numbers<[1], [0], [0], [1], [0, 0, 1, 1], [], []>} : vector<4x50xbf16>, vector<50x82xbf16>, vector<4x82xf32> -> vector<4x82xf32>
    %494 = vector.extract_strided_slice %493 {offsets = [0, 0], sizes = [4, 50], strides = [1, 1]} : vector<4x82xf32> to vector<4x50xf32>
    %c2_147 = arith.constant 2 : index
    %c0_148 = arith.constant 0 : index
    %c0_149 = arith.constant 0 : index
    %495 = vector.load %arg7[%c2_147, %c0_148, %c0_149] : memref<3x1x50xf32, #tpu.memory_space<vmem>>, vector<1x1x50xf32>
    %496 = vector.shape_cast %495 : vector<1x1x50xf32> to vector<1x50xf32>
    %497 = vector.broadcast %496 : vector<1x50xf32> to vector<4x50xf32>
    %498 = arith.addf %494, %497 : vector<4x50xf32>
    %cst_150 = arith.constant 0.000000e+00 : f32
    %499 = vector.broadcast %cst_150 : f32 to vector<4x50xf32>
    %500 = arith.maximumf %498, %499 : vector<4x50xf32>
    %501 = math.absf %498 : vector<4x50xf32>
    %cst_151 = arith.constant 0.000000e+00 : f32
    %502 = vector.broadcast %cst_151 : f32 to vector<4x50xf32>
    %503 = arith.subf %502, %501 : vector<4x50xf32>
    %504 = math.exp %503 : vector<4x50xf32>
    %505 = math.log1p %504 : vector<4x50xf32>
    %506 = arith.addf %500, %505 : vector<4x50xf32>
    %507 = vector.shape_cast %506 : vector<4x50xf32> to vector<1x4x50xf32>
    %508 = vector.extract_strided_slice %493 {offsets = [0, 50], sizes = [4, 16], strides = [1, 1]} : vector<4x82xf32> to vector<4x16xf32>
    %509 = vector.shape_cast %508 : vector<4x16xf32> to vector<1x4x16xf32>
    %510 = vector.extract_strided_slice %493 {offsets = [0, 66], sizes = [4, 16], strides = [1, 1]} : vector<4x82xf32> to vector<4x16xf32>
    %511 = vector.shape_cast %510 : vector<4x16xf32> to vector<1x4x16xf32>
    %c2_152 = arith.constant 2 : index
    %c0_153 = arith.constant 0 : index
    %c0_154 = arith.constant 0 : index
    %512 = vector.load %arg8[%c2_152, %c0_153, %c0_154] : memref<3x16x50xf32, #tpu.memory_space<vmem>>, vector<1x16x50xf32>
    %513 = vector.shape_cast %512 : vector<1x16x50xf32> to vector<16x50xf32>
    %c2_155 = arith.constant 2 : index
    %c0_156 = arith.constant 0 : index
    %c0_157 = arith.constant 0 : index
    %514 = vector.load %arg9[%c2_155, %c0_156, %c0_157] : memref<3x1x50xf32, #tpu.memory_space<vmem>>, vector<1x1x50xf32>
    %515 = vector.shape_cast %514 : vector<1x1x50xf32> to vector<1x50xf32>
    %cst_158 = arith.constant 0.000000e+00 : f32
    %516 = vector.broadcast %cst_158 : f32 to vector<1x16x50xf32>
    %517 = vector.extract_strided_slice %507 {offsets = [0, 0, 0], sizes = [1, 1, 50], strides = [1, 1, 1]} : vector<1x4x50xf32> to vector<1x1x50xf32>
    %518 = vector.extract_strided_slice %488 {offsets = [0, 0, 0], sizes = [1, 1, 50], strides = [1, 1, 1]} : vector<1x4x50xf32> to vector<1x1x50xf32>
    %519 = vector.extract_strided_slice %509 {offsets = [0, 0, 0], sizes = [1, 1, 16], strides = [1, 1, 1]} : vector<1x4x16xf32> to vector<1x1x16xf32>
    %520 = vector.shape_cast %519 : vector<1x1x16xf32> to vector<1x16xf32>
    %521 = vector.shape_cast %520 : vector<1x16xf32> to vector<1x16x1xf32>
    %522 = vector.shape_cast %513 : vector<16x50xf32> to vector<1x16x50xf32>
    %523 = vector.broadcast %517 : vector<1x1x50xf32> to vector<1x16x50xf32>
    %524 = arith.mulf %523, %522 : vector<1x16x50xf32>
    %525 = math.exp %524 : vector<1x16x50xf32>
    %526 = arith.mulf %525, %516 : vector<1x16x50xf32>
    %527 = arith.mulf %517, %518 : vector<1x1x50xf32>
    %528 = vector.broadcast %521 : vector<1x16x1xf32> to vector<1x16x50xf32>
    %529 = vector.broadcast %527 : vector<1x1x50xf32> to vector<1x16x50xf32>
    %530 = arith.mulf %528, %529 : vector<1x16x50xf32>
    %531 = arith.addf %526, %530 : vector<1x16x50xf32>
    %532 = vector.extract_strided_slice %511 {offsets = [0, 0, 0], sizes = [1, 1, 16], strides = [1, 1, 1]} : vector<1x4x16xf32> to vector<1x1x16xf32>
    %cst_159 = arith.constant dense<0.000000e+00> : vector<1x1x50xf32>
    %533 = tpu.matmul %532, %531, %cst_159 {dimension_numbers = #tpu.dot_dimension_numbers<[2], [1], [1], [2], [0, 0, 0, 1, 1, 2], [0], [0]>} : vector<1x1x16xf32>, vector<1x16x50xf32>, vector<1x1x50xf32> -> vector<1x1x50xf32>
    %534 = vector.shape_cast %533 : vector<1x1x50xf32> to vector<1x50xf32>
    %535 = vector.extract_strided_slice %488 {offsets = [0, 0, 0], sizes = [1, 1, 50], strides = [1, 1, 1]} : vector<1x4x50xf32> to vector<1x1x50xf32>
    %536 = vector.shape_cast %535 : vector<1x1x50xf32> to vector<1x50xf32>
    %537 = arith.mulf %515, %536 : vector<1x50xf32>
    %538 = arith.addf %534, %537 : vector<1x50xf32>
    %c0_160 = arith.constant 0 : index
    %c0_161 = arith.constant 0 : index
    %c0_162 = arith.constant 0 : index
    %539 = vector.load %arg12[%c0_160, %c0_161, %c0_162] : memref<1x4x50xf32, #tpu.memory_space<vmem>>, vector<1x1x50xf32>
    %540 = vector.shape_cast %539 : vector<1x1x50xf32> to vector<1x50xf32>
    %541 = vector.shape_cast %538 : vector<1x50xf32> to vector<1x1x50xf32>
    tpu.vector_store %arg12[%c0_160, %c0_161, %c0_162], %541 {strides = array<i32>} : memref<1x4x50xf32, #tpu.memory_space<vmem>>, vector<1x1x50xf32>,
    %542 = vector.extract_strided_slice %507 {offsets = [0, 1, 0], sizes = [1, 1, 50], strides = [1, 1, 1]} : vector<1x4x50xf32> to vector<1x1x50xf32>
    %543 = vector.extract_strided_slice %488 {offsets = [0, 1, 0], sizes = [1, 1, 50], strides = [1, 1, 1]} : vector<1x4x50xf32> to vector<1x1x50xf32>
    %544 = vector.extract_strided_slice %509 {offsets = [0, 1, 0], sizes = [1, 1, 16], strides = [1, 1, 1]} : vector<1x4x16xf32> to vector<1x1x16xf32>
    %545 = vector.shape_cast %544 : vector<1x1x16xf32> to vector<1x16xf32>
    %546 = vector.shape_cast %545 : vector<1x16xf32> to vector<1x16x1xf32>
    %547 = vector.shape_cast %513 : vector<16x50xf32> to vector<1x16x50xf32>
    %548 = vector.broadcast %542 : vector<1x1x50xf32> to vector<1x16x50xf32>
    %549 = arith.mulf %548, %547 : vector<1x16x50xf32>
    %550 = math.exp %549 : vector<1x16x50xf32>
    %551 = arith.mulf %550, %531 : vector<1x16x50xf32>
    %552 = arith.mulf %542, %543 : vector<1x1x50xf32>
    %553 = vector.broadcast %546 : vector<1x16x1xf32> to vector<1x16x50xf32>
    %554 = vector.broadcast %552 : vector<1x1x50xf32> to vector<1x16x50xf32>
    %555 = arith.mulf %553, %554 : vector<1x16x50xf32>
    %556 = arith.addf %551, %555 : vector<1x16x50xf32>
    %557 = vector.extract_strided_slice %511 {offsets = [0, 1, 0], sizes = [1, 1, 16], strides = [1, 1, 1]} : vector<1x4x16xf32> to vector<1x1x16xf32>
    %cst_163 = arith.constant dense<0.000000e+00> : vector<1x1x50xf32>
    %558 = tpu.matmul %557, %556, %cst_163 {dimension_numbers = #tpu.dot_dimension_numbers<[2], [1], [1], [2], [0, 0, 0, 1, 1, 2], [0], [0]>} : vector<1x1x16xf32>, vector<1x16x50xf32>, vector<1x1x50xf32> -> vector<1x1x50xf32>
    %559 = vector.shape_cast %558 : vector<1x1x50xf32> to vector<1x50xf32>
    %560 = vector.extract_strided_slice %488 {offsets = [0, 1, 0], sizes = [1, 1, 50], strides = [1, 1, 1]} : vector<1x4x50xf32> to vector<1x1x50xf32>
    %561 = vector.shape_cast %560 : vector<1x1x50xf32> to vector<1x50xf32>
    %562 = arith.mulf %515, %561 : vector<1x50xf32>
    %563 = arith.addf %559, %562 : vector<1x50xf32>
    %c0_164 = arith.constant 0 : index
    %c1_165 = arith.constant 1 : index
    %c0_166 = arith.constant 0 : index
    %564 = vector.load %arg12[%c0_164, %c1_165, %c0_166] : memref<1x4x50xf32, #tpu.memory_space<vmem>>, vector<1x1x50xf32>
    %565 = vector.shape_cast %564 : vector<1x1x50xf32> to vector<1x50xf32>
    %566 = vector.shape_cast %563 : vector<1x50xf32> to vector<1x1x50xf32>
    tpu.vector_store %arg12[%c0_164, %c1_165, %c0_166], %566 {strides = array<i32>} : memref<1x4x50xf32, #tpu.memory_space<vmem>>, vector<1x1x50xf32>,
    %567 = vector.extract_strided_slice %507 {offsets = [0, 2, 0], sizes = [1, 1, 50], strides = [1, 1, 1]} : vector<1x4x50xf32> to vector<1x1x50xf32>
    %568 = vector.extract_strided_slice %488 {offsets = [0, 2, 0], sizes = [1, 1, 50], strides = [1, 1, 1]} : vector<1x4x50xf32> to vector<1x1x50xf32>
    %569 = vector.extract_strided_slice %509 {offsets = [0, 2, 0], sizes = [1, 1, 16], strides = [1, 1, 1]} : vector<1x4x16xf32> to vector<1x1x16xf32>
    %570 = vector.shape_cast %569 : vector<1x1x16xf32> to vector<1x16xf32>
    %571 = vector.shape_cast %570 : vector<1x16xf32> to vector<1x16x1xf32>
    %572 = vector.shape_cast %513 : vector<16x50xf32> to vector<1x16x50xf32>
    %573 = vector.broadcast %567 : vector<1x1x50xf32> to vector<1x16x50xf32>
    %574 = arith.mulf %573, %572 : vector<1x16x50xf32>
    %575 = math.exp %574 : vector<1x16x50xf32>
    %576 = arith.mulf %575, %556 : vector<1x16x50xf32>
    %577 = arith.mulf %567, %568 : vector<1x1x50xf32>
    %578 = vector.broadcast %571 : vector<1x16x1xf32> to vector<1x16x50xf32>
    %579 = vector.broadcast %577 : vector<1x1x50xf32> to vector<1x16x50xf32>
    %580 = arith.mulf %578, %579 : vector<1x16x50xf32>
    %581 = arith.addf %576, %580 : vector<1x16x50xf32>
    %582 = vector.extract_strided_slice %511 {offsets = [0, 2, 0], sizes = [1, 1, 16], strides = [1, 1, 1]} : vector<1x4x16xf32> to vector<1x1x16xf32>
    %cst_167 = arith.constant dense<0.000000e+00> : vector<1x1x50xf32>
    %583 = tpu.matmul %582, %581, %cst_167 {dimension_numbers = #tpu.dot_dimension_numbers<[2], [1], [1], [2], [0, 0, 0, 1, 1, 2], [0], [0]>} : vector<1x1x16xf32>, vector<1x16x50xf32>, vector<1x1x50xf32> -> vector<1x1x50xf32>
    %584 = vector.shape_cast %583 : vector<1x1x50xf32> to vector<1x50xf32>
    %585 = vector.extract_strided_slice %488 {offsets = [0, 2, 0], sizes = [1, 1, 50], strides = [1, 1, 1]} : vector<1x4x50xf32> to vector<1x1x50xf32>
    %586 = vector.shape_cast %585 : vector<1x1x50xf32> to vector<1x50xf32>
    %587 = arith.mulf %515, %586 : vector<1x50xf32>
    %588 = arith.addf %584, %587 : vector<1x50xf32>
    %c0_168 = arith.constant 0 : index
    %c2_169 = arith.constant 2 : index
    %c0_170 = arith.constant 0 : index
    %589 = vector.load %arg12[%c0_168, %c2_169, %c0_170] : memref<1x4x50xf32, #tpu.memory_space<vmem>>, vector<1x1x50xf32>
    %590 = vector.shape_cast %589 : vector<1x1x50xf32> to vector<1x50xf32>
    %591 = vector.shape_cast %588 : vector<1x50xf32> to vector<1x1x50xf32>
    tpu.vector_store %arg12[%c0_168, %c2_169, %c0_170], %591 {strides = array<i32>} : memref<1x4x50xf32, #tpu.memory_space<vmem>>, vector<1x1x50xf32>,
    %592 = vector.extract_strided_slice %507 {offsets = [0, 3, 0], sizes = [1, 1, 50], strides = [1, 1, 1]} : vector<1x4x50xf32> to vector<1x1x50xf32>
    %593 = vector.extract_strided_slice %488 {offsets = [0, 3, 0], sizes = [1, 1, 50], strides = [1, 1, 1]} : vector<1x4x50xf32> to vector<1x1x50xf32>
    %594 = vector.extract_strided_slice %509 {offsets = [0, 3, 0], sizes = [1, 1, 16], strides = [1, 1, 1]} : vector<1x4x16xf32> to vector<1x1x16xf32>
    %595 = vector.shape_cast %594 : vector<1x1x16xf32> to vector<1x16xf32>
    %596 = vector.shape_cast %595 : vector<1x16xf32> to vector<1x16x1xf32>
    %597 = vector.shape_cast %513 : vector<16x50xf32> to vector<1x16x50xf32>
    %598 = vector.broadcast %592 : vector<1x1x50xf32> to vector<1x16x50xf32>
    %599 = arith.mulf %598, %597 : vector<1x16x50xf32>
    %600 = math.exp %599 : vector<1x16x50xf32>
    %601 = arith.mulf %600, %581 : vector<1x16x50xf32>
    %602 = arith.mulf %592, %593 : vector<1x1x50xf32>
    %603 = vector.broadcast %596 : vector<1x16x1xf32> to vector<1x16x50xf32>
    %604 = vector.broadcast %602 : vector<1x1x50xf32> to vector<1x16x50xf32>
    %605 = arith.mulf %603, %604 : vector<1x16x50xf32>
    %606 = arith.addf %601, %605 : vector<1x16x50xf32>
    %607 = vector.extract_strided_slice %511 {offsets = [0, 3, 0], sizes = [1, 1, 16], strides = [1, 1, 1]} : vector<1x4x16xf32> to vector<1x1x16xf32>
    %cst_171 = arith.constant dense<0.000000e+00> : vector<1x1x50xf32>
    %608 = tpu.matmul %607, %606, %cst_171 {dimension_numbers = #tpu.dot_dimension_numbers<[2], [1], [1], [2], [0, 0, 0, 1, 1, 2], [0], [0]>} : vector<1x1x16xf32>, vector<1x16x50xf32>, vector<1x1x50xf32> -> vector<1x1x50xf32>
    %609 = vector.shape_cast %608 : vector<1x1x50xf32> to vector<1x50xf32>
    %610 = vector.extract_strided_slice %488 {offsets = [0, 3, 0], sizes = [1, 1, 50], strides = [1, 1, 1]} : vector<1x4x50xf32> to vector<1x1x50xf32>
    %611 = vector.shape_cast %610 : vector<1x1x50xf32> to vector<1x50xf32>
    %612 = arith.mulf %515, %611 : vector<1x50xf32>
    %613 = arith.addf %609, %612 : vector<1x50xf32>
    %c0_172 = arith.constant 0 : index
    %c3_173 = arith.constant 3 : index
    %c0_174 = arith.constant 0 : index
    %614 = vector.load %arg12[%c0_172, %c3_173, %c0_174] : memref<1x4x50xf32, #tpu.memory_space<vmem>>, vector<1x1x50xf32>
    %615 = vector.shape_cast %614 : vector<1x1x50xf32> to vector<1x50xf32>
    %616 = vector.shape_cast %613 : vector<1x50xf32> to vector<1x1x50xf32>
    tpu.vector_store %arg12[%c0_172, %c3_173, %c0_174], %616 {strides = array<i32>} : memref<1x4x50xf32, #tpu.memory_space<vmem>>, vector<1x1x50xf32>,
    %c0_175 = arith.constant 0 : index
    %c0_176 = arith.constant 0 : index
    %c0_177 = arith.constant 0 : index
    %617 = vector.load %arg12[%c0_175, %c0_176, %c0_177] : memref<1x4x50xf32, #tpu.memory_space<vmem>>, vector<1x4x50xf32>
    %618 = vector.shape_cast %617 : vector<1x4x50xf32> to vector<4x50xf32>
    %cst_178 = arith.constant 0.000000e+00 : f32
    %619 = vector.broadcast %cst_178 : f32 to vector<4x50xf32>
    %620 = arith.subf %619, %442 : vector<4x50xf32>
    %621 = math.exp %620 : vector<4x50xf32>
    %cst_179 = arith.constant 1.000000e+00 : f32
    %622 = vector.broadcast %cst_179 : f32 to vector<4x50xf32>
    %623 = arith.addf %622, %621 : vector<4x50xf32>
    %624 = tpu.reciprocal %623 {approx = true} : vector<4x50xf32> -> vector<4x50xf32>
    %625 = arith.mulf %442, %624 : vector<4x50xf32>
    %626 = arith.mulf %618, %625 : vector<4x50xf32>
    %627 = arith.truncf %626 : vector<4x50xf32> to vector<4x50xbf16>
    %c2_180 = arith.constant 2 : index
    %c0_181 = arith.constant 0 : index
    %c0_182 = arith.constant 0 : index
    %628 = vector.load %arg10[%c2_180, %c0_181, %c0_182] : memref<3x50x25xbf16, #tpu.memory_space<vmem>>, vector<1x50x25xbf16>
    %629 = vector.shape_cast %628 : vector<1x50x25xbf16> to vector<50x25xbf16>
    %cst_183 = arith.constant dense<0.000000e+00> : vector<4x25xf32>
    %630 = tpu.matmul %627, %629, %cst_183 {dimension_numbers = #tpu.dot_dimension_numbers<[1], [0], [0], [1], [0, 0, 1, 1], [], []>} : vector<4x50xbf16>, vector<50x25xbf16>, vector<4x25xf32> -> vector<4x25xf32>
    %631 = arith.addf %421, %630 : vector<4x25xf32>
    %632 = vector.shape_cast %631 : vector<4x25xf32> to vector<1x4x25xf32>
    %c0_184 = arith.constant 0 : index
    %c0_185 = arith.constant 0 : index
    %c0_186 = arith.constant 0 : index
    %633 = vector.load %arg11[%c0_184, %c0_185, %c0_186] : memref<1x4x25xf32, #tpu.memory_space<vmem>>, vector<1x4x25xf32>
    tpu.vector_store %arg11[%c0_184, %c0_185, %c0_186], %632 {strides = array<i32>} : memref<1x4x25xf32, #tpu.memory_space<vmem>>, vector<1x4x25xf32>,
    return
  }
  func.func @transform_0(%arg0: i32) -> (i32, i32, i32) {
    %c0_i32 = arith.constant 0 : i32
    %c0_i32_0 = arith.constant 0 : i32
    %c0_i32_1 = arith.constant 0 : i32
    return %arg0, %c0_i32, %c0_i32_0 : i32, i32, i32
  }
  func.func @transform_1(%arg0: i32) -> (i32, i32, i32) {
    %c0_i32 = arith.constant 0 : i32
    %c0_i32_0 = arith.constant 0 : i32
    %c0_i32_1 = arith.constant 0 : i32
    %c0_i32_2 = arith.constant 0 : i32
    return %c0_i32, %c0_i32_0, %c0_i32_1 : i32, i32, i32
  }
  func.func @transform_2(%arg0: i32) -> (i32, i32, i32) {
    %c0_i32 = arith.constant 0 : i32
    %c0_i32_0 = arith.constant 0 : i32
    %c0_i32_1 = arith.constant 0 : i32
    %c0_i32_2 = arith.constant 0 : i32
    return %c0_i32, %c0_i32_0, %c0_i32_1 : i32, i32, i32
  }
  func.func @transform_3(%arg0: i32) -> (i32, i32, i32) {
    %c0_i32 = arith.constant 0 : i32
    %c0_i32_0 = arith.constant 0 : i32
    %c0_i32_1 = arith.constant 0 : i32
    %c0_i32_2 = arith.constant 0 : i32
    return %c0_i32, %c0_i32_0, %c0_i32_1 : i32, i32, i32
  }
  func.func @transform_4(%arg0: i32) -> (i32, i32, i32) {
    %c0_i32 = arith.constant 0 : i32
    %c0_i32_0 = arith.constant 0 : i32
    %c0_i32_1 = arith.constant 0 : i32
    %c0_i32_2 = arith.constant 0 : i32
    return %c0_i32, %c0_i32_0, %c0_i32_1 : i32, i32, i32
  }
  func.func @transform_5(%arg0: i32) -> (i32, i32, i32) {
    %c0_i32 = arith.constant 0 : i32
    %c0_i32_0 = arith.constant 0 : i32
    %c0_i32_1 = arith.constant 0 : i32
    %c0_i32_2 = arith.constant 0 : i32
    return %c0_i32, %c0_i32_0, %c0_i32_1 : i32, i32, i32
  }
  func.func @transform_6(%arg0: i32) -> (i32, i32, i32) {
    %c0_i32 = arith.constant 0 : i32
    %c0_i32_0 = arith.constant 0 : i32
    %c0_i32_1 = arith.constant 0 : i32
    %c0_i32_2 = arith.constant 0 : i32
    return %c0_i32, %c0_i32_0, %c0_i32_1 : i32, i32, i32
  }
  func.func @transform_7(%arg0: i32) -> (i32, i32, i32) {
    %c0_i32 = arith.constant 0 : i32
    %c0_i32_0 = arith.constant 0 : i32
    %c0_i32_1 = arith.constant 0 : i32
    %c0_i32_2 = arith.constant 0 : i32
    return %c0_i32, %c0_i32_0, %c0_i32_1 : i32, i32, i32
  }
  func.func @transform_8(%arg0: i32) -> (i32, i32, i32) {
    %c0_i32 = arith.constant 0 : i32
    %c0_i32_0 = arith.constant 0 : i32
    %c0_i32_1 = arith.constant 0 : i32
    %c0_i32_2 = arith.constant 0 : i32
    return %c0_i32, %c0_i32_0, %c0_i32_1 : i32, i32, i32
  }
  func.func @transform_9(%arg0: i32) -> (i32, i32, i32) {
    %c0_i32 = arith.constant 0 : i32
    %c0_i32_0 = arith.constant 0 : i32
    %c0_i32_1 = arith.constant 0 : i32
    %c0_i32_2 = arith.constant 0 : i32
    return %c0_i32, %c0_i32_0, %c0_i32_1 : i32, i32, i32
  }
  func.func @transform_10(%arg0: i32) -> (i32, i32, i32) {
    %c0_i32 = arith.constant 0 : i32
    %c0_i32_0 = arith.constant 0 : i32
    %c0_i32_1 = arith.constant 0 : i32
    return %arg0, %c0_i32, %c0_i32_0 : i32, i32, i32
  }
}

module attributes {stable_mosaic.version = 11 : i64} {
  func.func @kernel(%arg0: i32, %arg1: memref<1x4x225xf32, #tpu.memory_space<vmem>>, %arg2: memref<8x36xbf16, #tpu.memory_space<vmem>>, %arg3: memref<8x1xf32, #tpu.memory_space<vmem>>, %arg4: memref<8x72xbf16, #tpu.memory_space<vmem>>, %arg5: memref<8x1xf32, #tpu.memory_space<vmem>>, %arg6: memref<4x72xbf16, #tpu.memory_space<vmem>>, %arg7: memref<4x1xf32, #tpu.memory_space<vmem>>, %arg8: memref<4x36xbf16, #tpu.memory_space<vmem>>, %arg9: memref<4x1xf32, #tpu.memory_space<vmem>>, %arg10: memref<9x225x25xbf16, #tpu.memory_space<vmem>>, %arg11: memref<1x4x25xf32, #tpu.memory_space<vmem>>) attributes {dimension_semantics = [#tpu.dimension_semantics<parallel>], iteration_bounds = array<i64: 2>, scalar_prefetch = 0 : i64, scratch_operands = 0 : i64, tpu.core_type = #tpu.core_type<tc>, window_params = [{transform_indices = @transform_0, window_bounds = array<i64: 1, 4, 225>}, {pipeline_mode = #tpu.pipeline_mode<synchronous>, transform_indices = @transform_1, window_bounds = array<i64: 8, 36>}, {pipeline_mode = #tpu.pipeline_mode<synchronous>, transform_indices = @transform_2, window_bounds = array<i64: 8, 1>}, {pipeline_mode = #tpu.pipeline_mode<synchronous>, transform_indices = @transform_3, window_bounds = array<i64: 8, 72>}, {pipeline_mode = #tpu.pipeline_mode<synchronous>, transform_indices = @transform_4, window_bounds = array<i64: 8, 1>}, {pipeline_mode = #tpu.pipeline_mode<synchronous>, transform_indices = @transform_5, window_bounds = array<i64: 4, 72>}, {pipeline_mode = #tpu.pipeline_mode<synchronous>, transform_indices = @transform_6, window_bounds = array<i64: 4, 1>}, {pipeline_mode = #tpu.pipeline_mode<synchronous>, transform_indices = @transform_7, window_bounds = array<i64: 4, 36>}, {pipeline_mode = #tpu.pipeline_mode<synchronous>, transform_indices = @transform_8, window_bounds = array<i64: 4, 1>}, {pipeline_mode = #tpu.pipeline_mode<synchronous>, transform_indices = @transform_9, window_bounds = array<i64: 9, 225, 25>}, {transform_indices = @transform_10, window_bounds = array<i64: 1, 4, 25>}]} {
    %0 = tpu.iota {dimensions = array<i32: 1>} : vector<1x225xi32>
    %c15_i32 = arith.constant 15 : i32
    %c0_i32 = arith.constant 0 : i32
    %1 = arith.cmpi eq, %c15_i32, %c0_i32 : i32
    %c1_i32 = arith.constant 1 : i32
    %2 = arith.select %1, %c1_i32, %c15_i32 : i32
    %3 = vector.broadcast %2 : i32 to vector<1x225xi32>
    %4 = arith.remsi %0, %3 : vector<1x225xi32>
    %c0_i32_0 = arith.constant 0 : i32
    %5 = vector.broadcast %c0_i32_0 : i32 to vector<1x225xi32>
    %6 = arith.cmpi ne, %4, %5 : vector<1x225xi32>
    %c0_i32_1 = arith.constant 0 : i32
    %7 = vector.broadcast %c0_i32_1 : i32 to vector<1x225xi32>
    %8 = arith.cmpi slt, %4, %7 : vector<1x225xi32>
    %c0_i32_2 = arith.constant 0 : i32
    %9 = arith.cmpi slt, %2, %c0_i32_2 : i32
    %10 = vector.broadcast %9 : i1 to vector<1x225xi1>
    %11 = vector.broadcast %10 : vector<1x225xi1> to vector<1x225xi1>
    %12 = arith.xori %8, %11 : vector<1x225xi1>
    %13 = arith.andi %12, %6 : vector<1x225xi1>
    %14 = vector.broadcast %2 : i32 to vector<1x225xi32>
    %15 = arith.addi %4, %14 : vector<1x225xi32>
    %16 = arith.select %13, %15, %4 : vector<1x225xi1>, vector<1x225xi32>
    %c0_i32_3 = arith.constant 0 : i32
    %17 = vector.broadcast %c0_i32_3 : i32 to vector<1x225xi32>
    %18 = arith.cmpi eq, %16, %17 : vector<1x225xi32>
    %c14_i32 = arith.constant 14 : i32
    %19 = vector.broadcast %c14_i32 : i32 to vector<1x225xi32>
    %20 = arith.cmpi eq, %16, %19 : vector<1x225xi32>
    %c0 = arith.constant 0 : index
    %c0_4 = arith.constant 0 : index
    %c0_5 = arith.constant 0 : index
    %21 = vector.load %arg1[%c0, %c0_4, %c0_5] : memref<1x4x225xf32, #tpu.memory_space<vmem>>, vector<1x4x225xf32>
    %22 = vector.shape_cast %21 : vector<1x4x225xf32> to vector<4x225xf32>
    %c0_6 = arith.constant 0 : index
    %c0_7 = arith.constant 0 : index
    %23 = vector.load %arg2[%c0_6, %c0_7] : memref<8x36xbf16, #tpu.memory_space<vmem>>, vector<8x36xbf16>
    %c0_8 = arith.constant 0 : index
    %c0_9 = arith.constant 0 : index
    %24 = vector.load %arg3[%c0_8, %c0_9] : memref<8x1xf32, #tpu.memory_space<vmem>>, vector<8x1xf32>
    %25 = vector.extract_strided_slice %22 {offsets = [0, 14], sizes = [4, 211], strides = [1, 1]} : vector<4x225xf32> to vector<4x211xf32>
    %26 = vector.extract_strided_slice %22 {offsets = [0, 0], sizes = [4, 14], strides = [1, 1]} : vector<4x225xf32> to vector<4x14xf32>
    %27 = tpu.concatenate %25, %26 in 1 : vector<4x211xf32>, vector<4x14xf32> -> vector<4x225xf32>
    %28 = vector.extract_strided_slice %22 {offsets = [0, 224], sizes = [4, 1], strides = [1, 1]} : vector<4x225xf32> to vector<4x1xf32>
    %29 = vector.extract_strided_slice %22 {offsets = [0, 0], sizes = [4, 224], strides = [1, 1]} : vector<4x225xf32> to vector<4x224xf32>
    %30 = tpu.concatenate %28, %29 in 1 : vector<4x1xf32>, vector<4x224xf32> -> vector<4x225xf32>
    %31 = vector.shape_cast %18 : vector<1x225xi1> to vector<1x225xi1>
    %32 = vector.broadcast %31 : vector<1x225xi1> to vector<4x225xi1>
    %33 = arith.select %32, %27, %30 : vector<4x225xi1>, vector<4x225xf32>
    %34 = vector.extract_strided_slice %22 {offsets = [0, 211], sizes = [4, 14], strides = [1, 1]} : vector<4x225xf32> to vector<4x14xf32>
    %35 = vector.extract_strided_slice %22 {offsets = [0, 0], sizes = [4, 211], strides = [1, 1]} : vector<4x225xf32> to vector<4x211xf32>
    %36 = tpu.concatenate %34, %35 in 1 : vector<4x14xf32>, vector<4x211xf32> -> vector<4x225xf32>
    %37 = vector.extract_strided_slice %22 {offsets = [0, 1], sizes = [4, 224], strides = [1, 1]} : vector<4x225xf32> to vector<4x224xf32>
    %38 = vector.extract_strided_slice %22 {offsets = [0, 0], sizes = [4, 1], strides = [1, 1]} : vector<4x225xf32> to vector<4x1xf32>
    %39 = tpu.concatenate %37, %38 in 1 : vector<4x224xf32>, vector<4x1xf32> -> vector<4x225xf32>
    %40 = vector.shape_cast %20 : vector<1x225xi1> to vector<1x225xi1>
    %41 = vector.broadcast %40 : vector<1x225xi1> to vector<4x225xi1>
    %42 = arith.select %41, %36, %39 : vector<4x225xi1>, vector<4x225xf32>
    %43 = vector.extract_strided_slice %33 {offsets = [0, 210], sizes = [4, 15], strides = [1, 1]} : vector<4x225xf32> to vector<4x15xf32>
    %44 = vector.extract_strided_slice %33 {offsets = [0, 0], sizes = [4, 210], strides = [1, 1]} : vector<4x225xf32> to vector<4x210xf32>
    %45 = tpu.concatenate %43, %44 in 1 : vector<4x15xf32>, vector<4x210xf32> -> vector<4x225xf32>
    %46 = vector.extract_strided_slice %22 {offsets = [0, 210], sizes = [4, 15], strides = [1, 1]} : vector<4x225xf32> to vector<4x15xf32>
    %47 = vector.extract_strided_slice %22 {offsets = [0, 0], sizes = [4, 210], strides = [1, 1]} : vector<4x225xf32> to vector<4x210xf32>
    %48 = tpu.concatenate %46, %47 in 1 : vector<4x15xf32>, vector<4x210xf32> -> vector<4x225xf32>
    %49 = vector.extract_strided_slice %42 {offsets = [0, 210], sizes = [4, 15], strides = [1, 1]} : vector<4x225xf32> to vector<4x15xf32>
    %50 = vector.extract_strided_slice %42 {offsets = [0, 0], sizes = [4, 210], strides = [1, 1]} : vector<4x225xf32> to vector<4x210xf32>
    %51 = tpu.concatenate %49, %50 in 1 : vector<4x15xf32>, vector<4x210xf32> -> vector<4x225xf32>
    %52 = vector.extract_strided_slice %33 {offsets = [0, 15], sizes = [4, 210], strides = [1, 1]} : vector<4x225xf32> to vector<4x210xf32>
    %53 = vector.extract_strided_slice %33 {offsets = [0, 0], sizes = [4, 15], strides = [1, 1]} : vector<4x225xf32> to vector<4x15xf32>
    %54 = tpu.concatenate %52, %53 in 1 : vector<4x210xf32>, vector<4x15xf32> -> vector<4x225xf32>
    %55 = vector.extract_strided_slice %22 {offsets = [0, 15], sizes = [4, 210], strides = [1, 1]} : vector<4x225xf32> to vector<4x210xf32>
    %56 = vector.extract_strided_slice %22 {offsets = [0, 0], sizes = [4, 15], strides = [1, 1]} : vector<4x225xf32> to vector<4x15xf32>
    %57 = tpu.concatenate %55, %56 in 1 : vector<4x210xf32>, vector<4x15xf32> -> vector<4x225xf32>
    %58 = vector.extract_strided_slice %42 {offsets = [0, 15], sizes = [4, 210], strides = [1, 1]} : vector<4x225xf32> to vector<4x210xf32>
    %59 = vector.extract_strided_slice %42 {offsets = [0, 0], sizes = [4, 15], strides = [1, 1]} : vector<4x225xf32> to vector<4x15xf32>
    %60 = tpu.concatenate %58, %59 in 1 : vector<4x210xf32>, vector<4x15xf32> -> vector<4x225xf32>
    %61 = tpu.concatenate %45, %48, %51, %33, %22, %42, %54, %57, %60 in 0 : vector<4x225xf32>, vector<4x225xf32>, vector<4x225xf32>, vector<4x225xf32>, vector<4x225xf32>, vector<4x225xf32>, vector<4x225xf32>, vector<4x225xf32>, vector<4x225xf32> -> vector<36x225xf32>
    %62 = arith.truncf %61 : vector<36x225xf32> to vector<36x225xbf16>
    %cst = arith.constant dense<0.000000e+00> : vector<8x225xf32>
    %63 = tpu.matmul %23, %62, %cst {dimension_numbers = #tpu.dot_dimension_numbers<[1], [0], [0], [1], [0, 0, 1, 1], [], []>} : vector<8x36xbf16>, vector<36x225xbf16>, vector<8x225xf32> -> vector<8x225xf32>
    %64 = vector.broadcast %24 : vector<8x1xf32> to vector<8x225xf32>
    %65 = arith.addf %63, %64 : vector<8x225xf32>
    %cst_10 = arith.constant 0.000000e+00 : f32
    %66 = vector.broadcast %cst_10 : f32 to vector<8x225xf32>
    %67 = arith.maximumf %65, %66 : vector<8x225xf32>
    %c0_11 = arith.constant 0 : index
    %c0_12 = arith.constant 0 : index
    %68 = vector.load %arg4[%c0_11, %c0_12] : memref<8x72xbf16, #tpu.memory_space<vmem>>, vector<8x72xbf16>
    %c0_13 = arith.constant 0 : index
    %c0_14 = arith.constant 0 : index
    %69 = vector.load %arg5[%c0_13, %c0_14] : memref<8x1xf32, #tpu.memory_space<vmem>>, vector<8x1xf32>
    %70 = vector.extract_strided_slice %67 {offsets = [0, 14], sizes = [8, 211], strides = [1, 1]} : vector<8x225xf32> to vector<8x211xf32>
    %71 = vector.extract_strided_slice %67 {offsets = [0, 0], sizes = [8, 14], strides = [1, 1]} : vector<8x225xf32> to vector<8x14xf32>
    %72 = tpu.concatenate %70, %71 in 1 : vector<8x211xf32>, vector<8x14xf32> -> vector<8x225xf32>
    %73 = vector.extract_strided_slice %67 {offsets = [0, 224], sizes = [8, 1], strides = [1, 1]} : vector<8x225xf32> to vector<8x1xf32>
    %74 = vector.extract_strided_slice %67 {offsets = [0, 0], sizes = [8, 224], strides = [1, 1]} : vector<8x225xf32> to vector<8x224xf32>
    %75 = tpu.concatenate %73, %74 in 1 : vector<8x1xf32>, vector<8x224xf32> -> vector<8x225xf32>
    %76 = vector.shape_cast %18 : vector<1x225xi1> to vector<1x225xi1>
    %77 = vector.broadcast %76 : vector<1x225xi1> to vector<8x225xi1>
    %78 = arith.select %77, %72, %75 : vector<8x225xi1>, vector<8x225xf32>
    %79 = vector.extract_strided_slice %67 {offsets = [0, 211], sizes = [8, 14], strides = [1, 1]} : vector<8x225xf32> to vector<8x14xf32>
    %80 = vector.extract_strided_slice %67 {offsets = [0, 0], sizes = [8, 211], strides = [1, 1]} : vector<8x225xf32> to vector<8x211xf32>
    %81 = tpu.concatenate %79, %80 in 1 : vector<8x14xf32>, vector<8x211xf32> -> vector<8x225xf32>
    %82 = vector.extract_strided_slice %67 {offsets = [0, 1], sizes = [8, 224], strides = [1, 1]} : vector<8x225xf32> to vector<8x224xf32>
    %83 = vector.extract_strided_slice %67 {offsets = [0, 0], sizes = [8, 1], strides = [1, 1]} : vector<8x225xf32> to vector<8x1xf32>
    %84 = tpu.concatenate %82, %83 in 1 : vector<8x224xf32>, vector<8x1xf32> -> vector<8x225xf32>
    %85 = vector.shape_cast %20 : vector<1x225xi1> to vector<1x225xi1>
    %86 = vector.broadcast %85 : vector<1x225xi1> to vector<8x225xi1>
    %87 = arith.select %86, %81, %84 : vector<8x225xi1>, vector<8x225xf32>
    %88 = vector.extract_strided_slice %78 {offsets = [0, 210], sizes = [8, 15], strides = [1, 1]} : vector<8x225xf32> to vector<8x15xf32>
    %89 = vector.extract_strided_slice %78 {offsets = [0, 0], sizes = [8, 210], strides = [1, 1]} : vector<8x225xf32> to vector<8x210xf32>
    %90 = tpu.concatenate %88, %89 in 1 : vector<8x15xf32>, vector<8x210xf32> -> vector<8x225xf32>
    %91 = vector.extract_strided_slice %67 {offsets = [0, 210], sizes = [8, 15], strides = [1, 1]} : vector<8x225xf32> to vector<8x15xf32>
    %92 = vector.extract_strided_slice %67 {offsets = [0, 0], sizes = [8, 210], strides = [1, 1]} : vector<8x225xf32> to vector<8x210xf32>
    %93 = tpu.concatenate %91, %92 in 1 : vector<8x15xf32>, vector<8x210xf32> -> vector<8x225xf32>
    %94 = vector.extract_strided_slice %87 {offsets = [0, 210], sizes = [8, 15], strides = [1, 1]} : vector<8x225xf32> to vector<8x15xf32>
    %95 = vector.extract_strided_slice %87 {offsets = [0, 0], sizes = [8, 210], strides = [1, 1]} : vector<8x225xf32> to vector<8x210xf32>
    %96 = tpu.concatenate %94, %95 in 1 : vector<8x15xf32>, vector<8x210xf32> -> vector<8x225xf32>
    %97 = vector.extract_strided_slice %78 {offsets = [0, 15], sizes = [8, 210], strides = [1, 1]} : vector<8x225xf32> to vector<8x210xf32>
    %98 = vector.extract_strided_slice %78 {offsets = [0, 0], sizes = [8, 15], strides = [1, 1]} : vector<8x225xf32> to vector<8x15xf32>
    %99 = tpu.concatenate %97, %98 in 1 : vector<8x210xf32>, vector<8x15xf32> -> vector<8x225xf32>
    %100 = vector.extract_strided_slice %67 {offsets = [0, 15], sizes = [8, 210], strides = [1, 1]} : vector<8x225xf32> to vector<8x210xf32>
    %101 = vector.extract_strided_slice %67 {offsets = [0, 0], sizes = [8, 15], strides = [1, 1]} : vector<8x225xf32> to vector<8x15xf32>
    %102 = tpu.concatenate %100, %101 in 1 : vector<8x210xf32>, vector<8x15xf32> -> vector<8x225xf32>
    %103 = vector.extract_strided_slice %87 {offsets = [0, 15], sizes = [8, 210], strides = [1, 1]} : vector<8x225xf32> to vector<8x210xf32>
    %104 = vector.extract_strided_slice %87 {offsets = [0, 0], sizes = [8, 15], strides = [1, 1]} : vector<8x225xf32> to vector<8x15xf32>
    %105 = tpu.concatenate %103, %104 in 1 : vector<8x210xf32>, vector<8x15xf32> -> vector<8x225xf32>
    %106 = tpu.concatenate %90, %93, %96, %78, %67, %87, %99, %102, %105 in 0 : vector<8x225xf32>, vector<8x225xf32>, vector<8x225xf32>, vector<8x225xf32>, vector<8x225xf32>, vector<8x225xf32>, vector<8x225xf32>, vector<8x225xf32>, vector<8x225xf32> -> vector<72x225xf32>
    %107 = arith.truncf %106 : vector<72x225xf32> to vector<72x225xbf16>
    %cst_15 = arith.constant dense<0.000000e+00> : vector<8x225xf32>
    %108 = tpu.matmul %68, %107, %cst_15 {dimension_numbers = #tpu.dot_dimension_numbers<[1], [0], [0], [1], [0, 0, 1, 1], [], []>} : vector<8x72xbf16>, vector<72x225xbf16>, vector<8x225xf32> -> vector<8x225xf32>
    %109 = vector.broadcast %69 : vector<8x1xf32> to vector<8x225xf32>
    %110 = arith.addf %108, %109 : vector<8x225xf32>
    %cst_16 = arith.constant 0.000000e+00 : f32
    %111 = vector.broadcast %cst_16 : f32 to vector<8x225xf32>
    %112 = arith.maximumf %110, %111 : vector<8x225xf32>
    %c0_17 = arith.constant 0 : index
    %c0_18 = arith.constant 0 : index
    %113 = vector.load %arg6[%c0_17, %c0_18] : memref<4x72xbf16, #tpu.memory_space<vmem>>, vector<4x72xbf16>
    %c0_19 = arith.constant 0 : index
    %c0_20 = arith.constant 0 : index
    %114 = vector.load %arg7[%c0_19, %c0_20] : memref<4x1xf32, #tpu.memory_space<vmem>>, vector<4x1xf32>
    %115 = vector.extract_strided_slice %112 {offsets = [0, 14], sizes = [8, 211], strides = [1, 1]} : vector<8x225xf32> to vector<8x211xf32>
    %116 = vector.extract_strided_slice %112 {offsets = [0, 0], sizes = [8, 14], strides = [1, 1]} : vector<8x225xf32> to vector<8x14xf32>
    %117 = tpu.concatenate %115, %116 in 1 : vector<8x211xf32>, vector<8x14xf32> -> vector<8x225xf32>
    %118 = vector.extract_strided_slice %112 {offsets = [0, 224], sizes = [8, 1], strides = [1, 1]} : vector<8x225xf32> to vector<8x1xf32>
    %119 = vector.extract_strided_slice %112 {offsets = [0, 0], sizes = [8, 224], strides = [1, 1]} : vector<8x225xf32> to vector<8x224xf32>
    %120 = tpu.concatenate %118, %119 in 1 : vector<8x1xf32>, vector<8x224xf32> -> vector<8x225xf32>
    %121 = vector.shape_cast %18 : vector<1x225xi1> to vector<1x225xi1>
    %122 = vector.broadcast %121 : vector<1x225xi1> to vector<8x225xi1>
    %123 = arith.select %122, %117, %120 : vector<8x225xi1>, vector<8x225xf32>
    %124 = vector.extract_strided_slice %112 {offsets = [0, 211], sizes = [8, 14], strides = [1, 1]} : vector<8x225xf32> to vector<8x14xf32>
    %125 = vector.extract_strided_slice %112 {offsets = [0, 0], sizes = [8, 211], strides = [1, 1]} : vector<8x225xf32> to vector<8x211xf32>
    %126 = tpu.concatenate %124, %125 in 1 : vector<8x14xf32>, vector<8x211xf32> -> vector<8x225xf32>
    %127 = vector.extract_strided_slice %112 {offsets = [0, 1], sizes = [8, 224], strides = [1, 1]} : vector<8x225xf32> to vector<8x224xf32>
    %128 = vector.extract_strided_slice %112 {offsets = [0, 0], sizes = [8, 1], strides = [1, 1]} : vector<8x225xf32> to vector<8x1xf32>
    %129 = tpu.concatenate %127, %128 in 1 : vector<8x224xf32>, vector<8x1xf32> -> vector<8x225xf32>
    %130 = vector.shape_cast %20 : vector<1x225xi1> to vector<1x225xi1>
    %131 = vector.broadcast %130 : vector<1x225xi1> to vector<8x225xi1>
    %132 = arith.select %131, %126, %129 : vector<8x225xi1>, vector<8x225xf32>
    %133 = vector.extract_strided_slice %123 {offsets = [0, 210], sizes = [8, 15], strides = [1, 1]} : vector<8x225xf32> to vector<8x15xf32>
    %134 = vector.extract_strided_slice %123 {offsets = [0, 0], sizes = [8, 210], strides = [1, 1]} : vector<8x225xf32> to vector<8x210xf32>
    %135 = tpu.concatenate %133, %134 in 1 : vector<8x15xf32>, vector<8x210xf32> -> vector<8x225xf32>
    %136 = vector.extract_strided_slice %112 {offsets = [0, 210], sizes = [8, 15], strides = [1, 1]} : vector<8x225xf32> to vector<8x15xf32>
    %137 = vector.extract_strided_slice %112 {offsets = [0, 0], sizes = [8, 210], strides = [1, 1]} : vector<8x225xf32> to vector<8x210xf32>
    %138 = tpu.concatenate %136, %137 in 1 : vector<8x15xf32>, vector<8x210xf32> -> vector<8x225xf32>
    %139 = vector.extract_strided_slice %132 {offsets = [0, 210], sizes = [8, 15], strides = [1, 1]} : vector<8x225xf32> to vector<8x15xf32>
    %140 = vector.extract_strided_slice %132 {offsets = [0, 0], sizes = [8, 210], strides = [1, 1]} : vector<8x225xf32> to vector<8x210xf32>
    %141 = tpu.concatenate %139, %140 in 1 : vector<8x15xf32>, vector<8x210xf32> -> vector<8x225xf32>
    %142 = vector.extract_strided_slice %123 {offsets = [0, 15], sizes = [8, 210], strides = [1, 1]} : vector<8x225xf32> to vector<8x210xf32>
    %143 = vector.extract_strided_slice %123 {offsets = [0, 0], sizes = [8, 15], strides = [1, 1]} : vector<8x225xf32> to vector<8x15xf32>
    %144 = tpu.concatenate %142, %143 in 1 : vector<8x210xf32>, vector<8x15xf32> -> vector<8x225xf32>
    %145 = vector.extract_strided_slice %112 {offsets = [0, 15], sizes = [8, 210], strides = [1, 1]} : vector<8x225xf32> to vector<8x210xf32>
    %146 = vector.extract_strided_slice %112 {offsets = [0, 0], sizes = [8, 15], strides = [1, 1]} : vector<8x225xf32> to vector<8x15xf32>
    %147 = tpu.concatenate %145, %146 in 1 : vector<8x210xf32>, vector<8x15xf32> -> vector<8x225xf32>
    %148 = vector.extract_strided_slice %132 {offsets = [0, 15], sizes = [8, 210], strides = [1, 1]} : vector<8x225xf32> to vector<8x210xf32>
    %149 = vector.extract_strided_slice %132 {offsets = [0, 0], sizes = [8, 15], strides = [1, 1]} : vector<8x225xf32> to vector<8x15xf32>
    %150 = tpu.concatenate %148, %149 in 1 : vector<8x210xf32>, vector<8x15xf32> -> vector<8x225xf32>
    %151 = tpu.concatenate %135, %138, %141, %123, %112, %132, %144, %147, %150 in 0 : vector<8x225xf32>, vector<8x225xf32>, vector<8x225xf32>, vector<8x225xf32>, vector<8x225xf32>, vector<8x225xf32>, vector<8x225xf32>, vector<8x225xf32>, vector<8x225xf32> -> vector<72x225xf32>
    %152 = arith.truncf %151 : vector<72x225xf32> to vector<72x225xbf16>
    %cst_21 = arith.constant dense<0.000000e+00> : vector<4x225xf32>
    %153 = tpu.matmul %113, %152, %cst_21 {dimension_numbers = #tpu.dot_dimension_numbers<[1], [0], [0], [1], [0, 0, 1, 1], [], []>} : vector<4x72xbf16>, vector<72x225xbf16>, vector<4x225xf32> -> vector<4x225xf32>
    %154 = vector.broadcast %114 : vector<4x1xf32> to vector<4x225xf32>
    %155 = arith.addf %153, %154 : vector<4x225xf32>
    %c0_22 = arith.constant 0 : index
    %c0_23 = arith.constant 0 : index
    %156 = vector.load %arg8[%c0_22, %c0_23] : memref<4x36xbf16, #tpu.memory_space<vmem>>, vector<4x36xbf16>
    %c0_24 = arith.constant 0 : index
    %c0_25 = arith.constant 0 : index
    %157 = vector.load %arg9[%c0_24, %c0_25] : memref<4x1xf32, #tpu.memory_space<vmem>>, vector<4x1xf32>
    %c0_26 = arith.constant 0 : index
    %c0_27 = arith.constant 0 : index
    %c0_28 = arith.constant 0 : index
    %158 = vector.load %arg10[%c0_26, %c0_27, %c0_28] : memref<9x225x25xbf16, #tpu.memory_space<vmem>>, vector<9x225x25xbf16>
    %159 = arith.truncf %155 : vector<4x225xf32> to vector<4x225xbf16>
    %160 = vector.extract_strided_slice %158 {offsets = [0, 0, 0], sizes = [1, 225, 25], strides = [1, 1, 1]} : vector<9x225x25xbf16> to vector<1x225x25xbf16>
    %161 = vector.shape_cast %160 : vector<1x225x25xbf16> to vector<225x25xbf16>
    %cst_29 = arith.constant dense<0.000000e+00> : vector<4x25xf32>
    %162 = tpu.matmul %159, %161, %cst_29 {dimension_numbers = #tpu.dot_dimension_numbers<[1], [0], [0], [1], [0, 0, 1, 1], [], []>} : vector<4x225xbf16>, vector<225x25xbf16>, vector<4x25xf32> -> vector<4x25xf32>
    %163 = vector.extract_strided_slice %158 {offsets = [1, 0, 0], sizes = [1, 225, 25], strides = [1, 1, 1]} : vector<9x225x25xbf16> to vector<1x225x25xbf16>
    %164 = vector.shape_cast %163 : vector<1x225x25xbf16> to vector<225x25xbf16>
    %cst_30 = arith.constant dense<0.000000e+00> : vector<4x25xf32>
    %165 = tpu.matmul %159, %164, %cst_30 {dimension_numbers = #tpu.dot_dimension_numbers<[1], [0], [0], [1], [0, 0, 1, 1], [], []>} : vector<4x225xbf16>, vector<225x25xbf16>, vector<4x25xf32> -> vector<4x25xf32>
    %166 = vector.extract_strided_slice %158 {offsets = [2, 0, 0], sizes = [1, 225, 25], strides = [1, 1, 1]} : vector<9x225x25xbf16> to vector<1x225x25xbf16>
    %167 = vector.shape_cast %166 : vector<1x225x25xbf16> to vector<225x25xbf16>
    %cst_31 = arith.constant dense<0.000000e+00> : vector<4x25xf32>
    %168 = tpu.matmul %159, %167, %cst_31 {dimension_numbers = #tpu.dot_dimension_numbers<[1], [0], [0], [1], [0, 0, 1, 1], [], []>} : vector<4x225xbf16>, vector<225x25xbf16>, vector<4x25xf32> -> vector<4x25xf32>
    %169 = vector.extract_strided_slice %158 {offsets = [3, 0, 0], sizes = [1, 225, 25], strides = [1, 1, 1]} : vector<9x225x25xbf16> to vector<1x225x25xbf16>
    %170 = vector.shape_cast %169 : vector<1x225x25xbf16> to vector<225x25xbf16>
    %cst_32 = arith.constant dense<0.000000e+00> : vector<4x25xf32>
    %171 = tpu.matmul %159, %170, %cst_32 {dimension_numbers = #tpu.dot_dimension_numbers<[1], [0], [0], [1], [0, 0, 1, 1], [], []>} : vector<4x225xbf16>, vector<225x25xbf16>, vector<4x25xf32> -> vector<4x25xf32>
    %172 = vector.extract_strided_slice %158 {offsets = [4, 0, 0], sizes = [1, 225, 25], strides = [1, 1, 1]} : vector<9x225x25xbf16> to vector<1x225x25xbf16>
    %173 = vector.shape_cast %172 : vector<1x225x25xbf16> to vector<225x25xbf16>
    %cst_33 = arith.constant dense<0.000000e+00> : vector<4x25xf32>
    %174 = tpu.matmul %159, %173, %cst_33 {dimension_numbers = #tpu.dot_dimension_numbers<[1], [0], [0], [1], [0, 0, 1, 1], [], []>} : vector<4x225xbf16>, vector<225x25xbf16>, vector<4x25xf32> -> vector<4x25xf32>
    %175 = vector.extract_strided_slice %158 {offsets = [5, 0, 0], sizes = [1, 225, 25], strides = [1, 1, 1]} : vector<9x225x25xbf16> to vector<1x225x25xbf16>
    %176 = vector.shape_cast %175 : vector<1x225x25xbf16> to vector<225x25xbf16>
    %cst_34 = arith.constant dense<0.000000e+00> : vector<4x25xf32>
    %177 = tpu.matmul %159, %176, %cst_34 {dimension_numbers = #tpu.dot_dimension_numbers<[1], [0], [0], [1], [0, 0, 1, 1], [], []>} : vector<4x225xbf16>, vector<225x25xbf16>, vector<4x25xf32> -> vector<4x25xf32>
    %178 = vector.extract_strided_slice %158 {offsets = [6, 0, 0], sizes = [1, 225, 25], strides = [1, 1, 1]} : vector<9x225x25xbf16> to vector<1x225x25xbf16>
    %179 = vector.shape_cast %178 : vector<1x225x25xbf16> to vector<225x25xbf16>
    %cst_35 = arith.constant dense<0.000000e+00> : vector<4x25xf32>
    %180 = tpu.matmul %159, %179, %cst_35 {dimension_numbers = #tpu.dot_dimension_numbers<[1], [0], [0], [1], [0, 0, 1, 1], [], []>} : vector<4x225xbf16>, vector<225x25xbf16>, vector<4x25xf32> -> vector<4x25xf32>
    %181 = vector.extract_strided_slice %158 {offsets = [7, 0, 0], sizes = [1, 225, 25], strides = [1, 1, 1]} : vector<9x225x25xbf16> to vector<1x225x25xbf16>
    %182 = vector.shape_cast %181 : vector<1x225x25xbf16> to vector<225x25xbf16>
    %cst_36 = arith.constant dense<0.000000e+00> : vector<4x25xf32>
    %183 = tpu.matmul %159, %182, %cst_36 {dimension_numbers = #tpu.dot_dimension_numbers<[1], [0], [0], [1], [0, 0, 1, 1], [], []>} : vector<4x225xbf16>, vector<225x25xbf16>, vector<4x25xf32> -> vector<4x25xf32>
    %184 = vector.extract_strided_slice %158 {offsets = [8, 0, 0], sizes = [1, 225, 25], strides = [1, 1, 1]} : vector<9x225x25xbf16> to vector<1x225x25xbf16>
    %185 = vector.shape_cast %184 : vector<1x225x25xbf16> to vector<225x25xbf16>
    %cst_37 = arith.constant dense<0.000000e+00> : vector<4x25xf32>
    %186 = tpu.matmul %159, %185, %cst_37 {dimension_numbers = #tpu.dot_dimension_numbers<[1], [0], [0], [1], [0, 0, 1, 1], [], []>} : vector<4x225xbf16>, vector<225x25xbf16>, vector<4x25xf32> -> vector<4x25xf32>
    %187 = tpu.concatenate %162, %165, %168, %171, %174, %177, %180, %183, %186 in 0 : vector<4x25xf32>, vector<4x25xf32>, vector<4x25xf32>, vector<4x25xf32>, vector<4x25xf32>, vector<4x25xf32>, vector<4x25xf32>, vector<4x25xf32>, vector<4x25xf32> -> vector<36x25xf32>
    %188 = arith.truncf %187 : vector<36x25xf32> to vector<36x25xbf16>
    %cst_38 = arith.constant dense<0.000000e+00> : vector<4x25xf32>
    %189 = tpu.matmul %156, %188, %cst_38 {dimension_numbers = #tpu.dot_dimension_numbers<[1], [0], [0], [1], [0, 0, 1, 1], [], []>} : vector<4x36xbf16>, vector<36x25xbf16>, vector<4x25xf32> -> vector<4x25xf32>
    %190 = vector.broadcast %157 : vector<4x1xf32> to vector<4x25xf32>
    %191 = arith.addf %189, %190 : vector<4x25xf32>
    %c0_39 = arith.constant 0 : index
    %c0_40 = arith.constant 0 : index
    %c0_41 = arith.constant 0 : index
    %192 = vector.load %arg11[%c0_39, %c0_40, %c0_41] : memref<1x4x25xf32, #tpu.memory_space<vmem>>, vector<1x4x25xf32>
    %193 = vector.shape_cast %192 : vector<1x4x25xf32> to vector<4x25xf32>
    %194 = vector.shape_cast %191 : vector<4x25xf32> to vector<1x4x25xf32>
    tpu.vector_store %arg11[%c0_39, %c0_40, %c0_41], %194 {strides = array<i32>} : memref<1x4x25xf32, #tpu.memory_space<vmem>>, vector<1x4x25xf32>,
    return
  }
  func.func @transform_0(%arg0: i32) -> (i32, i32, i32) {
    %c0_i32 = arith.constant 0 : i32
    %c0_i32_0 = arith.constant 0 : i32
    %c0_i32_1 = arith.constant 0 : i32
    return %arg0, %c0_i32, %c0_i32_0 : i32, i32, i32
  }
  func.func @transform_1(%arg0: i32) -> (i32, i32) {
    %c0_i32 = arith.constant 0 : i32
    %c0_i32_0 = arith.constant 0 : i32
    %c0_i32_1 = arith.constant 0 : i32
    return %c0_i32, %c0_i32_0 : i32, i32
  }
  func.func @transform_2(%arg0: i32) -> (i32, i32) {
    %c0_i32 = arith.constant 0 : i32
    %c0_i32_0 = arith.constant 0 : i32
    %c0_i32_1 = arith.constant 0 : i32
    return %c0_i32, %c0_i32_0 : i32, i32
  }
  func.func @transform_3(%arg0: i32) -> (i32, i32) {
    %c0_i32 = arith.constant 0 : i32
    %c0_i32_0 = arith.constant 0 : i32
    %c0_i32_1 = arith.constant 0 : i32
    return %c0_i32, %c0_i32_0 : i32, i32
  }
  func.func @transform_4(%arg0: i32) -> (i32, i32) {
    %c0_i32 = arith.constant 0 : i32
    %c0_i32_0 = arith.constant 0 : i32
    %c0_i32_1 = arith.constant 0 : i32
    return %c0_i32, %c0_i32_0 : i32, i32
  }
  func.func @transform_5(%arg0: i32) -> (i32, i32) {
    %c0_i32 = arith.constant 0 : i32
    %c0_i32_0 = arith.constant 0 : i32
    %c0_i32_1 = arith.constant 0 : i32
    return %c0_i32, %c0_i32_0 : i32, i32
  }
  func.func @transform_6(%arg0: i32) -> (i32, i32) {
    %c0_i32 = arith.constant 0 : i32
    %c0_i32_0 = arith.constant 0 : i32
    %c0_i32_1 = arith.constant 0 : i32
    return %c0_i32, %c0_i32_0 : i32, i32
  }
  func.func @transform_7(%arg0: i32) -> (i32, i32) {
    %c0_i32 = arith.constant 0 : i32
    %c0_i32_0 = arith.constant 0 : i32
    %c0_i32_1 = arith.constant 0 : i32
    return %c0_i32, %c0_i32_0 : i32, i32
  }
  func.func @transform_8(%arg0: i32) -> (i32, i32) {
    %c0_i32 = arith.constant 0 : i32
    %c0_i32_0 = arith.constant 0 : i32
    %c0_i32_1 = arith.constant 0 : i32
    return %c0_i32, %c0_i32_0 : i32, i32
  }
  func.func @transform_9(%arg0: i32) -> (i32, i32, i32) {
    %c0_i32 = arith.constant 0 : i32
    %c0_i32_0 = arith.constant 0 : i32
    %c0_i32_1 = arith.constant 0 : i32
    %c0_i32_2 = arith.constant 0 : i32
    return %c0_i32, %c0_i32_0, %c0_i32_1 : i32, i32, i32
  }
  func.func @transform_10(%arg0: i32) -> (i32, i32, i32) {
    %c0_i32 = arith.constant 0 : i32
    %c0_i32_0 = arith.constant 0 : i32
    %c0_i32_1 = arith.constant 0 : i32
    return %arg0, %c0_i32, %c0_i32_0 : i32, i32, i32
  }
}

module attributes {stable_mosaic.version = 11 : i64} {
  func.func @kernel(%arg0: i32, %arg1: memref<1x4x25xf32, #tpu.memory_space<vmem>>, %arg2: memref<8x36xbf16, #tpu.memory_space<vmem>>, %arg3: memref<8x1xf32, #tpu.memory_space<vmem>>, %arg4: memref<8x72xbf16, #tpu.memory_space<vmem>>, %arg5: memref<8x1xf32, #tpu.memory_space<vmem>>, %arg6: memref<3x72xbf16, #tpu.memory_space<vmem>>, %arg7: memref<3x1xf32, #tpu.memory_space<vmem>>, %arg8: memref<27x3xbf16, #tpu.memory_space<vmem>>, %arg9: memref<27x1xf32, #tpu.memory_space<vmem>>, %arg10: memref<1x27x25xf32, #tpu.memory_space<vmem>>) attributes {dimension_semantics = [#tpu.dimension_semantics<parallel>], iteration_bounds = array<i64: 2>, scalar_prefetch = 0 : i64, scratch_operands = 0 : i64, tpu.core_type = #tpu.core_type<tc>, window_params = [{transform_indices = @transform_0, window_bounds = array<i64: 1, 4, 25>}, {pipeline_mode = #tpu.pipeline_mode<synchronous>, transform_indices = @transform_1, window_bounds = array<i64: 8, 36>}, {pipeline_mode = #tpu.pipeline_mode<synchronous>, transform_indices = @transform_2, window_bounds = array<i64: 8, 1>}, {pipeline_mode = #tpu.pipeline_mode<synchronous>, transform_indices = @transform_3, window_bounds = array<i64: 8, 72>}, {pipeline_mode = #tpu.pipeline_mode<synchronous>, transform_indices = @transform_4, window_bounds = array<i64: 8, 1>}, {pipeline_mode = #tpu.pipeline_mode<synchronous>, transform_indices = @transform_5, window_bounds = array<i64: 3, 72>}, {pipeline_mode = #tpu.pipeline_mode<synchronous>, transform_indices = @transform_6, window_bounds = array<i64: 3, 1>}, {pipeline_mode = #tpu.pipeline_mode<synchronous>, transform_indices = @transform_7, window_bounds = array<i64: 27, 3>}, {pipeline_mode = #tpu.pipeline_mode<synchronous>, transform_indices = @transform_8, window_bounds = array<i64: 27, 1>}, {transform_indices = @transform_9, window_bounds = array<i64: 1, 27, 25>}]} {
    %0 = tpu.iota {dimensions = array<i32: 1>} : vector<1x25xi32>
    %c5_i32 = arith.constant 5 : i32
    %c0_i32 = arith.constant 0 : i32
    %1 = arith.cmpi eq, %c5_i32, %c0_i32 : i32
    %c1_i32 = arith.constant 1 : i32
    %2 = arith.select %1, %c1_i32, %c5_i32 : i32
    %3 = vector.broadcast %2 : i32 to vector<1x25xi32>
    %4 = arith.remsi %0, %3 : vector<1x25xi32>
    %c0_i32_0 = arith.constant 0 : i32
    %5 = vector.broadcast %c0_i32_0 : i32 to vector<1x25xi32>
    %6 = arith.cmpi ne, %4, %5 : vector<1x25xi32>
    %c0_i32_1 = arith.constant 0 : i32
    %7 = vector.broadcast %c0_i32_1 : i32 to vector<1x25xi32>
    %8 = arith.cmpi slt, %4, %7 : vector<1x25xi32>
    %c0_i32_2 = arith.constant 0 : i32
    %9 = arith.cmpi slt, %2, %c0_i32_2 : i32
    %10 = vector.broadcast %9 : i1 to vector<1x25xi1>
    %11 = vector.broadcast %10 : vector<1x25xi1> to vector<1x25xi1>
    %12 = arith.xori %8, %11 : vector<1x25xi1>
    %13 = arith.andi %12, %6 : vector<1x25xi1>
    %14 = vector.broadcast %2 : i32 to vector<1x25xi32>
    %15 = arith.addi %4, %14 : vector<1x25xi32>
    %16 = arith.select %13, %15, %4 : vector<1x25xi1>, vector<1x25xi32>
    %c0_i32_3 = arith.constant 0 : i32
    %17 = vector.broadcast %c0_i32_3 : i32 to vector<1x25xi32>
    %18 = arith.cmpi eq, %16, %17 : vector<1x25xi32>
    %c4_i32 = arith.constant 4 : i32
    %19 = vector.broadcast %c4_i32 : i32 to vector<1x25xi32>
    %20 = arith.cmpi eq, %16, %19 : vector<1x25xi32>
    %c0 = arith.constant 0 : index
    %c0_4 = arith.constant 0 : index
    %c0_5 = arith.constant 0 : index
    %21 = vector.load %arg1[%c0, %c0_4, %c0_5] : memref<1x4x25xf32, #tpu.memory_space<vmem>>, vector<1x4x25xf32>
    %22 = vector.shape_cast %21 : vector<1x4x25xf32> to vector<4x25xf32>
    %c0_6 = arith.constant 0 : index
    %c0_7 = arith.constant 0 : index
    %23 = vector.load %arg2[%c0_6, %c0_7] : memref<8x36xbf16, #tpu.memory_space<vmem>>, vector<8x36xbf16>
    %c0_8 = arith.constant 0 : index
    %c0_9 = arith.constant 0 : index
    %24 = vector.load %arg3[%c0_8, %c0_9] : memref<8x1xf32, #tpu.memory_space<vmem>>, vector<8x1xf32>
    %25 = vector.extract_strided_slice %22 {offsets = [0, 4], sizes = [4, 21], strides = [1, 1]} : vector<4x25xf32> to vector<4x21xf32>
    %26 = vector.extract_strided_slice %22 {offsets = [0, 0], sizes = [4, 4], strides = [1, 1]} : vector<4x25xf32> to vector<4x4xf32>
    %27 = tpu.concatenate %25, %26 in 1 : vector<4x21xf32>, vector<4x4xf32> -> vector<4x25xf32>
    %28 = vector.extract_strided_slice %22 {offsets = [0, 24], sizes = [4, 1], strides = [1, 1]} : vector<4x25xf32> to vector<4x1xf32>
    %29 = vector.extract_strided_slice %22 {offsets = [0, 0], sizes = [4, 24], strides = [1, 1]} : vector<4x25xf32> to vector<4x24xf32>
    %30 = tpu.concatenate %28, %29 in 1 : vector<4x1xf32>, vector<4x24xf32> -> vector<4x25xf32>
    %31 = vector.shape_cast %18 : vector<1x25xi1> to vector<1x25xi1>
    %32 = vector.broadcast %31 : vector<1x25xi1> to vector<4x25xi1>
    %33 = arith.select %32, %27, %30 : vector<4x25xi1>, vector<4x25xf32>
    %34 = vector.extract_strided_slice %22 {offsets = [0, 21], sizes = [4, 4], strides = [1, 1]} : vector<4x25xf32> to vector<4x4xf32>
    %35 = vector.extract_strided_slice %22 {offsets = [0, 0], sizes = [4, 21], strides = [1, 1]} : vector<4x25xf32> to vector<4x21xf32>
    %36 = tpu.concatenate %34, %35 in 1 : vector<4x4xf32>, vector<4x21xf32> -> vector<4x25xf32>
    %37 = vector.extract_strided_slice %22 {offsets = [0, 1], sizes = [4, 24], strides = [1, 1]} : vector<4x25xf32> to vector<4x24xf32>
    %38 = vector.extract_strided_slice %22 {offsets = [0, 0], sizes = [4, 1], strides = [1, 1]} : vector<4x25xf32> to vector<4x1xf32>
    %39 = tpu.concatenate %37, %38 in 1 : vector<4x24xf32>, vector<4x1xf32> -> vector<4x25xf32>
    %40 = vector.shape_cast %20 : vector<1x25xi1> to vector<1x25xi1>
    %41 = vector.broadcast %40 : vector<1x25xi1> to vector<4x25xi1>
    %42 = arith.select %41, %36, %39 : vector<4x25xi1>, vector<4x25xf32>
    %43 = vector.extract_strided_slice %33 {offsets = [0, 20], sizes = [4, 5], strides = [1, 1]} : vector<4x25xf32> to vector<4x5xf32>
    %44 = vector.extract_strided_slice %33 {offsets = [0, 0], sizes = [4, 20], strides = [1, 1]} : vector<4x25xf32> to vector<4x20xf32>
    %45 = tpu.concatenate %43, %44 in 1 : vector<4x5xf32>, vector<4x20xf32> -> vector<4x25xf32>
    %46 = vector.extract_strided_slice %22 {offsets = [0, 20], sizes = [4, 5], strides = [1, 1]} : vector<4x25xf32> to vector<4x5xf32>
    %47 = vector.extract_strided_slice %22 {offsets = [0, 0], sizes = [4, 20], strides = [1, 1]} : vector<4x25xf32> to vector<4x20xf32>
    %48 = tpu.concatenate %46, %47 in 1 : vector<4x5xf32>, vector<4x20xf32> -> vector<4x25xf32>
    %49 = vector.extract_strided_slice %42 {offsets = [0, 20], sizes = [4, 5], strides = [1, 1]} : vector<4x25xf32> to vector<4x5xf32>
    %50 = vector.extract_strided_slice %42 {offsets = [0, 0], sizes = [4, 20], strides = [1, 1]} : vector<4x25xf32> to vector<4x20xf32>
    %51 = tpu.concatenate %49, %50 in 1 : vector<4x5xf32>, vector<4x20xf32> -> vector<4x25xf32>
    %52 = vector.extract_strided_slice %33 {offsets = [0, 5], sizes = [4, 20], strides = [1, 1]} : vector<4x25xf32> to vector<4x20xf32>
    %53 = vector.extract_strided_slice %33 {offsets = [0, 0], sizes = [4, 5], strides = [1, 1]} : vector<4x25xf32> to vector<4x5xf32>
    %54 = tpu.concatenate %52, %53 in 1 : vector<4x20xf32>, vector<4x5xf32> -> vector<4x25xf32>
    %55 = vector.extract_strided_slice %22 {offsets = [0, 5], sizes = [4, 20], strides = [1, 1]} : vector<4x25xf32> to vector<4x20xf32>
    %56 = vector.extract_strided_slice %22 {offsets = [0, 0], sizes = [4, 5], strides = [1, 1]} : vector<4x25xf32> to vector<4x5xf32>
    %57 = tpu.concatenate %55, %56 in 1 : vector<4x20xf32>, vector<4x5xf32> -> vector<4x25xf32>
    %58 = vector.extract_strided_slice %42 {offsets = [0, 5], sizes = [4, 20], strides = [1, 1]} : vector<4x25xf32> to vector<4x20xf32>
    %59 = vector.extract_strided_slice %42 {offsets = [0, 0], sizes = [4, 5], strides = [1, 1]} : vector<4x25xf32> to vector<4x5xf32>
    %60 = tpu.concatenate %58, %59 in 1 : vector<4x20xf32>, vector<4x5xf32> -> vector<4x25xf32>
    %61 = tpu.concatenate %45, %48, %51, %33, %22, %42, %54, %57, %60 in 0 : vector<4x25xf32>, vector<4x25xf32>, vector<4x25xf32>, vector<4x25xf32>, vector<4x25xf32>, vector<4x25xf32>, vector<4x25xf32>, vector<4x25xf32>, vector<4x25xf32> -> vector<36x25xf32>
    %62 = arith.truncf %61 : vector<36x25xf32> to vector<36x25xbf16>
    %cst = arith.constant dense<0.000000e+00> : vector<8x25xf32>
    %63 = tpu.matmul %23, %62, %cst {dimension_numbers = #tpu.dot_dimension_numbers<[1], [0], [0], [1], [0, 0, 1, 1], [], []>} : vector<8x36xbf16>, vector<36x25xbf16>, vector<8x25xf32> -> vector<8x25xf32>
    %64 = vector.broadcast %24 : vector<8x1xf32> to vector<8x25xf32>
    %65 = arith.addf %63, %64 : vector<8x25xf32>
    %cst_10 = arith.constant 0.000000e+00 : f32
    %66 = vector.broadcast %cst_10 : f32 to vector<8x25xf32>
    %67 = arith.maximumf %65, %66 : vector<8x25xf32>
    %c0_11 = arith.constant 0 : index
    %c0_12 = arith.constant 0 : index
    %68 = vector.load %arg4[%c0_11, %c0_12] : memref<8x72xbf16, #tpu.memory_space<vmem>>, vector<8x72xbf16>
    %c0_13 = arith.constant 0 : index
    %c0_14 = arith.constant 0 : index
    %69 = vector.load %arg5[%c0_13, %c0_14] : memref<8x1xf32, #tpu.memory_space<vmem>>, vector<8x1xf32>
    %70 = vector.extract_strided_slice %67 {offsets = [0, 4], sizes = [8, 21], strides = [1, 1]} : vector<8x25xf32> to vector<8x21xf32>
    %71 = vector.extract_strided_slice %67 {offsets = [0, 0], sizes = [8, 4], strides = [1, 1]} : vector<8x25xf32> to vector<8x4xf32>
    %72 = tpu.concatenate %70, %71 in 1 : vector<8x21xf32>, vector<8x4xf32> -> vector<8x25xf32>
    %73 = vector.extract_strided_slice %67 {offsets = [0, 24], sizes = [8, 1], strides = [1, 1]} : vector<8x25xf32> to vector<8x1xf32>
    %74 = vector.extract_strided_slice %67 {offsets = [0, 0], sizes = [8, 24], strides = [1, 1]} : vector<8x25xf32> to vector<8x24xf32>
    %75 = tpu.concatenate %73, %74 in 1 : vector<8x1xf32>, vector<8x24xf32> -> vector<8x25xf32>
    %76 = vector.shape_cast %18 : vector<1x25xi1> to vector<1x25xi1>
    %77 = vector.broadcast %76 : vector<1x25xi1> to vector<8x25xi1>
    %78 = arith.select %77, %72, %75 : vector<8x25xi1>, vector<8x25xf32>
    %79 = vector.extract_strided_slice %67 {offsets = [0, 21], sizes = [8, 4], strides = [1, 1]} : vector<8x25xf32> to vector<8x4xf32>
    %80 = vector.extract_strided_slice %67 {offsets = [0, 0], sizes = [8, 21], strides = [1, 1]} : vector<8x25xf32> to vector<8x21xf32>
    %81 = tpu.concatenate %79, %80 in 1 : vector<8x4xf32>, vector<8x21xf32> -> vector<8x25xf32>
    %82 = vector.extract_strided_slice %67 {offsets = [0, 1], sizes = [8, 24], strides = [1, 1]} : vector<8x25xf32> to vector<8x24xf32>
    %83 = vector.extract_strided_slice %67 {offsets = [0, 0], sizes = [8, 1], strides = [1, 1]} : vector<8x25xf32> to vector<8x1xf32>
    %84 = tpu.concatenate %82, %83 in 1 : vector<8x24xf32>, vector<8x1xf32> -> vector<8x25xf32>
    %85 = vector.shape_cast %20 : vector<1x25xi1> to vector<1x25xi1>
    %86 = vector.broadcast %85 : vector<1x25xi1> to vector<8x25xi1>
    %87 = arith.select %86, %81, %84 : vector<8x25xi1>, vector<8x25xf32>
    %88 = vector.extract_strided_slice %78 {offsets = [0, 20], sizes = [8, 5], strides = [1, 1]} : vector<8x25xf32> to vector<8x5xf32>
    %89 = vector.extract_strided_slice %78 {offsets = [0, 0], sizes = [8, 20], strides = [1, 1]} : vector<8x25xf32> to vector<8x20xf32>
    %90 = tpu.concatenate %88, %89 in 1 : vector<8x5xf32>, vector<8x20xf32> -> vector<8x25xf32>
    %91 = vector.extract_strided_slice %67 {offsets = [0, 20], sizes = [8, 5], strides = [1, 1]} : vector<8x25xf32> to vector<8x5xf32>
    %92 = vector.extract_strided_slice %67 {offsets = [0, 0], sizes = [8, 20], strides = [1, 1]} : vector<8x25xf32> to vector<8x20xf32>
    %93 = tpu.concatenate %91, %92 in 1 : vector<8x5xf32>, vector<8x20xf32> -> vector<8x25xf32>
    %94 = vector.extract_strided_slice %87 {offsets = [0, 20], sizes = [8, 5], strides = [1, 1]} : vector<8x25xf32> to vector<8x5xf32>
    %95 = vector.extract_strided_slice %87 {offsets = [0, 0], sizes = [8, 20], strides = [1, 1]} : vector<8x25xf32> to vector<8x20xf32>
    %96 = tpu.concatenate %94, %95 in 1 : vector<8x5xf32>, vector<8x20xf32> -> vector<8x25xf32>
    %97 = vector.extract_strided_slice %78 {offsets = [0, 5], sizes = [8, 20], strides = [1, 1]} : vector<8x25xf32> to vector<8x20xf32>
    %98 = vector.extract_strided_slice %78 {offsets = [0, 0], sizes = [8, 5], strides = [1, 1]} : vector<8x25xf32> to vector<8x5xf32>
    %99 = tpu.concatenate %97, %98 in 1 : vector<8x20xf32>, vector<8x5xf32> -> vector<8x25xf32>
    %100 = vector.extract_strided_slice %67 {offsets = [0, 5], sizes = [8, 20], strides = [1, 1]} : vector<8x25xf32> to vector<8x20xf32>
    %101 = vector.extract_strided_slice %67 {offsets = [0, 0], sizes = [8, 5], strides = [1, 1]} : vector<8x25xf32> to vector<8x5xf32>
    %102 = tpu.concatenate %100, %101 in 1 : vector<8x20xf32>, vector<8x5xf32> -> vector<8x25xf32>
    %103 = vector.extract_strided_slice %87 {offsets = [0, 5], sizes = [8, 20], strides = [1, 1]} : vector<8x25xf32> to vector<8x20xf32>
    %104 = vector.extract_strided_slice %87 {offsets = [0, 0], sizes = [8, 5], strides = [1, 1]} : vector<8x25xf32> to vector<8x5xf32>
    %105 = tpu.concatenate %103, %104 in 1 : vector<8x20xf32>, vector<8x5xf32> -> vector<8x25xf32>
    %106 = tpu.concatenate %90, %93, %96, %78, %67, %87, %99, %102, %105 in 0 : vector<8x25xf32>, vector<8x25xf32>, vector<8x25xf32>, vector<8x25xf32>, vector<8x25xf32>, vector<8x25xf32>, vector<8x25xf32>, vector<8x25xf32>, vector<8x25xf32> -> vector<72x25xf32>
    %107 = arith.truncf %106 : vector<72x25xf32> to vector<72x25xbf16>
    %cst_15 = arith.constant dense<0.000000e+00> : vector<8x25xf32>
    %108 = tpu.matmul %68, %107, %cst_15 {dimension_numbers = #tpu.dot_dimension_numbers<[1], [0], [0], [1], [0, 0, 1, 1], [], []>} : vector<8x72xbf16>, vector<72x25xbf16>, vector<8x25xf32> -> vector<8x25xf32>
    %109 = vector.broadcast %69 : vector<8x1xf32> to vector<8x25xf32>
    %110 = arith.addf %108, %109 : vector<8x25xf32>
    %cst_16 = arith.constant 0.000000e+00 : f32
    %111 = vector.broadcast %cst_16 : f32 to vector<8x25xf32>
    %112 = arith.maximumf %110, %111 : vector<8x25xf32>
    %c0_17 = arith.constant 0 : index
    %c0_18 = arith.constant 0 : index
    %113 = vector.load %arg6[%c0_17, %c0_18] : memref<3x72xbf16, #tpu.memory_space<vmem>>, vector<3x72xbf16>
    %c0_19 = arith.constant 0 : index
    %c0_20 = arith.constant 0 : index
    %114 = vector.load %arg7[%c0_19, %c0_20] : memref<3x1xf32, #tpu.memory_space<vmem>>, vector<3x1xf32>
    %115 = vector.extract_strided_slice %112 {offsets = [0, 4], sizes = [8, 21], strides = [1, 1]} : vector<8x25xf32> to vector<8x21xf32>
    %116 = vector.extract_strided_slice %112 {offsets = [0, 0], sizes = [8, 4], strides = [1, 1]} : vector<8x25xf32> to vector<8x4xf32>
    %117 = tpu.concatenate %115, %116 in 1 : vector<8x21xf32>, vector<8x4xf32> -> vector<8x25xf32>
    %118 = vector.extract_strided_slice %112 {offsets = [0, 24], sizes = [8, 1], strides = [1, 1]} : vector<8x25xf32> to vector<8x1xf32>
    %119 = vector.extract_strided_slice %112 {offsets = [0, 0], sizes = [8, 24], strides = [1, 1]} : vector<8x25xf32> to vector<8x24xf32>
    %120 = tpu.concatenate %118, %119 in 1 : vector<8x1xf32>, vector<8x24xf32> -> vector<8x25xf32>
    %121 = vector.shape_cast %18 : vector<1x25xi1> to vector<1x25xi1>
    %122 = vector.broadcast %121 : vector<1x25xi1> to vector<8x25xi1>
    %123 = arith.select %122, %117, %120 : vector<8x25xi1>, vector<8x25xf32>
    %124 = vector.extract_strided_slice %112 {offsets = [0, 21], sizes = [8, 4], strides = [1, 1]} : vector<8x25xf32> to vector<8x4xf32>
    %125 = vector.extract_strided_slice %112 {offsets = [0, 0], sizes = [8, 21], strides = [1, 1]} : vector<8x25xf32> to vector<8x21xf32>
    %126 = tpu.concatenate %124, %125 in 1 : vector<8x4xf32>, vector<8x21xf32> -> vector<8x25xf32>
    %127 = vector.extract_strided_slice %112 {offsets = [0, 1], sizes = [8, 24], strides = [1, 1]} : vector<8x25xf32> to vector<8x24xf32>
    %128 = vector.extract_strided_slice %112 {offsets = [0, 0], sizes = [8, 1], strides = [1, 1]} : vector<8x25xf32> to vector<8x1xf32>
    %129 = tpu.concatenate %127, %128 in 1 : vector<8x24xf32>, vector<8x1xf32> -> vector<8x25xf32>
    %130 = vector.shape_cast %20 : vector<1x25xi1> to vector<1x25xi1>
    %131 = vector.broadcast %130 : vector<1x25xi1> to vector<8x25xi1>
    %132 = arith.select %131, %126, %129 : vector<8x25xi1>, vector<8x25xf32>
    %133 = vector.extract_strided_slice %123 {offsets = [0, 20], sizes = [8, 5], strides = [1, 1]} : vector<8x25xf32> to vector<8x5xf32>
    %134 = vector.extract_strided_slice %123 {offsets = [0, 0], sizes = [8, 20], strides = [1, 1]} : vector<8x25xf32> to vector<8x20xf32>
    %135 = tpu.concatenate %133, %134 in 1 : vector<8x5xf32>, vector<8x20xf32> -> vector<8x25xf32>
    %136 = vector.extract_strided_slice %112 {offsets = [0, 20], sizes = [8, 5], strides = [1, 1]} : vector<8x25xf32> to vector<8x5xf32>
    %137 = vector.extract_strided_slice %112 {offsets = [0, 0], sizes = [8, 20], strides = [1, 1]} : vector<8x25xf32> to vector<8x20xf32>
    %138 = tpu.concatenate %136, %137 in 1 : vector<8x5xf32>, vector<8x20xf32> -> vector<8x25xf32>
    %139 = vector.extract_strided_slice %132 {offsets = [0, 20], sizes = [8, 5], strides = [1, 1]} : vector<8x25xf32> to vector<8x5xf32>
    %140 = vector.extract_strided_slice %132 {offsets = [0, 0], sizes = [8, 20], strides = [1, 1]} : vector<8x25xf32> to vector<8x20xf32>
    %141 = tpu.concatenate %139, %140 in 1 : vector<8x5xf32>, vector<8x20xf32> -> vector<8x25xf32>
    %142 = vector.extract_strided_slice %123 {offsets = [0, 5], sizes = [8, 20], strides = [1, 1]} : vector<8x25xf32> to vector<8x20xf32>
    %143 = vector.extract_strided_slice %123 {offsets = [0, 0], sizes = [8, 5], strides = [1, 1]} : vector<8x25xf32> to vector<8x5xf32>
    %144 = tpu.concatenate %142, %143 in 1 : vector<8x20xf32>, vector<8x5xf32> -> vector<8x25xf32>
    %145 = vector.extract_strided_slice %112 {offsets = [0, 5], sizes = [8, 20], strides = [1, 1]} : vector<8x25xf32> to vector<8x20xf32>
    %146 = vector.extract_strided_slice %112 {offsets = [0, 0], sizes = [8, 5], strides = [1, 1]} : vector<8x25xf32> to vector<8x5xf32>
    %147 = tpu.concatenate %145, %146 in 1 : vector<8x20xf32>, vector<8x5xf32> -> vector<8x25xf32>
    %148 = vector.extract_strided_slice %132 {offsets = [0, 5], sizes = [8, 20], strides = [1, 1]} : vector<8x25xf32> to vector<8x20xf32>
    %149 = vector.extract_strided_slice %132 {offsets = [0, 0], sizes = [8, 5], strides = [1, 1]} : vector<8x25xf32> to vector<8x5xf32>
    %150 = tpu.concatenate %148, %149 in 1 : vector<8x20xf32>, vector<8x5xf32> -> vector<8x25xf32>
    %151 = tpu.concatenate %135, %138, %141, %123, %112, %132, %144, %147, %150 in 0 : vector<8x25xf32>, vector<8x25xf32>, vector<8x25xf32>, vector<8x25xf32>, vector<8x25xf32>, vector<8x25xf32>, vector<8x25xf32>, vector<8x25xf32>, vector<8x25xf32> -> vector<72x25xf32>
    %152 = arith.truncf %151 : vector<72x25xf32> to vector<72x25xbf16>
    %cst_21 = arith.constant dense<0.000000e+00> : vector<3x25xf32>
    %153 = tpu.matmul %113, %152, %cst_21 {dimension_numbers = #tpu.dot_dimension_numbers<[1], [0], [0], [1], [0, 0, 1, 1], [], []>} : vector<3x72xbf16>, vector<72x25xbf16>, vector<3x25xf32> -> vector<3x25xf32>
    %154 = vector.broadcast %114 : vector<3x1xf32> to vector<3x25xf32>
    %155 = arith.addf %153, %154 : vector<3x25xf32>
    %c0_22 = arith.constant 0 : index
    %c0_23 = arith.constant 0 : index
    %156 = vector.load %arg8[%c0_22, %c0_23] : memref<27x3xbf16, #tpu.memory_space<vmem>>, vector<27x3xbf16>
    %c0_24 = arith.constant 0 : index
    %c0_25 = arith.constant 0 : index
    %157 = vector.load %arg9[%c0_24, %c0_25] : memref<27x1xf32, #tpu.memory_space<vmem>>, vector<27x1xf32>
    %158 = arith.truncf %155 : vector<3x25xf32> to vector<3x25xbf16>
    %cst_26 = arith.constant dense<0.000000e+00> : vector<27x25xf32>
    %159 = tpu.matmul %156, %158, %cst_26 {dimension_numbers = #tpu.dot_dimension_numbers<[1], [0], [0], [1], [0, 0, 1, 1], [], []>} : vector<27x3xbf16>, vector<3x25xbf16>, vector<27x25xf32> -> vector<27x25xf32>
    %160 = vector.broadcast %157 : vector<27x1xf32> to vector<27x25xf32>
    %161 = arith.addf %159, %160 : vector<27x25xf32>
    %c0_27 = arith.constant 0 : index
    %c0_28 = arith.constant 0 : index
    %c0_29 = arith.constant 0 : index
    %162 = vector.load %arg10[%c0_27, %c0_28, %c0_29] : memref<1x27x25xf32, #tpu.memory_space<vmem>>, vector<1x27x25xf32>
    %163 = vector.shape_cast %162 : vector<1x27x25xf32> to vector<27x25xf32>
    %164 = vector.shape_cast %161 : vector<27x25xf32> to vector<1x27x25xf32>
    tpu.vector_store %arg10[%c0_27, %c0_28, %c0_29], %164 {strides = array<i32>} : memref<1x27x25xf32, #tpu.memory_space<vmem>>, vector<1x27x25xf32>,
    return
  }
  func.func @transform_0(%arg0: i32) -> (i32, i32, i32) {
    %c0_i32 = arith.constant 0 : i32
    %c0_i32_0 = arith.constant 0 : i32
    %c0_i32_1 = arith.constant 0 : i32
    return %arg0, %c0_i32, %c0_i32_0 : i32, i32, i32
  }
  func.func @transform_1(%arg0: i32) -> (i32, i32) {
    %c0_i32 = arith.constant 0 : i32
    %c0_i32_0 = arith.constant 0 : i32
    %c0_i32_1 = arith.constant 0 : i32
    return %c0_i32, %c0_i32_0 : i32, i32
  }
  func.func @transform_2(%arg0: i32) -> (i32, i32) {
    %c0_i32 = arith.constant 0 : i32
    %c0_i32_0 = arith.constant 0 : i32
    %c0_i32_1 = arith.constant 0 : i32
    return %c0_i32, %c0_i32_0 : i32, i32
  }
  func.func @transform_3(%arg0: i32) -> (i32, i32) {
    %c0_i32 = arith.constant 0 : i32
    %c0_i32_0 = arith.constant 0 : i32
    %c0_i32_1 = arith.constant 0 : i32
    return %c0_i32, %c0_i32_0 : i32, i32
  }
  func.func @transform_4(%arg0: i32) -> (i32, i32) {
    %c0_i32 = arith.constant 0 : i32
    %c0_i32_0 = arith.constant 0 : i32
    %c0_i32_1 = arith.constant 0 : i32
    return %c0_i32, %c0_i32_0 : i32, i32
  }
  func.func @transform_5(%arg0: i32) -> (i32, i32) {
    %c0_i32 = arith.constant 0 : i32
    %c0_i32_0 = arith.constant 0 : i32
    %c0_i32_1 = arith.constant 0 : i32
    return %c0_i32, %c0_i32_0 : i32, i32
  }
  func.func @transform_6(%arg0: i32) -> (i32, i32) {
    %c0_i32 = arith.constant 0 : i32
    %c0_i32_0 = arith.constant 0 : i32
    %c0_i32_1 = arith.constant 0 : i32
    return %c0_i32, %c0_i32_0 : i32, i32
  }
  func.func @transform_7(%arg0: i32) -> (i32, i32) {
    %c0_i32 = arith.constant 0 : i32
    %c0_i32_0 = arith.constant 0 : i32
    %c0_i32_1 = arith.constant 0 : i32
    return %c0_i32, %c0_i32_0 : i32, i32
  }
  func.func @transform_8(%arg0: i32) -> (i32, i32) {
    %c0_i32 = arith.constant 0 : i32
    %c0_i32_0 = arith.constant 0 : i32
    %c0_i32_1 = arith.constant 0 : i32
    return %c0_i32, %c0_i32_0 : i32, i32
  }
  func.func @transform_9(%arg0: i32) -> (i32, i32, i32) {
    %c0_i32 = arith.constant 0 : i32
    %c0_i32_0 = arith.constant 0 : i32
    %c0_i32_1 = arith.constant 0 : i32
    return %arg0, %c0_i32, %c0_i32_0 : i32, i32, i32
  }
}

</mosaic_0001>

<llo_original>
// kernel: tile.8
$region0: #{tile.8}
  #allocation0 [shape = 's32[1]{0}', space=sflag, size = 0x4, scoped, tag = 'scoped memory for tile.8']
  %s0 = inlined_call_operand.vmem [shape: f32[3], index: 0, kind: input, shape index: {}]
  %s1 = inlined_call_operand.vmem [shape: f32[9,3], index: 1, kind: output, shape index: {}]
  // Predicated region
  $region2: #{tile.8} parent=0 // pred_check
    _
  $region3: #{tile.8} parent=0 // pred_check_branch
    %3 = sbr.rel (0) target = $region5
  $region4: #{tile.8} parent=0 // pred_region
    _
  $region5: #{tile.8} parent=0 // pred_fallthru
    _
  %v4 = vld [vmem:[%s0] ss:$0 sm:$0xff]
  %5 = vst [vmem:[%s1] sm:$0xff] %v4
  %s6 = scalar_lea.vmem %s1, 8
  %7 = vst [vmem:[%s6] sm:$0xff] %v4

// kernel: tile.0
$region0: #{tile.0}
  %s0 = inlined_call_operand.vmem [shape: f32[9,3], index: 0, kind: input, shape index: {}]
  %s1 = inlined_call_operand.vmem [shape: f32[27,1], index: 1, kind: output, shape index: {}]
  %v2 = vld [vmem:[%s0] sm:$0xff]
  %vm3 = vcmask 7168
  %4 = vst.msk [vmem:[%s1] ss:$3 sm:$0xff] %vm3, %v2
  %s5 = scalar_lea.vmem %s0, 8
  %v6 = vld [vmem:[%s5] sm:$0x1]
  %vm7 = vcmask 7168
  %s8 = scalar_lea.vmem %s1, 24
  %9 = vst.msk [vmem:[%s8] sm:$0x1] %vm7, %v6
  %v10 = vld [vmem:[%s0] sm:$0xff]
  %11 = vrot.lane.b32.xlu0 %v10, 127
  %v12 = vpop.permute.xlu0 %11
  %vm13 = vcmask 7168
  %s14 = scalar_lea.vmem %s1, 1
  %15 = vst.msk [vmem:[%s14] ss:$3 sm:$0xff] %vm13, %v12
  %s16 = scalar_lea.vmem %s0, 8
  %v17 = vld [vmem:[%s16] sm:$0x1]
  %18 = vrot.lane.b32.xlu0 %v17, 127
  %v19 = vpop.permute.xlu0 %18
  %vm20 = vcmask 7168
  %s21 = scalar_lea.vmem %s1, 25
  %22 = vst.msk [vmem:[%s21] sm:$0x1] %vm20, %v19
  %v23 = vld [vmem:[%s0] sm:$0xff]
  %24 = vrot.lane.b32.xlu0 %v23, 126
  %v25 = vpop.permute.xlu0 %24
  %vm26 = vcmask 7168
  %s27 = scalar_lea.vmem %s1, 2
  %28 = vst.msk [vmem:[%s27] ss:$3 sm:$0xff] %vm26, %v25
  %s29 = scalar_lea.vmem %s0, 8
  %v30 = vld [vmem:[%s29] sm:$0x1]
  %31 = vrot.lane.b32.xlu0 %v30, 126
  %v32 = vpop.permute.xlu0 %31
  %vm33 = vcmask 7168
  %s34 = scalar_lea.vmem %s1, 26
  %35 = vst.msk [vmem:[%s34] sm:$0x1] %vm33, %v32

// kernel: squeeze.1
$region0: #{squeeze.1}
  %s0 = inlined_call_operand.vmem [shape: f32[2,4,15,15], index: 0, kind: input, shape index: {}]
  %s1 = inlined_call_operand.vmem [shape: f32[2,4,225], index: 1, kind: output, shape index: {}]
  $region1: #{squeeze.1} parent=0
    #allocation0 [shape = 'u8[16384]{0}', space=vmem, size = 0x4000, scoped, tag = 'scoped mem for output reshape']
    %s2 = smov 3
    %v3 = vld [vmem:[%s0] ss:$16 sm:%s2]
    %s4 = smov 12
    %v5 = vld [vmem:[%s0] ss:$16 sm:%s4]
    %vm6 = vcmask 1043458
    %v7 = vsel %vm6, %v5, %v3
    %s8 = smov 48
    %v9 = vld [vmem:[%s0] ss:$16 sm:%s8]
    %vm10 = vcmask 1045508
    %v11 = vsel %vm10, %v9, %v7
    %s12 = smov 192
    %v13 = vld [vmem:[%s0] ss:$16 sm:%s12]
    %vm14 = vcmask 1047558
    %v15 = vsel %vm14, %v13, %v11
    %vm16 = vcmask 121856
    %17 = vst.msk [vmem:[#allocation0] sm:$0xf] %vm16, %v15
    %s18 = scalar_lea.vmem [#allocation0], 12
    %19 = vst.msk [vmem:[%s18] sm:$0xf0] %vm16, %v15
    %s20 = scalar_lea.vmem %s0, 8
    %s21 = smov 3
    %v22 = vld [vmem:[%s20] ss:$16 sm:%s21]
    %s23 = scalar_lea.vmem %s0, 8
    %s24 = smov 12
    %v25 = vld [vmem:[%s23] ss:$16 sm:%s24]
    %vm26 = vcmask 1043458
    %v27 = vsel %vm26, %v25, %v22
    %s28 = scalar_lea.vmem %s0, 8
    %s29 = smov 48
    %v30 = vld [vmem:[%s28] ss:$16 sm:%s29]
    %vm31 = vcmask 1045508
    %v32 = vsel %vm31, %v30, %v27
    %s33 = scalar_lea.vmem %s0, 8
    %s34 = smov 192
    %v35 = vld [vmem:[%s33] ss:$16 sm:%s34]
    %vm36 = vcmask 1047558
    %v37 = vsel %vm36, %v35, %v32
    %s38 = scalar_lea.vmem %s0, 8
    %s39 = smov 3
    %v40 = vld [vmem:[%s38] ss:$16 sm:%s39]
    %s41 = scalar_lea.vmem %s0, 8
    %s42 = smov 12
    %v43 = vld [vmem:[%s41] ss:$16 sm:%s42]
    %vm44 = vcmask 1043458
    %v45 = vsel %vm44, %v43, %v40
    %s46 = scalar_lea.vmem %s0, 8
    %s47 = smov 48
    %v48 = vld [vmem:[%s46] ss:$16 sm:%s47]
    %vm49 = vcmask 1045508
    %v50 = vsel %vm49, %v48, %v45
    %s51 = scalar_lea.vmem %s0, 8
    %s52 = smov 192
    %v53 = vld [vmem:[%s51] ss:$16 sm:%s52]
    %vm54 = vcmask 1047558
    %v55 = vsel %vm54, %v53, %v50
    %vm56 = vcmask 64512
    %v57 = vsel %vm56, %v55, %v37
    %58 = vrot.lane.b32.xlu0 %v57, 120
    %v59 = vpop.permute.xlu0 %58
    %vm60 = vcmask 56320
    %s61 = scalar_lea.vmem [#allocation0], 8
    %62 = vst.msk [vmem:[%s61] sm:$0xf] %vm60, %v59
    %s63 = scalar_lea.vmem [#allocation0], 20
    %64 = vst.msk [vmem:[%s63] sm:$0xf0] %vm60, %v59
    %vm65 = vcmask 1048512
    %66 = vst.msk [vmem:[#allocation0] sm:$0xf] %vm65, %v59
    %s67 = scalar_lea.vmem [#allocation0], 12
    %68 = vst.msk [vmem:[%s67] sm:$0xf0] %vm65, %v59
    %s69 = scalar_lea.vmem %s0, 7
    %s70 = smov 3
    %v71 = vld [vmem:[%s69] ss:$16 sm:%s70]
    %s72 = scalar_lea.vmem %s0, 7
    %s73 = smov 12
    %v74 = vld [vmem:[%s72] ss:$16 sm:%s73]
    %vm75 = vcmask 1043458
    %v76 = vsel %vm75, %v74, %v71
    %s77 = scalar_lea.vmem %s0, 7
    %s78 = smov 48
    %v79 = vld [vmem:[%s77] ss:$16 sm:%s78]
    %vm80 = vcmask 1045508
    %v81 = vsel %vm80, %v79, %v76
    %s82 = scalar_lea.vmem %s0, 7
    %s83 = smov 192
    %v84 = vld [vmem:[%s82] ss:$16 sm:%s83]
    %vm85 = vcmask 1047558
    %v86 = vsel %vm85, %v84, %v81
    %87 = vrot.lane.b32.xlu0 %v86, 105
    %v88 = vpop.permute.xlu0 %87
    %vm89 = vcmask 982856
    %90 = vst.msk [vmem:[#allocation0] sm:$0xf] %vm89, %v88
    %s91 = scalar_lea.vmem [#allocation0], 12
    %92 = vst.msk [vmem:[%s91] sm:$0xf0] %vm89, %v88
    %s93 = scalar_lea.vmem %s0, 6
    %s94 = smov 3
    %v95 = vld [vmem:[%s93] ss:$16 sm:%s94]
    %s96 = scalar_lea.vmem %s0, 6
    %s97 = smov 12
    %v98 = vld [vmem:[%s96] ss:$16 sm:%s97]
    %vm99 = vcmask 1043458
    %v100 = vsel %vm99, %v98, %v95
    %s101 = scalar_lea.vmem %s0, 6
    %s102 = smov 48
    %v103 = vld [vmem:[%s101] ss:$16 sm:%s102]
    %vm104 = vcmask 1045508
    %v105 = vsel %vm104, %v103, %v100
    %s106 = scalar_lea.vmem %s0, 6
    %s107 = smov 192
    %v108 = vld [vmem:[%s106] ss:$16 sm:%s107]
    %vm109 = vcmask 1047558
    %v110 = vsel %vm109, %v108, %v105
    %111 = vrot.lane.b32.xlu0 %v110, 90
    %v112 = vpop.permute.xlu0 %111
    %vm113 = vcmask 859856
    %114 = vst.msk [vmem:[#allocation0] sm:$0xf] %vm113, %v112
    %s115 = scalar_lea.vmem [#allocation0], 12
    %116 = vst.msk [vmem:[%s115] sm:$0xf0] %vm113, %v112
    %s117 = scalar_lea.vmem %s0, 14
    %s118 = smov 3
    %v119 = vld [vmem:[%s117] ss:$16 sm:%s118]
    %s120 = scalar_lea.vmem %s0, 14
    %s121 = smov 12
    %v122 = vld [vmem:[%s120] ss:$16 sm:%s121]
    %vm123 = vcmask 1043458
    %v124 = vsel %vm123, %v122, %v119
    %s125 = scalar_lea.vmem %s0, 14
    %s126 = smov 48
    %v127 = vld [vmem:[%s125] ss:$16 sm:%s126]
    %vm128 = vcmask 1045508
    %v129 = vsel %vm128, %v127, %v124
    %s130 = scalar_lea.vmem %s0, 14
    %s131 = smov 192
    %v132 = vld [vmem:[%s130] ss:$16 sm:%s131]
    %vm133 = vcmask 1047558
    %v134 = vsel %vm133, %v132, %v129
    %135 = vrot.lane.b32.xlu0 %v134, 82
    %v136 = vpop.permute.xlu0 %135
    %vm137 = vcmask 794256
    %s138 = scalar_lea.vmem [#allocation0], 8
    %139 = vst.msk [vmem:[%s138] sm:$0xf] %vm137, %v136
    %s140 = scalar_lea.vmem [#allocation0], 20
    %141 = vst.msk [vmem:[%s140] sm:$0xf0] %vm137, %v136
    %s142 = scalar_lea.vmem %s0, 5
    %s143 = smov 3
    %v144 = vld [vmem:[%s142] ss:$16 sm:%s143]
    %s145 = scalar_lea.vmem %s0, 5
    %s146 = smov 12
    %v147 = vld [vmem:[%s145] ss:$16 sm:%s146]
    %vm148 = vcmask 1043458
    %v149 = vsel %vm148, %v147, %v144
    %s150 = scalar_lea.vmem %s0, 5
    %s151 = smov 48
    %v152 = vld [vmem:[%s150] ss:$16 sm:%s151]
    %vm153 = vcmask 1045508
    %v154 = vsel %vm153, %v152, %v149
    %s155 = scalar_lea.vmem %s0, 5
    %s156 = smov 192
    %v157 = vld [vmem:[%s155] ss:$16 sm:%s156]
    %vm158 = vcmask 1047558
    %v159 = vsel %vm158, %v157, %v154
    %160 = vrot.lane.b32.xlu0 %v159, 75
    %v161 = vpop.permute.xlu0 %160
    %vm162 = vcmask 736856
    %163 = vst.msk [vmem:[#allocation0] sm:$0xf] %vm162, %v161
    %s164 = scalar_lea.vmem [#allocation0], 12
    %165 = vst.msk [vmem:[%s164] sm:$0xf0] %vm162, %v161
    %s166 = scalar_lea.vmem %s0, 13
    %s167 = smov 3
    %v168 = vld [vmem:[%s166] ss:$16 sm:%s167]
    %s169 = scalar_lea.vmem %s0, 13
    %s170 = smov 12
    %v171 = vld [vmem:[%s169] ss:$16 sm:%s170]
    %vm172 = vcmask 1043458
    %v173 = vsel %vm172, %v171, %v168
    %s174 = scalar_lea.vmem %s0, 13
    %s175 = smov 48
    %v176 = vld [vmem:[%s174] ss:$16 sm:%s175]
    %vm177 = vcmask 1045508
    %v178 = vsel %vm177, %v176, %v173
    %s179 = scalar_lea.vmem %s0, 13
    %s180 = smov 192
    %v181 = vld [vmem:[%s179] ss:$16 sm:%s180]
    %vm182 = vcmask 1047558
    %v183 = vsel %vm182, %v181, %v178
    %184 = vrot.lane.b32.xlu0 %v183, 67
    %v185 = vpop.permute.xlu0 %184
    %vm186 = vcmask 671256
    %s187 = scalar_lea.vmem [#allocation0], 8
    %188 = vst.msk [vmem:[%s187] sm:$0xf] %vm186, %v185
    %s189 = scalar_lea.vmem [#allocation0], 20
    %190 = vst.msk [vmem:[%s189] sm:$0xf0] %vm186, %v185
    %s191 = scalar_lea.vmem %s0, 4
    %s192 = smov 3
    %v193 = vld [vmem:[%s191] ss:$16 sm:%s192]
    %s194 = scalar_lea.vmem %s0, 4
    %s195 = smov 12
    %v196 = vld [vmem:[%s194] ss:$16 sm:%s195]
    %vm197 = vcmask 1043458
    %v198 = vsel %vm197, %v196, %v193
    %s199 = scalar_lea.vmem %s0, 4
    %s200 = smov 48
    %v201 = vld [vmem:[%s199] ss:$16 sm:%s200]
    %vm202 = vcmask 1045508
    %v203 = vsel %vm202, %v201, %v198
    %s204 = scalar_lea.vmem %s0, 4
    %s205 = smov 192
    %v206 = vld [vmem:[%s204] ss:$16 sm:%s205]
    %vm207 = vcmask 1047558
    %v208 = vsel %vm207, %v206, %v203
    %209 = vrot.lane.b32.xlu0 %v208, 60
    %v210 = vpop.permute.xlu0 %209
    %vm211 = vcmask 613856
    %212 = vst.msk [vmem:[#allocation0] sm:$0xf] %vm211, %v210
    %s213 = scalar_lea.vmem [#allocation0], 12
    %214 = vst.msk [vmem:[%s213] sm:$0xf0] %vm211, %v210
    %s215 = scalar_lea.vmem %s0, 12
    %s216 = smov 3
    %v217 = vld [vmem:[%s215] ss:$16 sm:%s216]
    %s218 = scalar_lea.vmem %s0, 12
    %s219 = smov 12
    %v220 = vld [vmem:[%s218] ss:$16 sm:%s219]
    %vm221 = vcmask 1043458
    %v222 = vsel %vm221, %v220, %v217
    %s223 = scalar_lea.vmem %s0, 12
    %s224 = smov 48
    %v225 = vld [vmem:[%s223] ss:$16 sm:%s224]
    %vm226 = vcmask 1045508
    %v227 = vsel %vm226, %v225, %v222
    %s228 = scalar_lea.vmem %s0, 12
    %s229 = smov 192
    %v230 = vld [vmem:[%s228] ss:$16 sm:%s229]
    %vm231 = vcmask 1047558
    %v232 = vsel %vm231, %v230, %v227
    %233 = vrot.lane.b32.xlu0 %v232, 52
    %v234 = vpop.permute.xlu0 %233
    %vm235 = vcmask 548256
    %s236 = scalar_lea.vmem [#allocation0], 8
    %237 = vst.msk [vmem:[%s236] sm:$0xf] %vm235, %v234
    %s238 = scalar_lea.vmem [#allocation0], 20
    %239 = vst.msk [vmem:[%s238] sm:$0xf0] %vm235, %v234
    %s240 = scalar_lea.vmem %s0, 3
    %s241 = smov 3
    %v242 = vld [vmem:[%s240] ss:$16 sm:%s241]
    %s243 = scalar_lea.vmem %s0, 3
    %s244 = smov 12
    %v245 = vld [vmem:[%s243] ss:$16 sm:%s244]
    %vm246 = vcmask 1043458
    %v247 = vsel %vm246, %v245, %v242
    %s248 = scalar_lea.vmem %s0, 3
    %s249 = smov 48
    %v250 = vld [vmem:[%s248] ss:$16 sm:%s249]
    %vm251 = vcmask 1045508
    %v252 = vsel %vm251, %v250, %v247
    %s253 = scalar_lea.vmem %s0, 3
    %s254 = smov 192
    %v255 = vld [vmem:[%s253] ss:$16 sm:%s254]
    %vm256 = vcmask 1047558
    %v257 = vsel %vm256, %v255, %v252
    %258 = vrot.lane.b32.xlu0 %v257, 45
    %v259 = vpop.permute.xlu0 %258
    %vm260 = vcmask 490856
    %261 = vst.msk [vmem:[#allocation0] sm:$0xf] %vm260, %v259
    %s262 = scalar_lea.vmem [#allocation0], 12
    %263 = vst.msk [vmem:[%s262] sm:$0xf0] %vm260, %v259
    %s264 = scalar_lea.vmem %s0, 11
    %s265 = smov 3
    %v266 = vld [vmem:[%s264] ss:$16 sm:%s265]
    %s267 = scalar_lea.vmem %s0, 11
    %s268 = smov 12
    %v269 = vld [vmem:[%s267] ss:$16 sm:%s268]
    %vm270 = vcmask 1043458
    %v271 = vsel %vm270, %v269, %v266
    %s272 = scalar_lea.vmem %s0, 11
    %s273 = smov 48
    %v274 = vld [vmem:[%s272] ss:$16 sm:%s273]
    %vm275 = vcmask 1045508
    %v276 = vsel %vm275, %v274, %v271
    %s277 = scalar_lea.vmem %s0, 11
    %s278 = smov 192
    %v279 = vld [vmem:[%s277] ss:$16 sm:%s278]
    %vm280 = vcmask 1047558
    %v281 = vsel %vm280, %v279, %v276
    %282 = vrot.lane.b32.xlu0 %v281, 37
    %v283 = vpop.permute.xlu0 %282
    %vm284 = vcmask 425256
    %s285 = scalar_lea.vmem [#allocation0], 8
    %286 = vst.msk [vmem:[%s285] sm:$0xf] %vm284, %v283
    %s287 = scalar_lea.vmem [#allocation0], 20
    %288 = vst.msk [vmem:[%s287] sm:$0xf0] %vm284, %v283
    %s289 = scalar_lea.vmem %s0, 2
    %s290 = smov 3
    %v291 = vld [vmem:[%s289] ss:$16 sm:%s290]
    %s292 = scalar_lea.vmem %s0, 2
    %s293 = smov 12
    %v294 = vld [vmem:[%s292] ss:$16 sm:%s293]
    %vm295 = vcmask 1043458
    %v296 = vsel %vm295, %v294, %v291
    %s297 = scalar_lea.vmem %s0, 2
    %s298 = smov 48
    %v299 = vld [vmem:[%s297] ss:$16 sm:%s298]
    %vm300 = vcmask 1045508
    %v301 = vsel %vm300, %v299, %v296
    %s302 = scalar_lea.vmem %s0, 2
    %s303 = smov 192
    %v304 = vld [vmem:[%s302] ss:$16 sm:%s303]
    %vm305 = vcmask 1047558
    %v306 = vsel %vm305, %v304, %v301
    %307 = vrot.lane.b32.xlu0 %v306, 30
    %v308 = vpop.permute.xlu0 %307
    %vm309 = vcmask 367856
    %310 = vst.msk [vmem:[#allocation0] sm:$0xf] %vm309, %v308
    %s311 = scalar_lea.vmem [#allocation0], 12
    %312 = vst.msk [vmem:[%s311] sm:$0xf0] %vm309, %v308
    %s313 = scalar_lea.vmem %s0, 10
    %s314 = smov 3
    %v315 = vld [vmem:[%s313] ss:$16 sm:%s314]
    %s316 = scalar_lea.vmem %s0, 10
    %s317 = smov 12
    %v318 = vld [vmem:[%s316] ss:$16 sm:%s317]
    %vm319 = vcmask 1043458
    %v320 = vsel %vm319, %v318, %v315
    %s321 = scalar_lea.vmem %s0, 10
    %s322 = smov 48
    %v323 = vld [vmem:[%s321] ss:$16 sm:%s322]
    %vm324 = vcmask 1045508
    %v325 = vsel %vm324, %v323, %v320
    %s326 = scalar_lea.vmem %s0, 10
    %s327 = smov 192
    %v328 = vld [vmem:[%s326] ss:$16 sm:%s327]
    %vm329 = vcmask 1047558
    %v330 = vsel %vm329, %v328, %v325
    %331 = vrot.lane.b32.xlu0 %v330, 22
    %v332 = vpop.permute.xlu0 %331
    %vm333 = vcmask 302256
    %s334 = scalar_lea.vmem [#allocation0], 8
    %335 = vst.msk [vmem:[%s334] sm:$0xf] %vm333, %v332
    %s336 = scalar_lea.vmem [#allocation0], 20
    %337 = vst.msk [vmem:[%s336] sm:$0xf0] %vm333, %v332
    %s338 = scalar_lea.vmem %s0, 1
    %s339 = smov 3
    %v340 = vld [vmem:[%s338] ss:$16 sm:%s339]
    %s341 = scalar_lea.vmem %s0, 1
    %s342 = smov 12
    %v343 = vld [vmem:[%s341] ss:$16 sm:%s342]
    %vm344 = vcmask 1043458
    %v345 = vsel %vm344, %v343, %v340
    %s346 = scalar_lea.vmem %s0, 1
    %s347 = smov 48
    %v348 = vld [vmem:[%s346] ss:$16 sm:%s347]
    %vm349 = vcmask 1045508
    %v350 = vsel %vm349, %v348, %v345
    %s351 = scalar_lea.vmem %s0, 1
    %s352 = smov 192
    %v353 = vld [vmem:[%s351] ss:$16 sm:%s352]
    %vm354 = vcmask 1047558
    %v355 = vsel %vm354, %v353, %v350
    %356 = vrot.lane.b32.xlu0 %v355, 15
    %v357 = vpop.permute.xlu0 %356
    %vm358 = vcmask 244856
    %359 = vst.msk [vmem:[#allocation0] sm:$0xf] %vm358, %v357
    %s360 = scalar_lea.vmem [#allocation0], 12
    %361 = vst.msk [vmem:[%s360] sm:$0xf0] %vm358, %v357
    %s362 = scalar_lea.vmem %s0, 9
    %s363 = smov 3
    %v364 = vld [vmem:[%s362] ss:$16 sm:%s363]
    %s365 = scalar_lea.vmem %s0, 9
    %s366 = smov 12
    %v367 = vld [vmem:[%s365] ss:$16 sm:%s366]
    %vm368 = vcmask 1043458
    %v369 = vsel %vm368, %v367, %v364
    %s370 = scalar_lea.vmem %s0, 9
    %s371 = smov 48
    %v372 = vld [vmem:[%s370] ss:$16 sm:%s371]
    %vm373 = vcmask 1045508
    %v374 = vsel %vm373, %v372, %v369
    %s375 = scalar_lea.vmem %s0, 9
    %s376 = smov 192
    %v377 = vld [vmem:[%s375] ss:$16 sm:%s376]
    %vm378 = vcmask 1047558
    %v379 = vsel %vm378, %v377, %v374
    %380 = vrot.lane.b32.xlu0 %v379, 7
    %v381 = vpop.permute.xlu0 %380
    %vm382 = vcmask 179256
    %s383 = scalar_lea.vmem [#allocation0], 8
    %384 = vst.msk [vmem:[%s383] sm:$0xf] %vm382, %v381
    %s385 = scalar_lea.vmem [#allocation0], 20
    %386 = vst.msk [vmem:[%s385] sm:$0xf0] %vm382, %v381
    %s388 = ssub.s32 16, 1
    %v389 = vld [vmem:[#allocation0] sm:%s388]
    %s391 = ssub.s32 16, 1
    %392 = vst [vmem:[%s1] sm:%s391] %v389
    %s393 = scalar_lea.vmem [#allocation0], 8
    %v394 = vld [vmem:[%s393] sm:%s388]
    %s396 = ssub.s32 16, 1
    %s397 = scalar_lea.vmem %s1, 4
    %398 = vst [vmem:[%s397] sm:%s396] %v394
    %s399 = scalar_lea.vmem [#allocation0], 16
    %v400 = vld [vmem:[%s399] sm:%s388]
    %s402 = ssub.s32 16, 1
    %s403 = scalar_lea.vmem %s1, 8
    %404 = vst [vmem:[%s403] sm:%s402] %v400
    %s405 = scalar_lea.vmem [#allocation0], 24
    %v406 = vld [vmem:[%s405] sm:%s388]
    %s408 = ssub.s32 16, 1
    %s409 = scalar_lea.vmem %s1, 12
    %410 = vst [vmem:[%s409] sm:%s408] %v406

// kernel: mamba_cnn_mol_forward.5
$region0: #{mamba_cnn_mol_forward.5}
  #allocation0 [shape = 'u32[]', space=smem, size = 0x4, offset = 0x4, fixed_abs, tag = 'smem constant byte address 0x4 - core index']
  #allocation1 [shape = 'u32[72,128]{1,0:T(1,128)}', space=vmem, size = 0x9000, scoped, tag = 'internal scratch']
  %s0 = inlined_call_operand.vmem [shape: f32[2,4,25], index: 0, kind: input, shape index: {}]
  %s1 = inlined_call_operand.vmem [shape: bf16[8,36], index: 1, kind: input, shape index: {}]
  %s2 = inlined_call_operand.vmem [shape: f32[8,1], index: 2, kind: input, shape index: {}]
  %s3 = inlined_call_operand.vmem [shape: bf16[8,72], index: 3, kind: input, shape index: {}]
  %s4 = inlined_call_operand.vmem [shape: f32[8,1], index: 4, kind: input, shape index: {}]
  %s5 = inlined_call_operand.vmem [shape: bf16[3,72], index: 5, kind: input, shape index: {}]
  %s6 = inlined_call_operand.vmem [shape: f32[3,1], index: 6, kind: input, shape index: {}]
  %s7 = inlined_call_operand.vmem [shape: bf16[27,3], index: 7, kind: input, shape index: {}]
  %s8 = inlined_call_operand.vmem [shape: f32[27,1], index: 8, kind: input, shape index: {}]
  %s9 = inlined_call_operand.vmem [shape: f32[2,27,25], index: 9, kind: output, shape index: {}]
  %s10 = sld [smem:[#allocation0]]
  $region69: #{mamba_cnn_mol_forward.5} parent=0
    _
  %s12 = ssub.s32 1, %s10
  %s13 = scalar_select 0, %s12, %s10
  loop: start=0, step=1, limit=4
  $region2: #{mamba_cnn_mol_forward.5} parent=0 // loop_pre_header
    _
  $region3: #{mamba_cnn_mol_forward.5} parent=0 // loop_header
    %s15 = sphi 0, %s19
    %p16 = scmp.ge.s32.totalorder %s15, 4
    %s25 = sphi 0, %s27
    %s28 = sphi 0, %s25
    %s29 = sphi 0, %s28
    %s45 = sphi 0, %s29
    %s49 = sphi 0, %s49
    %s51 = sphi 0, %s49
    %s52 = sphi 0, %s51
    %s66 = sphi 0, %s52
    %s70 = sphi 0, %s70
    %s72 = sphi 0, %s70
    %s73 = sphi 0, %s72
    %s87 = sphi 0, %s73
    %s91 = sphi 0, %s91
    %s93 = sphi 0, %s91
    %s94 = sphi 0, %s93
    %s108 = sphi 0, %s94
    %s112 = sphi 0, %s112
    %s114 = sphi 0, %s112
    %s115 = sphi 0, %s114
    %s129 = sphi 0, %s115
    %s133 = sphi 0, %s133
    %s135 = sphi 0, %s133
    %s136 = sphi 0, %s135
    %s150 = sphi 0, %s136
    %s154 = sphi 0, %s154
    %s156 = sphi 0, %s154
    %s157 = sphi 0, %s156
    %s171 = sphi 0, %s157
    %s175 = sphi 0, %s175
    %s177 = sphi 0, %s175
    %s178 = sphi 0, %s177
    %s192 = sphi 0, %s178
    %s196 = sphi 0, %s196
    %s198 = sphi 0, %s196
    %s199 = sphi 0, %s198
    %s213 = sphi 0, %s199
    %s219 = sphi 0, %s221
    %s222 = sphi 0, %s219
    %s223 = sphi 0, %s222
    %s239 = sphi 0, %s223
  $region4: #{mamba_cnn_mol_forward.5} parent=0 // loop_header_branch
    %18 = sbr.rel (%p16) target = $region8
  $region5: #{mamba_cnn_mol_forward.5} parent=0 // loop_body
    %s20 = ssub.s32 %s15, 1
    %s21 = ssub.s32 %s15, 2
    %s22 = sadd.s32 %s15, 1
    %s23 = ssub.s32 %s15, %s22
    %p24 = scmp.eq.s32.totalorder %s23, 0
    %s26 = sadd.s32 %s25, 1
    %s27 = scalar_select %p24, %s25, %s26
    %p30 = pneg %p24
    %p31 = scmp.eq.s32.totalorder %s15, 1
    %p32 = por %p30, %p31
    %p33 = scmp.ne.s32.totalorder %s25, %s28
    %p34 = scmp.eq.s32.totalorder %s15, 0
    %p35 = por %p33, %p34
    %p36 = scmp.ne.s32.totalorder %s25, %s28
    %p37 = scmp.eq.s32.totalorder %s20, 1
    %p38 = por %p36, %p37
    %p39 = scmp.ne.s32.totalorder %s28, %s29
    %p40 = scmp.eq.s32.totalorder %s20, 0
    %p41 = por %p39, %p40
    %p42 = scmp.ne.s32.totalorder %s28, %s29
    %p43 = scmp.eq.s32.totalorder %s21, 1
    %p44 = por %p42, %p43
    %p46 = scmp.ne.s32.totalorder %s29, %s45
    %p47 = scmp.eq.s32.totalorder %s21, 0
    %p48 = por %p46, %p47
    %s50 = sadd.s32 %s49, 1
    %p53 = scmp.eq.s32.totalorder %s15, 1
    %p54 = scmp.ne.s32.totalorder %s49, %s51
    %p55 = scmp.eq.s32.totalorder %s15, 0
    %p56 = por %p54, %p55
    %p57 = scmp.ne.s32.totalorder %s49, %s51
    %p58 = scmp.eq.s32.totalorder %s20, 1
    %p59 = por %p57, %p58
    %p60 = scmp.ne.s32.totalorder %s51, %s52
    %p61 = scmp.eq.s32.totalorder %s20, 0
    %p62 = por %p60, %p61
    %p63 = scmp.ne.s32.totalorder %s51, %s52
    %p64 = scmp.eq.s32.totalorder %s21, 1
    %p65 = por %p63, %p64
    %p67 = scmp.ne.s32.totalorder %s52, %s66
    %p68 = scmp.eq.s32.totalorder %s21, 0
    %p69 = por %p67, %p68
    %s71 = sadd.s32 %s70, 1
    %p74 = scmp.eq.s32.totalorder %s15, 1
    %p75 = scmp.ne.s32.totalorder %s70, %s72
    %p76 = scmp.eq.s32.totalorder %s15, 0
    %p77 = por %p75, %p76
    %p78 = scmp.ne.s32.totalorder %s70, %s72
    %p79 = scmp.eq.s32.totalorder %s20, 1
    %p80 = por %p78, %p79
    %p81 = scmp.ne.s32.totalorder %s72, %s73
    %p82 = scmp.eq.s32.totalorder %s20, 0
    %p83 = por %p81, %p82
    %p84 = scmp.ne.s32.totalorder %s72, %s73
    %p85 = scmp.eq.s32.totalorder %s21, 1
    %p86 = por %p84, %p85
    %p88 = scmp.ne.s32.totalorder %s73, %s87
    %p89 = scmp.eq.s32.totalorder %s21, 0
    %p90 = por %p88, %p89
    %s92 = sadd.s32 %s91, 1
    %p95 = scmp.eq.s32.totalorder %s15, 1
    %p96 = scmp.ne.s32.totalorder %s91, %s93
    %p97 = scmp.eq.s32.totalorder %s15, 0
    %p98 = por %p96, %p97
    %p99 = scmp.ne.s32.totalorder %s91, %s93
    %p100 = scmp.eq.s32.totalorder %s20, 1
    %p101 = por %p99, %p100
    %p102 = scmp.ne.s32.totalorder %s93, %s94
    %p103 = scmp.eq.s32.totalorder %s20, 0
    %p104 = por %p102, %p103
    %p105 = scmp.ne.s32.totalorder %s93, %s94
    %p106 = scmp.eq.s32.totalorder %s21, 1
    %p107 = por %p105, %p106
    %p109 = scmp.ne.s32.totalorder %s94, %s108
    %p110 = scmp.eq.s32.totalorder %s21, 0
    %p111 = por %p109, %p110
    %s113 = sadd.s32 %s112, 1
    %p116 = scmp.eq.s32.totalorder %s15, 1
    %p117 = scmp.ne.s32.totalorder %s112, %s114
    %p118 = scmp.eq.s32.totalorder %s15, 0
    %p119 = por %p117, %p118
    %p120 = scmp.ne.s32.totalorder %s112, %s114
    %p121 = scmp.eq.s32.totalorder %s20, 1
    %p122 = por %p120, %p121
    %p123 = scmp.ne.s32.totalorder %s114, %s115
    %p124 = scmp.eq.s32.totalorder %s20, 0
    %p125 = por %p123, %p124
    %p126 = scmp.ne.s32.totalorder %s114, %s115
    %p127 = scmp.eq.s32.totalorder %s21, 1
    %p128 = por %p126, %p127
    %p130 = scmp.ne.s32.totalorder %s115, %s129
    %p131 = scmp.eq.s32.totalorder %s21, 0
    %p132 = por %p130, %p131
    %s134 = sadd.s32 %s133, 1
    %p137 = scmp.eq.s32.totalorder %s15, 1
    %p138 = scmp.ne.s32.totalorder %s133, %s135
    %p139 = scmp.eq.s32.totalorder %s15, 0
    %p140 = por %p138, %p139
    %p141 = scmp.ne.s32.totalorder %s133, %s135
    %p142 = scmp.eq.s32.totalorder %s20, 1
    %p143 = por %p141, %p142
    %p144 = scmp.ne.s32.totalorder %s135, %s136
    %p145 = scmp.eq.s32.totalorder %s20, 0
    %p146 = por %p144, %p145
    %p147 = scmp.ne.s32.totalorder %s135, %s136
    %p148 = scmp.eq.s32.totalorder %s21, 1
    %p149 = por %p147, %p148
    %p151 = scmp.ne.s32.totalorder %s136, %s150
    %p152 = scmp.eq.s32.totalorder %s21, 0
    %p153 = por %p151, %p152
    %s155 = sadd.s32 %s154, 1
    %p158 = scmp.eq.s32.totalorder %s15, 1
    %p159 = scmp.ne.s32.totalorder %s154, %s156
    %p160 = scmp.eq.s32.totalorder %s15, 0
    %p161 = por %p159, %p160
    %p162 = scmp.ne.s32.totalorder %s154, %s156
    %p163 = scmp.eq.s32.totalorder %s20, 1
    %p164 = por %p162, %p163
    %p165 = scmp.ne.s32.totalorder %s156, %s157
    %p166 = scmp.eq.s32.totalorder %s20, 0
    %p167 = por %p165, %p166
    %p168 = scmp.ne.s32.totalorder %s156, %s157
    %p169 = scmp.eq.s32.totalorder %s21, 1
    %p170 = por %p168, %p169
    %p172 = scmp.ne.s32.totalorder %s157, %s171
    %p173 = scmp.eq.s32.totalorder %s21, 0
    %p174 = por %p172, %p173
    %s176 = sadd.s32 %s175, 1
    %p179 = scmp.eq.s32.totalorder %s15, 1
    %p180 = scmp.ne.s32.totalorder %s175, %s177
    %p181 = scmp.eq.s32.totalorder %s15, 0
    %p182 = por %p180, %p181
    %p183 = scmp.ne.s32.totalorder %s175, %s177
    %p184 = scmp.eq.s32.totalorder %s20, 1
    %p185 = por %p183, %p184
    %p186 = scmp.ne.s32.totalorder %s177, %s178
    %p187 = scmp.eq.s32.totalorder %s20, 0
    %p188 = por %p186, %p187
    %p189 = scmp.ne.s32.totalorder %s177, %s178
    %p190 = scmp.eq.s32.totalorder %s21, 1
    %p191 = por %p189, %p190
    %p193 = scmp.ne.s32.totalorder %s178, %s192
    %p194 = scmp.eq.s32.totalorder %s21, 0
    %p195 = por %p193, %p194
    %s197 = sadd.s32 %s196, 1
    %p200 = scmp.eq.s32.totalorder %s15, 1
    %p201 = scmp.ne.s32.totalorder %s196, %s198
    %p202 = scmp.eq.s32.totalorder %s15, 0
    %p203 = por %p201, %p202
    %p204 = scmp.ne.s32.totalorder %s196, %s198
    %p205 = scmp.eq.s32.totalorder %s20, 1
    %p206 = por %p204, %p205
    %p207 = scmp.ne.s32.totalorder %s198, %s199
    %p208 = scmp.eq.s32.totalorder %s20, 0
    %p209 = por %p207, %p208
    %p210 = scmp.ne.s32.totalorder %s198, %s199
    %p211 = scmp.eq.s32.totalorder %s21, 1
    %p212 = por %p210, %p211
    %p214 = scmp.ne.s32.totalorder %s199, %s213
    %p215 = scmp.eq.s32.totalorder %s21, 0
    %p216 = por %p214, %p215
    %s217 = ssub.s32 %s15, %s22
    %p218 = scmp.eq.s32.totalorder %s217, 0
    %s220 = sadd.s32 %s219, 1
    %s221 = scalar_select %p218, %s219, %s220
    %p224 = pneg %p218
    %p225 = scmp.eq.s32.totalorder %s15, 1
    %p226 = por %p224, %p225
    %p227 = scmp.ne.s32.totalorder %s219, %s222
    %p228 = scmp.eq.s32.totalorder %s15, 0
    %p229 = por %p227, %p228
    %p230 = scmp.ne.s32.totalorder %s219, %s222
    %p231 = scmp.eq.s32.totalorder %s20, 1
    %p232 = por %p230, %p231
    %p233 = scmp.ne.s32.totalorder %s222, %s223
    %p234 = scmp.eq.s32.totalorder %s20, 0
    %p235 = por %p233, %p234
    %p236 = scmp.ne.s32.totalorder %s222, %s223
    %p237 = scmp.eq.s32.totalorder %s21, 1
    %p238 = por %p236, %p237
    %p240 = scmp.ne.s32.totalorder %s223, %s239
    %p241 = scmp.eq.s32.totalorder %s21, 0
    %p242 = por %p240, %p241
    %p243 = scmp.le.s32.totalorder 1, %s15
    %p244 = scmp.lt.s32.totalorder %s15, 3
    %p245 = pnand %p243, %p244
    %p246 = pneg %p245
    // Predicated region
    $region9: #{mamba_cnn_mol_forward.5} parent=5 // pred_check
      _
    $region10: #{mamba_cnn_mol_forward.5} parent=5 // pred_check_branch
      %248 = sbr.rel (%p245) target = $region12
    $region11: #{mamba_cnn_mol_forward.5} parent=5 // pred_region
      %s249 = ssub.s32 %s15, 1
      // Predicated region
      $region13: #{mamba_cnn_mol_forward.5} parent=11 // pred_check
        %p250 = pneg %p62
      $region14: #{mamba_cnn_mol_forward.5} parent=11 // pred_check_branch
        %252 = sbr.rel (%p250) target = $region16
      $region15: #{mamba_cnn_mol_forward.5} parent=11 // pred_region
        _
      $region16: #{mamba_cnn_mol_forward.5} parent=11 // pred_fallthru
        _
      // Predicated region
      $region17: #{mamba_cnn_mol_forward.5} parent=11 // pred_check
        %p253 = pneg %p83
      $region18: #{mamba_cnn_mol_forward.5} parent=11 // pred_check_branch
        %255 = sbr.rel (%p253) target = $region20
      $region19: #{mamba_cnn_mol_forward.5} parent=11 // pred_region
        _
      $region20: #{mamba_cnn_mol_forward.5} parent=11 // pred_fallthru
        _
      // Predicated region
      $region21: #{mamba_cnn_mol_forward.5} parent=11 // pred_check
        %p256 = pneg %p104
      $region22: #{mamba_cnn_mol_forward.5} parent=11 // pred_check_branch
        %258 = sbr.rel (%p256) target = $region24
      $region23: #{mamba_cnn_mol_forward.5} parent=11 // pred_region
        _
      $region24: #{mamba_cnn_mol_forward.5} parent=11 // pred_fallthru
        _
      // Predicated region
      $region25: #{mamba_cnn_mol_forward.5} parent=11 // pred_check
        %p259 = pneg %p125
      $region26: #{mamba_cnn_mol_forward.5} parent=11 // pred_check_branch
        %261 = sbr.rel (%p259) target = $region28
      $region27: #{mamba_cnn_mol_forward.5} parent=11 // pred_region
        _
      $region28: #{mamba_cnn_mol_forward.5} parent=11 // pred_fallthru
        _
      // Predicated region
      $region29: #{mamba_cnn_mol_forward.5} parent=11 // pred_check
        %p262 = pneg %p146
      $region30: #{mamba_cnn_mol_forward.5} parent=11 // pred_check_branch
        %264 = sbr.rel (%p262) target = $region32
      $region31: #{mamba_cnn_mol_forward.5} parent=11 // pred_region
        _
      $region32: #{mamba_cnn_mol_forward.5} parent=11 // pred_fallthru
        _
      // Predicated region
      $region33: #{mamba_cnn_mol_forward.5} parent=11 // pred_check
        %p265 = pneg %p167
      $region34: #{mamba_cnn_mol_forward.5} parent=11 // pred_check_branch
        %267 = sbr.rel (%p265) target = $region36
      $region35: #{mamba_cnn_mol_forward.5} parent=11 // pred_region
        _
      $region36: #{mamba_cnn_mol_forward.5} parent=11 // pred_fallthru
        _
      // Predicated region
      $region37: #{mamba_cnn_mol_forward.5} parent=11 // pred_check
        %p268 = pneg %p188
      $region38: #{mamba_cnn_mol_forward.5} parent=11 // pred_check_branch
        %270 = sbr.rel (%p268) target = $region40
      $region39: #{mamba_cnn_mol_forward.5} parent=11 // pred_region
        _
      $region40: #{mamba_cnn_mol_forward.5} parent=11 // pred_fallthru
        _
      // Predicated region
      $region41: #{mamba_cnn_mol_forward.5} parent=11 // pred_check
        %p271 = pneg %p209
      $region42: #{mamba_cnn_mol_forward.5} parent=11 // pred_check_branch
        %273 = sbr.rel (%p271) target = $region44
      $region43: #{mamba_cnn_mol_forward.5} parent=11 // pred_region
        _
      $region44: #{mamba_cnn_mol_forward.5} parent=11 // pred_fallthru
        _
    $region12: #{mamba_cnn_mol_forward.5} parent=5 // pred_fallthru
      _
    %p274 = scmp.lt.s32.totalorder %s15, 2
    // Predicated region
    $region45: #{mamba_cnn_mol_forward.5} parent=5 // pred_check
      %p275 = pneg %p274
    $region46: #{mamba_cnn_mol_forward.5} parent=5 // pred_check_branch
      %277 = sbr.rel (%p275) target = $region48
    $region47: #{mamba_cnn_mol_forward.5} parent=5 // pred_region
      // Predicated region
      $region49: #{mamba_cnn_mol_forward.5} parent=47 // pred_check
        %p278 = pneg %p35
      $region50: #{mamba_cnn_mol_forward.5} parent=47 // pred_check_branch
        %280 = sbr.rel (%p278) target = $region52
      $region51: #{mamba_cnn_mol_forward.5} parent=47 // pred_region
        %p281 = scmp.lt.s32.totalorder %s15, 1
        %s282 = scalar_select %p281, %s15, 1
        %s283 = smul.addr %s282, 4
        %s284 = scalar_lea.vmem %s0, %s283
      $region52: #{mamba_cnn_mol_forward.5} parent=47 // pred_fallthru
        _
    $region48: #{mamba_cnn_mol_forward.5} parent=5 // pred_fallthru
      _
    %p285 = scmp.le.s32.totalorder 1, %s15
    %p286 = scmp.lt.s32.totalorder %s15, 3
    %p287 = pnand %p285, %p286
    %p288 = pneg %p287
    // Predicated region
    $region53: #{mamba_cnn_mol_forward.5} parent=5 // pred_check
      _
    $region54: #{mamba_cnn_mol_forward.5} parent=5 // pred_check_branch
      %290 = sbr.rel (%p287) target = $region56
    $region55: #{mamba_cnn_mol_forward.5} parent=5 // pred_region
      %s291 = ssub.s32 %s15, 1
      %p292 = scmp.lt.s32.totalorder %s20, 1
      %s293 = scalar_select %p292, %s20, 1
      %s294 = smul.addr %s293, 4
      %s295 = scalar_lea.vmem %s0, %s294
      %p296 = pneg %p41
      %p297 = pneg %p38
      %p298 = pneg %p62
      %p299 = pneg %p59
      %p300 = pneg %p83
      %p301 = pneg %p80
      %p302 = pneg %p104
      %p303 = pneg %p101
      %p304 = pneg %p125
      %p305 = pneg %p122
      %p306 = pneg %p146
      %p307 = pneg %p143
      %p308 = pneg %p167
      %p309 = pneg %p164
      %p310 = pneg %p188
      %p311 = pneg %p185
      %p312 = pneg %p209
      %p313 = pneg %p206
      %p314 = pneg %p235
      %p315 = pneg %p232
      %p316 = scmp.lt.s32.totalorder %s20, 1
      %s317 = scalar_select %p316, %s20, 1
      %s318 = smul.addr %s317, 4
      %s319 = smul.addr %s318, 8
      %s320 = scalar_lea.vmem %s9, %s319
      %p321 = scmp.lt.s32.totalorder %s20, 1
      %s322 = scalar_select %p321, %s20, 1
      %s323 = smul.addr %s322, 4
      %s324 = scalar_lea.vmem %s0, %s323
      %p325 = scmp.lt.s32.totalorder %s20, 1
      %s326 = scalar_select %p325, %s20, 1
      %s327 = smul.addr %s326, 4
      %s328 = smul.addr %s327, 8
      %s329 = scalar_lea.vmem %s9, %s328
      %v331 = vlaneseq
      %v332 = vand.u32 %v331, 127
      %vm333 = vcmp.lt.s32.totalorder %v332, 0
      %v334 = vsub.s32 0, %v332
      %v335 = vsel %vm333, %v334, %v332
      %v336 = vand.u32 %v335, 65535
      %v337 = vshrl.u32 %v335, 16
      %v339 = vmul.u32 %v336, 52429
      %v340 = vmul.u32 %v336, 52428
      %v341 = vmul.u32 %v337, 52429
      %v342 = vmul.u32 %v337, 52428
      %v343 = vshll.u32 %v340, 16
      %v344 = vshrl.u32 %v340, 16
      %v345 = vshll.u32 %v341, 16
      %v346 = vshrl.u32 %v341, 16
      %vm347 = vc.u32 %v339, %v343
      %v348 = vsel %vm347, 1, 0
      %v349 = vadd.s32 %v339, %v343
      %v350 = vadd.s32 %v342, %v348
      %vm351 = vc.u32 %v349, %v345
      %v352 = vsel %vm351, 1, 0
      %v353 = vadd.s32 %v349, %v345
      %v354 = vadd.s32 %v350, %v352
      %v355 = vadd.s32 %v354, %v344
      %v356 = vadd.s32 %v355, %v346
      %v357 = vshrl.u32 %v356, 2
      %v358 = vmul.u32 %v357, 5
      %v359 = vsub.s32 %v335, %v358
      %v360 = vsub.s32 0, %v359
      %v361 = vsel %vm333, %v360, %v359
      %vm362 = vcmp.ne.s32.totalorder %v361, 0
      %vm363 = vcmp.lt.s32.totalorder %v361, 0
      %vm364 = vmand %vm363, %vm362
      %v365 = vadd.s32 %v361, 5
      %v366 = vsel %vm364, %v365, %v361
      %vm367 = vcmp.eq.s32.totalorder %v366, 0
      %vm368 = vcmp.eq.s32.totalorder %v366, 4
      %v369 = vld [vmem:[%s324] sm:$0xf]
      %v370 = vld [vmem:[%s1] sm:$0xf]
      %v371 = vld [vmem:[%s2] sm:$0xff]
      %373 = vrot.lane.b32.xlu0 %v369, 124
      %v374 = vpop.permute.xlu0 %373
      %376 = vrot.lane.b32.xlu0 %v369, 21
      %v377 = vpop.permute.xlu0 %376
      %vm379 = vcmask 171008
      %v380 = vsel %vm379, %v374, %v377
      %381 = vrot.lane.b32.xlu0 %v369, 104
      %v382 = vpop.permute.xlu0 %381
      %384 = vrot.lane.b32.xlu0 %v369, 1
      %v385 = vpop.permute.xlu0 %384
      %vm387 = vcmask 7168
      %v388 = vsel %vm387, %v382, %v385
      %v389 = vsel %vm367, 1, 0
      %vm390 = vcmp.eq.s32.totalorder %v389, 1
      %v391 = vsel %vm390, %v380, %v388
      %392 = vrot.lane.b32.xlu0 %v369, 107
      %v393 = vpop.permute.xlu0 %392
      %395 = vrot.lane.b32.xlu0 %v369, 4
      %v396 = vpop.permute.xlu0 %395
      %vm398 = vcmask 31744
      %v399 = vsel %vm398, %v393, %v396
      %400 = vrot.lane.b32.xlu0 %v369, 127
      %v401 = vpop.permute.xlu0 %400
      %403 = vrot.lane.b32.xlu0 %v369, 24
      %v404 = vpop.permute.xlu0 %403
      %vm406 = vcmask 195584
      %v407 = vsel %vm406, %v401, %v404
      %v408 = vsel %vm368, 1, 0
      %vm409 = vcmp.eq.s32.totalorder %v408, 1
      %v410 = vsel %vm409, %v399, %v407
      %412 = vrot.lane.b32.xlu0 %v391, 108
      %v413 = vpop.permute.xlu0 %412
      %415 = vrot.lane.b32.xlu0 %v391, 5
      %v416 = vpop.permute.xlu0 %415
      %vm418 = vcmask 39936
      %v419 = vsel %vm418, %v413, %v416
      %420 = vrot.lane.b32.xlu0 %v369, 108
      %v421 = vpop.permute.xlu0 %420
      %423 = vrot.lane.b32.xlu0 %v369, 5
      %v424 = vpop.permute.xlu0 %423
      %v426 = vsel %vm418, %v421, %v424
      %428 = vrot.lane.b32.xlu0 %v410, 108
      %v429 = vpop.permute.xlu0 %428
      %431 = vrot.lane.b32.xlu0 %v410, 5
      %v432 = vpop.permute.xlu0 %431
      %v434 = vsel %vm418, %v429, %v432
      %435 = vrot.lane.b32.xlu0 %v391, 123
      %v436 = vpop.permute.xlu0 %435
      %438 = vrot.lane.b32.xlu0 %v391, 20
      %v439 = vpop.permute.xlu0 %438
      %vm441 = vcmask 162816
      %v442 = vsel %vm441, %v436, %v439
      %443 = vrot.lane.b32.xlu0 %v369, 123
      %v444 = vpop.permute.xlu0 %443
      %446 = vrot.lane.b32.xlu0 %v369, 20
      %v447 = vpop.permute.xlu0 %446
      %v449 = vsel %vm441, %v444, %v447
      %450 = vrot.lane.b32.xlu0 %v410, 123
      %v451 = vpop.permute.xlu0 %450
      %453 = vrot.lane.b32.xlu0 %v410, 20
      %v454 = vpop.permute.xlu0 %453
      %v456 = vsel %vm441, %v451, %v454
      %v458 = vrot.slane %v426, 4
      %v460 = vrot.slane %v391, 4
      %v462 = vrot.slane %v410, 4
      %v465 = vrot.slane %v449, 4
      %vm467 = vcmask 1043456
      %v468 = vsel %vm467, %v419, %v458
      %v469 = vsel %vm467, %v434, %v460
      %v470 = vsel %vm467, %v369, %v462
      %v471 = vsel %vm467, %v442, %v465
      %v472 = vpack.c.bf16 %v469, %v468
      %v473 = vpack.c.bf16 %v471, %v470
      %v474 = vpack.c.bf16 %v456, %v456
      %476 = vset.pattern.permute.xlu0 0
      %477 = vperm.xlu0 %476, %v371
      %v478 = vpop.permute.xlu0 %477
      %vm480 = vcmask 293888
      %v482 = vsel %vm480, %v370, 0
      %vm484 = vcmask 1041408
      %v486 = vsel %vm484, %v474, 0
      %488 = vmatpush.bf16.msra.mxu0 0
      %489 = vmatpush.bf16.msra.mxu0 0
      %490 = vmatpush.bf16.msra.mxu0 0
      %491 = vmatpush.bf16.msra.mxu0 0
      %492 = vmatpush.bf16.msra.mxu0 0
      %493 = vmatpush.bf16.msra.mxu0 %v486
      %494 = vmatpush.bf16.msra.mxu0 %v473
      %495 = vmatpush.bf16.msra.mxu0 %v472
      %496 = vmatmul.bf16.gmra.mxu0 %v482
      %v497 = vpop.f32.mrf.mxu0
      %v498 = vadd.f32 %v478, %v497
      %v499 = vpop.f32.mrf.mxu0
      %500 = vdwg.mxu0
      %v501 = vmax.f32 %v498, 0.0
      %v502 = vld [vmem:[%s3] sm:$0xf]
      %v503 = vld [vmem:[%s4] sm:$0xff]
      %505 = vrot.lane.b32.xlu0 %v501, 124
      %v506 = vpop.permute.xlu0 %505
      %508 = vrot.lane.b32.xlu0 %v501, 21
      %v509 = vpop.permute.xlu0 %508
      %v511 = vsel %vm379, %v506, %v509
      %512 = vrot.lane.b32.xlu0 %v501, 104
      %v513 = vpop.permute.xlu0 %512
      %515 = vrot.lane.b32.xlu0 %v501, 1
      %v516 = vpop.permute.xlu0 %515
      %v518 = vsel %vm387, %v513, %v516
      %v519 = vsel %vm390, %v511, %v518
      %520 = vrot.lane.b32.xlu0 %v501, 107
      %v521 = vpop.permute.xlu0 %520
      %523 = vrot.lane.b32.xlu0 %v501, 4
      %v524 = vpop.permute.xlu0 %523
      %v526 = vsel %vm398, %v521, %v524
      %527 = vrot.lane.b32.xlu0 %v501, 127
      %v528 = vpop.permute.xlu0 %527
      %530 = vrot.lane.b32.xlu0 %v501, 24
      %v531 = vpop.permute.xlu0 %530
      %v533 = vsel %vm406, %v528, %v531
      %v534 = vsel %vm409, %v526, %v533
      %536 = vrot.lane.b32.xlu0 %v519, 108
      %v537 = vpop.permute.xlu0 %536
      %539 = vrot.lane.b32.xlu0 %v519, 5
      %v540 = vpop.permute.xlu0 %539
      %v542 = vsel %vm418, %v537, %v540
      %543 = vrot.lane.b32.xlu0 %v501, 108
      %v544 = vpop.permute.xlu0 %543
      %546 = vrot.lane.b32.xlu0 %v501, 5
      %v547 = vpop.permute.xlu0 %546
      %v549 = vsel %vm418, %v544, %v547
      %551 = vrot.lane.b32.xlu0 %v534, 108
      %v552 = vpop.permute.xlu0 %551
      %554 = vrot.lane.b32.xlu0 %v534, 5
      %v555 = vpop.permute.xlu0 %554
      %v557 = vsel %vm418, %v552, %v555
      %558 = vrot.lane.b32.xlu0 %v519, 123
      %v559 = vpop.permute.xlu0 %558
      %561 = vrot.lane.b32.xlu0 %v519, 20
      %v562 = vpop.permute.xlu0 %561
      %v564 = vsel %vm441, %v559, %v562
      %565 = vrot.lane.b32.xlu0 %v501, 123
      %v566 = vpop.permute.xlu0 %565
      %568 = vrot.lane.b32.xlu0 %v501, 20
      %v569 = vpop.permute.xlu0 %568
      %v571 = vsel %vm441, %v566, %v569
      %572 = vrot.lane.b32.xlu0 %v534, 123
      %v573 = vpop.permute.xlu0 %572
      %575 = vrot.lane.b32.xlu0 %v534, 20
      %v576 = vpop.permute.xlu0 %575
      %v578 = vsel %vm441, %v573, %v576
      %v579 = vpack.c.bf16 %v549, %v542
      %v580 = vpack.c.bf16 %v519, %v557
      %v581 = vpack.c.bf16 %v534, %v501
      %v582 = vpack.c.bf16 %v571, %v564
      %v583 = vpack.c.bf16 %v578, %v578
      %585 = vset.pattern.permute.xlu0 0
      %586 = vperm.xlu0 %585, %v503
      %v587 = vpop.permute.xlu0 %586
      %vm589 = vcmask 588800
      %v591 = vsel %vm589, %v502, 0
      %v594 = vsel %vm467, %v583, 0
      %596 = vmatpush.bf16.msra.mxu0 0
      %597 = vmatpush.bf16.msra.mxu0 0
      %598 = vmatpush.bf16.msra.mxu0 0
      %599 = vmatpush.bf16.msra.mxu0 %v594
      %600 = vmatpush.bf16.msra.mxu0 %v582
      %601 = vmatpush.bf16.msra.mxu0 %v581
      %602 = vmatpush.bf16.msra.mxu0 %v580
      %603 = vmatpush.bf16.msra.mxu0 %v579
      %604 = vmatmul.bf16.gmra.mxu0 %v591
      %v605 = vpop.f32.mrf.mxu0
      %v606 = vadd.f32 %v587, %v605
      %v607 = vpop.f32.mrf.mxu0
      %608 = vdwg.mxu0
      %v609 = vmax.f32 %v606, 0.0
      %v610 = vld [vmem:[%s5] sm:$0x3]
      %v611 = vld [vmem:[%s6] sm:$0x7]
      %613 = vrot.lane.b32.xlu0 %v609, 124
      %v614 = vpop.permute.xlu0 %613
      %616 = vrot.lane.b32.xlu0 %v609, 21
      %v617 = vpop.permute.xlu0 %616
      %v619 = vsel %vm379, %v614, %v617
      %620 = vrot.lane.b32.xlu0 %v609, 104
      %v621 = vpop.permute.xlu0 %620
      %623 = vrot.lane.b32.xlu0 %v609, 1
      %v624 = vpop.permute.xlu0 %623
      %v626 = vsel %vm387, %v621, %v624
      %v627 = vsel %vm390, %v619, %v626
      %628 = vrot.lane.b32.xlu0 %v609, 107
      %v629 = vpop.permute.xlu0 %628
      %631 = vrot.lane.b32.xlu0 %v609, 4
      %v632 = vpop.permute.xlu0 %631
      %v634 = vsel %vm398, %v629, %v632
      %635 = vrot.lane.b32.xlu0 %v609, 127
      %v636 = vpop.permute.xlu0 %635
      %638 = vrot.lane.b32.xlu0 %v609, 24
      %v639 = vpop.permute.xlu0 %638
      %v641 = vsel %vm406, %v636, %v639
      %v642 = vsel %vm409, %v634, %v641
      %644 = vrot.lane.b32.xlu0 %v627, 108
      %v645 = vpop.permute.xlu0 %644
      %647 = vrot.lane.b32.xlu0 %v627, 5
      %v648 = vpop.permute.xlu0 %647
      %v650 = vsel %vm418, %v645, %v648
      %651 = vrot.lane.b32.xlu0 %v609, 108
      %v652 = vpop.permute.xlu0 %651
      %654 = vrot.lane.b32.xlu0 %v609, 5
      %v655 = vpop.permute.xlu0 %654
      %v657 = vsel %vm418, %v652, %v655
      %659 = vrot.lane.b32.xlu0 %v642, 108
      %v660 = vpop.permute.xlu0 %659
      %662 = vrot.lane.b32.xlu0 %v642, 5
      %v663 = vpop.permute.xlu0 %662
      %v665 = vsel %vm418, %v660, %v663
      %666 = vrot.lane.b32.xlu0 %v627, 123
      %v667 = vpop.permute.xlu0 %666
      %669 = vrot.lane.b32.xlu0 %v627, 20
      %v670 = vpop.permute.xlu0 %669
      %v672 = vsel %vm441, %v667, %v670
      %673 = vrot.lane.b32.xlu0 %v609, 123
      %v674 = vpop.permute.xlu0 %673
      %676 = vrot.lane.b32.xlu0 %v609, 20
      %v677 = vpop.permute.xlu0 %676
      %v679 = vsel %vm441, %v674, %v677
      %680 = vrot.lane.b32.xlu0 %v642, 123
      %v681 = vpop.permute.xlu0 %680
      %683 = vrot.lane.b32.xlu0 %v642, 20
      %v684 = vpop.permute.xlu0 %683
      %v686 = vsel %vm441, %v681, %v684
      %v687 = vpack.c.bf16 %v657, %v650
      %v688 = vpack.c.bf16 %v627, %v665
      %v689 = vpack.c.bf16 %v642, %v609
      %v690 = vpack.c.bf16 %v679, %v672
      %v691 = vpack.c.bf16 %v686, %v686
      %693 = vset.pattern.permute.xlu0 0
      %694 = vperm.xlu0 %693, %v611
      %v695 = vpop.permute.xlu0 %694
      %v698 = vsel %vm589, %v610, 0
      %v701 = vsel %vm467, %v691, 0
      %703 = vmatpush.bf16.msra.mxu0 0
      %704 = vmatpush.bf16.msra.mxu0 0
      %705 = vmatpush.bf16.msra.mxu0 0
      %706 = vmatpush.bf16.msra.mxu0 %v701
      %707 = vmatpush.bf16.msra.mxu0 %v690
      %708 = vmatpush.bf16.msra.mxu0 %v689
      %709 = vmatpush.bf16.msra.mxu0 %v688
      %710 = vmatpush.bf16.msra.mxu0 %v687
      %711 = vmatmul.bf16.gmra.mxu0 %v698
      %v712 = vpop.f32.mrf.mxu0
      %v713 = vadd.f32 %v695, %v712
      %v714 = vpop.f32.mrf.mxu0
      %715 = vdwg.mxu0
      %v716 = vld [vmem:[%s7] sm:$0xf]
      %v717 = vld [vmem:[%s7 + $0x4] sm:$0xf]
      %v718 = vld [vmem:[%s7 + $0x8] sm:$0xf]
      %v719 = vld [vmem:[%s7 + $0xc] sm:$0x3]
      %v720 = vld [vmem:[%s8] sm:$0xff]
      %v721 = vld [vmem:[%s8 + $0x8] sm:$0xff]
      %v722 = vld [vmem:[%s8 + $0x10] sm:$0xff]
      %v723 = vld [vmem:[%s8 + $0x18] sm:$0x7]
      %v724 = vpack.c.bf16 %v713, %v713
      %726 = vset.pattern.permute.xlu0 0
      %727 = vperm.xlu0 %726, %v720
      %v728 = vpop.permute.xlu0 %727
      %731 = vset.pattern.permute.xlu0 0
      %732 = vperm.xlu0 %731, %v721
      %v733 = vpop.permute.xlu0 %732
      %736 = vset.pattern.permute.xlu0 0
      %737 = vperm.xlu0 %736, %v722
      %v738 = vpop.permute.xlu0 %737
      %741 = vset.pattern.permute.xlu0 0
      %742 = vperm.xlu0 %741, %v723
      %v743 = vpop.permute.xlu0 %742
      %v749 = vunpack.c.l.b16 %v716
      %v750 = vunpack.c.l.b16 %v717
      %v751 = vunpack.c.l.b16 %v718
      %v752 = vunpack.c.l.b16 %v719
      %v753 = vpack.c.b16 %v750, %v749
      %v754 = vpack.c.b16 %v752, %v751
      %vm755 = vcmask 23552
      %v757 = vsel %vm755, %v753, 0
      %v760 = vsel %vm755, %v754, 0
      %vm762 = vcmask 1040384
      %v763 = vsel %vm762, 4294967295, 65535
      %v764 = vsel %vm484, %v763, 0
      %v766 = vand.u32 %v724, %v764
      %768 = vmatpush.bf16.msra.mxu0 0
      %769 = vmatpush.bf16.msra.mxu0 0
      %770 = vmatpush.bf16.msra.mxu0 0
      %771 = vmatpush.bf16.msra.mxu0 0
      %772 = vmatpush.bf16.msra.mxu0 0
      %773 = vmatpush.bf16.msra.mxu0 0
      %774 = vmatpush.bf16.msra.mxu0 0
      %775 = vmatpush.bf16.msra.mxu0 %v766
      %776 = vmatmul.bf16.gmra.mxu0 %v757
      %v777 = vpop.f32.mrf.mxu0
      %v778 = vadd.f32 %v728, %v777
      %v779 = vpop.f32.mrf.mxu0
      %v780 = vadd.f32 %v733, %v779
      %781 = vmatmul.bf16.gmra.mxu0 %v760
      %v782 = vpop.f32.mrf.mxu0
      %v783 = vadd.f32 %v738, %v782
      %v784 = vpop.f32.mrf.mxu0
      %v785 = vadd.f32 %v743, %v784
      %786 = vdwg.mxu0
      %vm787 = vcmask 203776
      %788 = vst.msk [vmem:[%s329] sm:$0xff] %vm787, %v778
      %789 = vst.msk [vmem:[%s329 + $0x8] sm:$0xff] %vm787, %v780
      %790 = vst.msk [vmem:[%s329 + $0x10] sm:$0xff] %vm787, %v783
      %vm791 = vcmask 198656
      %792 = vst.msk [vmem:[%s329 + $0x18] sm:$0x7] %vm791, %v785
      %p793 = scmp.lt.s32.totalorder %s20, 1
      %s794 = scalar_select %p793, %s20, 1
      %s795 = smul.addr %s794, 4
      %s796 = smul.addr %s795, 8
      %s797 = scalar_lea.vmem %s9, %s796
      // Predicated region
      $region57: #{mamba_cnn_mol_forward.5} parent=55 // pred_check
        %p798 = pneg %p232
      $region58: #{mamba_cnn_mol_forward.5} parent=55 // pred_check_branch
        %800 = sbr.rel (%p798) target = $region60
      $region59: #{mamba_cnn_mol_forward.5} parent=55 // pred_region
        _
      $region60: #{mamba_cnn_mol_forward.5} parent=55 // pred_fallthru
        _
    $region56: #{mamba_cnn_mol_forward.5} parent=5 // pred_fallthru
      _
    %p801 = scmp.le.s32.totalorder 2, %s15
    // Predicated region
    $region61: #{mamba_cnn_mol_forward.5} parent=5 // pred_check
      %p802 = pneg %p801
    $region62: #{mamba_cnn_mol_forward.5} parent=5 // pred_check_branch
      %804 = sbr.rel (%p802) target = $region64
    $region63: #{mamba_cnn_mol_forward.5} parent=5 // pred_region
      %s805 = ssub.s32 %s15, 2
      // Predicated region
      $region65: #{mamba_cnn_mol_forward.5} parent=63 // pred_check
        %p806 = pneg %p238
      $region66: #{mamba_cnn_mol_forward.5} parent=63 // pred_check_branch
        %808 = sbr.rel (%p806) target = $region68
      $region67: #{mamba_cnn_mol_forward.5} parent=63 // pred_region
        %p809 = scmp.lt.s32.totalorder %s21, 1
        %s810 = scalar_select %p809, %s21, 1
        %s811 = smul.addr %s810, 4
        %s812 = smul.addr %s811, 8
        %s813 = scalar_lea.vmem %s9, %s812
      $region68: #{mamba_cnn_mol_forward.5} parent=63 // pred_fallthru
        _
    $region64: #{mamba_cnn_mol_forward.5} parent=5 // pred_fallthru
      _
  $region6: #{mamba_cnn_mol_forward.5} parent=0 // loop_footer
    %s19 = sadd.s32 1, %s15
  $region7: #{mamba_cnn_mol_forward.5} parent=0 // loop_footer_branch
    %14 = sbr.rel target = $region3
  $region8: #{mamba_cnn_mol_forward.5} parent=0 // loop_exit
    _

// kernel: mamba_cnn_mol_forward.4
$region0: #{mamba_cnn_mol_forward.4}
  #allocation0 [shape = 'u32[]', space=smem, size = 0x4, offset = 0x4, fixed_abs, tag = 'smem constant byte address 0x4 - core index']
  #allocation1 [shape = 'u32[72,128]{1,0:T(1,128)}', space=vmem, size = 0x9000, scoped, tag = 'internal scratch']
  #allocation2 [shape = 'f32[1,4,50]{2,1,0:T(4,128)}', space=vmem, size = 0x800, scoped, tag = 'scratch operand']
  %s0 = inlined_call_operand.vmem [shape: f32[2,4,25], index: 0, kind: input, shape index: {}]
  %s1 = inlined_call_operand.vmem [shape: f32[3,1,25], index: 1, kind: input, shape index: {}]
  %s2 = inlined_call_operand.vmem [shape: bf16[3,25,100], index: 2, kind: input, shape index: {}]
  %s3 = inlined_call_operand.vmem [shape: f32[3,4,50], index: 3, kind: input, shape index: {}]
  %s4 = inlined_call_operand.vmem [shape: f32[3,1,50], index: 4, kind: input, shape index: {}]
  %s5 = inlined_call_operand.vmem [shape: bf16[3,50,82], index: 5, kind: input, shape index: {}]
  %s6 = inlined_call_operand.vmem [shape: f32[3,1,50], index: 6, kind: input, shape index: {}]
  %s7 = inlined_call_operand.vmem [shape: f32[3,16,50], index: 7, kind: input, shape index: {}]
  %s8 = inlined_call_operand.vmem [shape: f32[3,1,50], index: 8, kind: input, shape index: {}]
  %s9 = inlined_call_operand.vmem [shape: bf16[3,50,25], index: 9, kind: input, shape index: {}]
  %s10 = inlined_call_operand.vmem [shape: f32[2,4,25], index: 10, kind: output, shape index: {}]
  %s11 = sld [smem:[#allocation0]]
  $region73: #{mamba_cnn_mol_forward.4} parent=0
    _
  %s13 = ssub.s32 1, %s11
  %s14 = scalar_select 0, %s13, %s11
  loop: start=0, step=1, limit=4
  $region2: #{mamba_cnn_mol_forward.4} parent=0 // loop_pre_header
    _
  $region3: #{mamba_cnn_mol_forward.4} parent=0 // loop_header
    %s16 = sphi 0, %s20
    %p17 = scmp.ge.s32.totalorder %s16, 4
    %s26 = sphi 0, %s28
    %s29 = sphi 0, %s26
    %s30 = sphi 0, %s29
    %s46 = sphi 0, %s30
    %s50 = sphi 0, %s50
    %s52 = sphi 0, %s50
    %s53 = sphi 0, %s52
    %s67 = sphi 0, %s53
    %s71 = sphi 0, %s71
    %s73 = sphi 0, %s71
    %s74 = sphi 0, %s73
    %s88 = sphi 0, %s74
    %s92 = sphi 0, %s92
    %s94 = sphi 0, %s92
    %s95 = sphi 0, %s94
    %s109 = sphi 0, %s95
    %s113 = sphi 0, %s113
    %s115 = sphi 0, %s113
    %s116 = sphi 0, %s115
    %s130 = sphi 0, %s116
    %s134 = sphi 0, %s134
    %s136 = sphi 0, %s134
    %s137 = sphi 0, %s136
    %s151 = sphi 0, %s137
    %s155 = sphi 0, %s155
    %s157 = sphi 0, %s155
    %s158 = sphi 0, %s157
    %s172 = sphi 0, %s158
    %s176 = sphi 0, %s176
    %s178 = sphi 0, %s176
    %s179 = sphi 0, %s178
    %s193 = sphi 0, %s179
    %s197 = sphi 0, %s197
    %s199 = sphi 0, %s197
    %s200 = sphi 0, %s199
    %s214 = sphi 0, %s200
    %s218 = sphi 0, %s218
    %s220 = sphi 0, %s218
    %s221 = sphi 0, %s220
    %s235 = sphi 0, %s221
    %s241 = sphi 0, %s243
    %s244 = sphi 0, %s241
    %s245 = sphi 0, %s244
    %s261 = sphi 0, %s245
  $region4: #{mamba_cnn_mol_forward.4} parent=0 // loop_header_branch
    %19 = sbr.rel (%p17) target = $region8
  $region5: #{mamba_cnn_mol_forward.4} parent=0 // loop_body
    %s21 = ssub.s32 %s16, 1
    %s22 = ssub.s32 %s16, 2
    %s23 = sadd.s32 %s16, 1
    %s24 = ssub.s32 %s16, %s23
    %p25 = scmp.eq.s32.totalorder %s24, 0
    %s27 = sadd.s32 %s26, 1
    %s28 = scalar_select %p25, %s26, %s27
    %p31 = pneg %p25
    %p32 = scmp.eq.s32.totalorder %s16, 1
    %p33 = por %p31, %p32
    %p34 = scmp.ne.s32.totalorder %s26, %s29
    %p35 = scmp.eq.s32.totalorder %s16, 0
    %p36 = por %p34, %p35
    %p37 = scmp.ne.s32.totalorder %s26, %s29
    %p38 = scmp.eq.s32.totalorder %s21, 1
    %p39 = por %p37, %p38
    %p40 = scmp.ne.s32.totalorder %s29, %s30
    %p41 = scmp.eq.s32.totalorder %s21, 0
    %p42 = por %p40, %p41
    %p43 = scmp.ne.s32.totalorder %s29, %s30
    %p44 = scmp.eq.s32.totalorder %s22, 1
    %p45 = por %p43, %p44
    %p47 = scmp.ne.s32.totalorder %s30, %s46
    %p48 = scmp.eq.s32.totalorder %s22, 0
    %p49 = por %p47, %p48
    %s51 = sadd.s32 %s50, 1
    %p54 = scmp.eq.s32.totalorder %s16, 1
    %p55 = scmp.ne.s32.totalorder %s50, %s52
    %p56 = scmp.eq.s32.totalorder %s16, 0
    %p57 = por %p55, %p56
    %p58 = scmp.ne.s32.totalorder %s50, %s52
    %p59 = scmp.eq.s32.totalorder %s21, 1
    %p60 = por %p58, %p59
    %p61 = scmp.ne.s32.totalorder %s52, %s53
    %p62 = scmp.eq.s32.totalorder %s21, 0
    %p63 = por %p61, %p62
    %p64 = scmp.ne.s32.totalorder %s52, %s53
    %p65 = scmp.eq.s32.totalorder %s22, 1
    %p66 = por %p64, %p65
    %p68 = scmp.ne.s32.totalorder %s53, %s67
    %p69 = scmp.eq.s32.totalorder %s22, 0
    %p70 = por %p68, %p69
    %s72 = sadd.s32 %s71, 1
    %p75 = scmp.eq.s32.totalorder %s16, 1
    %p76 = scmp.ne.s32.totalorder %s71, %s73
    %p77 = scmp.eq.s32.totalorder %s16, 0
    %p78 = por %p76, %p77
    %p79 = scmp.ne.s32.totalorder %s71, %s73
    %p80 = scmp.eq.s32.totalorder %s21, 1
    %p81 = por %p79, %p80
    %p82 = scmp.ne.s32.totalorder %s73, %s74
    %p83 = scmp.eq.s32.totalorder %s21, 0
    %p84 = por %p82, %p83
    %p85 = scmp.ne.s32.totalorder %s73, %s74
    %p86 = scmp.eq.s32.totalorder %s22, 1
    %p87 = por %p85, %p86
    %p89 = scmp.ne.s32.totalorder %s74, %s88
    %p90 = scmp.eq.s32.totalorder %s22, 0
    %p91 = por %p89, %p90
    %s93 = sadd.s32 %s92, 1
    %p96 = scmp.eq.s32.totalorder %s16, 1
    %p97 = scmp.ne.s32.totalorder %s92, %s94
    %p98 = scmp.eq.s32.totalorder %s16, 0
    %p99 = por %p97, %p98
    %p100 = scmp.ne.s32.totalorder %s92, %s94
    %p101 = scmp.eq.s32.totalorder %s21, 1
    %p102 = por %p100, %p101
    %p103 = scmp.ne.s32.totalorder %s94, %s95
    %p104 = scmp.eq.s32.totalorder %s21, 0
    %p105 = por %p103, %p104
    %p106 = scmp.ne.s32.totalorder %s94, %s95
    %p107 = scmp.eq.s32.totalorder %s22, 1
    %p108 = por %p106, %p107
    %p110 = scmp.ne.s32.totalorder %s95, %s109
    %p111 = scmp.eq.s32.totalorder %s22, 0
    %p112 = por %p110, %p111
    %s114 = sadd.s32 %s113, 1
    %p117 = scmp.eq.s32.totalorder %s16, 1
    %p118 = scmp.ne.s32.totalorder %s113, %s115
    %p119 = scmp.eq.s32.totalorder %s16, 0
    %p120 = por %p118, %p119
    %p121 = scmp.ne.s32.totalorder %s113, %s115
    %p122 = scmp.eq.s32.totalorder %s21, 1
    %p123 = por %p121, %p122
    %p124 = scmp.ne.s32.totalorder %s115, %s116
    %p125 = scmp.eq.s32.totalorder %s21, 0
    %p126 = por %p124, %p125
    %p127 = scmp.ne.s32.totalorder %s115, %s116
    %p128 = scmp.eq.s32.totalorder %s22, 1
    %p129 = por %p127, %p128
    %p131 = scmp.ne.s32.totalorder %s116, %s130
    %p132 = scmp.eq.s32.totalorder %s22, 0
    %p133 = por %p131, %p132
    %s135 = sadd.s32 %s134, 1
    %p138 = scmp.eq.s32.totalorder %s16, 1
    %p139 = scmp.ne.s32.totalorder %s134, %s136
    %p140 = scmp.eq.s32.totalorder %s16, 0
    %p141 = por %p139, %p140
    %p142 = scmp.ne.s32.totalorder %s134, %s136
    %p143 = scmp.eq.s32.totalorder %s21, 1
    %p144 = por %p142, %p143
    %p145 = scmp.ne.s32.totalorder %s136, %s137
    %p146 = scmp.eq.s32.totalorder %s21, 0
    %p147 = por %p145, %p146
    %p148 = scmp.ne.s32.totalorder %s136, %s137
    %p149 = scmp.eq.s32.totalorder %s22, 1
    %p150 = por %p148, %p149
    %p152 = scmp.ne.s32.totalorder %s137, %s151
    %p153 = scmp.eq.s32.totalorder %s22, 0
    %p154 = por %p152, %p153
    %s156 = sadd.s32 %s155, 1
    %p159 = scmp.eq.s32.totalorder %s16, 1
    %p160 = scmp.ne.s32.totalorder %s155, %s157
    %p161 = scmp.eq.s32.totalorder %s16, 0
    %p162 = por %p160, %p161
    %p163 = scmp.ne.s32.totalorder %s155, %s157
    %p164 = scmp.eq.s32.totalorder %s21, 1
    %p165 = por %p163, %p164
    %p166 = scmp.ne.s32.totalorder %s157, %s158
    %p167 = scmp.eq.s32.totalorder %s21, 0
    %p168 = por %p166, %p167
    %p169 = scmp.ne.s32.totalorder %s157, %s158
    %p170 = scmp.eq.s32.totalorder %s22, 1
    %p171 = por %p169, %p170
    %p173 = scmp.ne.s32.totalorder %s158, %s172
    %p174 = scmp.eq.s32.totalorder %s22, 0
    %p175 = por %p173, %p174
    %s177 = sadd.s32 %s176, 1
    %p180 = scmp.eq.s32.totalorder %s16, 1
    %p181 = scmp.ne.s32.totalorder %s176, %s178
    %p182 = scmp.eq.s32.totalorder %s16, 0
    %p183 = por %p181, %p182
    %p184 = scmp.ne.s32.totalorder %s176, %s178
    %p185 = scmp.eq.s32.totalorder %s21, 1
    %p186 = por %p184, %p185
    %p187 = scmp.ne.s32.totalorder %s178, %s179
    %p188 = scmp.eq.s32.totalorder %s21, 0
    %p189 = por %p187, %p188
    %p190 = scmp.ne.s32.totalorder %s178, %s179
    %p191 = scmp.eq.s32.totalorder %s22, 1
    %p192 = por %p190, %p191
    %p194 = scmp.ne.s32.totalorder %s179, %s193
    %p195 = scmp.eq.s32.totalorder %s22, 0
    %p196 = por %p194, %p195
    %s198 = sadd.s32 %s197, 1
    %p201 = scmp.eq.s32.totalorder %s16, 1
    %p202 = scmp.ne.s32.totalorder %s197, %s199
    %p203 = scmp.eq.s32.totalorder %s16, 0
    %p204 = por %p202, %p203
    %p205 = scmp.ne.s32.totalorder %s197, %s199
    %p206 = scmp.eq.s32.totalorder %s21, 1
    %p207 = por %p205, %p206
    %p208 = scmp.ne.s32.totalorder %s199, %s200
    %p209 = scmp.eq.s32.totalorder %s21, 0
    %p210 = por %p208, %p209
    %p211 = scmp.ne.s32.totalorder %s199, %s200
    %p212 = scmp.eq.s32.totalorder %s22, 1
    %p213 = por %p211, %p212
    %p215 = scmp.ne.s32.totalorder %s200, %s214
    %p216 = scmp.eq.s32.totalorder %s22, 0
    %p217 = por %p215, %p216
    %s219 = sadd.s32 %s218, 1
    %p222 = scmp.eq.s32.totalorder %s16, 1
    %p223 = scmp.ne.s32.totalorder %s218, %s220
    %p224 = scmp.eq.s32.totalorder %s16, 0
    %p225 = por %p223, %p224
    %p226 = scmp.ne.s32.totalorder %s218, %s220
    %p227 = scmp.eq.s32.totalorder %s21, 1
    %p228 = por %p226, %p227
    %p229 = scmp.ne.s32.totalorder %s220, %s221
    %p230 = scmp.eq.s32.totalorder %s21, 0
    %p231 = por %p229, %p230
    %p232 = scmp.ne.s32.totalorder %s220, %s221
    %p233 = scmp.eq.s32.totalorder %s22, 1
    %p234 = por %p232, %p233
    %p236 = scmp.ne.s32.totalorder %s221, %s235
    %p237 = scmp.eq.s32.totalorder %s22, 0
    %p238 = por %p236, %p237
    %s239 = ssub.s32 %s16, %s23
    %p240 = scmp.eq.s32.totalorder %s239, 0
    %s242 = sadd.s32 %s241, 1
    %s243 = scalar_select %p240, %s241, %s242
    %p246 = pneg %p240
    %p247 = scmp.eq.s32.totalorder %s16, 1
    %p248 = por %p246, %p247
    %p249 = scmp.ne.s32.totalorder %s241, %s244
    %p250 = scmp.eq.s32.totalorder %s16, 0
    %p251 = por %p249, %p250
    %p252 = scmp.ne.s32.totalorder %s241, %s244
    %p253 = scmp.eq.s32.totalorder %s21, 1
    %p254 = por %p252, %p253
    %p255 = scmp.ne.s32.totalorder %s244, %s245
    %p256 = scmp.eq.s32.totalorder %s21, 0
    %p257 = por %p255, %p256
    %p258 = scmp.ne.s32.totalorder %s244, %s245
    %p259 = scmp.eq.s32.totalorder %s22, 1
    %p260 = por %p258, %p259
    %p262 = scmp.ne.s32.totalorder %s245, %s261
    %p263 = scmp.eq.s32.totalorder %s22, 0
    %p264 = por %p262, %p263
    %p265 = scmp.le.s32.totalorder 1, %s16
    %p266 = scmp.lt.s32.totalorder %s16, 3
    %p267 = pnand %p265, %p266
    %p268 = pneg %p267
    // Predicated region
    $region9: #{mamba_cnn_mol_forward.4} parent=5 // pred_check
      _
    $region10: #{mamba_cnn_mol_forward.4} parent=5 // pred_check_branch
      %270 = sbr.rel (%p267) target = $region12
    $region11: #{mamba_cnn_mol_forward.4} parent=5 // pred_region
      %s271 = ssub.s32 %s16, 1
      // Predicated region
      $region13: #{mamba_cnn_mol_forward.4} parent=11 // pred_check
        %p272 = pneg %p63
      $region14: #{mamba_cnn_mol_forward.4} parent=11 // pred_check_branch
        %274 = sbr.rel (%p272) target = $region16
      $region15: #{mamba_cnn_mol_forward.4} parent=11 // pred_region
        _
      $region16: #{mamba_cnn_mol_forward.4} parent=11 // pred_fallthru
        _
      // Predicated region
      $region17: #{mamba_cnn_mol_forward.4} parent=11 // pred_check
        %p275 = pneg %p84
      $region18: #{mamba_cnn_mol_forward.4} parent=11 // pred_check_branch
        %277 = sbr.rel (%p275) target = $region20
      $region19: #{mamba_cnn_mol_forward.4} parent=11 // pred_region
        _
      $region20: #{mamba_cnn_mol_forward.4} parent=11 // pred_fallthru
        _
      // Predicated region
      $region21: #{mamba_cnn_mol_forward.4} parent=11 // pred_check
        %p278 = pneg %p105
      $region22: #{mamba_cnn_mol_forward.4} parent=11 // pred_check_branch
        %280 = sbr.rel (%p278) target = $region24
      $region23: #{mamba_cnn_mol_forward.4} parent=11 // pred_region
        _
      $region24: #{mamba_cnn_mol_forward.4} parent=11 // pred_fallthru
        _
      // Predicated region
      $region25: #{mamba_cnn_mol_forward.4} parent=11 // pred_check
        %p281 = pneg %p126
      $region26: #{mamba_cnn_mol_forward.4} parent=11 // pred_check_branch
        %283 = sbr.rel (%p281) target = $region28
      $region27: #{mamba_cnn_mol_forward.4} parent=11 // pred_region
        _
      $region28: #{mamba_cnn_mol_forward.4} parent=11 // pred_fallthru
        _
      // Predicated region
      $region29: #{mamba_cnn_mol_forward.4} parent=11 // pred_check
        %p284 = pneg %p147
      $region30: #{mamba_cnn_mol_forward.4} parent=11 // pred_check_branch
        %286 = sbr.rel (%p284) target = $region32
      $region31: #{mamba_cnn_mol_forward.4} parent=11 // pred_region
        _
      $region32: #{mamba_cnn_mol_forward.4} parent=11 // pred_fallthru
        _
      // Predicated region
      $region33: #{mamba_cnn_mol_forward.4} parent=11 // pred_check
        %p287 = pneg %p168
      $region34: #{mamba_cnn_mol_forward.4} parent=11 // pred_check_branch
        %289 = sbr.rel (%p287) target = $region36
      $region35: #{mamba_cnn_mol_forward.4} parent=11 // pred_region
        _
      $region36: #{mamba_cnn_mol_forward.4} parent=11 // pred_fallthru
        _
      // Predicated region
      $region37: #{mamba_cnn_mol_forward.4} parent=11 // pred_check
        %p290 = pneg %p189
      $region38: #{mamba_cnn_mol_forward.4} parent=11 // pred_check_branch
        %292 = sbr.rel (%p290) target = $region40
      $region39: #{mamba_cnn_mol_forward.4} parent=11 // pred_region
        _
      $region40: #{mamba_cnn_mol_forward.4} parent=11 // pred_fallthru
        _
      // Predicated region
      $region41: #{mamba_cnn_mol_forward.4} parent=11 // pred_check
        %p293 = pneg %p210
      $region42: #{mamba_cnn_mol_forward.4} parent=11 // pred_check_branch
        %295 = sbr.rel (%p293) target = $region44
      $region43: #{mamba_cnn_mol_forward.4} parent=11 // pred_region
        _
      $region44: #{mamba_cnn_mol_forward.4} parent=11 // pred_fallthru
        _
      // Predicated region
      $region45: #{mamba_cnn_mol_forward.4} parent=11 // pred_check
        %p296 = pneg %p231
      $region46: #{mamba_cnn_mol_forward.4} parent=11 // pred_check_branch
        %298 = sbr.rel (%p296) target = $region48
      $region47: #{mamba_cnn_mol_forward.4} parent=11 // pred_region
        _
      $region48: #{mamba_cnn_mol_forward.4} parent=11 // pred_fallthru
        _
    $region12: #{mamba_cnn_mol_forward.4} parent=5 // pred_fallthru
      _
    %p299 = scmp.lt.s32.totalorder %s16, 2
    // Predicated region
    $region49: #{mamba_cnn_mol_forward.4} parent=5 // pred_check
      %p300 = pneg %p299
    $region50: #{mamba_cnn_mol_forward.4} parent=5 // pred_check_branch
      %302 = sbr.rel (%p300) target = $region52
    $region51: #{mamba_cnn_mol_forward.4} parent=5 // pred_region
      // Predicated region
      $region53: #{mamba_cnn_mol_forward.4} parent=51 // pred_check
        %p303 = pneg %p36
      $region54: #{mamba_cnn_mol_forward.4} parent=51 // pred_check_branch
        %305 = sbr.rel (%p303) target = $region56
      $region55: #{mamba_cnn_mol_forward.4} parent=51 // pred_region
        %p306 = scmp.lt.s32.totalorder %s16, 1
        %s307 = scalar_select %p306, %s16, 1
        %s308 = smul.addr %s307, 4
        %s309 = scalar_lea.vmem %s0, %s308
      $region56: #{mamba_cnn_mol_forward.4} parent=51 // pred_fallthru
        _
    $region52: #{mamba_cnn_mol_forward.4} parent=5 // pred_fallthru
      _
    %p310 = scmp.le.s32.totalorder 1, %s16
    %p311 = scmp.lt.s32.totalorder %s16, 3
    %p312 = pnand %p310, %p311
    %p313 = pneg %p312
    // Predicated region
    $region57: #{mamba_cnn_mol_forward.4} parent=5 // pred_check
      _
    $region58: #{mamba_cnn_mol_forward.4} parent=5 // pred_check_branch
      %315 = sbr.rel (%p312) target = $region60
    $region59: #{mamba_cnn_mol_forward.4} parent=5 // pred_region
      %s316 = ssub.s32 %s16, 1
      %p317 = scmp.lt.s32.totalorder %s21, 1
      %s318 = scalar_select %p317, %s21, 1
      %s319 = smul.addr %s318, 4
      %s320 = scalar_lea.vmem %s0, %s319
      %p321 = pneg %p42
      %p322 = pneg %p39
      %p323 = pneg %p63
      %p324 = pneg %p60
      %p325 = pneg %p84
      %p326 = pneg %p81
      %p327 = pneg %p105
      %p328 = pneg %p102
      %p329 = pneg %p126
      %p330 = pneg %p123
      %p331 = pneg %p147
      %p332 = pneg %p144
      %p333 = pneg %p168
      %p334 = pneg %p165
      %p335 = pneg %p189
      %p336 = pneg %p186
      %p337 = pneg %p210
      %p338 = pneg %p207
      %p339 = pneg %p231
      %p340 = pneg %p228
      %p341 = pneg %p257
      %p342 = pneg %p254
      %p343 = scmp.lt.s32.totalorder %s21, 1
      %s344 = scalar_select %p343, %s21, 1
      %s345 = smul.addr %s344, 4
      %s346 = scalar_lea.vmem %s10, %s345
      %p347 = scmp.lt.s32.totalorder %s21, 1
      %s348 = scalar_select %p347, %s21, 1
      %s349 = smul.addr %s348, 4
      %s350 = scalar_lea.vmem %s0, %s349
      %p351 = scmp.lt.s32.totalorder %s21, 1
      %s352 = scalar_select %p351, %s21, 1
      %s353 = smul.addr %s352, 4
      %s354 = scalar_lea.vmem %s10, %s353
      %v356 = vld [vmem:[%s350] sm:$0xf]
      %v357 = vmul.f32 %v356, %v356
      %vm358 = vcmask 199680
      %v359 = vsel %vm358, %v357, 0.0
      %360 = vadd.xlane.f32.xlu0 %v359
      %v361 = vpop.xlane.xlu0 %360
      %v362 = vrcp.pop 25.0
      %v363 = vmul.f32 25.0, %v362
      %v364 = vsub.f32 1.0, %v363
      %v365 = vmul.f32 %v362, %v364
      %v366 = vadd.f32 %v362, %v365
      %vm367 = vweird.f32 %v362
      %v368 = vsel %vm367, %v362, %v366
      %v369 = vmul.f32 %v361, %v368
      %v370 = vadd.f32 %v369, 1e-05
      %v371 = vrsqrt.pop %v370
      %v372 = vmul.f32 %v371, %v370
      %v373 = vmul.f32 %v372, %v371
      %v374 = vmul.f32 0.5, %v373
      %v375 = vsub.f32 1.5, %v374
      %v376 = vmul.f32 %v371, %v375
      %vm377 = vweird.f32 %v370
      %vm378 = vweird.f32 %v371
      %vm379 = vmor %vm377, %vm378
      %v380 = vsel %vm379, %v371, %v376
      %v381 = vmul.f32 %v356, %v380
      %v382 = vld [vmem:[%s1] sm:$0x1]
      %v384 = vperm.slane %v382, 0
      %v386 = vmul.f32 %v381, %v384
      %v387 = vpack.c.bf16 %v386, %v386
      %v388 = vld [vmem:[%s2] sm:$0xf]
      %v389 = vld [vmem:[%s2 + $0x4] sm:$0xf]
      %v390 = vld [vmem:[%s2 + $0x8] sm:$0xf]
      %v391 = vld [vmem:[%s2 + $0xc] sm:$0x1]
      %v396 = vunpack.c.l.b16 %v388
      %v397 = vunpack.c.l.b16 %v389
      %v398 = vunpack.c.l.b16 %v390
      %v399 = vunpack.c.l.b16 %v391
      %v400 = vpack.c.b16 %v397, %v396
      %v401 = vpack.c.b16 %v399, %v398
      %vm403 = vcmask 203776
      %v405 = vsel %vm403, %v387, 0
      %vm407 = vcmask 1043456
      %vm408 = vcmask 1044480
      %v409 = vsel %vm407, 4294967295, 65535
      %v410 = vsel %vm408, %v409, 0
      %v412 = vand.u32 %v401, %v410
      %414 = vmatpush.bf16.msra.mxu0 0
      %415 = vmatpush.bf16.msra.mxu0 0
      %416 = vmatpush.bf16.msra.mxu0 0
      %417 = vmatpush.bf16.msra.mxu0 0
      %418 = vmatpush.bf16.msra.mxu0 0
      %419 = vmatpush.bf16.msra.mxu0 0
      %420 = vmatpush.bf16.msra.mxu0 %v412
      %421 = vmatpush.bf16.msra.mxu0 %v400
      %422 = vmatmul.bf16.gmra.mxu0 %v405
      %v423 = vpop.f32.mrf.mxu0
      %v424 = vadd.f32 0.0, %v423
      %v425 = vpop.f32.mrf.mxu0
      %426 = vdwg.mxu0
      %v427 = vld [vmem:[%s3] sm:$0xf]
      %v428 = vperm.slane %v427, 3
      %v429 = vmul.f32 %v424, %v428
      %v431 = vrot.slane %v424, 5
      %vm433 = vcmask 1042432
      %v434 = vsel %vm433, 0.0, %v431
      %v435 = vperm.slane %v427, 0
      %v436 = vmul.f32 %v434, %v435
      %v437 = vadd.f32 %v429, %v436
      %v438 = vrot.slane %v424, 6
      %vm440 = vcmask 1041408
      %v441 = vsel %vm440, 0.0, %v438
      %v442 = vperm.slane %v427, 1
      %v443 = vmul.f32 %v441, %v442
      %v444 = vadd.f32 %v437, %v443
      %v445 = vrot.slane %v424, 7
      %vm447 = vcmask 1040384
      %v448 = vsel %vm447, 0.0, %v445
      %v449 = vperm.slane %v427, 2
      %v450 = vmul.f32 %v448, %v449
      %v451 = vadd.f32 %v444, %v450
      %v452 = vld [vmem:[%s4] sm:$0x1]
      %v454 = vperm.slane %v452, 0
      %v456 = vadd.f32 %v451, %v454
      %v457 = vsub.f32 0.0, %v456
      %v458 = vmul.f32 %v457, 1.442695
      %v459 = vpow.pop %v458
      %v460 = vadd.f32 %v459, 1.0
      %v461 = vrcp.pop %v460
      %v462 = vmul.f32 %v456, %v461
      %v463 = vpack.c.bf16 %v462, %v462
      %v464 = vld [vmem:[%s5] sm:$0xf]
      %v465 = vld [vmem:[%s5 + $0x4] sm:$0xf]
      %v466 = vld [vmem:[%s5 + $0x8] sm:$0xf]
      %v467 = vld [vmem:[%s5 + $0xc] sm:$0xf]
      %v468 = vld [vmem:[%s5 + $0x10] sm:$0xf]
      %v469 = vld [vmem:[%s5 + $0x14] sm:$0xf]
      %v470 = vld [vmem:[%s5 + $0x18] sm:$0x1]
      %v478 = vunpack.c.l.b16 %v464
      %v479 = vunpack.c.l.b16 %v465
      %v480 = vunpack.c.l.b16 %v466
      %v481 = vunpack.c.l.b16 %v467
      %v482 = vunpack.c.l.b16 %v468
      %v483 = vunpack.c.l.b16 %v469
      %v484 = vunpack.c.l.b16 %v470
      %v485 = vpack.c.b16 %v479, %v478
      %v486 = vpack.c.b16 %v481, %v480
      %v487 = vpack.c.b16 %v483, %v482
      %v488 = vpack.c.b16 %v484, %v484
      %vm492 = vcmask 408576
      %v494 = vsel %vm492, %v463, 0
      %v497 = vsel %vm447, %v488, 0
      %499 = vmatpush.bf16.msra.mxu0 0
      %500 = vmatpush.bf16.msra.mxu0 0
      %501 = vmatpush.bf16.msra.mxu0 0
      %502 = vmatpush.bf16.msra.mxu0 0
      %503 = vmatpush.bf16.msra.mxu0 %v497
      %504 = vmatpush.bf16.msra.mxu0 %v487
      %505 = vmatpush.bf16.msra.mxu0 %v486
      %506 = vmatpush.bf16.msra.mxu0 %v485
      %507 = vmatmul.bf16.gmra.mxu0 %v494
      %v508 = vpop.f32.mrf.mxu0
      %v509 = vadd.f32 0.0, %v508
      %v510 = vpop.f32.mrf.mxu0
      %511 = vdwg.mxu0
      %v512 = vld [vmem:[%s6] sm:$0x1]
      %v514 = vperm.slane %v512, 0
      %v516 = vadd.f32 %v509, %v514
      %v517 = vmax.f32 %v516, 0.0
      %v518 = vand.u32 2147483647, %v516
      %v519 = vsub.f32 0.0, %v518
      %v520 = vmul.f32 %v519, 1.442695
      %v521 = vpow.pop %v520
      %v522 = vadd.f32 %v521, 1.0
      %v523 = vlog2.pop %v522
      %v524 = vmul.f32 %v523, 0.6931472
      %v525 = vmul.f32 -0.5, %v521
      %v526 = vadd.f32 %v525, 1.0
      %v527 = vmul.f32 %v526, %v521
      %v528 = vand.u32 2147483647, %v521
      %vm529 = vcmp.lt.f32.partialorder %v528, 0.0004427343
      %v530 = vsel %vm529, %v527, %v524
      %v531 = vadd.f32 %v517, %v530
      %v532 = vld [vmem:[%s7] sm:$0xff]
      %v533 = vld [vmem:[%s7 + $0x8] sm:$0xff]
      %v534 = vld [vmem:[%s8] sm:$0x1]
      %v535 = vperm.slane %v509, 0
      %v536 = vlaneseq
      %v537 = vshrl.u32 %v536, 7
      %v538 = vadd.s32 %v537, 50
      %539 = vset.pattern.permute.xlu0 %v538
      %540 = vperm.xlu0 %539, %v535
      %v541 = vpop.permute.xlu0 %540
      %v542 = vlaneseq
      %v543 = vshrl.u32 %v542, 7
      %v544 = vadd.s32 %v543, 58
      %545 = vset.pattern.permute.xlu0 %v544
      %546 = vperm.xlu0 %545, %v535
      %v547 = vpop.permute.xlu0 %546
      %v548 = vperm.slane %v531, 0
      %v549 = vmul.f32 %v548, %v532
      %v550 = vmul.f32 %v548, %v533
      %v551 = vmul.f32 %v549, 1.442695
      %v552 = vpow.pop %v551
      %v553 = vmul.f32 %v550, 1.442695
      %v554 = vpow.pop %v553
      %v555 = vmul.f32 %v552, 0.0
      %v556 = vmul.f32 %v554, 0.0
      %v557 = vmul.f32 %v531, %v462
      %v558 = vperm.slane %v557, 0
      %v559 = vmul.f32 %v541, %v558
      %v560 = vmul.f32 %v547, %v558
      %v561 = vadd.f32 %v555, %v559
      %v562 = vadd.f32 %v556, %v560
      %v563 = vmul.f32 %v534, %v462
      %565 = vrot.lane.b32.xlu0 %v509, 62
      %v566 = vpop.permute.xlu0 %565
      %vm567 = vcmask 130048
      %v568 = vsel %vm567, %v566, 0
      %570 = vmatpush.msra.mxu0 0.0
      %571 = vmatpush.msra.mxu0 0.0
      %572 = vmatpush.msra.mxu0 0.0
      %573 = vmatpush.msra.mxu0 0.0
      %574 = vmatpush.msra.mxu0 0.0
      %575 = vmatpush.msra.mxu0 0.0
      %576 = vmatpush.msra.mxu0 0.0
      %577 = vmatpush.msra.mxu0 0.0
      %578 = vmatpush.msra.mxu0 0.0
      %579 = vmatpush.msra.mxu0 0.0
      %580 = vmatpush.msra.mxu0 0.0
      %581 = vmatpush.msra.mxu0 0.0
      %582 = vmatpush.msra.mxu0 0.0
      %583 = vmatpush.msra.mxu0 0.0
      %584 = vmatpush.msra.mxu0 %v562
      %585 = vmatpush.msra.mxu0 %v561
      %586 = vmatmul.f32.gmra.mxu0 %v568
      %v587 = vpop.f32.mrf.mxu0
      %v588 = vadd.f32 %v563, %v587
      %589 = vdwg.mxu0
      %vm590 = vcmask 401408
      %591 = vst.msk [vmem:[#allocation2] sm:$0x1] %vm590, %v588
      %v592 = vperm.slane %v509, 1
      %v593 = vlaneseq
      %v594 = vshrl.u32 %v593, 7
      %v595 = vadd.s32 %v594, 50
      %596 = vset.pattern.permute.xlu0 %v595
      %597 = vperm.xlu0 %596, %v592
      %v598 = vpop.permute.xlu0 %597
      %v599 = vlaneseq
      %v600 = vshrl.u32 %v599, 7
      %v601 = vadd.s32 %v600, 58
      %602 = vset.pattern.permute.xlu0 %v601
      %603 = vperm.xlu0 %602, %v592
      %v604 = vpop.permute.xlu0 %603
      %v605 = vperm.slane %v531, 1
      %v606 = vmul.f32 %v605, %v532
      %v607 = vmul.f32 %v605, %v533
      %v608 = vmul.f32 %v606, 1.442695
      %v609 = vpow.pop %v608
      %v610 = vmul.f32 %v607, 1.442695
      %v611 = vpow.pop %v610
      %v612 = vmul.f32 %v609, %v561
      %v613 = vmul.f32 %v611, %v562
      %v614 = vperm.slane %v557, 1
      %v615 = vmul.f32 %v598, %v614
      %v616 = vmul.f32 %v604, %v614
      %v617 = vadd.f32 %v612, %v615
      %v618 = vadd.f32 %v613, %v616
      %620 = vst [vmem:[#allocation1] sm:$0xff] %v462
      %s621 = scalar_lea.vmem [#allocation1], 1
      %v622 = vld [vmem:[%s621] ss:$9 sm:$0xff]
      %v624 = vmul.f32 %v534, %v622
      %v625 = vrot.slane %v509, 1
      %626 = vrot.lane.b32.xlu0 %v625, 62
      %v627 = vpop.permute.xlu0 %626
      %v628 = vsel %vm567, %v627, 0
      %630 = vmatpush.msra.mxu0 0.0
      %631 = vmatpush.msra.mxu0 0.0
      %632 = vmatpush.msra.mxu0 0.0
      %633 = vmatpush.msra.mxu0 0.0
      %634 = vmatpush.msra.mxu0 0.0
      %635 = vmatpush.msra.mxu0 0.0
      %636 = vmatpush.msra.mxu0 0.0
      %637 = vmatpush.msra.mxu0 0.0
      %638 = vmatpush.msra.mxu0 0.0
      %639 = vmatpush.msra.mxu0 0.0
      %640 = vmatpush.msra.mxu0 0.0
      %641 = vmatpush.msra.mxu0 0.0
      %642 = vmatpush.msra.mxu0 0.0
      %643 = vmatpush.msra.mxu0 0.0
      %644 = vmatpush.msra.mxu0 %v618
      %645 = vmatpush.msra.mxu0 %v617
      %646 = vmatmul.f32.gmra.mxu0 %v628
      %v647 = vpop.f32.mrf.mxu0
      %v648 = vadd.f32 %v624, %v647
      %649 = vdwg.mxu0
      %650 = vst.msk [vmem:[#allocation2 + $0x1] sm:$0x1] %vm590, %v648
      %v651 = vperm.slane %v509, 2
      %v652 = vlaneseq
      %v653 = vshrl.u32 %v652, 7
      %v654 = vadd.s32 %v653, 50
      %655 = vset.pattern.permute.xlu0 %v654
      %656 = vperm.xlu0 %655, %v651
      %v657 = vpop.permute.xlu0 %656
      %v658 = vlaneseq
      %v659 = vshrl.u32 %v658, 7
      %v660 = vadd.s32 %v659, 58
      %661 = vset.pattern.permute.xlu0 %v660
      %662 = vperm.xlu0 %661, %v651
      %v663 = vpop.permute.xlu0 %662
      %v664 = vperm.slane %v531, 2
      %v665 = vmul.f32 %v664, %v532
      %v666 = vmul.f32 %v664, %v533
      %v667 = vmul.f32 %v665, 1.442695
      %v668 = vpow.pop %v667
      %v669 = vmul.f32 %v666, 1.442695
      %v670 = vpow.pop %v669
      %v671 = vmul.f32 %v668, %v617
      %v672 = vmul.f32 %v670, %v618
      %v673 = vperm.slane %v557, 2
      %v674 = vmul.f32 %v657, %v673
      %v675 = vmul.f32 %v663, %v673
      %v676 = vadd.f32 %v671, %v674
      %v677 = vadd.f32 %v672, %v675
      %678 = vst [vmem:[#allocation1] sm:$0xff] %v462
      %s679 = scalar_lea.vmem [#allocation1], 2
      %v680 = vld [vmem:[%s679] ss:$9 sm:$0xff]
      %v682 = vmul.f32 %v534, %v680
      %v683 = vrot.slane %v509, 2
      %684 = vrot.lane.b32.xlu0 %v683, 62
      %v685 = vpop.permute.xlu0 %684
      %v686 = vsel %vm567, %v685, 0
      %688 = vmatpush.msra.mxu0 0.0
      %689 = vmatpush.msra.mxu0 0.0
      %690 = vmatpush.msra.mxu0 0.0
      %691 = vmatpush.msra.mxu0 0.0
      %692 = vmatpush.msra.mxu0 0.0
      %693 = vmatpush.msra.mxu0 0.0
      %694 = vmatpush.msra.mxu0 0.0
      %695 = vmatpush.msra.mxu0 0.0
      %696 = vmatpush.msra.mxu0 0.0
      %697 = vmatpush.msra.mxu0 0.0
      %698 = vmatpush.msra.mxu0 0.0
      %699 = vmatpush.msra.mxu0 0.0
      %700 = vmatpush.msra.mxu0 0.0
      %701 = vmatpush.msra.mxu0 0.0
      %702 = vmatpush.msra.mxu0 %v677
      %703 = vmatpush.msra.mxu0 %v676
      %704 = vmatmul.f32.gmra.mxu0 %v686
      %v705 = vpop.f32.mrf.mxu0
      %v706 = vadd.f32 %v682, %v705
      %707 = vdwg.mxu0
      %708 = vst.msk [vmem:[#allocation2 + $0x2] sm:$0x1] %vm590, %v706
      %v709 = vperm.slane %v509, 3
      %v710 = vlaneseq
      %v711 = vshrl.u32 %v710, 7
      %v712 = vadd.s32 %v711, 50
      %713 = vset.pattern.permute.xlu0 %v712
      %714 = vperm.xlu0 %713, %v709
      %v715 = vpop.permute.xlu0 %714
      %v716 = vlaneseq
      %v717 = vshrl.u32 %v716, 7
      %v718 = vadd.s32 %v717, 58
      %719 = vset.pattern.permute.xlu0 %v718
      %720 = vperm.xlu0 %719, %v709
      %v721 = vpop.permute.xlu0 %720
      %v722 = vperm.slane %v531, 3
      %v723 = vmul.f32 %v722, %v532
      %v724 = vmul.f32 %v722, %v533
      %v725 = vmul.f32 %v723, 1.442695
      %v726 = vpow.pop %v725
      %v727 = vmul.f32 %v724, 1.442695
      %v728 = vpow.pop %v727
      %v729 = vmul.f32 %v726, %v676
      %v730 = vmul.f32 %v728, %v677
      %v731 = vperm.slane %v557, 3
      %v732 = vmul.f32 %v715, %v731
      %v733 = vmul.f32 %v721, %v731
      %v734 = vadd.f32 %v729, %v732
      %v735 = vadd.f32 %v730, %v733
      %736 = vst [vmem:[#allocation1] sm:$0xff] %v462
      %s737 = scalar_lea.vmem [#allocation1], 3
      %v738 = vld [vmem:[%s737] ss:$9 sm:$0xff]
      %v740 = vmul.f32 %v534, %v738
      %v741 = vrot.slane %v509, 3
      %742 = vrot.lane.b32.xlu0 %v741, 62
      %v743 = vpop.permute.xlu0 %742
      %v744 = vsel %vm567, %v743, 0
      %746 = vmatpush.msra.mxu0 0.0
      %747 = vmatpush.msra.mxu0 0.0
      %748 = vmatpush.msra.mxu0 0.0
      %749 = vmatpush.msra.mxu0 0.0
      %750 = vmatpush.msra.mxu0 0.0
      %751 = vmatpush.msra.mxu0 0.0
      %752 = vmatpush.msra.mxu0 0.0
      %753 = vmatpush.msra.mxu0 0.0
      %754 = vmatpush.msra.mxu0 0.0
      %755 = vmatpush.msra.mxu0 0.0
      %756 = vmatpush.msra.mxu0 0.0
      %757 = vmatpush.msra.mxu0 0.0
      %758 = vmatpush.msra.mxu0 0.0
      %759 = vmatpush.msra.mxu0 0.0
      %760 = vmatpush.msra.mxu0 %v735
      %761 = vmatpush.msra.mxu0 %v734
      %762 = vmatmul.f32.gmra.mxu0 %v744
      %v763 = vpop.f32.mrf.mxu0
      %v764 = vadd.f32 %v740, %v763
      %765 = vdwg.mxu0
      %766 = vst.msk [vmem:[#allocation2 + $0x3] sm:$0x1] %vm590, %v764
      %v767 = vld [vmem:[#allocation2] sm:$0xf]
      %v768 = vsub.f32 0.0, %v424
      %v769 = vmul.f32 %v768, 1.442695
      %v770 = vpow.pop %v769
      %v771 = vadd.f32 %v770, 1.0
      %v772 = vrcp.pop %v771
      %v773 = vmul.f32 %v424, %v772
      %775 = vrot.lane.b32.xlu0 %v773, 78
      %v776 = vpop.permute.xlu0 %775
      %v778 = vmul.f32 %v767, %v776
      %v779 = vpack.c.bf16 %v778, %v778
      %v780 = vld [vmem:[%s9] sm:$0xf]
      %v781 = vld [vmem:[%s9 + $0x4] sm:$0xf]
      %v782 = vld [vmem:[%s9 + $0x8] sm:$0xf]
      %v783 = vld [vmem:[%s9 + $0xc] sm:$0xf]
      %v784 = vld [vmem:[%s9 + $0x10] sm:$0xf]
      %v785 = vld [vmem:[%s9 + $0x14] sm:$0xf]
      %v786 = vld [vmem:[%s9 + $0x18] sm:$0x1]
      %v794 = vunpack.c.l.b16 %v780
      %v795 = vunpack.c.l.b16 %v781
      %v796 = vunpack.c.l.b16 %v782
      %v797 = vunpack.c.l.b16 %v783
      %v798 = vunpack.c.l.b16 %v784
      %v799 = vunpack.c.l.b16 %v785
      %v800 = vunpack.c.l.b16 %v786
      %v801 = vpack.c.b16 %v795, %v794
      %v802 = vpack.c.b16 %v797, %v796
      %v803 = vpack.c.b16 %v799, %v798
      %v804 = vpack.c.b16 %v800, %v800
      %v809 = vsel %vm492, %v779, 0
      %v812 = vsel %vm447, %v804, 0
      %814 = vmatpush.bf16.msra.mxu0 0
      %815 = vmatpush.bf16.msra.mxu0 0
      %816 = vmatpush.bf16.msra.mxu0 0
      %817 = vmatpush.bf16.msra.mxu0 0
      %818 = vmatpush.bf16.msra.mxu0 %v812
      %819 = vmatpush.bf16.msra.mxu0 %v803
      %820 = vmatpush.bf16.msra.mxu0 %v802
      %821 = vmatpush.bf16.msra.mxu0 %v801
      %822 = vmatmul.bf16.gmra.mxu0 %v809
      %v823 = vpop.f32.mrf.mxu0
      %v824 = vadd.f32 0.0, %v823
      %v825 = vpop.f32.mrf.mxu0
      %826 = vdwg.mxu0
      %v827 = vadd.f32 %v356, %v824
      %v828 = vmul.f32 %v827, %v827
      %v829 = vsel %vm358, %v828, 0.0
      %830 = vadd.xlane.f32.xlu0 %v829
      %v831 = vpop.xlane.xlu0 %830
      %v832 = vmul.f32 %v831, %v368
      %v833 = vadd.f32 %v832, 1e-05
      %v834 = vrsqrt.pop %v833
      %v835 = vmul.f32 %v834, %v833
      %v836 = vmul.f32 %v835, %v834
      %v837 = vmul.f32 0.5, %v836
      %v838 = vsub.f32 1.5, %v837
      %v839 = vmul.f32 %v834, %v838
      %vm840 = vweird.f32 %v833
      %vm841 = vweird.f32 %v834
      %vm842 = vmor %vm840, %vm841
      %v843 = vsel %vm842, %v834, %v839
      %v844 = vmul.f32 %v827, %v843
      %s845 = scalar_lea.vmem %s1, 1
      %v846 = vld [vmem:[%s845] sm:$0x1]
      %v848 = vperm.slane %v846, 0
      %v850 = vmul.f32 %v844, %v848
      %v851 = vpack.c.bf16 %v850, %v850
      %s852 = scalar_lea.vmem %s2, 16
      %v853 = vld [vmem:[%s852] sm:$0xf]
      %v854 = vld [vmem:[%s852 + $0x4] sm:$0xf]
      %v855 = vld [vmem:[%s852 + $0x8] sm:$0xf]
      %v856 = vld [vmem:[%s852 + $0xc] sm:$0x1]
      %v861 = vunpack.c.l.b16 %v853
      %v862 = vunpack.c.l.b16 %v854
      %v863 = vunpack.c.l.b16 %v855
      %v864 = vunpack.c.l.b16 %v856
      %v865 = vpack.c.b16 %v862, %v861
      %v866 = vpack.c.b16 %v864, %v863
      %v869 = vsel %vm403, %v851, 0
      %v872 = vand.u32 %v866, %v410
      %874 = vmatpush.bf16.msra.mxu0 0
      %875 = vmatpush.bf16.msra.mxu0 0
      %876 = vmatpush.bf16.msra.mxu0 0
      %877 = vmatpush.bf16.msra.mxu0 0
      %878 = vmatpush.bf16.msra.mxu0 0
      %879 = vmatpush.bf16.msra.mxu0 0
      %880 = vmatpush.bf16.msra.mxu0 %v872
      %881 = vmatpush.bf16.msra.mxu0 %v865
      %882 = vmatmul.bf16.gmra.mxu0 %v869
      %v883 = vpop.f32.mrf.mxu0
      %v884 = vadd.f32 0.0, %v883
      %v885 = vpop.f32.mrf.mxu0
      %886 = vdwg.mxu0
      %s887 = scalar_lea.vmem %s3, 4
      %v888 = vld [vmem:[%s887] sm:$0xf]
      %v889 = vperm.slane %v888, 3
      %v890 = vmul.f32 %v884, %v889
      %v892 = vrot.slane %v884, 5
      %v894 = vsel %vm433, 0.0, %v892
      %v895 = vperm.slane %v888, 0
      %v896 = vmul.f32 %v894, %v895
      %v897 = vadd.f32 %v890, %v896
      %v898 = vrot.slane %v884, 6
      %v900 = vsel %vm440, 0.0, %v898
      %v901 = vperm.slane %v888, 1
      %v902 = vmul.f32 %v900, %v901
      %v903 = vadd.f32 %v897, %v902
      %v904 = vrot.slane %v884, 7
      %v906 = vsel %vm447, 0.0, %v904
      %v907 = vperm.slane %v888, 2
      %v908 = vmul.f32 %v906, %v907
      %v909 = vadd.f32 %v903, %v908
      %s910 = scalar_lea.vmem %s4, 1
      %v911 = vld [vmem:[%s910] sm:$0x1]
      %v913 = vperm.slane %v911, 0
      %v915 = vadd.f32 %v909, %v913
      %v916 = vsub.f32 0.0, %v915
      %v917 = vmul.f32 %v916, 1.442695
      %v918 = vpow.pop %v917
      %v919 = vadd.f32 %v918, 1.0
      %v920 = vrcp.pop %v919
      %v921 = vmul.f32 %v915, %v920
      %v922 = vpack.c.bf16 %v921, %v921
      %s923 = scalar_lea.vmem %s5, 28
      %v924 = vld [vmem:[%s923] sm:$0xf]
      %v925 = vld [vmem:[%s923 + $0x4] sm:$0xf]
      %v926 = vld [vmem:[%s923 + $0x8] sm:$0xf]
      %v927 = vld [vmem:[%s923 + $0xc] sm:$0xf]
      %v928 = vld [vmem:[%s923 + $0x10] sm:$0xf]
      %v929 = vld [vmem:[%s923 + $0x14] sm:$0xf]
      %v930 = vld [vmem:[%s923 + $0x18] sm:$0x1]
      %v938 = vunpack.c.l.b16 %v924
      %v939 = vunpack.c.l.b16 %v925
      %v940 = vunpack.c.l.b16 %v926
      %v941 = vunpack.c.l.b16 %v927
      %v942 = vunpack.c.l.b16 %v928
      %v943 = vunpack.c.l.b16 %v929
      %v944 = vunpack.c.l.b16 %v930
      %v945 = vpack.c.b16 %v939, %v938
      %v946 = vpack.c.b16 %v941, %v940
      %v947 = vpack.c.b16 %v943, %v942
      %v948 = vpack.c.b16 %v944, %v944
      %v953 = vsel %vm492, %v922, 0
      %v956 = vsel %vm447, %v948, 0
      %958 = vmatpush.bf16.msra.mxu0 0
      %959 = vmatpush.bf16.msra.mxu0 0
      %960 = vmatpush.bf16.msra.mxu0 0
      %961 = vmatpush.bf16.msra.mxu0 0
      %962 = vmatpush.bf16.msra.mxu0 %v956
      %963 = vmatpush.bf16.msra.mxu0 %v947
      %964 = vmatpush.bf16.msra.mxu0 %v946
      %965 = vmatpush.bf16.msra.mxu0 %v945
      %966 = vmatmul.bf16.gmra.mxu0 %v953
      %v967 = vpop.f32.mrf.mxu0
      %v968 = vadd.f32 0.0, %v967
      %v969 = vpop.f32.mrf.mxu0
      %970 = vdwg.mxu0
      %s971 = scalar_lea.vmem %s6, 1
      %v972 = vld [vmem:[%s971] sm:$0x1]
      %v974 = vperm.slane %v972, 0
      %v976 = vadd.f32 %v968, %v974
      %v977 = vmax.f32 %v976, 0.0
      %v978 = vand.u32 2147483647, %v976
      %v979 = vsub.f32 0.0, %v978
      %v980 = vmul.f32 %v979, 1.442695
      %v981 = vpow.pop %v980
      %v982 = vadd.f32 %v981, 1.0
      %v983 = vlog2.pop %v982
      %v984 = vmul.f32 %v983, 0.6931472
      %v985 = vmul.f32 -0.5, %v981
      %v986 = vadd.f32 %v985, 1.0
      %v987 = vmul.f32 %v986, %v981
      %v988 = vand.u32 2147483647, %v981
      %vm989 = vcmp.lt.f32.partialorder %v988, 0.0004427343
      %v990 = vsel %vm989, %v987, %v984
      %v991 = vadd.f32 %v977, %v990
      %s992 = scalar_lea.vmem %s7, 16
      %v993 = vld [vmem:[%s992] sm:$0xff]
      %v994 = vld [vmem:[%s992 + $0x8] sm:$0xff]
      %s995 = scalar_lea.vmem %s8, 1
      %v996 = vld [vmem:[%s995] sm:$0x1]
      %v997 = vperm.slane %v968, 0
      %v998 = vlaneseq
      %v999 = vshrl.u32 %v998, 7
      %v1000 = vadd.s32 %v999, 50
      %1001 = vset.pattern.permute.xlu0 %v1000
      %1002 = vperm.xlu0 %1001, %v997
      %v1003 = vpop.permute.xlu0 %1002
      %v1004 = vlaneseq
      %v1005 = vshrl.u32 %v1004, 7
      %v1006 = vadd.s32 %v1005, 58
      %1007 = vset.pattern.permute.xlu0 %v1006
      %1008 = vperm.xlu0 %1007, %v997
      %v1009 = vpop.permute.xlu0 %1008
      %v1010 = vperm.slane %v991, 0
      %v1011 = vmul.f32 %v1010, %v993
      %v1012 = vmul.f32 %v1010, %v994
      %v1013 = vmul.f32 %v1011, 1.442695
      %v1014 = vpow.pop %v1013
      %v1015 = vmul.f32 %v1012, 1.442695
      %v1016 = vpow.pop %v1015
      %v1017 = vmul.f32 %v1014, 0.0
      %v1018 = vmul.f32 %v1016, 0.0
      %v1019 = vmul.f32 %v991, %v921
      %v1020 = vperm.slane %v1019, 0
      %v1021 = vmul.f32 %v1003, %v1020
      %v1022 = vmul.f32 %v1009, %v1020
      %v1023 = vadd.f32 %v1017, %v1021
      %v1024 = vadd.f32 %v1018, %v1022
      %v1025 = vmul.f32 %v996, %v921
      %1027 = vrot.lane.b32.xlu0 %v968, 62
      %v1028 = vpop.permute.xlu0 %1027
      %v1029 = vsel %vm567, %v1028, 0
      %1031 = vmatpush.msra.mxu0 0.0
      %1032 = vmatpush.msra.mxu0 0.0
      %1033 = vmatpush.msra.mxu0 0.0
      %1034 = vmatpush.msra.mxu0 0.0
      %1035 = vmatpush.msra.mxu0 0.0
      %1036 = vmatpush.msra.mxu0 0.0
      %1037 = vmatpush.msra.mxu0 0.0
      %1038 = vmatpush.msra.mxu0 0.0
      %1039 = vmatpush.msra.mxu0 0.0
      %1040 = vmatpush.msra.mxu0 0.0
      %1041 = vmatpush.msra.mxu0 0.0
      %1042 = vmatpush.msra.mxu0 0.0
      %1043 = vmatpush.msra.mxu0 0.0
      %1044 = vmatpush.msra.mxu0 0.0
      %1045 = vmatpush.msra.mxu0 %v1024
      %1046 = vmatpush.msra.mxu0 %v1023
      %1047 = vmatmul.f32.gmra.mxu0 %v1029
      %v1048 = vpop.f32.mrf.mxu0
      %v1049 = vadd.f32 %v1025, %v1048
      %1050 = vdwg.mxu0
      %1051 = vst.msk [vmem:[#allocation2] sm:$0x1] %vm590, %v1049
      %v1052 = vperm.slane %v968, 1
      %v1053 = vlaneseq
      %v1054 = vshrl.u32 %v1053, 7
      %v1055 = vadd.s32 %v1054, 50
      %1056 = vset.pattern.permute.xlu0 %v1055
      %1057 = vperm.xlu0 %1056, %v1052
      %v1058 = vpop.permute.xlu0 %1057
      %v1059 = vlaneseq
      %v1060 = vshrl.u32 %v1059, 7
      %v1061 = vadd.s32 %v1060, 58
      %1062 = vset.pattern.permute.xlu0 %v1061
      %1063 = vperm.xlu0 %1062, %v1052
      %v1064 = vpop.permute.xlu0 %1063
      %v1065 = vperm.slane %v991, 1
      %v1066 = vmul.f32 %v1065, %v993
      %v1067 = vmul.f32 %v1065, %v994
      %v1068 = vmul.f32 %v1066, 1.442695
      %v1069 = vpow.pop %v1068
      %v1070 = vmul.f32 %v1067, 1.442695
      %v1071 = vpow.pop %v1070
      %v1072 = vmul.f32 %v1069, %v1023
      %v1073 = vmul.f32 %v1071, %v1024
      %v1074 = vperm.slane %v1019, 1
      %v1075 = vmul.f32 %v1058, %v1074
      %v1076 = vmul.f32 %v1064, %v1074
      %v1077 = vadd.f32 %v1072, %v1075
      %v1078 = vadd.f32 %v1073, %v1076
      %1080 = vst [vmem:[#allocation1] sm:$0xff] %v921
      %s1081 = scalar_lea.vmem [#allocation1], 1
      %v1082 = vld [vmem:[%s1081] ss:$9 sm:$0xff]
      %v1084 = vmul.f32 %v996, %v1082
      %v1085 = vrot.slane %v968, 1
      %1086 = vrot.lane.b32.xlu0 %v1085, 62
      %v1087 = vpop.permute.xlu0 %1086
      %v1088 = vsel %vm567, %v1087, 0
      %1090 = vmatpush.msra.mxu0 0.0
      %1091 = vmatpush.msra.mxu0 0.0
      %1092 = vmatpush.msra.mxu0 0.0
      %1093 = vmatpush.msra.mxu0 0.0
      %1094 = vmatpush.msra.mxu0 0.0
      %1095 = vmatpush.msra.mxu0 0.0
      %1096 = vmatpush.msra.mxu0 0.0
      %1097 = vmatpush.msra.mxu0 0.0
      %1098 = vmatpush.msra.mxu0 0.0
      %1099 = vmatpush.msra.mxu0 0.0
      %1100 = vmatpush.msra.mxu0 0.0
      %1101 = vmatpush.msra.mxu0 0.0
      %1102 = vmatpush.msra.mxu0 0.0
      %1103 = vmatpush.msra.mxu0 0.0
      %1104 = vmatpush.msra.mxu0 %v1078
      %1105 = vmatpush.msra.mxu0 %v1077
      %1106 = vmatmul.f32.gmra.mxu0 %v1088
      %v1107 = vpop.f32.mrf.mxu0
      %v1108 = vadd.f32 %v1084, %v1107
      %1109 = vdwg.mxu0
      %1110 = vst.msk [vmem:[#allocation2 + $0x1] sm:$0x1] %vm590, %v1108
      %v1111 = vperm.slane %v968, 2
      %v1112 = vlaneseq
      %v1113 = vshrl.u32 %v1112, 7
      %v1114 = vadd.s32 %v1113, 50
      %1115 = vset.pattern.permute.xlu0 %v1114
      %1116 = vperm.xlu0 %1115, %v1111
      %v1117 = vpop.permute.xlu0 %1116
      %v1118 = vlaneseq
      %v1119 = vshrl.u32 %v1118, 7
      %v1120 = vadd.s32 %v1119, 58
      %1121 = vset.pattern.permute.xlu0 %v1120
      %1122 = vperm.xlu0 %1121, %v1111
      %v1123 = vpop.permute.xlu0 %1122
      %v1124 = vperm.slane %v991, 2
      %v1125 = vmul.f32 %v1124, %v993
      %v1126 = vmul.f32 %v1124, %v994
      %v1127 = vmul.f32 %v1125, 1.442695
      %v1128 = vpow.pop %v1127
      %v1129 = vmul.f32 %v1126, 1.442695
      %v1130 = vpow.pop %v1129
      %v1131 = vmul.f32 %v1128, %v1077
      %v1132 = vmul.f32 %v1130, %v1078
      %v1133 = vperm.slane %v1019, 2
      %v1134 = vmul.f32 %v1117, %v1133
      %v1135 = vmul.f32 %v1123, %v1133
      %v1136 = vadd.f32 %v1131, %v1134
      %v1137 = vadd.f32 %v1132, %v1135
      %1138 = vst [vmem:[#allocation1] sm:$0xff] %v921
      %s1139 = scalar_lea.vmem [#allocation1], 2
      %v1140 = vld [vmem:[%s1139] ss:$9 sm:$0xff]
      %v1142 = vmul.f32 %v996, %v1140
      %v1143 = vrot.slane %v968, 2
      %1144 = vrot.lane.b32.xlu0 %v1143, 62
      %v1145 = vpop.permute.xlu0 %1144
      %v1146 = vsel %vm567, %v1145, 0
      %1148 = vmatpush.msra.mxu0 0.0
      %1149 = vmatpush.msra.mxu0 0.0
      %1150 = vmatpush.msra.mxu0 0.0
      %1151 = vmatpush.msra.mxu0 0.0
      %1152 = vmatpush.msra.mxu0 0.0
      %1153 = vmatpush.msra.mxu0 0.0
      %1154 = vmatpush.msra.mxu0 0.0
      %1155 = vmatpush.msra.mxu0 0.0
      %1156 = vmatpush.msra.mxu0 0.0
      %1157 = vmatpush.msra.mxu0 0.0
      %1158 = vmatpush.msra.mxu0 0.0
      %1159 = vmatpush.msra.mxu0 0.0
      %1160 = vmatpush.msra.mxu0 0.0
      %1161 = vmatpush.msra.mxu0 0.0
      %1162 = vmatpush.msra.mxu0 %v1137
      %1163 = vmatpush.msra.mxu0 %v1136
      %1164 = vmatmul.f32.gmra.mxu0 %v1146
      %v1165 = vpop.f32.mrf.mxu0
      %v1166 = vadd.f32 %v1142, %v1165
      %1167 = vdwg.mxu0
      %1168 = vst.msk [vmem:[#allocation2 + $0x2] sm:$0x1] %vm590, %v1166
      %v1169 = vperm.slane %v968, 3
      %v1170 = vlaneseq
      %v1171 = vshrl.u32 %v1170, 7
      %v1172 = vadd.s32 %v1171, 50
      %1173 = vset.pattern.permute.xlu0 %v1172
      %1174 = vperm.xlu0 %1173, %v1169
      %v1175 = vpop.permute.xlu0 %1174
      %v1176 = vlaneseq
      %v1177 = vshrl.u32 %v1176, 7
      %v1178 = vadd.s32 %v1177, 58
      %1179 = vset.pattern.permute.xlu0 %v1178
      %1180 = vperm.xlu0 %1179, %v1169
      %v1181 = vpop.permute.xlu0 %1180
      %v1182 = vperm.slane %v991, 3
      %v1183 = vmul.f32 %v1182, %v993
      %v1184 = vmul.f32 %v1182, %v994
      %v1185 = vmul.f32 %v1183, 1.442695
      %v1186 = vpow.pop %v1185
      %v1187 = vmul.f32 %v1184, 1.442695
      %v1188 = vpow.pop %v1187
      %v1189 = vmul.f32 %v1186, %v1136
      %v1190 = vmul.f32 %v1188, %v1137
      %v1191 = vperm.slane %v1019, 3
      %v1192 = vmul.f32 %v1175, %v1191
      %v1193 = vmul.f32 %v1181, %v1191
      %v1194 = vadd.f32 %v1189, %v1192
      %v1195 = vadd.f32 %v1190, %v1193
      %1196 = vst [vmem:[#allocation1] sm:$0xff] %v921
      %s1197 = scalar_lea.vmem [#allocation1], 3
      %v1198 = vld [vmem:[%s1197] ss:$9 sm:$0xff]
      %v1200 = vmul.f32 %v996, %v1198
      %v1201 = vrot.slane %v968, 3
      %1202 = vrot.lane.b32.xlu0 %v1201, 62
      %v1203 = vpop.permute.xlu0 %1202
      %v1204 = vsel %vm567, %v1203, 0
      %1206 = vmatpush.msra.mxu0 0.0
      %1207 = vmatpush.msra.mxu0 0.0
      %1208 = vmatpush.msra.mxu0 0.0
      %1209 = vmatpush.msra.mxu0 0.0
      %1210 = vmatpush.msra.mxu0 0.0
      %1211 = vmatpush.msra.mxu0 0.0
      %1212 = vmatpush.msra.mxu0 0.0
      %1213 = vmatpush.msra.mxu0 0.0
      %1214 = vmatpush.msra.mxu0 0.0
      %1215 = vmatpush.msra.mxu0 0.0
      %1216 = vmatpush.msra.mxu0 0.0
      %1217 = vmatpush.msra.mxu0 0.0
      %1218 = vmatpush.msra.mxu0 0.0
      %1219 = vmatpush.msra.mxu0 0.0
      %1220 = vmatpush.msra.mxu0 %v1195
      %1221 = vmatpush.msra.mxu0 %v1194
      %1222 = vmatmul.f32.gmra.mxu0 %v1204
      %v1223 = vpop.f32.mrf.mxu0
      %v1224 = vadd.f32 %v1200, %v1223
      %1225 = vdwg.mxu0
      %1226 = vst.msk [vmem:[#allocation2 + $0x3] sm:$0x1] %vm590, %v1224
      %v1227 = vld [vmem:[#allocation2] sm:$0xf]
      %v1228 = vsub.f32 0.0, %v884
      %v1229 = vmul.f32 %v1228, 1.442695
      %v1230 = vpow.pop %v1229
      %v1231 = vadd.f32 %v1230, 1.0
      %v1232 = vrcp.pop %v1231
      %v1233 = vmul.f32 %v884, %v1232
      %1235 = vrot.lane.b32.xlu0 %v1233, 78
      %v1236 = vpop.permute.xlu0 %1235
      %v1238 = vmul.f32 %v1227, %v1236
      %v1239 = vpack.c.bf16 %v1238, %v1238
      %s1240 = scalar_lea.vmem %s9, 28
      %v1241 = vld [vmem:[%s1240] sm:$0xf]
      %v1242 = vld [vmem:[%s1240 + $0x4] sm:$0xf]
      %v1243 = vld [vmem:[%s1240 + $0x8] sm:$0xf]
      %v1244 = vld [vmem:[%s1240 + $0xc] sm:$0xf]
      %v1245 = vld [vmem:[%s1240 + $0x10] sm:$0xf]
      %v1246 = vld [vmem:[%s1240 + $0x14] sm:$0xf]
      %v1247 = vld [vmem:[%s1240 + $0x18] sm:$0x1]
      %v1255 = vunpack.c.l.b16 %v1241
      %v1256 = vunpack.c.l.b16 %v1242
      %v1257 = vunpack.c.l.b16 %v1243
      %v1258 = vunpack.c.l.b16 %v1244
      %v1259 = vunpack.c.l.b16 %v1245
      %v1260 = vunpack.c.l.b16 %v1246
      %v1261 = vunpack.c.l.b16 %v1247
      %v1262 = vpack.c.b16 %v1256, %v1255
      %v1263 = vpack.c.b16 %v1258, %v1257
      %v1264 = vpack.c.b16 %v1260, %v1259
      %v1265 = vpack.c.b16 %v1261, %v1261
      %v1270 = vsel %vm492, %v1239, 0
      %v1273 = vsel %vm447, %v1265, 0
      %1275 = vmatpush.bf16.msra.mxu0 0
      %1276 = vmatpush.bf16.msra.mxu0 0
      %1277 = vmatpush.bf16.msra.mxu0 0
      %1278 = vmatpush.bf16.msra.mxu0 0
      %1279 = vmatpush.bf16.msra.mxu0 %v1273
      %1280 = vmatpush.bf16.msra.mxu0 %v1264
      %1281 = vmatpush.bf16.msra.mxu0 %v1263
      %1282 = vmatpush.bf16.msra.mxu0 %v1262
      %1283 = vmatmul.bf16.gmra.mxu0 %v1270
      %v1284 = vpop.f32.mrf.mxu0
      %v1285 = vadd.f32 0.0, %v1284
      %v1286 = vpop.f32.mrf.mxu0
      %1287 = vdwg.mxu0
      %v1288 = vadd.f32 %v827, %v1285
      %v1289 = vmul.f32 %v1288, %v1288
      %v1290 = vsel %vm358, %v1289, 0.0
      %1291 = vadd.xlane.f32.xlu0 %v1290
      %v1292 = vpop.xlane.xlu0 %1291
      %v1293 = vmul.f32 %v1292, %v368
      %v1294 = vadd.f32 %v1293, 1e-05
      %v1295 = vrsqrt.pop %v1294
      %v1296 = vmul.f32 %v1295, %v1294
      %v1297 = vmul.f32 %v1296, %v1295
      %v1298 = vmul.f32 0.5, %v1297
      %v1299 = vsub.f32 1.5, %v1298
      %v1300 = vmul.f32 %v1295, %v1299
      %vm1301 = vweird.f32 %v1294
      %vm1302 = vweird.f32 %v1295
      %vm1303 = vmor %vm1301, %vm1302
      %v1304 = vsel %vm1303, %v1295, %v1300
      %v1305 = vmul.f32 %v1288, %v1304
      %s1306 = scalar_lea.vmem %s1, 2
      %v1307 = vld [vmem:[%s1306] sm:$0x1]
      %v1309 = vperm.slane %v1307, 0
      %v1311 = vmul.f32 %v1305, %v1309
      %v1312 = vpack.c.bf16 %v1311, %v1311
      %s1313 = scalar_lea.vmem %s2, 32
      %v1314 = vld [vmem:[%s1313] sm:$0xf]
      %v1315 = vld [vmem:[%s1313 + $0x4] sm:$0xf]
      %v1316 = vld [vmem:[%s1313 + $0x8] sm:$0xf]
      %v1317 = vld [vmem:[%s1313 + $0xc] sm:$0x1]
      %v1322 = vunpack.c.l.b16 %v1314
      %v1323 = vunpack.c.l.b16 %v1315
      %v1324 = vunpack.c.l.b16 %v1316
      %v1325 = vunpack.c.l.b16 %v1317
      %v1326 = vpack.c.b16 %v1323, %v1322
      %v1327 = vpack.c.b16 %v1325, %v1324
      %v1330 = vsel %vm403, %v1312, 0
      %v1333 = vand.u32 %v1327, %v410
      %1335 = vmatpush.bf16.msra.mxu0 0
      %1336 = vmatpush.bf16.msra.mxu0 0
      %1337 = vmatpush.bf16.msra.mxu0 0
      %1338 = vmatpush.bf16.msra.mxu0 0
      %1339 = vmatpush.bf16.msra.mxu0 0
      %1340 = vmatpush.bf16.msra.mxu0 0
      %1341 = vmatpush.bf16.msra.mxu0 %v1333
      %1342 = vmatpush.bf16.msra.mxu0 %v1326
      %1343 = vmatmul.bf16.gmra.mxu0 %v1330
      %v1344 = vpop.f32.mrf.mxu0
      %v1345 = vadd.f32 0.0, %v1344
      %v1346 = vpop.f32.mrf.mxu0
      %1347 = vdwg.mxu0
      %s1348 = scalar_lea.vmem %s3, 8
      %v1349 = vld [vmem:[%s1348] sm:$0xf]
      %v1350 = vperm.slane %v1349, 3
      %v1351 = vmul.f32 %v1345, %v1350
      %v1353 = vrot.slane %v1345, 5
      %v1355 = vsel %vm433, 0.0, %v1353
      %v1356 = vperm.slane %v1349, 0
      %v1357 = vmul.f32 %v1355, %v1356
      %v1358 = vadd.f32 %v1351, %v1357
      %v1359 = vrot.slane %v1345, 6
      %v1361 = vsel %vm440, 0.0, %v1359
      %v1362 = vperm.slane %v1349, 1
      %v1363 = vmul.f32 %v1361, %v1362
      %v1364 = vadd.f32 %v1358, %v1363
      %v1365 = vrot.slane %v1345, 7
      %v1367 = vsel %vm447, 0.0, %v1365
      %v1368 = vperm.slane %v1349, 2
      %v1369 = vmul.f32 %v1367, %v1368
      %v1370 = vadd.f32 %v1364, %v1369
      %s1371 = scalar_lea.vmem %s4, 2
      %v1372 = vld [vmem:[%s1371] sm:$0x1]
      %v1374 = vperm.slane %v1372, 0
      %v1376 = vadd.f32 %v1370, %v1374
      %v1377 = vsub.f32 0.0, %v1376
      %v1378 = vmul.f32 %v1377, 1.442695
      %v1379 = vpow.pop %v1378
      %v1380 = vadd.f32 %v1379, 1.0
      %v1381 = vrcp.pop %v1380
      %v1382 = vmul.f32 %v1376, %v1381
      %v1383 = vpack.c.bf16 %v1382, %v1382
      %s1384 = scalar_lea.vmem %s5, 56
      %v1385 = vld [vmem:[%s1384] sm:$0xf]
      %v1386 = vld [vmem:[%s1384 + $0x4] sm:$0xf]
      %v1387 = vld [vmem:[%s1384 + $0x8] sm:$0xf]
      %v1388 = vld [vmem:[%s1384 + $0xc] sm:$0xf]
      %v1389 = vld [vmem:[%s1384 + $0x10] sm:$0xf]
      %v1390 = vld [vmem:[%s1384 + $0x14] sm:$0xf]
      %v1391 = vld [vmem:[%s1384 + $0x18] sm:$0x1]
      %v1399 = vunpack.c.l.b16 %v1385
      %v1400 = vunpack.c.l.b16 %v1386
      %v1401 = vunpack.c.l.b16 %v1387
      %v1402 = vunpack.c.l.b16 %v1388
      %v1403 = vunpack.c.l.b16 %v1389
      %v1404 = vunpack.c.l.b16 %v1390
      %v1405 = vunpack.c.l.b16 %v1391
      %v1406 = vpack.c.b16 %v1400, %v1399
      %v1407 = vpack.c.b16 %v1402, %v1401
      %v1408 = vpack.c.b16 %v1404, %v1403
      %v1409 = vpack.c.b16 %v1405, %v1405
      %v1414 = vsel %vm492, %v1383, 0
      %v1417 = vsel %vm447, %v1409, 0
      %1419 = vmatpush.bf16.msra.mxu0 0
      %1420 = vmatpush.bf16.msra.mxu0 0
      %1421 = vmatpush.bf16.msra.mxu0 0
      %1422 = vmatpush.bf16.msra.mxu0 0
      %1423 = vmatpush.bf16.msra.mxu0 %v1417
      %1424 = vmatpush.bf16.msra.mxu0 %v1408
      %1425 = vmatpush.bf16.msra.mxu0 %v1407
      %1426 = vmatpush.bf16.msra.mxu0 %v1406
      %1427 = vmatmul.bf16.gmra.mxu0 %v1414
      %v1428 = vpop.f32.mrf.mxu0
      %v1429 = vadd.f32 0.0, %v1428
      %v1430 = vpop.f32.mrf.mxu0
      %1431 = vdwg.mxu0
      %s1432 = scalar_lea.vmem %s6, 2
      %v1433 = vld [vmem:[%s1432] sm:$0x1]
      %v1435 = vperm.slane %v1433, 0
      %v1437 = vadd.f32 %v1429, %v1435
      %v1438 = vmax.f32 %v1437, 0.0
      %v1439 = vand.u32 2147483647, %v1437
      %v1440 = vsub.f32 0.0, %v1439
      %v1441 = vmul.f32 %v1440, 1.442695
      %v1442 = vpow.pop %v1441
      %v1443 = vadd.f32 %v1442, 1.0
      %v1444 = vlog2.pop %v1443
      %v1445 = vmul.f32 %v1444, 0.6931472
      %v1446 = vmul.f32 -0.5, %v1442
      %v1447 = vadd.f32 %v1446, 1.0
      %v1448 = vmul.f32 %v1447, %v1442
      %v1449 = vand.u32 2147483647, %v1442
      %vm1450 = vcmp.lt.f32.partialorder %v1449, 0.0004427343
      %v1451 = vsel %vm1450, %v1448, %v1445
      %v1452 = vadd.f32 %v1438, %v1451
      %s1453 = scalar_lea.vmem %s7, 32
      %v1454 = vld [vmem:[%s1453] sm:$0xff]
      %v1455 = vld [vmem:[%s1453 + $0x8] sm:$0xff]
      %s1456 = scalar_lea.vmem %s8, 2
      %v1457 = vld [vmem:[%s1456] sm:$0x1]
      %v1458 = vperm.slane %v1429, 0
      %v1459 = vlaneseq
      %v1460 = vshrl.u32 %v1459, 7
      %v1461 = vadd.s32 %v1460, 50
      %1462 = vset.pattern.permute.xlu0 %v1461
      %1463 = vperm.xlu0 %1462, %v1458
      %v1464 = vpop.permute.xlu0 %1463
      %v1465 = vlaneseq
      %v1466 = vshrl.u32 %v1465, 7
      %v1467 = vadd.s32 %v1466, 58
      %1468 = vset.pattern.permute.xlu0 %v1467
      %1469 = vperm.xlu0 %1468, %v1458
      %v1470 = vpop.permute.xlu0 %1469
      %v1471 = vperm.slane %v1452, 0
      %v1472 = vmul.f32 %v1471, %v1454
      %v1473 = vmul.f32 %v1471, %v1455
      %v1474 = vmul.f32 %v1472, 1.442695
      %v1475 = vpow.pop %v1474
      %v1476 = vmul.f32 %v1473, 1.442695
      %v1477 = vpow.pop %v1476
      %v1478 = vmul.f32 %v1475, 0.0
      %v1479 = vmul.f32 %v1477, 0.0
      %v1480 = vmul.f32 %v1452, %v1382
      %v1481 = vperm.slane %v1480, 0
      %v1482 = vmul.f32 %v1464, %v1481
      %v1483 = vmul.f32 %v1470, %v1481
      %v1484 = vadd.f32 %v1478, %v1482
      %v1485 = vadd.f32 %v1479, %v1483
      %v1486 = vmul.f32 %v1457, %v1382
      %1488 = vrot.lane.b32.xlu0 %v1429, 62
      %v1489 = vpop.permute.xlu0 %1488
      %v1490 = vsel %vm567, %v1489, 0
      %1492 = vmatpush.msra.mxu0 0.0
      %1493 = vmatpush.msra.mxu0 0.0
      %1494 = vmatpush.msra.mxu0 0.0
      %1495 = vmatpush.msra.mxu0 0.0
      %1496 = vmatpush.msra.mxu0 0.0
      %1497 = vmatpush.msra.mxu0 0.0
      %1498 = vmatpush.msra.mxu0 0.0
      %1499 = vmatpush.msra.mxu0 0.0
      %1500 = vmatpush.msra.mxu0 0.0
      %1501 = vmatpush.msra.mxu0 0.0
      %1502 = vmatpush.msra.mxu0 0.0
      %1503 = vmatpush.msra.mxu0 0.0
      %1504 = vmatpush.msra.mxu0 0.0
      %1505 = vmatpush.msra.mxu0 0.0
      %1506 = vmatpush.msra.mxu0 %v1485
      %1507 = vmatpush.msra.mxu0 %v1484
      %1508 = vmatmul.f32.gmra.mxu0 %v1490
      %v1509 = vpop.f32.mrf.mxu0
      %v1510 = vadd.f32 %v1486, %v1509
      %1511 = vdwg.mxu0
      %1512 = vst.msk [vmem:[#allocation2] sm:$0x1] %vm590, %v1510
      %v1513 = vperm.slane %v1429, 1
      %v1514 = vlaneseq
      %v1515 = vshrl.u32 %v1514, 7
      %v1516 = vadd.s32 %v1515, 50
      %1517 = vset.pattern.permute.xlu0 %v1516
      %1518 = vperm.xlu0 %1517, %v1513
      %v1519 = vpop.permute.xlu0 %1518
      %v1520 = vlaneseq
      %v1521 = vshrl.u32 %v1520, 7
      %v1522 = vadd.s32 %v1521, 58
      %1523 = vset.pattern.permute.xlu0 %v1522
      %1524 = vperm.xlu0 %1523, %v1513
      %v1525 = vpop.permute.xlu0 %1524
      %v1526 = vperm.slane %v1452, 1
      %v1527 = vmul.f32 %v1526, %v1454
      %v1528 = vmul.f32 %v1526, %v1455
      %v1529 = vmul.f32 %v1527, 1.442695
      %v1530 = vpow.pop %v1529
      %v1531 = vmul.f32 %v1528, 1.442695
      %v1532 = vpow.pop %v1531
      %v1533 = vmul.f32 %v1530, %v1484
      %v1534 = vmul.f32 %v1532, %v1485
      %v1535 = vperm.slane %v1480, 1
      %v1536 = vmul.f32 %v1519, %v1535
      %v1537 = vmul.f32 %v1525, %v1535
      %v1538 = vadd.f32 %v1533, %v1536
      %v1539 = vadd.f32 %v1534, %v1537
      %1541 = vst [vmem:[#allocation1] sm:$0xff] %v1382
      %s1542 = scalar_lea.vmem [#allocation1], 1
      %v1543 = vld [vmem:[%s1542] ss:$9 sm:$0xff]
      %v1545 = vmul.f32 %v1457, %v1543
      %v1546 = vrot.slane %v1429, 1
      %1547 = vrot.lane.b32.xlu0 %v1546, 62
      %v1548 = vpop.permute.xlu0 %1547
      %v1549 = vsel %vm567, %v1548, 0
      %1551 = vmatpush.msra.mxu0 0.0
      %1552 = vmatpush.msra.mxu0 0.0
      %1553 = vmatpush.msra.mxu0 0.0
      %1554 = vmatpush.msra.mxu0 0.0
      %1555 = vmatpush.msra.mxu0 0.0
      %1556 = vmatpush.msra.mxu0 0.0
      %1557 = vmatpush.msra.mxu0 0.0
      %1558 = vmatpush.msra.mxu0 0.0
      %1559 = vmatpush.msra.mxu0 0.0
      %1560 = vmatpush.msra.mxu0 0.0
      %1561 = vmatpush.msra.mxu0 0.0
      %1562 = vmatpush.msra.mxu0 0.0
      %1563 = vmatpush.msra.mxu0 0.0
      %1564 = vmatpush.msra.mxu0 0.0
      %1565 = vmatpush.msra.mxu0 %v1539
      %1566 = vmatpush.msra.mxu0 %v1538
      %1567 = vmatmul.f32.gmra.mxu0 %v1549
      %v1568 = vpop.f32.mrf.mxu0
      %v1569 = vadd.f32 %v1545, %v1568
      %1570 = vdwg.mxu0
      %1571 = vst.msk [vmem:[#allocation2 + $0x1] sm:$0x1] %vm590, %v1569
      %v1572 = vperm.slane %v1429, 2
      %v1573 = vlaneseq
      %v1574 = vshrl.u32 %v1573, 7
      %v1575 = vadd.s32 %v1574, 50
      %1576 = vset.pattern.permute.xlu0 %v1575
      %1577 = vperm.xlu0 %1576, %v1572
      %v1578 = vpop.permute.xlu0 %1577
      %v1579 = vlaneseq
      %v1580 = vshrl.u32 %v1579, 7
      %v1581 = vadd.s32 %v1580, 58
      %1582 = vset.pattern.permute.xlu0 %v1581
      %1583 = vperm.xlu0 %1582, %v1572
      %v1584 = vpop.permute.xlu0 %1583
      %v1585 = vperm.slane %v1452, 2
      %v1586 = vmul.f32 %v1585, %v1454
      %v1587 = vmul.f32 %v1585, %v1455
      %v1588 = vmul.f32 %v1586, 1.442695
      %v1589 = vpow.pop %v1588
      %v1590 = vmul.f32 %v1587, 1.442695
      %v1591 = vpow.pop %v1590
      %v1592 = vmul.f32 %v1589, %v1538
      %v1593 = vmul.f32 %v1591, %v1539
      %v1594 = vperm.slane %v1480, 2
      %v1595 = vmul.f32 %v1578, %v1594
      %v1596 = vmul.f32 %v1584, %v1594
      %v1597 = vadd.f32 %v1592, %v1595
      %v1598 = vadd.f32 %v1593, %v1596
      %1599 = vst [vmem:[#allocation1] sm:$0xff] %v1382
      %s1600 = scalar_lea.vmem [#allocation1], 2
      %v1601 = vld [vmem:[%s1600] ss:$9 sm:$0xff]
      %v1603 = vmul.f32 %v1457, %v1601
      %v1604 = vrot.slane %v1429, 2
      %1605 = vrot.lane.b32.xlu0 %v1604, 62
      %v1606 = vpop.permute.xlu0 %1605
      %v1607 = vsel %vm567, %v1606, 0
      %1609 = vmatpush.msra.mxu0 0.0
      %1610 = vmatpush.msra.mxu0 0.0
      %1611 = vmatpush.msra.mxu0 0.0
      %1612 = vmatpush.msra.mxu0 0.0
      %1613 = vmatpush.msra.mxu0 0.0
      %1614 = vmatpush.msra.mxu0 0.0
      %1615 = vmatpush.msra.mxu0 0.0
      %1616 = vmatpush.msra.mxu0 0.0
      %1617 = vmatpush.msra.mxu0 0.0
      %1618 = vmatpush.msra.mxu0 0.0
      %1619 = vmatpush.msra.mxu0 0.0
      %1620 = vmatpush.msra.mxu0 0.0
      %1621 = vmatpush.msra.mxu0 0.0
      %1622 = vmatpush.msra.mxu0 0.0
      %1623 = vmatpush.msra.mxu0 %v1598
      %1624 = vmatpush.msra.mxu0 %v1597
      %1625 = vmatmul.f32.gmra.mxu0 %v1607
      %v1626 = vpop.f32.mrf.mxu0
      %v1627 = vadd.f32 %v1603, %v1626
      %1628 = vdwg.mxu0
      %1629 = vst.msk [vmem:[#allocation2 + $0x2] sm:$0x1] %vm590, %v1627
      %v1630 = vperm.slane %v1429, 3
      %v1631 = vlaneseq
      %v1632 = vshrl.u32 %v1631, 7
      %v1633 = vadd.s32 %v1632, 50
      %1634 = vset.pattern.permute.xlu0 %v1633
      %1635 = vperm.xlu0 %1634, %v1630
      %v1636 = vpop.permute.xlu0 %1635
      %v1637 = vlaneseq
      %v1638 = vshrl.u32 %v1637, 7
      %v1639 = vadd.s32 %v1638, 58
      %1640 = vset.pattern.permute.xlu0 %v1639
      %1641 = vperm.xlu0 %1640, %v1630
      %v1642 = vpop.permute.xlu0 %1641
      %v1643 = vperm.slane %v1452, 3
      %v1644 = vmul.f32 %v1643, %v1454
      %v1645 = vmul.f32 %v1643, %v1455
      %v1646 = vmul.f32 %v1644, 1.442695
      %v1647 = vpow.pop %v1646
      %v1648 = vmul.f32 %v1645, 1.442695
      %v1649 = vpow.pop %v1648
      %v1650 = vmul.f32 %v1647, %v1597
      %v1651 = vmul.f32 %v1649, %v1598
      %v1652 = vperm.slane %v1480, 3
      %v1653 = vmul.f32 %v1636, %v1652
      %v1654 = vmul.f32 %v1642, %v1652
      %v1655 = vadd.f32 %v1650, %v1653
      %v1656 = vadd.f32 %v1651, %v1654
      %1657 = vst [vmem:[#allocation1] sm:$0xff] %v1382
      %s1658 = scalar_lea.vmem [#allocation1], 3
      %v1659 = vld [vmem:[%s1658] ss:$9 sm:$0xff]
      %v1661 = vmul.f32 %v1457, %v1659
      %v1662 = vrot.slane %v1429, 3
      %1663 = vrot.lane.b32.xlu0 %v1662, 62
      %v1664 = vpop.permute.xlu0 %1663
      %v1665 = vsel %vm567, %v1664, 0
      %1667 = vmatpush.msra.mxu0 0.0
      %1668 = vmatpush.msra.mxu0 0.0
      %1669 = vmatpush.msra.mxu0 0.0
      %1670 = vmatpush.msra.mxu0 0.0
      %1671 = vmatpush.msra.mxu0 0.0
      %1672 = vmatpush.msra.mxu0 0.0
      %1673 = vmatpush.msra.mxu0 0.0
      %1674 = vmatpush.msra.mxu0 0.0
      %1675 = vmatpush.msra.mxu0 0.0
      %1676 = vmatpush.msra.mxu0 0.0
      %1677 = vmatpush.msra.mxu0 0.0
      %1678 = vmatpush.msra.mxu0 0.0
      %1679 = vmatpush.msra.mxu0 0.0
      %1680 = vmatpush.msra.mxu0 0.0
      %1681 = vmatpush.msra.mxu0 %v1656
      %1682 = vmatpush.msra.mxu0 %v1655
      %1683 = vmatmul.f32.gmra.mxu0 %v1665
      %v1684 = vpop.f32.mrf.mxu0
      %v1685 = vadd.f32 %v1661, %v1684
      %1686 = vdwg.mxu0
      %1687 = vst.msk [vmem:[#allocation2 + $0x3] sm:$0x1] %vm590, %v1685
      %v1688 = vld [vmem:[#allocation2] sm:$0xf]
      %v1689 = vsub.f32 0.0, %v1345
      %v1690 = vmul.f32 %v1689, 1.442695
      %v1691 = vpow.pop %v1690
      %v1692 = vadd.f32 %v1691, 1.0
      %v1693 = vrcp.pop %v1692
      %v1694 = vmul.f32 %v1345, %v1693
      %1696 = vrot.lane.b32.xlu0 %v1694, 78
      %v1697 = vpop.permute.xlu0 %1696
      %v1699 = vmul.f32 %v1688, %v1697
      %v1700 = vpack.c.bf16 %v1699, %v1699
      %s1701 = scalar_lea.vmem %s9, 56
      %v1702 = vld [vmem:[%s1701] sm:$0xf]
      %v1703 = vld [vmem:[%s1701 + $0x4] sm:$0xf]
      %v1704 = vld [vmem:[%s1701 + $0x8] sm:$0xf]
      %v1705 = vld [vmem:[%s1701 + $0xc] sm:$0xf]
      %v1706 = vld [vmem:[%s1701 + $0x10] sm:$0xf]
      %v1707 = vld [vmem:[%s1701 + $0x14] sm:$0xf]
      %v1708 = vld [vmem:[%s1701 + $0x18] sm:$0x1]
      %v1716 = vunpack.c.l.b16 %v1702
      %v1717 = vunpack.c.l.b16 %v1703
      %v1718 = vunpack.c.l.b16 %v1704
      %v1719 = vunpack.c.l.b16 %v1705
      %v1720 = vunpack.c.l.b16 %v1706
      %v1721 = vunpack.c.l.b16 %v1707
      %v1722 = vunpack.c.l.b16 %v1708
      %v1723 = vpack.c.b16 %v1717, %v1716
      %v1724 = vpack.c.b16 %v1719, %v1718
      %v1725 = vpack.c.b16 %v1721, %v1720
      %v1726 = vpack.c.b16 %v1722, %v1722
      %v1731 = vsel %vm492, %v1700, 0
      %v1734 = vsel %vm447, %v1726, 0
      %1736 = vmatpush.bf16.msra.mxu0 0
      %1737 = vmatpush.bf16.msra.mxu0 0
      %1738 = vmatpush.bf16.msra.mxu0 0
      %1739 = vmatpush.bf16.msra.mxu0 0
      %1740 = vmatpush.bf16.msra.mxu0 %v1734
      %1741 = vmatpush.bf16.msra.mxu0 %v1725
      %1742 = vmatpush.bf16.msra.mxu0 %v1724
      %1743 = vmatpush.bf16.msra.mxu0 %v1723
      %1744 = vmatmul.bf16.gmra.mxu0 %v1731
      %v1745 = vpop.f32.mrf.mxu0
      %v1746 = vadd.f32 0.0, %v1745
      %v1747 = vpop.f32.mrf.mxu0
      %1748 = vdwg.mxu0
      %v1749 = vadd.f32 %v1288, %v1746
      %1750 = vst.msk [vmem:[%s354] sm:$0xf] %vm358, %v1749
      %p1751 = scmp.lt.s32.totalorder %s21, 1
      %s1752 = scalar_select %p1751, %s21, 1
      %s1753 = smul.addr %s1752, 4
      %s1754 = scalar_lea.vmem %s10, %s1753
      // Predicated region
      $region61: #{mamba_cnn_mol_forward.4} parent=59 // pred_check
        %p1755 = pneg %p254
      $region62: #{mamba_cnn_mol_forward.4} parent=59 // pred_check_branch
        %1757 = sbr.rel (%p1755) target = $region64
      $region63: #{mamba_cnn_mol_forward.4} parent=59 // pred_region
        _
      $region64: #{mamba_cnn_mol_forward.4} parent=59 // pred_fallthru
        _
    $region60: #{mamba_cnn_mol_forward.4} parent=5 // pred_fallthru
      _
    %p1758 = scmp.le.s32.totalorder 2, %s16
    // Predicated region
    $region65: #{mamba_cnn_mol_forward.4} parent=5 // pred_check
      %p1759 = pneg %p1758
    $region66: #{mamba_cnn_mol_forward.4} parent=5 // pred_check_branch
      %1761 = sbr.rel (%p1759) target = $region68
    $region67: #{mamba_cnn_mol_forward.4} parent=5 // pred_region
      %s1762 = ssub.s32 %s16, 2
      // Predicated region
      $region69: #{mamba_cnn_mol_forward.4} parent=67 // pred_check
        %p1763 = pneg %p260
      $region70: #{mamba_cnn_mol_forward.4} parent=67 // pred_check_branch
        %1765 = sbr.rel (%p1763) target = $region72
      $region71: #{mamba_cnn_mol_forward.4} parent=67 // pred_region
        %p1766 = scmp.lt.s32.totalorder %s22, 1
        %s1767 = scalar_select %p1766, %s22, 1
        %s1768 = smul.addr %s1767, 4
        %s1769 = scalar_lea.vmem %s10, %s1768
      $region72: #{mamba_cnn_mol_forward.4} parent=67 // pred_fallthru
        _
    $region68: #{mamba_cnn_mol_forward.4} parent=5 // pred_fallthru
      _
  $region6: #{mamba_cnn_mol_forward.4} parent=0 // loop_footer
    %s20 = sadd.s32 1, %s16
  $region7: #{mamba_cnn_mol_forward.4} parent=0 // loop_footer_branch
    %15 = sbr.rel target = $region3
  $region8: #{mamba_cnn_mol_forward.4} parent=0 // loop_exit
    _

// kernel: mamba_cnn_mol_forward.3
$region0: #{mamba_cnn_mol_forward.3}
  #allocation0 [shape = 'u32[]', space=smem, size = 0x4, offset = 0x4, fixed_abs, tag = 'smem constant byte address 0x4 - core index']
  #allocation1 [shape = 'u32[72,128]{1,0:T(1,128)}', space=vmem, size = 0x9000, scoped, tag = 'internal scratch']
  %s0 = inlined_call_operand.vmem [shape: f32[2,4,225], index: 0, kind: input, shape index: {}]
  %s1 = inlined_call_operand.vmem [shape: bf16[8,36], index: 1, kind: input, shape index: {}]
  %s2 = inlined_call_operand.vmem [shape: f32[8,1], index: 2, kind: input, shape index: {}]
  %s3 = inlined_call_operand.vmem [shape: bf16[8,72], index: 3, kind: input, shape index: {}]
  %s4 = inlined_call_operand.vmem [shape: f32[8,1], index: 4, kind: input, shape index: {}]
  %s5 = inlined_call_operand.vmem [shape: bf16[4,72], index: 5, kind: input, shape index: {}]
  %s6 = inlined_call_operand.vmem [shape: f32[4,1], index: 6, kind: input, shape index: {}]
  %s7 = inlined_call_operand.vmem [shape: bf16[4,36], index: 7, kind: input, shape index: {}]
  %s8 = inlined_call_operand.vmem [shape: f32[4,1], index: 8, kind: input, shape index: {}]
  %s9 = inlined_call_operand.hbm [shape: bf16[9,225,25], index: 9, kind: input, shape index: {}]
  %s10 = inlined_call_operand.vmem [shape: f32[2,4,25], index: 10, kind: output, shape index: {}]
  %s11 = sld [smem:[#allocation0]]
  $region77: #{mamba_cnn_mol_forward.3} parent=0
    _
  %s13 = ssub.s32 1, %s11
  %s14 = scalar_select 0, %s13, %s11
  $region1: #{mamba_cnn_mol_forward.3} parent=0
    #allocation2 [shape = 'u8[534528]{0}', space=vmem, size = 0x82800, scoped, tag = 'input window, operand 9, single buffered']
    #allocation3 [shape = 's32[2]{0}', space=sflag, size = 0x8, scoped, tag = 'scoped memory for mamba_cnn_mol_forward.3']
    %15 = vsyncpa [#allocation3], 0
    loop: start=0, step=1, limit=4
    $region2: #{mamba_cnn_mol_forward.3} parent=1 // loop_pre_header
      _
    $region3: #{mamba_cnn_mol_forward.3} parent=1 // loop_header
      %s17 = sphi 0, %s21
      %p18 = scmp.ge.s32.totalorder %s17, 4
      %s27 = sphi 0, %s29
      %s30 = sphi 0, %s27
      %s31 = sphi 0, %s30
      %s47 = sphi 0, %s31
      %s51 = sphi 0, %s51
      %s53 = sphi 0, %s51
      %s54 = sphi 0, %s53
      %s68 = sphi 0, %s54
      %s72 = sphi 0, %s72
      %s74 = sphi 0, %s72
      %s75 = sphi 0, %s74
      %s89 = sphi 0, %s75
      %s93 = sphi 0, %s93
      %s95 = sphi 0, %s93
      %s96 = sphi 0, %s95
      %s110 = sphi 0, %s96
      %s114 = sphi 0, %s114
      %s116 = sphi 0, %s114
      %s117 = sphi 0, %s116
      %s131 = sphi 0, %s117
      %s135 = sphi 0, %s135
      %s137 = sphi 0, %s135
      %s138 = sphi 0, %s137
      %s152 = sphi 0, %s138
      %s156 = sphi 0, %s156
      %s158 = sphi 0, %s156
      %s159 = sphi 0, %s158
      %s173 = sphi 0, %s159
      %s177 = sphi 0, %s177
      %s179 = sphi 0, %s177
      %s180 = sphi 0, %s179
      %s194 = sphi 0, %s180
      %s198 = sphi 0, %s198
      %s200 = sphi 0, %s198
      %s201 = sphi 0, %s200
      %s215 = sphi 0, %s201
      %s219 = sphi 0, %s219
      %s221 = sphi 0, %s219
      %s222 = sphi 0, %s221
      %s236 = sphi 0, %s222
      %s242 = sphi 0, %s244
      %s245 = sphi 0, %s242
      %s246 = sphi 0, %s245
      %s262 = sphi 0, %s246
    $region4: #{mamba_cnn_mol_forward.3} parent=1 // loop_header_branch
      %20 = sbr.rel (%p18) target = $region8
    $region5: #{mamba_cnn_mol_forward.3} parent=1 // loop_body
      %s22 = ssub.s32 %s17, 1
      %s23 = ssub.s32 %s17, 2
      %s24 = sadd.s32 %s17, 1
      %s25 = ssub.s32 %s17, %s24
      %p26 = scmp.eq.s32.totalorder %s25, 0
      %s28 = sadd.s32 %s27, 1
      %s29 = scalar_select %p26, %s27, %s28
      %p32 = pneg %p26
      %p33 = scmp.eq.s32.totalorder %s17, 1
      %p34 = por %p32, %p33
      %p35 = scmp.ne.s32.totalorder %s27, %s30
      %p36 = scmp.eq.s32.totalorder %s17, 0
      %p37 = por %p35, %p36
      %p38 = scmp.ne.s32.totalorder %s27, %s30
      %p39 = scmp.eq.s32.totalorder %s22, 1
      %p40 = por %p38, %p39
      %p41 = scmp.ne.s32.totalorder %s30, %s31
      %p42 = scmp.eq.s32.totalorder %s22, 0
      %p43 = por %p41, %p42
      %p44 = scmp.ne.s32.totalorder %s30, %s31
      %p45 = scmp.eq.s32.totalorder %s23, 1
      %p46 = por %p44, %p45
      %p48 = scmp.ne.s32.totalorder %s31, %s47
      %p49 = scmp.eq.s32.totalorder %s23, 0
      %p50 = por %p48, %p49
      %s52 = sadd.s32 %s51, 1
      %p55 = scmp.eq.s32.totalorder %s17, 1
      %p56 = scmp.ne.s32.totalorder %s51, %s53
      %p57 = scmp.eq.s32.totalorder %s17, 0
      %p58 = por %p56, %p57
      %p59 = scmp.ne.s32.totalorder %s51, %s53
      %p60 = scmp.eq.s32.totalorder %s22, 1
      %p61 = por %p59, %p60
      %p62 = scmp.ne.s32.totalorder %s53, %s54
      %p63 = scmp.eq.s32.totalorder %s22, 0
      %p64 = por %p62, %p63
      %p65 = scmp.ne.s32.totalorder %s53, %s54
      %p66 = scmp.eq.s32.totalorder %s23, 1
      %p67 = por %p65, %p66
      %p69 = scmp.ne.s32.totalorder %s54, %s68
      %p70 = scmp.eq.s32.totalorder %s23, 0
      %p71 = por %p69, %p70
      %s73 = sadd.s32 %s72, 1
      %p76 = scmp.eq.s32.totalorder %s17, 1
      %p77 = scmp.ne.s32.totalorder %s72, %s74
      %p78 = scmp.eq.s32.totalorder %s17, 0
      %p79 = por %p77, %p78
      %p80 = scmp.ne.s32.totalorder %s72, %s74
      %p81 = scmp.eq.s32.totalorder %s22, 1
      %p82 = por %p80, %p81
      %p83 = scmp.ne.s32.totalorder %s74, %s75
      %p84 = scmp.eq.s32.totalorder %s22, 0
      %p85 = por %p83, %p84
      %p86 = scmp.ne.s32.totalorder %s74, %s75
      %p87 = scmp.eq.s32.totalorder %s23, 1
      %p88 = por %p86, %p87
      %p90 = scmp.ne.s32.totalorder %s75, %s89
      %p91 = scmp.eq.s32.totalorder %s23, 0
      %p92 = por %p90, %p91
      %s94 = sadd.s32 %s93, 1
      %p97 = scmp.eq.s32.totalorder %s17, 1
      %p98 = scmp.ne.s32.totalorder %s93, %s95
      %p99 = scmp.eq.s32.totalorder %s17, 0
      %p100 = por %p98, %p99
      %p101 = scmp.ne.s32.totalorder %s93, %s95
      %p102 = scmp.eq.s32.totalorder %s22, 1
      %p103 = por %p101, %p102
      %p104 = scmp.ne.s32.totalorder %s95, %s96
      %p105 = scmp.eq.s32.totalorder %s22, 0
      %p106 = por %p104, %p105
      %p107 = scmp.ne.s32.totalorder %s95, %s96
      %p108 = scmp.eq.s32.totalorder %s23, 1
      %p109 = por %p107, %p108
      %p111 = scmp.ne.s32.totalorder %s96, %s110
      %p112 = scmp.eq.s32.totalorder %s23, 0
      %p113 = por %p111, %p112
      %s115 = sadd.s32 %s114, 1
      %p118 = scmp.eq.s32.totalorder %s17, 1
      %p119 = scmp.ne.s32.totalorder %s114, %s116
      %p120 = scmp.eq.s32.totalorder %s17, 0
      %p121 = por %p119, %p120
      %p122 = scmp.ne.s32.totalorder %s114, %s116
      %p123 = scmp.eq.s32.totalorder %s22, 1
      %p124 = por %p122, %p123
      %p125 = scmp.ne.s32.totalorder %s116, %s117
      %p126 = scmp.eq.s32.totalorder %s22, 0
      %p127 = por %p125, %p126
      %p128 = scmp.ne.s32.totalorder %s116, %s117
      %p129 = scmp.eq.s32.totalorder %s23, 1
      %p130 = por %p128, %p129
      %p132 = scmp.ne.s32.totalorder %s117, %s131
      %p133 = scmp.eq.s32.totalorder %s23, 0
      %p134 = por %p132, %p133
      %s136 = sadd.s32 %s135, 1
      %p139 = scmp.eq.s32.totalorder %s17, 1
      %p140 = scmp.ne.s32.totalorder %s135, %s137
      %p141 = scmp.eq.s32.totalorder %s17, 0
      %p142 = por %p140, %p141
      %p143 = scmp.ne.s32.totalorder %s135, %s137
      %p144 = scmp.eq.s32.totalorder %s22, 1
      %p145 = por %p143, %p144
      %p146 = scmp.ne.s32.totalorder %s137, %s138
      %p147 = scmp.eq.s32.totalorder %s22, 0
      %p148 = por %p146, %p147
      %p149 = scmp.ne.s32.totalorder %s137, %s138
      %p150 = scmp.eq.s32.totalorder %s23, 1
      %p151 = por %p149, %p150
      %p153 = scmp.ne.s32.totalorder %s138, %s152
      %p154 = scmp.eq.s32.totalorder %s23, 0
      %p155 = por %p153, %p154
      %s157 = sadd.s32 %s156, 1
      %p160 = scmp.eq.s32.totalorder %s17, 1
      %p161 = scmp.ne.s32.totalorder %s156, %s158
      %p162 = scmp.eq.s32.totalorder %s17, 0
      %p163 = por %p161, %p162
      %p164 = scmp.ne.s32.totalorder %s156, %s158
      %p165 = scmp.eq.s32.totalorder %s22, 1
      %p166 = por %p164, %p165
      %p167 = scmp.ne.s32.totalorder %s158, %s159
      %p168 = scmp.eq.s32.totalorder %s22, 0
      %p169 = por %p167, %p168
      %p170 = scmp.ne.s32.totalorder %s158, %s159
      %p171 = scmp.eq.s32.totalorder %s23, 1
      %p172 = por %p170, %p171
      %p174 = scmp.ne.s32.totalorder %s159, %s173
      %p175 = scmp.eq.s32.totalorder %s23, 0
      %p176 = por %p174, %p175
      %s178 = sadd.s32 %s177, 1
      %p181 = scmp.eq.s32.totalorder %s17, 1
      %p182 = scmp.ne.s32.totalorder %s177, %s179
      %p183 = scmp.eq.s32.totalorder %s17, 0
      %p184 = por %p182, %p183
      %p185 = scmp.ne.s32.totalorder %s177, %s179
      %p186 = scmp.eq.s32.totalorder %s22, 1
      %p187 = por %p185, %p186
      %p188 = scmp.ne.s32.totalorder %s179, %s180
      %p189 = scmp.eq.s32.totalorder %s22, 0
      %p190 = por %p188, %p189
      %p191 = scmp.ne.s32.totalorder %s179, %s180
      %p192 = scmp.eq.s32.totalorder %s23, 1
      %p193 = por %p191, %p192
      %p195 = scmp.ne.s32.totalorder %s180, %s194
      %p196 = scmp.eq.s32.totalorder %s23, 0
      %p197 = por %p195, %p196
      %s199 = sadd.s32 %s198, 1
      %p202 = scmp.eq.s32.totalorder %s17, 1
      %p203 = scmp.ne.s32.totalorder %s198, %s200
      %p204 = scmp.eq.s32.totalorder %s17, 0
      %p205 = por %p203, %p204
      %p206 = scmp.ne.s32.totalorder %s198, %s200
      %p207 = scmp.eq.s32.totalorder %s22, 1
      %p208 = por %p206, %p207
      %p209 = scmp.ne.s32.totalorder %s200, %s201
      %p210 = scmp.eq.s32.totalorder %s22, 0
      %p211 = por %p209, %p210
      %p212 = scmp.ne.s32.totalorder %s200, %s201
      %p213 = scmp.eq.s32.totalorder %s23, 1
      %p214 = por %p212, %p213
      %p216 = scmp.ne.s32.totalorder %s201, %s215
      %p217 = scmp.eq.s32.totalorder %s23, 0
      %p218 = por %p216, %p217
      %s220 = sadd.s32 %s219, 1
      %p223 = scmp.eq.s32.totalorder %s17, 1
      %p224 = scmp.ne.s32.totalorder %s219, %s221
      %p225 = scmp.eq.s32.totalorder %s17, 0
      %p226 = por %p224, %p225
      %p227 = scmp.ne.s32.totalorder %s219, %s221
      %p228 = scmp.eq.s32.totalorder %s22, 1
      %p229 = por %p227, %p228
      %p230 = scmp.ne.s32.totalorder %s221, %s222
      %p231 = scmp.eq.s32.totalorder %s22, 0
      %p232 = por %p230, %p231
      %p233 = scmp.ne.s32.totalorder %s221, %s222
      %p234 = scmp.eq.s32.totalorder %s23, 1
      %p235 = por %p233, %p234
      %p237 = scmp.ne.s32.totalorder %s222, %s236
      %p238 = scmp.eq.s32.totalorder %s23, 0
      %p239 = por %p237, %p238
      %s240 = ssub.s32 %s17, %s24
      %p241 = scmp.eq.s32.totalorder %s240, 0
      %s243 = sadd.s32 %s242, 1
      %s244 = scalar_select %p241, %s242, %s243
      %p247 = pneg %p241
      %p248 = scmp.eq.s32.totalorder %s17, 1
      %p249 = por %p247, %p248
      %p250 = scmp.ne.s32.totalorder %s242, %s245
      %p251 = scmp.eq.s32.totalorder %s17, 0
      %p252 = por %p250, %p251
      %p253 = scmp.ne.s32.totalorder %s242, %s245
      %p254 = scmp.eq.s32.totalorder %s22, 1
      %p255 = por %p253, %p254
      %p256 = scmp.ne.s32.totalorder %s245, %s246
      %p257 = scmp.eq.s32.totalorder %s22, 0
      %p258 = por %p256, %p257
      %p259 = scmp.ne.s32.totalorder %s245, %s246
      %p260 = scmp.eq.s32.totalorder %s23, 1
      %p261 = por %p259, %p260
      %p263 = scmp.ne.s32.totalorder %s246, %s262
      %p264 = scmp.eq.s32.totalorder %s23, 0
      %p265 = por %p263, %p264
      %p266 = scmp.le.s32.totalorder 1, %s17
      %p267 = scmp.lt.s32.totalorder %s17, 3
      %p268 = pnand %p266, %p267
      %p269 = pneg %p268
      // Predicated region
      $region9: #{mamba_cnn_mol_forward.3} parent=5 // pred_check
        _
      $region10: #{mamba_cnn_mol_forward.3} parent=5 // pred_check_branch
        %271 = sbr.rel (%p268) target = $region12
      $region11: #{mamba_cnn_mol_forward.3} parent=5 // pred_region
        %s272 = ssub.s32 %s17, 1
        // Predicated region
        $region13: #{mamba_cnn_mol_forward.3} parent=11 // pred_check
          %p273 = pneg %p64
        $region14: #{mamba_cnn_mol_forward.3} parent=11 // pred_check_branch
          %275 = sbr.rel (%p273) target = $region16
        $region15: #{mamba_cnn_mol_forward.3} parent=11 // pred_region
          _
        $region16: #{mamba_cnn_mol_forward.3} parent=11 // pred_fallthru
          _
        // Predicated region
        $region17: #{mamba_cnn_mol_forward.3} parent=11 // pred_check
          %p276 = pneg %p85
        $region18: #{mamba_cnn_mol_forward.3} parent=11 // pred_check_branch
          %278 = sbr.rel (%p276) target = $region20
        $region19: #{mamba_cnn_mol_forward.3} parent=11 // pred_region
          _
        $region20: #{mamba_cnn_mol_forward.3} parent=11 // pred_fallthru
          _
        // Predicated region
        $region21: #{mamba_cnn_mol_forward.3} parent=11 // pred_check
          %p279 = pneg %p106
        $region22: #{mamba_cnn_mol_forward.3} parent=11 // pred_check_branch
          %281 = sbr.rel (%p279) target = $region24
        $region23: #{mamba_cnn_mol_forward.3} parent=11 // pred_region
          _
        $region24: #{mamba_cnn_mol_forward.3} parent=11 // pred_fallthru
          _
        // Predicated region
        $region25: #{mamba_cnn_mol_forward.3} parent=11 // pred_check
          %p282 = pneg %p127
        $region26: #{mamba_cnn_mol_forward.3} parent=11 // pred_check_branch
          %284 = sbr.rel (%p282) target = $region28
        $region27: #{mamba_cnn_mol_forward.3} parent=11 // pred_region
          _
        $region28: #{mamba_cnn_mol_forward.3} parent=11 // pred_fallthru
          _
        // Predicated region
        $region29: #{mamba_cnn_mol_forward.3} parent=11 // pred_check
          %p285 = pneg %p148
        $region30: #{mamba_cnn_mol_forward.3} parent=11 // pred_check_branch
          %287 = sbr.rel (%p285) target = $region32
        $region31: #{mamba_cnn_mol_forward.3} parent=11 // pred_region
          _
        $region32: #{mamba_cnn_mol_forward.3} parent=11 // pred_fallthru
          _
        // Predicated region
        $region33: #{mamba_cnn_mol_forward.3} parent=11 // pred_check
          %p288 = pneg %p169
        $region34: #{mamba_cnn_mol_forward.3} parent=11 // pred_check_branch
          %290 = sbr.rel (%p288) target = $region36
        $region35: #{mamba_cnn_mol_forward.3} parent=11 // pred_region
          _
        $region36: #{mamba_cnn_mol_forward.3} parent=11 // pred_fallthru
          _
        // Predicated region
        $region37: #{mamba_cnn_mol_forward.3} parent=11 // pred_check
          %p291 = pneg %p190
        $region38: #{mamba_cnn_mol_forward.3} parent=11 // pred_check_branch
          %293 = sbr.rel (%p291) target = $region40
        $region39: #{mamba_cnn_mol_forward.3} parent=11 // pred_region
          _
        $region40: #{mamba_cnn_mol_forward.3} parent=11 // pred_fallthru
          _
        // Predicated region
        $region41: #{mamba_cnn_mol_forward.3} parent=11 // pred_check
          %p294 = pneg %p211
        $region42: #{mamba_cnn_mol_forward.3} parent=11 // pred_check_branch
          %296 = sbr.rel (%p294) target = $region44
        $region43: #{mamba_cnn_mol_forward.3} parent=11 // pred_region
          _
        $region44: #{mamba_cnn_mol_forward.3} parent=11 // pred_fallthru
          _
        // Predicated region
        $region45: #{mamba_cnn_mol_forward.3} parent=11 // pred_check
          %p297 = pneg %p232
        $region46: #{mamba_cnn_mol_forward.3} parent=11 // pred_check_branch
          %299 = sbr.rel (%p297) target = $region48
        $region47: #{mamba_cnn_mol_forward.3} parent=11 // pred_region
          %301 = vsyncadd [#allocation3], 0
          %s302 = sshll.u32 %s9, 4
          %s303 = int_to_ptr.hbm [resolvable:$true] %s302
          %s304 = sshll.u32 [#allocation2], 4
          %s305 = int_to_ptr.vmem [resolvable:$true] %s304
          %310 = dma.hbm_to_vmem [thread:$0]  %s303, 16704, %s305, [#allocation3], 64, 64, 4
        $region48: #{mamba_cnn_mol_forward.3} parent=11 // pred_fallthru
          _
      $region12: #{mamba_cnn_mol_forward.3} parent=5 // pred_fallthru
        _
      %p311 = scmp.lt.s32.totalorder %s17, 2
      // Predicated region
      $region49: #{mamba_cnn_mol_forward.3} parent=5 // pred_check
        %p312 = pneg %p311
      $region50: #{mamba_cnn_mol_forward.3} parent=5 // pred_check_branch
        %314 = sbr.rel (%p312) target = $region52
      $region51: #{mamba_cnn_mol_forward.3} parent=5 // pred_region
        // Predicated region
        $region53: #{mamba_cnn_mol_forward.3} parent=51 // pred_check
          %p315 = pneg %p37
        $region54: #{mamba_cnn_mol_forward.3} parent=51 // pred_check_branch
          %317 = sbr.rel (%p315) target = $region56
        $region55: #{mamba_cnn_mol_forward.3} parent=51 // pred_region
          %p318 = scmp.lt.s32.totalorder %s17, 1
          %s319 = scalar_select %p318, %s17, 1
          %s320 = smul.addr %s319, 2
          %s321 = smul.addr %s320, 4
          %s322 = scalar_lea.vmem %s0, %s321
        $region56: #{mamba_cnn_mol_forward.3} parent=51 // pred_fallthru
          _
      $region52: #{mamba_cnn_mol_forward.3} parent=5 // pred_fallthru
        _
      %p323 = scmp.le.s32.totalorder 1, %s17
      %p324 = scmp.lt.s32.totalorder %s17, 3
      %p325 = pnand %p323, %p324
      %p326 = pneg %p325
      // Predicated region
      $region57: #{mamba_cnn_mol_forward.3} parent=5 // pred_check
        _
      $region58: #{mamba_cnn_mol_forward.3} parent=5 // pred_check_branch
        %328 = sbr.rel (%p325) target = $region60
      $region59: #{mamba_cnn_mol_forward.3} parent=5 // pred_region
        %s329 = ssub.s32 %s17, 1
        // Predicated region
        $region61: #{mamba_cnn_mol_forward.3} parent=59 // pred_check
          %p330 = pneg %p232
        $region62: #{mamba_cnn_mol_forward.3} parent=59 // pred_check_branch
          %332 = sbr.rel (%p330) target = $region64
        $region63: #{mamba_cnn_mol_forward.3} parent=59 // pred_region
          %334 = dma.done [#allocation3], 16704
        $region64: #{mamba_cnn_mol_forward.3} parent=59 // pred_fallthru
          _
        %p335 = scmp.lt.s32.totalorder %s22, 1
        %s336 = scalar_select %p335, %s22, 1
        %s337 = smul.addr %s336, 2
        %s338 = smul.addr %s337, 4
        %s339 = scalar_lea.vmem %s0, %s338
        %p340 = pneg %p43
        %p341 = pneg %p40
        %p342 = pneg %p64
        %p343 = pneg %p61
        %p344 = pneg %p85
        %p345 = pneg %p82
        %p346 = pneg %p106
        %p347 = pneg %p103
        %p348 = pneg %p127
        %p349 = pneg %p124
        %p350 = pneg %p148
        %p351 = pneg %p145
        %p352 = pneg %p169
        %p353 = pneg %p166
        %p354 = pneg %p190
        %p355 = pneg %p187
        %p356 = pneg %p211
        %p357 = pneg %p208
        %p358 = pneg %p232
        %p359 = pneg %p229
        %p360 = pneg %p258
        %p361 = pneg %p255
        %p362 = scmp.lt.s32.totalorder %s22, 1
        %s363 = scalar_select %p362, %s22, 1
        %s364 = smul.addr %s363, 4
        %s365 = scalar_lea.vmem %s10, %s364
        %p366 = scmp.lt.s32.totalorder %s22, 1
        %s367 = scalar_select %p366, %s22, 1
        %s368 = smul.addr %s367, 2
        %s369 = smul.addr %s368, 4
        %s370 = scalar_lea.vmem %s0, %s369
        %p371 = scmp.lt.s32.totalorder %s22, 1
        %s372 = scalar_select %p371, %s22, 1
        %s373 = smul.addr %s372, 4
        %s374 = scalar_lea.vmem %s10, %s373
        %v376 = vlaneseq
        %v377 = vand.u32 %v376, 127
        %v378 = vadd.s32 %v377, 128
        %vm379 = vcmp.lt.s32.totalorder %v377, 0
        %v380 = vsub.s32 0, %v377
        %v381 = vsel %vm379, %v380, %v377
        %v382 = vand.u32 %v381, 65535
        %v383 = vshrl.u32 %v381, 16
        %v385 = vmul.u32 %v382, 34953
        %v386 = vmul.u32 %v382, 34952
        %v387 = vmul.u32 %v383, 34953
        %v388 = vmul.u32 %v383, 34952
        %v389 = vshll.u32 %v386, 16
        %v390 = vshrl.u32 %v386, 16
        %v391 = vshll.u32 %v387, 16
        %v392 = vshrl.u32 %v387, 16
        %vm393 = vc.u32 %v385, %v389
        %v394 = vsel %vm393, 1, 0
        %v395 = vadd.s32 %v385, %v389
        %v396 = vadd.s32 %v388, %v394
        %vm397 = vc.u32 %v395, %v391
        %v398 = vsel %vm397, 1, 0
        %v399 = vadd.s32 %v395, %v391
        %v400 = vadd.s32 %v396, %v398
        %v401 = vadd.s32 %v400, %v390
        %v402 = vadd.s32 %v401, %v392
        %v403 = vshrl.u32 %v402, 3
        %v404 = vmul.u32 %v403, 15
        %v405 = vsub.s32 %v381, %v404
        %v406 = vsub.s32 0, %v405
        %v407 = vsel %vm379, %v406, %v405
        %vm408 = vcmp.lt.s32.totalorder %v378, 0
        %v409 = vsub.s32 0, %v378
        %v410 = vsel %vm408, %v409, %v378
        %v411 = vand.u32 %v410, 65535
        %v412 = vshrl.u32 %v410, 16
        %v414 = vmul.u32 %v411, 34953
        %v415 = vmul.u32 %v411, 34952
        %v416 = vmul.u32 %v412, 34953
        %v417 = vmul.u32 %v412, 34952
        %v418 = vshll.u32 %v415, 16
        %v419 = vshrl.u32 %v415, 16
        %v420 = vshll.u32 %v416, 16
        %v421 = vshrl.u32 %v416, 16
        %vm422 = vc.u32 %v414, %v418
        %v423 = vsel %vm422, 1, 0
        %v424 = vadd.s32 %v414, %v418
        %v425 = vadd.s32 %v417, %v423
        %vm426 = vc.u32 %v424, %v420
        %v427 = vsel %vm426, 1, 0
        %v428 = vadd.s32 %v424, %v420
        %v429 = vadd.s32 %v425, %v427
        %v430 = vadd.s32 %v429, %v419
        %v431 = vadd.s32 %v430, %v421
        %v432 = vshrl.u32 %v431, 3
        %v433 = vmul.u32 %v432, 15
        %v434 = vsub.s32 %v410, %v433
        %v435 = vsub.s32 0, %v434
        %v436 = vsel %vm408, %v435, %v434
        %vm437 = vcmp.ne.s32.totalorder %v407, 0
        %vm438 = vcmp.ne.s32.totalorder %v436, 0
        %vm439 = vcmp.lt.s32.totalorder %v407, 0
        %vm440 = vcmp.lt.s32.totalorder %v436, 0
        %vm441 = vmand %vm439, %vm437
        %vm442 = vmand %vm440, %vm438
        %v443 = vadd.s32 %v407, 15
        %v444 = vadd.s32 %v436, 15
        %v445 = vsel %vm441, %v443, %v407
        %v446 = vsel %vm442, %v444, %v436
        %vm447 = vcmp.eq.s32.totalorder %v445, 0
        %vm448 = vcmp.eq.s32.totalorder %v446, 0
        %vm449 = vcmp.eq.s32.totalorder %v445, 14
        %vm450 = vcmp.eq.s32.totalorder %v446, 14
        %v451 = vld [vmem:[%s370] sm:$0xff]
        %v452 = vld [vmem:[%s1] sm:$0xf]
        %v453 = vld [vmem:[%s2] sm:$0xff]
        %455 = vst [vmem:[#allocation1] ss:$2 sm:$0xff] %v451
        %v456 = vld.sshfl [vmem:[#allocation1] sm:$0xff pattern:$0x75316420]
        %v457 = vld.sshfl [vmem:[#allocation1 + $0x8] sm:$0xff pattern:$0x75316420]
        %458 = vrot.lane.b32.xlu0 %v456, 114
        %v459 = vpop.permute.xlu0 %458
        %460 = vrot.lane.b32.xlu0 %v457, 114
        %v461 = vpop.permute.xlu0 %460
        %vm462 = vcmask 932864
        %v463 = vsel %vm462, %v459, %v461
        %466 = vst [vmem:[#allocation1] ss:$2 sm:$0xff] %v451
        %v467 = vld.sshfl [vmem:[#allocation1] sm:$0xff pattern:$0x75316420]
        %468 = vrot.lane.b32.xlu0 %v467, 83
        %v469 = vpop.permute.xlu0 %468
        %vm471 = vcmask 678912
        %v472 = vsel %vm471, %v461, %v469
        %473 = vst [vmem:[#allocation1] ss:$2 sm:$0xff] %v451
        %v474 = vld.sshfl [vmem:[#allocation1 + $0x8] sm:$0xff pattern:$0x75316420]
        %475 = vrot.lane.b32.xlu0 %v474, 32
        %v476 = vpop.permute.xlu0 %475
        %478 = vst [vmem:[#allocation1] ss:$2 sm:$0xff] %v451
        %v479 = vld.sshfl [vmem:[#allocation1] sm:$0xff pattern:$0x75316420]
        %v480 = vld.sshfl [vmem:[#allocation1 + $0x8] sm:$0xff pattern:$0x75316420]
        %481 = vrot.lane.b32.xlu0 %v479, 1
        %v482 = vpop.permute.xlu0 %481
        %483 = vrot.lane.b32.xlu0 %v480, 1
        %v484 = vpop.permute.xlu0 %483
        %vm485 = vcmask 7168
        %v486 = vsel %vm485, %v482, %v484
        %v489 = vsel %vm485, %v476, %v482
        %v490 = vsel %vm447, 1, 0
        %v491 = vsel %vm448, 1, 0
        %vm492 = vcmp.eq.s32.totalorder %v490, 1
        %vm493 = vcmp.eq.s32.totalorder %v491, 1
        %v494 = vsel %vm492, %v463, %v489
        %v495 = vsel %vm493, %v472, %v486
        %496 = vst [vmem:[#allocation1] ss:$2 sm:$0xff] %v451
        %v497 = vld.sshfl [vmem:[#allocation1 + $0x8] sm:$0xff pattern:$0x75316420]
        %498 = vrot.lane.b32.xlu0 %v497, 45
        %v499 = vpop.permute.xlu0 %498
        %501 = vst [vmem:[#allocation1] ss:$2 sm:$0xff] %v451
        %v502 = vld.sshfl [vmem:[#allocation1] sm:$0xff pattern:$0x75316420]
        %v503 = vld.sshfl [vmem:[#allocation1 + $0x8] sm:$0xff pattern:$0x75316420]
        %504 = vrot.lane.b32.xlu0 %v502, 14
        %v505 = vpop.permute.xlu0 %504
        %506 = vrot.lane.b32.xlu0 %v503, 14
        %v507 = vpop.permute.xlu0 %506
        %vm508 = vcmask 113664
        %v509 = vsel %vm508, %v505, %v507
        %v512 = vsel %vm508, %v499, %v505
        %513 = vst [vmem:[#allocation1] ss:$2 sm:$0xff] %v451
        %v514 = vld.sshfl [vmem:[#allocation1] sm:$0xff pattern:$0x75316420]
        %v515 = vld.sshfl [vmem:[#allocation1 + $0x8] sm:$0xff pattern:$0x75316420]
        %516 = vrot.lane.b32.xlu0 %v514, 127
        %v517 = vpop.permute.xlu0 %516
        %518 = vrot.lane.b32.xlu0 %v515, 127
        %v519 = vpop.permute.xlu0 %518
        %vm520 = vcmask 1039360
        %v521 = vsel %vm520, %v517, %v519
        %524 = vst [vmem:[#allocation1] ss:$2 sm:$0xff] %v451
        %v525 = vld.sshfl [vmem:[#allocation1] sm:$0xff pattern:$0x75316420]
        %526 = vrot.lane.b32.xlu0 %v525, 96
        %v527 = vpop.permute.xlu0 %526
        %vm529 = vcmask 785408
        %v530 = vsel %vm529, %v519, %v527
        %v531 = vsel %vm449, 1, 0
        %v532 = vsel %vm450, 1, 0
        %vm533 = vcmp.eq.s32.totalorder %v531, 1
        %vm534 = vcmp.eq.s32.totalorder %v532, 1
        %v535 = vsel %vm533, %v512, %v521
        %v536 = vsel %vm534, %v509, %v530
        %538 = vrot.lane.b32.xlu0 %v495, 46
        %v539 = vpop.permute.xlu0 %538
        %542 = vrot.lane.b32.xlu0 %v494, 15
        %v543 = vpop.permute.xlu0 %542
        %544 = vrot.lane.b32.xlu0 %v495, 15
        %v545 = vpop.permute.xlu0 %544
        %vm546 = vcmask 121856
        %v547 = vsel %vm546, %v543, %v545
        %v550 = vsel %vm546, %v539, %v543
        %551 = vst [vmem:[#allocation1] ss:$2 sm:$0xff] %v451
        %v552 = vld.sshfl [vmem:[#allocation1 + $0x8] sm:$0xff pattern:$0x75316420]
        %553 = vrot.lane.b32.xlu0 %v552, 46
        %v554 = vpop.permute.xlu0 %553
        %556 = vst [vmem:[#allocation1] ss:$2 sm:$0xff] %v451
        %v557 = vld.sshfl [vmem:[#allocation1] sm:$0xff pattern:$0x75316420]
        %v558 = vld.sshfl [vmem:[#allocation1 + $0x8] sm:$0xff pattern:$0x75316420]
        %559 = vrot.lane.b32.xlu0 %v557, 15
        %v560 = vpop.permute.xlu0 %559
        %561 = vrot.lane.b32.xlu0 %v558, 15
        %v562 = vpop.permute.xlu0 %561
        %v563 = vsel %vm546, %v560, %v562
        %v565 = vsel %vm546, %v554, %v560
        %567 = vrot.lane.b32.xlu0 %v536, 46
        %v568 = vpop.permute.xlu0 %567
        %571 = vrot.lane.b32.xlu0 %v535, 15
        %v572 = vpop.permute.xlu0 %571
        %573 = vrot.lane.b32.xlu0 %v536, 15
        %v574 = vpop.permute.xlu0 %573
        %v575 = vsel %vm546, %v572, %v574
        %v578 = vsel %vm546, %v568, %v572
        %579 = vrot.lane.b32.xlu0 %v494, 113
        %v580 = vpop.permute.xlu0 %579
        %581 = vrot.lane.b32.xlu0 %v495, 113
        %v582 = vpop.permute.xlu0 %581
        %vm583 = vcmask 924672
        %v584 = vsel %vm583, %v580, %v582
        %587 = vrot.lane.b32.xlu0 %v494, 82
        %v588 = vpop.permute.xlu0 %587
        %vm590 = vcmask 670720
        %v591 = vsel %vm590, %v582, %v588
        %592 = vst [vmem:[#allocation1] ss:$2 sm:$0xff] %v451
        %v593 = vld.sshfl [vmem:[#allocation1] sm:$0xff pattern:$0x75316420]
        %v594 = vld.sshfl [vmem:[#allocation1 + $0x8] sm:$0xff pattern:$0x75316420]
        %595 = vrot.lane.b32.xlu0 %v593, 113
        %v596 = vpop.permute.xlu0 %595
        %597 = vrot.lane.b32.xlu0 %v594, 113
        %v598 = vpop.permute.xlu0 %597
        %v599 = vsel %vm583, %v596, %v598
        %601 = vst [vmem:[#allocation1] ss:$2 sm:$0xff] %v451
        %v602 = vld.sshfl [vmem:[#allocation1] sm:$0xff pattern:$0x75316420]
        %603 = vrot.lane.b32.xlu0 %v602, 82
        %v604 = vpop.permute.xlu0 %603
        %v606 = vsel %vm590, %v598, %v604
        %607 = vrot.lane.b32.xlu0 %v535, 113
        %v608 = vpop.permute.xlu0 %607
        %609 = vrot.lane.b32.xlu0 %v536, 113
        %v610 = vpop.permute.xlu0 %609
        %v611 = vsel %vm583, %v608, %v610
        %614 = vrot.lane.b32.xlu0 %v535, 82
        %v615 = vpop.permute.xlu0 %614
        %v617 = vsel %vm590, %v610, %v615
        %v619 = vrot.slane %v565, 4
        %v620 = vrot.slane %v563, 4
        %v623 = vrot.slane %v494, 4
        %v624 = vrot.slane %v495, 4
        %627 = vst [vmem:[#allocation1] ss:$2 sm:$0xff] %v451
        %v628 = vld.sshfl [vmem:[#allocation1] sm:$0xff pattern:$0x75316420]
        %v629 = vld.sshfl [vmem:[#allocation1 + $0x8] sm:$0xff pattern:$0x75316420]
        %v632 = vrot.slane %v535, 4
        %v633 = vrot.slane %v536, 4
        %v637 = vrot.slane %v599, 4
        %v638 = vrot.slane %v606, 4
        %vm641 = vcmask 1043456
        %v642 = vsel %vm641, %v550, %v619
        %v643 = vsel %vm641, %v547, %v620
        %v644 = vsel %vm641, %v578, %v623
        %v645 = vsel %vm641, %v575, %v624
        %v646 = vsel %vm641, %v628, %v632
        %v647 = vsel %vm641, %v629, %v633
        %v648 = vsel %vm641, %v584, %v637
        %v649 = vsel %vm641, %v591, %v638
        %v650 = vpack.c.bf16 %v644, %v642
        %v651 = vpack.c.bf16 %v645, %v643
        %v652 = vpack.c.bf16 %v648, %v646
        %v653 = vpack.c.bf16 %v649, %v647
        %v654 = vpack.c.bf16 %v611, %v611
        %v655 = vpack.c.bf16 %v617, %v617
        %657 = vset.pattern.permute.xlu0 0
        %658 = vperm.xlu0 %657, %v453
        %v659 = vpop.permute.xlu0 %658
        %vm661 = vcmask 293888
        %v663 = vsel %vm661, %v452, 0
        %vm665 = vcmask 1041408
        %v667 = vsel %vm665, %v654, 0
        %v670 = vsel %vm665, %v655, 0
        %672 = vmatpush.bf16.msra.mxu0 0
        %673 = vmatpush.bf16.msra.mxu0 0
        %674 = vmatpush.bf16.msra.mxu0 0
        %675 = vmatpush.bf16.msra.mxu0 0
        %676 = vmatpush.bf16.msra.mxu0 0
        %677 = vmatpush.bf16.msra.mxu0 %v667
        %678 = vmatpush.bf16.msra.mxu0 %v652
        %679 = vmatpush.bf16.msra.mxu0 %v650
        %680 = vmatmul.bf16.gmra.mxu0 %v663
        %v681 = vpop.f32.mrf.mxu0
        %v682 = vadd.f32 %v659, %v681
        %v683 = vpop.f32.mrf.mxu0
        %684 = vdwg.mxu0
        %685 = vmatpush.bf16.msra.mxu0 0
        %686 = vmatpush.bf16.msra.mxu0 0
        %687 = vmatpush.bf16.msra.mxu0 0
        %688 = vmatpush.bf16.msra.mxu0 0
        %689 = vmatpush.bf16.msra.mxu0 0
        %690 = vmatpush.bf16.msra.mxu0 %v670
        %691 = vmatpush.bf16.msra.mxu0 %v653
        %692 = vmatpush.bf16.msra.mxu0 %v651
        %693 = vmatmul.bf16.gmra.mxu0 %v663
        %v694 = vpop.f32.mrf.mxu0
        %v695 = vadd.f32 %v659, %v694
        %v696 = vpop.f32.mrf.mxu0
        %697 = vdwg.mxu0
        %v698 = vmax.f32 %v682, 0.0
        %v699 = vmax.f32 %v695, 0.0
        %v700 = vld [vmem:[%s3] sm:$0xf]
        %v701 = vld [vmem:[%s4] sm:$0xff]
        %704 = vrot.lane.b32.xlu0 %v698, 114
        %v705 = vpop.permute.xlu0 %704
        %706 = vrot.lane.b32.xlu0 %v699, 114
        %v707 = vpop.permute.xlu0 %706
        %v708 = vsel %vm462, %v705, %v707
        %711 = vrot.lane.b32.xlu0 %v698, 83
        %v712 = vpop.permute.xlu0 %711
        %v714 = vsel %vm471, %v707, %v712
        %715 = vrot.lane.b32.xlu0 %v699, 32
        %v716 = vpop.permute.xlu0 %715
        %718 = vrot.lane.b32.xlu0 %v698, 1
        %v719 = vpop.permute.xlu0 %718
        %720 = vrot.lane.b32.xlu0 %v699, 1
        %v721 = vpop.permute.xlu0 %720
        %v722 = vsel %vm485, %v719, %v721
        %v725 = vsel %vm485, %v716, %v719
        %v726 = vsel %vm492, %v708, %v725
        %v727 = vsel %vm493, %v714, %v722
        %728 = vrot.lane.b32.xlu0 %v699, 45
        %v729 = vpop.permute.xlu0 %728
        %731 = vrot.lane.b32.xlu0 %v698, 14
        %v732 = vpop.permute.xlu0 %731
        %733 = vrot.lane.b32.xlu0 %v699, 14
        %v734 = vpop.permute.xlu0 %733
        %v735 = vsel %vm508, %v732, %v734
        %v738 = vsel %vm508, %v729, %v732
        %739 = vrot.lane.b32.xlu0 %v698, 127
        %v740 = vpop.permute.xlu0 %739
        %741 = vrot.lane.b32.xlu0 %v699, 127
        %v742 = vpop.permute.xlu0 %741
        %v743 = vsel %vm520, %v740, %v742
        %746 = vrot.lane.b32.xlu0 %v698, 96
        %v747 = vpop.permute.xlu0 %746
        %v749 = vsel %vm529, %v742, %v747
        %v750 = vsel %vm533, %v738, %v743
        %v751 = vsel %vm534, %v735, %v749
        %753 = vrot.lane.b32.xlu0 %v727, 46
        %v754 = vpop.permute.xlu0 %753
        %757 = vrot.lane.b32.xlu0 %v726, 15
        %v758 = vpop.permute.xlu0 %757
        %759 = vrot.lane.b32.xlu0 %v727, 15
        %v760 = vpop.permute.xlu0 %759
        %v761 = vsel %vm546, %v758, %v760
        %v764 = vsel %vm546, %v754, %v758
        %765 = vrot.lane.b32.xlu0 %v699, 46
        %v766 = vpop.permute.xlu0 %765
        %768 = vrot.lane.b32.xlu0 %v698, 15
        %v769 = vpop.permute.xlu0 %768
        %770 = vrot.lane.b32.xlu0 %v699, 15
        %v771 = vpop.permute.xlu0 %770
        %v772 = vsel %vm546, %v769, %v771
        %v775 = vsel %vm546, %v766, %v769
        %777 = vrot.lane.b32.xlu0 %v751, 46
        %v778 = vpop.permute.xlu0 %777
        %781 = vrot.lane.b32.xlu0 %v750, 15
        %v782 = vpop.permute.xlu0 %781
        %783 = vrot.lane.b32.xlu0 %v751, 15
        %v784 = vpop.permute.xlu0 %783
        %v785 = vsel %vm546, %v782, %v784
        %v788 = vsel %vm546, %v778, %v782
        %789 = vrot.lane.b32.xlu0 %v726, 113
        %v790 = vpop.permute.xlu0 %789
        %791 = vrot.lane.b32.xlu0 %v727, 113
        %v792 = vpop.permute.xlu0 %791
        %v793 = vsel %vm583, %v790, %v792
        %796 = vrot.lane.b32.xlu0 %v726, 82
        %v797 = vpop.permute.xlu0 %796
        %v799 = vsel %vm590, %v792, %v797
        %800 = vrot.lane.b32.xlu0 %v698, 113
        %v801 = vpop.permute.xlu0 %800
        %802 = vrot.lane.b32.xlu0 %v699, 113
        %v803 = vpop.permute.xlu0 %802
        %v804 = vsel %vm583, %v801, %v803
        %807 = vrot.lane.b32.xlu0 %v698, 82
        %v808 = vpop.permute.xlu0 %807
        %v810 = vsel %vm590, %v803, %v808
        %811 = vrot.lane.b32.xlu0 %v750, 113
        %v812 = vpop.permute.xlu0 %811
        %813 = vrot.lane.b32.xlu0 %v751, 113
        %v814 = vpop.permute.xlu0 %813
        %v815 = vsel %vm583, %v812, %v814
        %818 = vrot.lane.b32.xlu0 %v750, 82
        %v819 = vpop.permute.xlu0 %818
        %v821 = vsel %vm590, %v814, %v819
        %v822 = vpack.c.bf16 %v775, %v764
        %v823 = vpack.c.bf16 %v772, %v761
        %v824 = vpack.c.bf16 %v726, %v788
        %v825 = vpack.c.bf16 %v727, %v785
        %v826 = vpack.c.bf16 %v750, %v698
        %v827 = vpack.c.bf16 %v751, %v699
        %v828 = vpack.c.bf16 %v804, %v793
        %v829 = vpack.c.bf16 %v810, %v799
        %v830 = vpack.c.bf16 %v815, %v815
        %v831 = vpack.c.bf16 %v821, %v821
        %833 = vset.pattern.permute.xlu0 0
        %834 = vperm.xlu0 %833, %v701
        %v835 = vpop.permute.xlu0 %834
        %vm837 = vcmask 588800
        %v839 = vsel %vm837, %v700, 0
        %v842 = vsel %vm641, %v830, 0
        %v845 = vsel %vm641, %v831, 0
        %847 = vmatpush.bf16.msra.mxu0 0
        %848 = vmatpush.bf16.msra.mxu0 0
        %849 = vmatpush.bf16.msra.mxu0 0
        %850 = vmatpush.bf16.msra.mxu0 %v842
        %851 = vmatpush.bf16.msra.mxu0 %v828
        %852 = vmatpush.bf16.msra.mxu0 %v826
        %853 = vmatpush.bf16.msra.mxu0 %v824
        %854 = vmatpush.bf16.msra.mxu0 %v822
        %855 = vmatmul.bf16.gmra.mxu0 %v839
        %v856 = vpop.f32.mrf.mxu0
        %v857 = vadd.f32 %v835, %v856
        %v858 = vpop.f32.mrf.mxu0
        %859 = vdwg.mxu0
        %860 = vmatpush.bf16.msra.mxu0 0
        %861 = vmatpush.bf16.msra.mxu0 0
        %862 = vmatpush.bf16.msra.mxu0 0
        %863 = vmatpush.bf16.msra.mxu0 %v845
        %864 = vmatpush.bf16.msra.mxu0 %v829
        %865 = vmatpush.bf16.msra.mxu0 %v827
        %866 = vmatpush.bf16.msra.mxu0 %v825
        %867 = vmatpush.bf16.msra.mxu0 %v823
        %868 = vmatmul.bf16.gmra.mxu0 %v839
        %v869 = vpop.f32.mrf.mxu0
        %v870 = vadd.f32 %v835, %v869
        %v871 = vpop.f32.mrf.mxu0
        %872 = vdwg.mxu0
        %v873 = vmax.f32 %v857, 0.0
        %v874 = vmax.f32 %v870, 0.0
        %v875 = vld [vmem:[%s5] sm:$0x3]
        %v876 = vld [vmem:[%s6] sm:$0xf]
        %879 = vrot.lane.b32.xlu0 %v873, 114
        %v880 = vpop.permute.xlu0 %879
        %881 = vrot.lane.b32.xlu0 %v874, 114
        %v882 = vpop.permute.xlu0 %881
        %v883 = vsel %vm462, %v880, %v882
        %886 = vrot.lane.b32.xlu0 %v873, 83
        %v887 = vpop.permute.xlu0 %886
        %v889 = vsel %vm471, %v882, %v887
        %890 = vrot.lane.b32.xlu0 %v874, 32
        %v891 = vpop.permute.xlu0 %890
        %893 = vrot.lane.b32.xlu0 %v873, 1
        %v894 = vpop.permute.xlu0 %893
        %895 = vrot.lane.b32.xlu0 %v874, 1
        %v896 = vpop.permute.xlu0 %895
        %v897 = vsel %vm485, %v894, %v896
        %v900 = vsel %vm485, %v891, %v894
        %v901 = vsel %vm492, %v883, %v900
        %v902 = vsel %vm493, %v889, %v897
        %903 = vrot.lane.b32.xlu0 %v874, 45
        %v904 = vpop.permute.xlu0 %903
        %906 = vrot.lane.b32.xlu0 %v873, 14
        %v907 = vpop.permute.xlu0 %906
        %908 = vrot.lane.b32.xlu0 %v874, 14
        %v909 = vpop.permute.xlu0 %908
        %v910 = vsel %vm508, %v907, %v909
        %v913 = vsel %vm508, %v904, %v907
        %914 = vrot.lane.b32.xlu0 %v873, 127
        %v915 = vpop.permute.xlu0 %914
        %916 = vrot.lane.b32.xlu0 %v874, 127
        %v917 = vpop.permute.xlu0 %916
        %v918 = vsel %vm520, %v915, %v917
        %921 = vrot.lane.b32.xlu0 %v873, 96
        %v922 = vpop.permute.xlu0 %921
        %v924 = vsel %vm529, %v917, %v922
        %v925 = vsel %vm533, %v913, %v918
        %v926 = vsel %vm534, %v910, %v924
        %928 = vrot.lane.b32.xlu0 %v902, 46
        %v929 = vpop.permute.xlu0 %928
        %932 = vrot.lane.b32.xlu0 %v901, 15
        %v933 = vpop.permute.xlu0 %932
        %934 = vrot.lane.b32.xlu0 %v902, 15
        %v935 = vpop.permute.xlu0 %934
        %v936 = vsel %vm546, %v933, %v935
        %v939 = vsel %vm546, %v929, %v933
        %940 = vrot.lane.b32.xlu0 %v874, 46
        %v941 = vpop.permute.xlu0 %940
        %943 = vrot.lane.b32.xlu0 %v873, 15
        %v944 = vpop.permute.xlu0 %943
        %945 = vrot.lane.b32.xlu0 %v874, 15
        %v946 = vpop.permute.xlu0 %945
        %v947 = vsel %vm546, %v944, %v946
        %v950 = vsel %vm546, %v941, %v944
        %952 = vrot.lane.b32.xlu0 %v926, 46
        %v953 = vpop.permute.xlu0 %952
        %956 = vrot.lane.b32.xlu0 %v925, 15
        %v957 = vpop.permute.xlu0 %956
        %958 = vrot.lane.b32.xlu0 %v926, 15
        %v959 = vpop.permute.xlu0 %958
        %v960 = vsel %vm546, %v957, %v959
        %v963 = vsel %vm546, %v953, %v957
        %964 = vrot.lane.b32.xlu0 %v901, 113
        %v965 = vpop.permute.xlu0 %964
        %966 = vrot.lane.b32.xlu0 %v902, 113
        %v967 = vpop.permute.xlu0 %966
        %v968 = vsel %vm583, %v965, %v967
        %971 = vrot.lane.b32.xlu0 %v901, 82
        %v972 = vpop.permute.xlu0 %971
        %v974 = vsel %vm590, %v967, %v972
        %975 = vrot.lane.b32.xlu0 %v873, 113
        %v976 = vpop.permute.xlu0 %975
        %977 = vrot.lane.b32.xlu0 %v874, 113
        %v978 = vpop.permute.xlu0 %977
        %v979 = vsel %vm583, %v976, %v978
        %982 = vrot.lane.b32.xlu0 %v873, 82
        %v983 = vpop.permute.xlu0 %982
        %v985 = vsel %vm590, %v978, %v983
        %986 = vrot.lane.b32.xlu0 %v925, 113
        %v987 = vpop.permute.xlu0 %986
        %988 = vrot.lane.b32.xlu0 %v926, 113
        %v989 = vpop.permute.xlu0 %988
        %v990 = vsel %vm583, %v987, %v989
        %993 = vrot.lane.b32.xlu0 %v925, 82
        %v994 = vpop.permute.xlu0 %993
        %v996 = vsel %vm590, %v989, %v994
        %v997 = vpack.c.bf16 %v950, %v939
        %v998 = vpack.c.bf16 %v947, %v936
        %v999 = vpack.c.bf16 %v901, %v963
        %v1000 = vpack.c.bf16 %v902, %v960
        %v1001 = vpack.c.bf16 %v925, %v873
        %v1002 = vpack.c.bf16 %v926, %v874
        %v1003 = vpack.c.bf16 %v979, %v968
        %v1004 = vpack.c.bf16 %v985, %v974
        %v1005 = vpack.c.bf16 %v990, %v990
        %v1006 = vpack.c.bf16 %v996, %v996
        %1008 = vset.pattern.permute.xlu0 0
        %1009 = vperm.xlu0 %1008, %v876
        %v1010 = vpop.permute.xlu0 %1009
        %v1013 = vsel %vm837, %v875, 0
        %v1016 = vsel %vm641, %v1005, 0
        %v1019 = vsel %vm641, %v1006, 0
        %1021 = vmatpush.bf16.msra.mxu0 0
        %1022 = vmatpush.bf16.msra.mxu0 0
        %1023 = vmatpush.bf16.msra.mxu0 0
        %1024 = vmatpush.bf16.msra.mxu0 %v1016
        %1025 = vmatpush.bf16.msra.mxu0 %v1003
        %1026 = vmatpush.bf16.msra.mxu0 %v1001
        %1027 = vmatpush.bf16.msra.mxu0 %v999
        %1028 = vmatpush.bf16.msra.mxu0 %v997
        %1029 = vmatmul.bf16.gmra.mxu0 %v1013
        %v1030 = vpop.f32.mrf.mxu0
        %v1031 = vadd.f32 %v1010, %v1030
        %v1032 = vpop.f32.mrf.mxu0
        %1033 = vdwg.mxu0
        %1034 = vmatpush.bf16.msra.mxu0 0
        %1035 = vmatpush.bf16.msra.mxu0 0
        %1036 = vmatpush.bf16.msra.mxu0 0
        %1037 = vmatpush.bf16.msra.mxu0 %v1019
        %1038 = vmatpush.bf16.msra.mxu0 %v1004
        %1039 = vmatpush.bf16.msra.mxu0 %v1002
        %1040 = vmatpush.bf16.msra.mxu0 %v1000
        %1041 = vmatpush.bf16.msra.mxu0 %v998
        %1042 = vmatmul.bf16.gmra.mxu0 %v1013
        %v1043 = vpop.f32.mrf.mxu0
        %v1044 = vadd.f32 %v1010, %v1043
        %v1045 = vpop.f32.mrf.mxu0
        %1046 = vdwg.mxu0
        %v1047 = vld [vmem:[%s7] sm:$0x3]
        %v1048 = vld [vmem:[%s8] sm:$0xf]
        %v1049 = vld [vmem:[#allocation2] sm:$0xf]
        %v1050 = vld [vmem:[#allocation2 + $0x4] sm:$0xf]
        %v1051 = vld [vmem:[#allocation2 + $0x8] sm:$0xf]
        %v1052 = vld [vmem:[#allocation2 + $0xc] sm:$0xf]
        %v1053 = vld [vmem:[#allocation2 + $0x10] sm:$0xf]
        %v1054 = vld [vmem:[#allocation2 + $0x14] sm:$0xf]
        %v1055 = vld [vmem:[#allocation2 + $0x18] sm:$0xf]
        %v1056 = vld [vmem:[#allocation2 + $0x1c] sm:$0xf]
        %v1057 = vld [vmem:[#allocation2 + $0x20] sm:$0xf]
        %v1058 = vld [vmem:[#allocation2 + $0x24] sm:$0xf]
        %v1059 = vld [vmem:[#allocation2 + $0x28] sm:$0xf]
        %v1060 = vld [vmem:[#allocation2 + $0x2c] sm:$0xf]
        %v1061 = vld [vmem:[#allocation2 + $0x30] sm:$0xf]
        %v1062 = vld [vmem:[#allocation2 + $0x34] sm:$0xf]
        %v1063 = vld [vmem:[#allocation2 + $0x38] sm:$0xf]
        %v1064 = vld [vmem:[#allocation2 + $0x3c] sm:$0xf]
        %v1065 = vld [vmem:[#allocation2 + $0x40] sm:$0xf]
        %v1066 = vld [vmem:[#allocation2 + $0x44] sm:$0xf]
        %v1067 = vld [vmem:[#allocation2 + $0x48] sm:$0xf]
        %v1068 = vld [vmem:[#allocation2 + $0x4c] sm:$0xf]
        %v1069 = vld [vmem:[#allocation2 + $0x50] sm:$0xf]
        %v1070 = vld [vmem:[#allocation2 + $0x54] sm:$0xf]
        %v1071 = vld [vmem:[#allocation2 + $0x58] sm:$0xf]
        %v1072 = vld [vmem:[#allocation2 + $0x5c] sm:$0xf]
        %v1073 = vld [vmem:[#allocation2 + $0x60] sm:$0xf]
        %v1074 = vld [vmem:[#allocation2 + $0x64] sm:$0xf]
        %v1075 = vld [vmem:[#allocation2 + $0x68] sm:$0xf]
        %v1076 = vld [vmem:[#allocation2 + $0x6c] sm:$0xf]
        %v1077 = vld [vmem:[#allocation2 + $0x70] sm:$0x1]
        %v1078 = vld [vmem:[#allocation2 + $0x74] sm:$0xf]
        %v1079 = vld [vmem:[#allocation2 + $0x78] sm:$0xf]
        %v1080 = vld [vmem:[#allocation2 + $0x7c] sm:$0xf]
        %v1081 = vld [vmem:[#allocation2 + $0x80] sm:$0xf]
        %v1082 = vld [vmem:[#allocation2 + $0x84] sm:$0xf]
        %v1083 = vld [vmem:[#allocation2 + $0x88] sm:$0xf]
        %v1084 = vld [vmem:[#allocation2 + $0x8c] sm:$0xf]
        %v1085 = vld [vmem:[#allocation2 + $0x90] sm:$0xf]
        %v1086 = vld [vmem:[#allocation2 + $0x94] sm:$0xf]
        %v1087 = vld [vmem:[#allocation2 + $0x98] sm:$0xf]
        %v1088 = vld [vmem:[#allocation2 + $0x9c] sm:$0xf]
        %v1089 = vld [vmem:[#allocation2 + $0xa0] sm:$0xf]
        %v1090 = vld [vmem:[#allocation2 + $0xa4] sm:$0xf]
        %v1091 = vld [vmem:[#allocation2 + $0xa8] sm:$0xf]
        %v1092 = vld [vmem:[#allocation2 + $0xac] sm:$0xf]
        %v1093 = vld [vmem:[#allocation2 + $0xb0] sm:$0xf]
        %v1094 = vld [vmem:[#allocation2 + $0xb4] sm:$0xf]
        %v1095 = vld [vmem:[#allocation2 + $0xb8] sm:$0xf]
        %v1096 = vld [vmem:[#allocation2 + $0xbc] sm:$0xf]
        %v1097 = vld [vmem:[#allocation2 + $0xc0] sm:$0xf]
        %v1098 = vld [vmem:[#allocation2 + $0xc4] sm:$0xf]
        %v1099 = vld [vmem:[#allocation2 + $0xc8] sm:$0xf]
        %v1100 = vld [vmem:[#allocation2 + $0xcc] sm:$0xf]
        %v1101 = vld [vmem:[#allocation2 + $0xd0] sm:$0xf]
        %v1102 = vld [vmem:[#allocation2 + $0xd4] sm:$0xf]
        %v1103 = vld [vmem:[#allocation2 + $0xd8] sm:$0xf]
        %v1104 = vld [vmem:[#allocation2 + $0xdc] sm:$0xf]
        %v1105 = vld [vmem:[#allocation2 + $0xe0] sm:$0xf]
        %v1106 = vld [vmem:[#allocation2 + $0xe4] sm:$0x1]
        %v1107 = vld [vmem:[#allocation2 + $0xe8] sm:$0xf]
        %v1108 = vld [vmem:[#allocation2 + $0xec] sm:$0xf]
        %v1109 = vld [vmem:[#allocation2 + $0xf0] sm:$0xf]
        %v1110 = vld [vmem:[#allocation2 + $0xf4] sm:$0xf]
        %v1111 = vld [vmem:[#allocation2 + $0xf8] sm:$0xf]
        %v1112 = vld [vmem:[#allocation2 + $0xfc] sm:$0xf]
        %v1113 = vld [vmem:[#allocation2 + $0x100] sm:$0xf]
        %v1114 = vld [vmem:[#allocation2 + $0x104] sm:$0xf]
        %v1115 = vld [vmem:[#allocation2 + $0x108] sm:$0xf]
        %v1116 = vld [vmem:[#allocation2 + $0x10c] sm:$0xf]
        %v1117 = vld [vmem:[#allocation2 + $0x110] sm:$0xf]
        %v1118 = vld [vmem:[#allocation2 + $0x114] sm:$0xf]
        %v1119 = vld [vmem:[#allocation2 + $0x118] sm:$0xf]
        %v1120 = vld [vmem:[#allocation2 + $0x11c] sm:$0xf]
        %v1121 = vld [vmem:[#allocation2 + $0x120] sm:$0xf]
        %v1122 = vld [vmem:[#allocation2 + $0x124] sm:$0xf]
        %v1123 = vld [vmem:[#allocation2 + $0x128] sm:$0xf]
        %v1124 = vld [vmem:[#allocation2 + $0x12c] sm:$0xf]
        %v1125 = vld [vmem:[#allocation2 + $0x130] sm:$0xf]
        %v1126 = vld [vmem:[#allocation2 + $0x134] sm:$0xf]
        %v1127 = vld [vmem:[#allocation2 + $0x138] sm:$0xf]
        %v1128 = vld [vmem:[#allocation2 + $0x13c] sm:$0xf]
        %v1129 = vld [vmem:[#allocation2 + $0x140] sm:$0xf]
        %v1130 = vld [vmem:[#allocation2 + $0x144] sm:$0xf]
        %v1131 = vld [vmem:[#allocation2 + $0x148] sm:$0xf]
        %v1132 = vld [vmem:[#allocation2 + $0x14c] sm:$0xf]
        %v1133 = vld [vmem:[#allocation2 + $0x150] sm:$0xf]
        %v1134 = vld [vmem:[#allocation2 + $0x154] sm:$0xf]
        %v1135 = vld [vmem:[#allocation2 + $0x158] sm:$0x1]
        %v1136 = vld [vmem:[#allocation2 + $0x15c] sm:$0xf]
        %v1137 = vld [vmem:[#allocation2 + $0x160] sm:$0xf]
        %v1138 = vld [vmem:[#allocation2 + $0x164] sm:$0xf]
        %v1139 = vld [vmem:[#allocation2 + $0x168] sm:$0xf]
        %v1140 = vld [vmem:[#allocation2 + $0x16c] sm:$0xf]
        %v1141 = vld [vmem:[#allocation2 + $0x170] sm:$0xf]
        %v1142 = vld [vmem:[#allocation2 + $0x174] sm:$0xf]
        %v1143 = vld [vmem:[#allocation2 + $0x178] sm:$0xf]
        %v1144 = vld [vmem:[#allocation2 + $0x17c] sm:$0xf]
        %v1145 = vld [vmem:[#allocation2 + $0x180] sm:$0xf]
        %v1146 = vld [vmem:[#allocation2 + $0x184] sm:$0xf]
        %v1147 = vld [vmem:[#allocation2 + $0x188] sm:$0xf]
        %v1148 = vld [vmem:[#allocation2 + $0x18c] sm:$0xf]
        %v1149 = vld [vmem:[#allocation2 + $0x190] sm:$0xf]
        %v1150 = vld [vmem:[#allocation2 + $0x194] sm:$0xf]
        %v1151 = vld [vmem:[#allocation2 + $0x198] sm:$0xf]
        %v1152 = vld [vmem:[#allocation2 + $0x19c] sm:$0xf]
        %v1153 = vld [vmem:[#allocation2 + $0x1a0] sm:$0xf]
        %v1154 = vld [vmem:[#allocation2 + $0x1a4] sm:$0xf]
        %v1155 = vld [vmem:[#allocation2 + $0x1a8] sm:$0xf]
        %v1156 = vld [vmem:[#allocation2 + $0x1ac] sm:$0xf]
        %v1157 = vld [vmem:[#allocation2 + $0x1b0] sm:$0xf]
        %v1158 = vld [vmem:[#allocation2 + $0x1b4] sm:$0xf]
        %v1159 = vld [vmem:[#allocation2 + $0x1b8] sm:$0xf]
        %v1160 = vld [vmem:[#allocation2 + $0x1bc] sm:$0xf]
        %v1161 = vld [vmem:[#allocation2 + $0x1c0] sm:$0xf]
        %v1162 = vld [vmem:[#allocation2 + $0x1c4] sm:$0xf]
        %v1163 = vld [vmem:[#allocation2 + $0x1c8] sm:$0xf]
        %v1164 = vld [vmem:[#allocation2 + $0x1cc] sm:$0x1]
        %v1165 = vld [vmem:[#allocation2 + $0x1d0] sm:$0xf]
        %v1166 = vld [vmem:[#allocation2 + $0x1d4] sm:$0xf]
        %v1167 = vld [vmem:[#allocation2 + $0x1d8] sm:$0xf]
        %v1168 = vld [vmem:[#allocation2 + $0x1dc] sm:$0xf]
        %v1169 = vld [vmem:[#allocation2 + $0x1e0] sm:$0xf]
        %v1170 = vld [vmem:[#allocation2 + $0x1e4] sm:$0xf]
        %v1171 = vld [vmem:[#allocation2 + $0x1e8] sm:$0xf]
        %v1172 = vld [vmem:[#allocation2 + $0x1ec] sm:$0xf]
        %v1173 = vld [vmem:[#allocation2 + $0x1f0] sm:$0xf]
        %v1174 = vld [vmem:[#allocation2 + $0x1f4] sm:$0xf]
        %v1175 = vld [vmem:[#allocation2 + $0x1f8] sm:$0xf]
        %v1176 = vld [vmem:[#allocation2 + $0x1fc] sm:$0xf]
        %v1177 = vld [vmem:[#allocation2 + $0x200] sm:$0xf]
        %v1178 = vld [vmem:[#allocation2 + $0x204] sm:$0xf]
        %v1179 = vld [vmem:[#allocation2 + $0x208] sm:$0xf]
        %v1180 = vld [vmem:[#allocation2 + $0x20c] sm:$0xf]
        %v1181 = vld [vmem:[#allocation2 + $0x210] sm:$0xf]
        %v1182 = vld [vmem:[#allocation2 + $0x214] sm:$0xf]
        %v1183 = vld [vmem:[#allocation2 + $0x218] sm:$0xf]
        %v1184 = vld [vmem:[#allocation2 + $0x21c] sm:$0xf]
        %v1185 = vld [vmem:[#allocation2 + $0x220] sm:$0xf]
        %v1186 = vld [vmem:[#allocation2 + $0x224] sm:$0xf]
        %v1187 = vld [vmem:[#allocation2 + $0x228] sm:$0xf]
        %v1188 = vld [vmem:[#allocation2 + $0x22c] sm:$0xf]
        %v1189 = vld [vmem:[#allocation2 + $0x230] sm:$0xf]
        %v1190 = vld [vmem:[#allocation2 + $0x234] sm:$0xf]
        %v1191 = vld [vmem:[#allocation2 + $0x238] sm:$0xf]
        %v1192 = vld [vmem:[#allocation2 + $0x23c] sm:$0xf]
        %v1193 = vld [vmem:[#allocation2 + $0x240] sm:$0x1]
        %v1194 = vld [vmem:[#allocation2 + $0x244] sm:$0xf]
        %v1195 = vld [vmem:[#allocation2 + $0x248] sm:$0xf]
        %v1196 = vld [vmem:[#allocation2 + $0x24c] sm:$0xf]
        %v1197 = vld [vmem:[#allocation2 + $0x250] sm:$0xf]
        %v1198 = vld [vmem:[#allocation2 + $0x254] sm:$0xf]
        %v1199 = vld [vmem:[#allocation2 + $0x258] sm:$0xf]
        %v1200 = vld [vmem:[#allocation2 + $0x25c] sm:$0xf]
        %v1201 = vld [vmem:[#allocation2 + $0x260] sm:$0xf]
        %v1202 = vld [vmem:[#allocation2 + $0x264] sm:$0xf]
        %v1203 = vld [vmem:[#allocation2 + $0x268] sm:$0xf]
        %v1204 = vld [vmem:[#allocation2 + $0x26c] sm:$0xf]
        %v1205 = vld [vmem:[#allocation2 + $0x270] sm:$0xf]
        %v1206 = vld [vmem:[#allocation2 + $0x274] sm:$0xf]
        %v1207 = vld [vmem:[#allocation2 + $0x278] sm:$0xf]
        %v1208 = vld [vmem:[#allocation2 + $0x27c] sm:$0xf]
        %v1209 = vld [vmem:[#allocation2 + $0x280] sm:$0xf]
        %v1210 = vld [vmem:[#allocation2 + $0x284] sm:$0xf]
        %v1211 = vld [vmem:[#allocation2 + $0x288] sm:$0xf]
        %v1212 = vld [vmem:[#allocation2 + $0x28c] sm:$0xf]
        %v1213 = vld [vmem:[#allocation2 + $0x290] sm:$0xf]
        %v1214 = vld [vmem:[#allocation2 + $0x294] sm:$0xf]
        %v1215 = vld [vmem:[#allocation2 + $0x298] sm:$0xf]
        %v1216 = vld [vmem:[#allocation2 + $0x29c] sm:$0xf]
        %v1217 = vld [vmem:[#allocation2 + $0x2a0] sm:$0xf]
        %v1218 = vld [vmem:[#allocation2 + $0x2a4] sm:$0xf]
        %v1219 = vld [vmem:[#allocation2 + $0x2a8] sm:$0xf]
        %v1220 = vld [vmem:[#allocation2 + $0x2ac] sm:$0xf]
        %v1221 = vld [vmem:[#allocation2 + $0x2b0] sm:$0xf]
        %v1222 = vld [vmem:[#allocation2 + $0x2b4] sm:$0x1]
        %v1223 = vld [vmem:[#allocation2 + $0x2b8] sm:$0xf]
        %v1224 = vld [vmem:[#allocation2 + $0x2bc] sm:$0xf]
        %v1225 = vld [vmem:[#allocation2 + $0x2c0] sm:$0xf]
        %v1226 = vld [vmem:[#allocation2 + $0x2c4] sm:$0xf]
        %v1227 = vld [vmem:[#allocation2 + $0x2c8] sm:$0xf]
        %v1228 = vld [vmem:[#allocation2 + $0x2cc] sm:$0xf]
        %v1229 = vld [vmem:[#allocation2 + $0x2d0] sm:$0xf]
        %v1230 = vld [vmem:[#allocation2 + $0x2d4] sm:$0xf]
        %v1231 = vld [vmem:[#allocation2 + $0x2d8] sm:$0xf]
        %v1232 = vld [vmem:[#allocation2 + $0x2dc] sm:$0xf]
        %v1233 = vld [vmem:[#allocation2 + $0x2e0] sm:$0xf]
        %v1234 = vld [vmem:[#allocation2 + $0x2e4] sm:$0xf]
        %v1235 = vld [vmem:[#allocation2 + $0x2e8] sm:$0xf]
        %v1236 = vld [vmem:[#allocation2 + $0x2ec] sm:$0xf]
        %v1237 = vld [vmem:[#allocation2 + $0x2f0] sm:$0xf]
        %v1238 = vld [vmem:[#allocation2 + $0x2f4] sm:$0xf]
        %v1239 = vld [vmem:[#allocation2 + $0x2f8] sm:$0xf]
        %v1240 = vld [vmem:[#allocation2 + $0x2fc] sm:$0xf]
        %v1241 = vld [vmem:[#allocation2 + $0x300] sm:$0xf]
        %v1242 = vld [vmem:[#allocation2 + $0x304] sm:$0xf]
        %v1243 = vld [vmem:[#allocation2 + $0x308] sm:$0xf]
        %v1244 = vld [vmem:[#allocation2 + $0x30c] sm:$0xf]
        %v1245 = vld [vmem:[#allocation2 + $0x310] sm:$0xf]
        %v1246 = vld [vmem:[#allocation2 + $0x314] sm:$0xf]
        %v1247 = vld [vmem:[#allocation2 + $0x318] sm:$0xf]
        %v1248 = vld [vmem:[#allocation2 + $0x31c] sm:$0xf]
        %v1249 = vld [vmem:[#allocation2 + $0x320] sm:$0xf]
        %v1250 = vld [vmem:[#allocation2 + $0x324] sm:$0xf]
        %v1251 = vld [vmem:[#allocation2 + $0x328] sm:$0x1]
        %v1252 = vld [vmem:[#allocation2 + $0x32c] sm:$0xf]
        %v1253 = vld [vmem:[#allocation2 + $0x330] sm:$0xf]
        %v1254 = vld [vmem:[#allocation2 + $0x334] sm:$0xf]
        %v1255 = vld [vmem:[#allocation2 + $0x338] sm:$0xf]
        %v1256 = vld [vmem:[#allocation2 + $0x33c] sm:$0xf]
        %v1257 = vld [vmem:[#allocation2 + $0x340] sm:$0xf]
        %v1258 = vld [vmem:[#allocation2 + $0x344] sm:$0xf]
        %v1259 = vld [vmem:[#allocation2 + $0x348] sm:$0xf]
        %v1260 = vld [vmem:[#allocation2 + $0x34c] sm:$0xf]
        %v1261 = vld [vmem:[#allocation2 + $0x350] sm:$0xf]
        %v1262 = vld [vmem:[#allocation2 + $0x354] sm:$0xf]
        %v1263 = vld [vmem:[#allocation2 + $0x358] sm:$0xf]
        %v1264 = vld [vmem:[#allocation2 + $0x35c] sm:$0xf]
        %v1265 = vld [vmem:[#allocation2 + $0x360] sm:$0xf]
        %v1266 = vld [vmem:[#allocation2 + $0x364] sm:$0xf]
        %v1267 = vld [vmem:[#allocation2 + $0x368] sm:$0xf]
        %v1268 = vld [vmem:[#allocation2 + $0x36c] sm:$0xf]
        %v1269 = vld [vmem:[#allocation2 + $0x370] sm:$0xf]
        %v1270 = vld [vmem:[#allocation2 + $0x374] sm:$0xf]
        %v1271 = vld [vmem:[#allocation2 + $0x378] sm:$0xf]
        %v1272 = vld [vmem:[#allocation2 + $0x37c] sm:$0xf]
        %v1273 = vld [vmem:[#allocation2 + $0x380] sm:$0xf]
        %v1274 = vld [vmem:[#allocation2 + $0x384] sm:$0xf]
        %v1275 = vld [vmem:[#allocation2 + $0x388] sm:$0xf]
        %v1276 = vld [vmem:[#allocation2 + $0x38c] sm:$0xf]
        %v1277 = vld [vmem:[#allocation2 + $0x390] sm:$0xf]
        %v1278 = vld [vmem:[#allocation2 + $0x394] sm:$0xf]
        %v1279 = vld [vmem:[#allocation2 + $0x398] sm:$0xf]
        %v1280 = vld [vmem:[#allocation2 + $0x39c] sm:$0x1]
        %v1281 = vld [vmem:[#allocation2 + $0x3a0] sm:$0xf]
        %v1282 = vld [vmem:[#allocation2 + $0x3a4] sm:$0xf]
        %v1283 = vld [vmem:[#allocation2 + $0x3a8] sm:$0xf]
        %v1284 = vld [vmem:[#allocation2 + $0x3ac] sm:$0xf]
        %v1285 = vld [vmem:[#allocation2 + $0x3b0] sm:$0xf]
        %v1286 = vld [vmem:[#allocation2 + $0x3b4] sm:$0xf]
        %v1287 = vld [vmem:[#allocation2 + $0x3b8] sm:$0xf]
        %v1288 = vld [vmem:[#allocation2 + $0x3bc] sm:$0xf]
        %v1289 = vld [vmem:[#allocation2 + $0x3c0] sm:$0xf]
        %v1290 = vld [vmem:[#allocation2 + $0x3c4] sm:$0xf]
        %v1291 = vld [vmem:[#allocation2 + $0x3c8] sm:$0xf]
        %v1292 = vld [vmem:[#allocation2 + $0x3cc] sm:$0xf]
        %v1293 = vld [vmem:[#allocation2 + $0x3d0] sm:$0xf]
        %v1294 = vld [vmem:[#allocation2 + $0x3d4] sm:$0xf]
        %v1295 = vld [vmem:[#allocation2 + $0x3d8] sm:$0xf]
        %v1296 = vld [vmem:[#allocation2 + $0x3dc] sm:$0xf]
        %v1297 = vld [vmem:[#allocation2 + $0x3e0] sm:$0xf]
        %v1298 = vld [vmem:[#allocation2 + $0x3e4] sm:$0xf]
        %v1299 = vld [vmem:[#allocation2 + $0x3e8] sm:$0xf]
        %v1300 = vld [vmem:[#allocation2 + $0x3ec] sm:$0xf]
        %v1301 = vld [vmem:[#allocation2 + $0x3f0] sm:$0xf]
        %v1302 = vld [vmem:[#allocation2 + $0x3f4] sm:$0xf]
        %v1303 = vld [vmem:[#allocation2 + $0x3f8] sm:$0xf]
        %v1304 = vld [vmem:[#allocation2 + $0x3fc] sm:$0xf]
        %v1305 = vld [vmem:[#allocation2 + $0x400] sm:$0xf]
        %v1306 = vld [vmem:[#allocation2 + $0x404] sm:$0xf]
        %v1307 = vld [vmem:[#allocation2 + $0x408] sm:$0xf]
        %v1308 = vld [vmem:[#allocation2 + $0x40c] sm:$0xf]
        %v1309 = vld [vmem:[#allocation2 + $0x410] sm:$0x1]
        %v1310 = vpack.c.bf16 %v1031, %v1031
        %v1311 = vpack.c.bf16 %v1044, %v1044
        %v1341 = vunpack.c.l.b16 %v1049
        %v1342 = vunpack.c.l.b16 %v1050
        %v1343 = vunpack.c.l.b16 %v1051
        %v1344 = vunpack.c.l.b16 %v1052
        %v1345 = vunpack.c.l.b16 %v1053
        %v1346 = vunpack.c.l.b16 %v1054
        %v1347 = vunpack.c.l.b16 %v1055
        %v1348 = vunpack.c.l.b16 %v1056
        %v1349 = vunpack.c.l.b16 %v1057
        %v1350 = vunpack.c.l.b16 %v1058
        %v1351 = vunpack.c.l.b16 %v1059
        %v1352 = vunpack.c.l.b16 %v1060
        %v1353 = vunpack.c.l.b16 %v1061
        %v1354 = vunpack.c.l.b16 %v1062
        %v1355 = vunpack.c.l.b16 %v1063
        %v1356 = vunpack.c.l.b16 %v1064
        %v1357 = vunpack.c.l.b16 %v1065
        %v1358 = vunpack.c.l.b16 %v1066
        %v1359 = vunpack.c.l.b16 %v1067
        %v1360 = vunpack.c.l.b16 %v1068
        %v1361 = vunpack.c.l.b16 %v1069
        %v1362 = vunpack.c.l.b16 %v1070
        %v1363 = vunpack.c.l.b16 %v1071
        %v1364 = vunpack.c.l.b16 %v1072
        %v1365 = vunpack.c.l.b16 %v1073
        %v1366 = vunpack.c.l.b16 %v1074
        %v1367 = vunpack.c.l.b16 %v1075
        %v1368 = vunpack.c.l.b16 %v1076
        %v1369 = vunpack.c.l.b16 %v1077
        %v1370 = vpack.c.b16 %v1342, %v1341
        %v1371 = vpack.c.b16 %v1344, %v1343
        %v1372 = vpack.c.b16 %v1346, %v1345
        %v1373 = vpack.c.b16 %v1348, %v1347
        %v1374 = vpack.c.b16 %v1350, %v1349
        %v1375 = vpack.c.b16 %v1352, %v1351
        %v1376 = vpack.c.b16 %v1354, %v1353
        %v1377 = vpack.c.b16 %v1356, %v1355
        %v1378 = vpack.c.b16 %v1358, %v1357
        %v1379 = vpack.c.b16 %v1360, %v1359
        %v1380 = vpack.c.b16 %v1362, %v1361
        %v1381 = vpack.c.b16 %v1364, %v1363
        %v1382 = vpack.c.b16 %v1366, %v1365
        %v1383 = vpack.c.b16 %v1368, %v1367
        %v1384 = vpack.c.b16 %v1369, %v1369
        %vm1399 = vcmask 793600
        %v1401 = vsel %vm1399, %v1311, 0
        %vm1403 = vcmask 1040384
        %v1404 = vsel 0, 4294967295, 65535
        %v1405 = vsel %vm1403, %v1404, 0
        %v1407 = vand.u32 %v1384, %v1405
        %1409 = vmatpush.bf16.msra.mxu0 %v1377
        %1410 = vmatpush.bf16.msra.mxu0 %v1376
        %1411 = vmatpush.bf16.msra.mxu0 %v1375
        %1412 = vmatpush.bf16.msra.mxu0 %v1374
        %1413 = vmatpush.bf16.msra.mxu0 %v1373
        %1414 = vmatpush.bf16.msra.mxu0 %v1372
        %1415 = vmatpush.bf16.msra.mxu0 %v1371
        %1416 = vmatpush.bf16.msra.mxu0 %v1370
        %1417 = vmatmul.bf16.gmra.mxu0 %v1310
        %v1418 = vpop.f32.mrf.mxu0
        %v1419 = vadd.f32 0.0, %v1418
        %v1420 = vpop.f32.mrf.mxu0
        %1421 = vdwg.mxu0
        %1422 = vmatpush.bf16.msra.mxu0 0
        %1423 = vmatpush.bf16.msra.mxu0 %v1407
        %1424 = vmatpush.bf16.msra.mxu0 %v1383
        %1425 = vmatpush.bf16.msra.mxu0 %v1382
        %1426 = vmatpush.bf16.msra.mxu0 %v1381
        %1427 = vmatpush.bf16.msra.mxu0 %v1380
        %1428 = vmatpush.bf16.msra.mxu0 %v1379
        %1429 = vmatpush.bf16.msra.mxu0 %v1378
        %1430 = vmatmul.bf16.gmra.mxu0 %v1401
        %v1431 = vpop.f32.mrf.mxu0
        %v1432 = vadd.f32 %v1419, %v1431
        %v1433 = vpop.f32.mrf.mxu0
        %1434 = vdwg.mxu0
        %v1464 = vunpack.c.l.b16 %v1078
        %v1465 = vunpack.c.l.b16 %v1079
        %v1466 = vunpack.c.l.b16 %v1080
        %v1467 = vunpack.c.l.b16 %v1081
        %v1468 = vunpack.c.l.b16 %v1082
        %v1469 = vunpack.c.l.b16 %v1083
        %v1470 = vunpack.c.l.b16 %v1084
        %v1471 = vunpack.c.l.b16 %v1085
        %v1472 = vunpack.c.l.b16 %v1086
        %v1473 = vunpack.c.l.b16 %v1087
        %v1474 = vunpack.c.l.b16 %v1088
        %v1475 = vunpack.c.l.b16 %v1089
        %v1476 = vunpack.c.l.b16 %v1090
        %v1477 = vunpack.c.l.b16 %v1091
        %v1478 = vunpack.c.l.b16 %v1092
        %v1479 = vunpack.c.l.b16 %v1093
        %v1480 = vunpack.c.l.b16 %v1094
        %v1481 = vunpack.c.l.b16 %v1095
        %v1482 = vunpack.c.l.b16 %v1096
        %v1483 = vunpack.c.l.b16 %v1097
        %v1484 = vunpack.c.l.b16 %v1098
        %v1485 = vunpack.c.l.b16 %v1099
        %v1486 = vunpack.c.l.b16 %v1100
        %v1487 = vunpack.c.l.b16 %v1101
        %v1488 = vunpack.c.l.b16 %v1102
        %v1489 = vunpack.c.l.b16 %v1103
        %v1490 = vunpack.c.l.b16 %v1104
        %v1491 = vunpack.c.l.b16 %v1105
        %v1492 = vunpack.c.l.b16 %v1106
        %v1493 = vpack.c.b16 %v1465, %v1464
        %v1494 = vpack.c.b16 %v1467, %v1466
        %v1495 = vpack.c.b16 %v1469, %v1468
        %v1496 = vpack.c.b16 %v1471, %v1470
        %v1497 = vpack.c.b16 %v1473, %v1472
        %v1498 = vpack.c.b16 %v1475, %v1474
        %v1499 = vpack.c.b16 %v1477, %v1476
        %v1500 = vpack.c.b16 %v1479, %v1478
        %v1501 = vpack.c.b16 %v1481, %v1480
        %v1502 = vpack.c.b16 %v1483, %v1482
        %v1503 = vpack.c.b16 %v1485, %v1484
        %v1504 = vpack.c.b16 %v1487, %v1486
        %v1505 = vpack.c.b16 %v1489, %v1488
        %v1506 = vpack.c.b16 %v1491, %v1490
        %v1507 = vpack.c.b16 %v1492, %v1492
        %v1523 = vand.u32 %v1507, %v1405
        %1525 = vmatpush.bf16.msra.mxu0 %v1500
        %1526 = vmatpush.bf16.msra.mxu0 %v1499
        %1527 = vmatpush.bf16.msra.mxu0 %v1498
        %1528 = vmatpush.bf16.msra.mxu0 %v1497
        %1529 = vmatpush.bf16.msra.mxu0 %v1496
        %1530 = vmatpush.bf16.msra.mxu0 %v1495
        %1531 = vmatpush.bf16.msra.mxu0 %v1494
        %1532 = vmatpush.bf16.msra.mxu0 %v1493
        %1533 = vmatmul.bf16.gmra.mxu0 %v1310
        %v1534 = vpop.f32.mrf.mxu0
        %v1535 = vadd.f32 0.0, %v1534
        %v1536 = vpop.f32.mrf.mxu0
        %1537 = vdwg.mxu0
        %1538 = vmatpush.bf16.msra.mxu0 0
        %1539 = vmatpush.bf16.msra.mxu0 %v1523
        %1540 = vmatpush.bf16.msra.mxu0 %v1506
        %1541 = vmatpush.bf16.msra.mxu0 %v1505
        %1542 = vmatpush.bf16.msra.mxu0 %v1504
        %1543 = vmatpush.bf16.msra.mxu0 %v1503
        %1544 = vmatpush.bf16.msra.mxu0 %v1502
        %1545 = vmatpush.bf16.msra.mxu0 %v1501
        %1546 = vmatmul.bf16.gmra.mxu0 %v1401
        %v1547 = vpop.f32.mrf.mxu0
        %v1548 = vadd.f32 %v1535, %v1547
        %v1549 = vpop.f32.mrf.mxu0
        %1550 = vdwg.mxu0
        %v1580 = vunpack.c.l.b16 %v1107
        %v1581 = vunpack.c.l.b16 %v1108
        %v1582 = vunpack.c.l.b16 %v1109
        %v1583 = vunpack.c.l.b16 %v1110
        %v1584 = vunpack.c.l.b16 %v1111
        %v1585 = vunpack.c.l.b16 %v1112
        %v1586 = vunpack.c.l.b16 %v1113
        %v1587 = vunpack.c.l.b16 %v1114
        %v1588 = vunpack.c.l.b16 %v1115
        %v1589 = vunpack.c.l.b16 %v1116
        %v1590 = vunpack.c.l.b16 %v1117
        %v1591 = vunpack.c.l.b16 %v1118
        %v1592 = vunpack.c.l.b16 %v1119
        %v1593 = vunpack.c.l.b16 %v1120
        %v1594 = vunpack.c.l.b16 %v1121
        %v1595 = vunpack.c.l.b16 %v1122
        %v1596 = vunpack.c.l.b16 %v1123
        %v1597 = vunpack.c.l.b16 %v1124
        %v1598 = vunpack.c.l.b16 %v1125
        %v1599 = vunpack.c.l.b16 %v1126
        %v1600 = vunpack.c.l.b16 %v1127
        %v1601 = vunpack.c.l.b16 %v1128
        %v1602 = vunpack.c.l.b16 %v1129
        %v1603 = vunpack.c.l.b16 %v1130
        %v1604 = vunpack.c.l.b16 %v1131
        %v1605 = vunpack.c.l.b16 %v1132
        %v1606 = vunpack.c.l.b16 %v1133
        %v1607 = vunpack.c.l.b16 %v1134
        %v1608 = vunpack.c.l.b16 %v1135
        %v1609 = vpack.c.b16 %v1581, %v1580
        %v1610 = vpack.c.b16 %v1583, %v1582
        %v1611 = vpack.c.b16 %v1585, %v1584
        %v1612 = vpack.c.b16 %v1587, %v1586
        %v1613 = vpack.c.b16 %v1589, %v1588
        %v1614 = vpack.c.b16 %v1591, %v1590
        %v1615 = vpack.c.b16 %v1593, %v1592
        %v1616 = vpack.c.b16 %v1595, %v1594
        %v1617 = vpack.c.b16 %v1597, %v1596
        %v1618 = vpack.c.b16 %v1599, %v1598
        %v1619 = vpack.c.b16 %v1601, %v1600
        %v1620 = vpack.c.b16 %v1603, %v1602
        %v1621 = vpack.c.b16 %v1605, %v1604
        %v1622 = vpack.c.b16 %v1607, %v1606
        %v1623 = vpack.c.b16 %v1608, %v1608
        %v1639 = vand.u32 %v1623, %v1405
        %1641 = vmatpush.bf16.msra.mxu0 %v1616
        %1642 = vmatpush.bf16.msra.mxu0 %v1615
        %1643 = vmatpush.bf16.msra.mxu0 %v1614
        %1644 = vmatpush.bf16.msra.mxu0 %v1613
        %1645 = vmatpush.bf16.msra.mxu0 %v1612
        %1646 = vmatpush.bf16.msra.mxu0 %v1611
        %1647 = vmatpush.bf16.msra.mxu0 %v1610
        %1648 = vmatpush.bf16.msra.mxu0 %v1609
        %1649 = vmatmul.bf16.gmra.mxu0 %v1310
        %v1650 = vpop.f32.mrf.mxu0
        %v1651 = vadd.f32 0.0, %v1650
        %v1652 = vpop.f32.mrf.mxu0
        %1653 = vdwg.mxu0
        %1654 = vmatpush.bf16.msra.mxu0 0
        %1655 = vmatpush.bf16.msra.mxu0 %v1639
        %1656 = vmatpush.bf16.msra.mxu0 %v1622
        %1657 = vmatpush.bf16.msra.mxu0 %v1621
        %1658 = vmatpush.bf16.msra.mxu0 %v1620
        %1659 = vmatpush.bf16.msra.mxu0 %v1619
        %1660 = vmatpush.bf16.msra.mxu0 %v1618
        %1661 = vmatpush.bf16.msra.mxu0 %v1617
        %1662 = vmatmul.bf16.gmra.mxu0 %v1401
        %v1663 = vpop.f32.mrf.mxu0
        %v1664 = vadd.f32 %v1651, %v1663
        %v1665 = vpop.f32.mrf.mxu0
        %1666 = vdwg.mxu0
        %v1696 = vunpack.c.l.b16 %v1136
        %v1697 = vunpack.c.l.b16 %v1137
        %v1698 = vunpack.c.l.b16 %v1138
        %v1699 = vunpack.c.l.b16 %v1139
        %v1700 = vunpack.c.l.b16 %v1140
        %v1701 = vunpack.c.l.b16 %v1141
        %v1702 = vunpack.c.l.b16 %v1142
        %v1703 = vunpack.c.l.b16 %v1143
        %v1704 = vunpack.c.l.b16 %v1144
        %v1705 = vunpack.c.l.b16 %v1145
        %v1706 = vunpack.c.l.b16 %v1146
        %v1707 = vunpack.c.l.b16 %v1147
        %v1708 = vunpack.c.l.b16 %v1148
        %v1709 = vunpack.c.l.b16 %v1149
        %v1710 = vunpack.c.l.b16 %v1150
        %v1711 = vunpack.c.l.b16 %v1151
        %v1712 = vunpack.c.l.b16 %v1152
        %v1713 = vunpack.c.l.b16 %v1153
        %v1714 = vunpack.c.l.b16 %v1154
        %v1715 = vunpack.c.l.b16 %v1155
        %v1716 = vunpack.c.l.b16 %v1156
        %v1717 = vunpack.c.l.b16 %v1157
        %v1718 = vunpack.c.l.b16 %v1158
        %v1719 = vunpack.c.l.b16 %v1159
        %v1720 = vunpack.c.l.b16 %v1160
        %v1721 = vunpack.c.l.b16 %v1161
        %v1722 = vunpack.c.l.b16 %v1162
        %v1723 = vunpack.c.l.b16 %v1163
        %v1724 = vunpack.c.l.b16 %v1164
        %v1725 = vpack.c.b16 %v1697, %v1696
        %v1726 = vpack.c.b16 %v1699, %v1698
        %v1727 = vpack.c.b16 %v1701, %v1700
        %v1728 = vpack.c.b16 %v1703, %v1702
        %v1729 = vpack.c.b16 %v1705, %v1704
        %v1730 = vpack.c.b16 %v1707, %v1706
        %v1731 = vpack.c.b16 %v1709, %v1708
        %v1732 = vpack.c.b16 %v1711, %v1710
        %v1733 = vpack.c.b16 %v1713, %v1712
        %v1734 = vpack.c.b16 %v1715, %v1714
        %v1735 = vpack.c.b16 %v1717, %v1716
        %v1736 = vpack.c.b16 %v1719, %v1718
        %v1737 = vpack.c.b16 %v1721, %v1720
        %v1738 = vpack.c.b16 %v1723, %v1722
        %v1739 = vpack.c.b16 %v1724, %v1724
        %v1755 = vand.u32 %v1739, %v1405
        %1757 = vmatpush.bf16.msra.mxu0 %v1732
        %1758 = vmatpush.bf16.msra.mxu0 %v1731
        %1759 = vmatpush.bf16.msra.mxu0 %v1730
        %1760 = vmatpush.bf16.msra.mxu0 %v1729
        %1761 = vmatpush.bf16.msra.mxu0 %v1728
        %1762 = vmatpush.bf16.msra.mxu0 %v1727
        %1763 = vmatpush.bf16.msra.mxu0 %v1726
        %1764 = vmatpush.bf16.msra.mxu0 %v1725
        %1765 = vmatmul.bf16.gmra.mxu0 %v1310
        %v1766 = vpop.f32.mrf.mxu0
        %v1767 = vadd.f32 0.0, %v1766
        %v1768 = vpop.f32.mrf.mxu0
        %1769 = vdwg.mxu0
        %1770 = vmatpush.bf16.msra.mxu0 0
        %1771 = vmatpush.bf16.msra.mxu0 %v1755
        %1772 = vmatpush.bf16.msra.mxu0 %v1738
        %1773 = vmatpush.bf16.msra.mxu0 %v1737
        %1774 = vmatpush.bf16.msra.mxu0 %v1736
        %1775 = vmatpush.bf16.msra.mxu0 %v1735
        %1776 = vmatpush.bf16.msra.mxu0 %v1734
        %1777 = vmatpush.bf16.msra.mxu0 %v1733
        %1778 = vmatmul.bf16.gmra.mxu0 %v1401
        %v1779 = vpop.f32.mrf.mxu0
        %v1780 = vadd.f32 %v1767, %v1779
        %v1781 = vpop.f32.mrf.mxu0
        %1782 = vdwg.mxu0
        %v1812 = vunpack.c.l.b16 %v1165
        %v1813 = vunpack.c.l.b16 %v1166
        %v1814 = vunpack.c.l.b16 %v1167
        %v1815 = vunpack.c.l.b16 %v1168
        %v1816 = vunpack.c.l.b16 %v1169
        %v1817 = vunpack.c.l.b16 %v1170
        %v1818 = vunpack.c.l.b16 %v1171
        %v1819 = vunpack.c.l.b16 %v1172
        %v1820 = vunpack.c.l.b16 %v1173
        %v1821 = vunpack.c.l.b16 %v1174
        %v1822 = vunpack.c.l.b16 %v1175
        %v1823 = vunpack.c.l.b16 %v1176
        %v1824 = vunpack.c.l.b16 %v1177
        %v1825 = vunpack.c.l.b16 %v1178
        %v1826 = vunpack.c.l.b16 %v1179
        %v1827 = vunpack.c.l.b16 %v1180
        %v1828 = vunpack.c.l.b16 %v1181
        %v1829 = vunpack.c.l.b16 %v1182
        %v1830 = vunpack.c.l.b16 %v1183
        %v1831 = vunpack.c.l.b16 %v1184
        %v1832 = vunpack.c.l.b16 %v1185
        %v1833 = vunpack.c.l.b16 %v1186
        %v1834 = vunpack.c.l.b16 %v1187
        %v1835 = vunpack.c.l.b16 %v1188
        %v1836 = vunpack.c.l.b16 %v1189
        %v1837 = vunpack.c.l.b16 %v1190
        %v1838 = vunpack.c.l.b16 %v1191
        %v1839 = vunpack.c.l.b16 %v1192
        %v1840 = vunpack.c.l.b16 %v1193
        %v1841 = vpack.c.b16 %v1813, %v1812
        %v1842 = vpack.c.b16 %v1815, %v1814
        %v1843 = vpack.c.b16 %v1817, %v1816
        %v1844 = vpack.c.b16 %v1819, %v1818
        %v1845 = vpack.c.b16 %v1821, %v1820
        %v1846 = vpack.c.b16 %v1823, %v1822
        %v1847 = vpack.c.b16 %v1825, %v1824
        %v1848 = vpack.c.b16 %v1827, %v1826
        %v1849 = vpack.c.b16 %v1829, %v1828
        %v1850 = vpack.c.b16 %v1831, %v1830
        %v1851 = vpack.c.b16 %v1833, %v1832
        %v1852 = vpack.c.b16 %v1835, %v1834
        %v1853 = vpack.c.b16 %v1837, %v1836
        %v1854 = vpack.c.b16 %v1839, %v1838
        %v1855 = vpack.c.b16 %v1840, %v1840
        %v1871 = vand.u32 %v1855, %v1405
        %1873 = vmatpush.bf16.msra.mxu0 %v1848
        %1874 = vmatpush.bf16.msra.mxu0 %v1847
        %1875 = vmatpush.bf16.msra.mxu0 %v1846
        %1876 = vmatpush.bf16.msra.mxu0 %v1845
        %1877 = vmatpush.bf16.msra.mxu0 %v1844
        %1878 = vmatpush.bf16.msra.mxu0 %v1843
        %1879 = vmatpush.bf16.msra.mxu0 %v1842
        %1880 = vmatpush.bf16.msra.mxu0 %v1841
        %1881 = vmatmul.bf16.gmra.mxu0 %v1310
        %v1882 = vpop.f32.mrf.mxu0
        %v1883 = vadd.f32 0.0, %v1882
        %v1884 = vpop.f32.mrf.mxu0
        %1885 = vdwg.mxu0
        %1886 = vmatpush.bf16.msra.mxu0 0
        %1887 = vmatpush.bf16.msra.mxu0 %v1871
        %1888 = vmatpush.bf16.msra.mxu0 %v1854
        %1889 = vmatpush.bf16.msra.mxu0 %v1853
        %1890 = vmatpush.bf16.msra.mxu0 %v1852
        %1891 = vmatpush.bf16.msra.mxu0 %v1851
        %1892 = vmatpush.bf16.msra.mxu0 %v1850
        %1893 = vmatpush.bf16.msra.mxu0 %v1849
        %1894 = vmatmul.bf16.gmra.mxu0 %v1401
        %v1895 = vpop.f32.mrf.mxu0
        %v1896 = vadd.f32 %v1883, %v1895
        %v1897 = vpop.f32.mrf.mxu0
        %1898 = vdwg.mxu0
        %v1928 = vunpack.c.l.b16 %v1194
        %v1929 = vunpack.c.l.b16 %v1195
        %v1930 = vunpack.c.l.b16 %v1196
        %v1931 = vunpack.c.l.b16 %v1197
        %v1932 = vunpack.c.l.b16 %v1198
        %v1933 = vunpack.c.l.b16 %v1199
        %v1934 = vunpack.c.l.b16 %v1200
        %v1935 = vunpack.c.l.b16 %v1201
        %v1936 = vunpack.c.l.b16 %v1202
        %v1937 = vunpack.c.l.b16 %v1203
        %v1938 = vunpack.c.l.b16 %v1204
        %v1939 = vunpack.c.l.b16 %v1205
        %v1940 = vunpack.c.l.b16 %v1206
        %v1941 = vunpack.c.l.b16 %v1207
        %v1942 = vunpack.c.l.b16 %v1208
        %v1943 = vunpack.c.l.b16 %v1209
        %v1944 = vunpack.c.l.b16 %v1210
        %v1945 = vunpack.c.l.b16 %v1211
        %v1946 = vunpack.c.l.b16 %v1212
        %v1947 = vunpack.c.l.b16 %v1213
        %v1948 = vunpack.c.l.b16 %v1214
        %v1949 = vunpack.c.l.b16 %v1215
        %v1950 = vunpack.c.l.b16 %v1216
        %v1951 = vunpack.c.l.b16 %v1217
        %v1952 = vunpack.c.l.b16 %v1218
        %v1953 = vunpack.c.l.b16 %v1219
        %v1954 = vunpack.c.l.b16 %v1220
        %v1955 = vunpack.c.l.b16 %v1221
        %v1956 = vunpack.c.l.b16 %v1222
        %v1957 = vpack.c.b16 %v1929, %v1928
        %v1958 = vpack.c.b16 %v1931, %v1930
        %v1959 = vpack.c.b16 %v1933, %v1932
        %v1960 = vpack.c.b16 %v1935, %v1934
        %v1961 = vpack.c.b16 %v1937, %v1936
        %v1962 = vpack.c.b16 %v1939, %v1938
        %v1963 = vpack.c.b16 %v1941, %v1940
        %v1964 = vpack.c.b16 %v1943, %v1942
        %v1965 = vpack.c.b16 %v1945, %v1944
        %v1966 = vpack.c.b16 %v1947, %v1946
        %v1967 = vpack.c.b16 %v1949, %v1948
        %v1968 = vpack.c.b16 %v1951, %v1950
        %v1969 = vpack.c.b16 %v1953, %v1952
        %v1970 = vpack.c.b16 %v1955, %v1954
        %v1971 = vpack.c.b16 %v1956, %v1956
        %v1987 = vand.u32 %v1971, %v1405
        %1989 = vmatpush.bf16.msra.mxu0 %v1964
        %1990 = vmatpush.bf16.msra.mxu0 %v1963
        %1991 = vmatpush.bf16.msra.mxu0 %v1962
        %1992 = vmatpush.bf16.msra.mxu0 %v1961
        %1993 = vmatpush.bf16.msra.mxu0 %v1960
        %1994 = vmatpush.bf16.msra.mxu0 %v1959
        %1995 = vmatpush.bf16.msra.mxu0 %v1958
        %1996 = vmatpush.bf16.msra.mxu0 %v1957
        %1997 = vmatmul.bf16.gmra.mxu0 %v1310
        %v1998 = vpop.f32.mrf.mxu0
        %v1999 = vadd.f32 0.0, %v1998
        %v2000 = vpop.f32.mrf.mxu0
        %2001 = vdwg.mxu0
        %2002 = vmatpush.bf16.msra.mxu0 0
        %2003 = vmatpush.bf16.msra.mxu0 %v1987
        %2004 = vmatpush.bf16.msra.mxu0 %v1970
        %2005 = vmatpush.bf16.msra.mxu0 %v1969
        %2006 = vmatpush.bf16.msra.mxu0 %v1968
        %2007 = vmatpush.bf16.msra.mxu0 %v1967
        %2008 = vmatpush.bf16.msra.mxu0 %v1966
        %2009 = vmatpush.bf16.msra.mxu0 %v1965
        %2010 = vmatmul.bf16.gmra.mxu0 %v1401
        %v2011 = vpop.f32.mrf.mxu0
        %v2012 = vadd.f32 %v1999, %v2011
        %v2013 = vpop.f32.mrf.mxu0
        %2014 = vdwg.mxu0
        %v2044 = vunpack.c.l.b16 %v1223
        %v2045 = vunpack.c.l.b16 %v1224
        %v2046 = vunpack.c.l.b16 %v1225
        %v2047 = vunpack.c.l.b16 %v1226
        %v2048 = vunpack.c.l.b16 %v1227
        %v2049 = vunpack.c.l.b16 %v1228
        %v2050 = vunpack.c.l.b16 %v1229
        %v2051 = vunpack.c.l.b16 %v1230
        %v2052 = vunpack.c.l.b16 %v1231
        %v2053 = vunpack.c.l.b16 %v1232
        %v2054 = vunpack.c.l.b16 %v1233
        %v2055 = vunpack.c.l.b16 %v1234
        %v2056 = vunpack.c.l.b16 %v1235
        %v2057 = vunpack.c.l.b16 %v1236
        %v2058 = vunpack.c.l.b16 %v1237
        %v2059 = vunpack.c.l.b16 %v1238
        %v2060 = vunpack.c.l.b16 %v1239
        %v2061 = vunpack.c.l.b16 %v1240
        %v2062 = vunpack.c.l.b16 %v1241
        %v2063 = vunpack.c.l.b16 %v1242
        %v2064 = vunpack.c.l.b16 %v1243
        %v2065 = vunpack.c.l.b16 %v1244
        %v2066 = vunpack.c.l.b16 %v1245
        %v2067 = vunpack.c.l.b16 %v1246
        %v2068 = vunpack.c.l.b16 %v1247
        %v2069 = vunpack.c.l.b16 %v1248
        %v2070 = vunpack.c.l.b16 %v1249
        %v2071 = vunpack.c.l.b16 %v1250
        %v2072 = vunpack.c.l.b16 %v1251
        %v2073 = vpack.c.b16 %v2045, %v2044
        %v2074 = vpack.c.b16 %v2047, %v2046
        %v2075 = vpack.c.b16 %v2049, %v2048
        %v2076 = vpack.c.b16 %v2051, %v2050
        %v2077 = vpack.c.b16 %v2053, %v2052
        %v2078 = vpack.c.b16 %v2055, %v2054
        %v2079 = vpack.c.b16 %v2057, %v2056
        %v2080 = vpack.c.b16 %v2059, %v2058
        %v2081 = vpack.c.b16 %v2061, %v2060
        %v2082 = vpack.c.b16 %v2063, %v2062
        %v2083 = vpack.c.b16 %v2065, %v2064
        %v2084 = vpack.c.b16 %v2067, %v2066
        %v2085 = vpack.c.b16 %v2069, %v2068
        %v2086 = vpack.c.b16 %v2071, %v2070
        %v2087 = vpack.c.b16 %v2072, %v2072
        %v2103 = vand.u32 %v2087, %v1405
        %2105 = vmatpush.bf16.msra.mxu0 %v2080
        %2106 = vmatpush.bf16.msra.mxu0 %v2079
        %2107 = vmatpush.bf16.msra.mxu0 %v2078
        %2108 = vmatpush.bf16.msra.mxu0 %v2077
        %2109 = vmatpush.bf16.msra.mxu0 %v2076
        %2110 = vmatpush.bf16.msra.mxu0 %v2075
        %2111 = vmatpush.bf16.msra.mxu0 %v2074
        %2112 = vmatpush.bf16.msra.mxu0 %v2073
        %2113 = vmatmul.bf16.gmra.mxu0 %v1310
        %v2114 = vpop.f32.mrf.mxu0
        %v2115 = vadd.f32 0.0, %v2114
        %v2116 = vpop.f32.mrf.mxu0
        %2117 = vdwg.mxu0
        %2118 = vmatpush.bf16.msra.mxu0 0
        %2119 = vmatpush.bf16.msra.mxu0 %v2103
        %2120 = vmatpush.bf16.msra.mxu0 %v2086
        %2121 = vmatpush.bf16.msra.mxu0 %v2085
        %2122 = vmatpush.bf16.msra.mxu0 %v2084
        %2123 = vmatpush.bf16.msra.mxu0 %v2083
        %2124 = vmatpush.bf16.msra.mxu0 %v2082
        %2125 = vmatpush.bf16.msra.mxu0 %v2081
        %2126 = vmatmul.bf16.gmra.mxu0 %v1401
        %v2127 = vpop.f32.mrf.mxu0
        %v2128 = vadd.f32 %v2115, %v2127
        %v2129 = vpop.f32.mrf.mxu0
        %2130 = vdwg.mxu0
        %v2160 = vunpack.c.l.b16 %v1252
        %v2161 = vunpack.c.l.b16 %v1253
        %v2162 = vunpack.c.l.b16 %v1254
        %v2163 = vunpack.c.l.b16 %v1255
        %v2164 = vunpack.c.l.b16 %v1256
        %v2165 = vunpack.c.l.b16 %v1257
        %v2166 = vunpack.c.l.b16 %v1258
        %v2167 = vunpack.c.l.b16 %v1259
        %v2168 = vunpack.c.l.b16 %v1260
        %v2169 = vunpack.c.l.b16 %v1261
        %v2170 = vunpack.c.l.b16 %v1262
        %v2171 = vunpack.c.l.b16 %v1263
        %v2172 = vunpack.c.l.b16 %v1264
        %v2173 = vunpack.c.l.b16 %v1265
        %v2174 = vunpack.c.l.b16 %v1266
        %v2175 = vunpack.c.l.b16 %v1267
        %v2176 = vunpack.c.l.b16 %v1268
        %v2177 = vunpack.c.l.b16 %v1269
        %v2178 = vunpack.c.l.b16 %v1270
        %v2179 = vunpack.c.l.b16 %v1271
        %v2180 = vunpack.c.l.b16 %v1272
        %v2181 = vunpack.c.l.b16 %v1273
        %v2182 = vunpack.c.l.b16 %v1274
        %v2183 = vunpack.c.l.b16 %v1275
        %v2184 = vunpack.c.l.b16 %v1276
        %v2185 = vunpack.c.l.b16 %v1277
        %v2186 = vunpack.c.l.b16 %v1278
        %v2187 = vunpack.c.l.b16 %v1279
        %v2188 = vunpack.c.l.b16 %v1280
        %v2189 = vpack.c.b16 %v2161, %v2160
        %v2190 = vpack.c.b16 %v2163, %v2162
        %v2191 = vpack.c.b16 %v2165, %v2164
        %v2192 = vpack.c.b16 %v2167, %v2166
        %v2193 = vpack.c.b16 %v2169, %v2168
        %v2194 = vpack.c.b16 %v2171, %v2170
        %v2195 = vpack.c.b16 %v2173, %v2172
        %v2196 = vpack.c.b16 %v2175, %v2174
        %v2197 = vpack.c.b16 %v2177, %v2176
        %v2198 = vpack.c.b16 %v2179, %v2178
        %v2199 = vpack.c.b16 %v2181, %v2180
        %v2200 = vpack.c.b16 %v2183, %v2182
        %v2201 = vpack.c.b16 %v2185, %v2184
        %v2202 = vpack.c.b16 %v2187, %v2186
        %v2203 = vpack.c.b16 %v2188, %v2188
        %v2219 = vand.u32 %v2203, %v1405
        %2221 = vmatpush.bf16.msra.mxu0 %v2196
        %2222 = vmatpush.bf16.msra.mxu0 %v2195
        %2223 = vmatpush.bf16.msra.mxu0 %v2194
        %2224 = vmatpush.bf16.msra.mxu0 %v2193
        %2225 = vmatpush.bf16.msra.mxu0 %v2192
        %2226 = vmatpush.bf16.msra.mxu0 %v2191
        %2227 = vmatpush.bf16.msra.mxu0 %v2190
        %2228 = vmatpush.bf16.msra.mxu0 %v2189
        %2229 = vmatmul.bf16.gmra.mxu0 %v1310
        %v2230 = vpop.f32.mrf.mxu0
        %v2231 = vadd.f32 0.0, %v2230
        %v2232 = vpop.f32.mrf.mxu0
        %2233 = vdwg.mxu0
        %2234 = vmatpush.bf16.msra.mxu0 0
        %2235 = vmatpush.bf16.msra.mxu0 %v2219
        %2236 = vmatpush.bf16.msra.mxu0 %v2202
        %2237 = vmatpush.bf16.msra.mxu0 %v2201
        %2238 = vmatpush.bf16.msra.mxu0 %v2200
        %2239 = vmatpush.bf16.msra.mxu0 %v2199
        %2240 = vmatpush.bf16.msra.mxu0 %v2198
        %2241 = vmatpush.bf16.msra.mxu0 %v2197
        %2242 = vmatmul.bf16.gmra.mxu0 %v1401
        %v2243 = vpop.f32.mrf.mxu0
        %v2244 = vadd.f32 %v2231, %v2243
        %v2245 = vpop.f32.mrf.mxu0
        %2246 = vdwg.mxu0
        %v2276 = vunpack.c.l.b16 %v1281
        %v2277 = vunpack.c.l.b16 %v1282
        %v2278 = vunpack.c.l.b16 %v1283
        %v2279 = vunpack.c.l.b16 %v1284
        %v2280 = vunpack.c.l.b16 %v1285
        %v2281 = vunpack.c.l.b16 %v1286
        %v2282 = vunpack.c.l.b16 %v1287
        %v2283 = vunpack.c.l.b16 %v1288
        %v2284 = vunpack.c.l.b16 %v1289
        %v2285 = vunpack.c.l.b16 %v1290
        %v2286 = vunpack.c.l.b16 %v1291
        %v2287 = vunpack.c.l.b16 %v1292
        %v2288 = vunpack.c.l.b16 %v1293
        %v2289 = vunpack.c.l.b16 %v1294
        %v2290 = vunpack.c.l.b16 %v1295
        %v2291 = vunpack.c.l.b16 %v1296
        %v2292 = vunpack.c.l.b16 %v1297
        %v2293 = vunpack.c.l.b16 %v1298
        %v2294 = vunpack.c.l.b16 %v1299
        %v2295 = vunpack.c.l.b16 %v1300
        %v2296 = vunpack.c.l.b16 %v1301
        %v2297 = vunpack.c.l.b16 %v1302
        %v2298 = vunpack.c.l.b16 %v1303
        %v2299 = vunpack.c.l.b16 %v1304
        %v2300 = vunpack.c.l.b16 %v1305
        %v2301 = vunpack.c.l.b16 %v1306
        %v2302 = vunpack.c.l.b16 %v1307
        %v2303 = vunpack.c.l.b16 %v1308
        %v2304 = vunpack.c.l.b16 %v1309
        %v2305 = vpack.c.b16 %v2277, %v2276
        %v2306 = vpack.c.b16 %v2279, %v2278
        %v2307 = vpack.c.b16 %v2281, %v2280
        %v2308 = vpack.c.b16 %v2283, %v2282
        %v2309 = vpack.c.b16 %v2285, %v2284
        %v2310 = vpack.c.b16 %v2287, %v2286
        %v2311 = vpack.c.b16 %v2289, %v2288
        %v2312 = vpack.c.b16 %v2291, %v2290
        %v2313 = vpack.c.b16 %v2293, %v2292
        %v2314 = vpack.c.b16 %v2295, %v2294
        %v2315 = vpack.c.b16 %v2297, %v2296
        %v2316 = vpack.c.b16 %v2299, %v2298
        %v2317 = vpack.c.b16 %v2301, %v2300
        %v2318 = vpack.c.b16 %v2303, %v2302
        %v2319 = vpack.c.b16 %v2304, %v2304
        %v2335 = vand.u32 %v2319, %v1405
        %2337 = vmatpush.bf16.msra.mxu0 %v2312
        %2338 = vmatpush.bf16.msra.mxu0 %v2311
        %2339 = vmatpush.bf16.msra.mxu0 %v2310
        %2340 = vmatpush.bf16.msra.mxu0 %v2309
        %2341 = vmatpush.bf16.msra.mxu0 %v2308
        %2342 = vmatpush.bf16.msra.mxu0 %v2307
        %2343 = vmatpush.bf16.msra.mxu0 %v2306
        %2344 = vmatpush.bf16.msra.mxu0 %v2305
        %2345 = vmatmul.bf16.gmra.mxu0 %v1310
        %v2346 = vpop.f32.mrf.mxu0
        %v2347 = vadd.f32 0.0, %v2346
        %v2348 = vpop.f32.mrf.mxu0
        %2349 = vdwg.mxu0
        %2350 = vmatpush.bf16.msra.mxu0 0
        %2351 = vmatpush.bf16.msra.mxu0 %v2335
        %2352 = vmatpush.bf16.msra.mxu0 %v2318
        %2353 = vmatpush.bf16.msra.mxu0 %v2317
        %2354 = vmatpush.bf16.msra.mxu0 %v2316
        %2355 = vmatpush.bf16.msra.mxu0 %v2315
        %2356 = vmatpush.bf16.msra.mxu0 %v2314
        %2357 = vmatpush.bf16.msra.mxu0 %v2313
        %2358 = vmatmul.bf16.gmra.mxu0 %v1401
        %v2359 = vpop.f32.mrf.mxu0
        %v2360 = vadd.f32 %v2347, %v2359
        %v2361 = vpop.f32.mrf.mxu0
        %2362 = vdwg.mxu0
        %v2364 = vrot.slane %v1548, 4
        %v2367 = vrot.slane %v1780, 4
        %v2370 = vrot.slane %v2012, 4
        %v2373 = vrot.slane %v2244, 4
        %v2375 = vsel %vm641, %v1432, %v2364
        %v2376 = vsel %vm641, %v1664, %v2367
        %v2377 = vsel %vm641, %v1896, %v2370
        %v2378 = vsel %vm641, %v2128, %v2373
        %v2379 = vpack.c.bf16 %v2376, %v2375
        %v2380 = vpack.c.bf16 %v2378, %v2377
        %v2381 = vpack.c.bf16 %v2360, %v2360
        %2383 = vset.pattern.permute.xlu0 0
        %2384 = vperm.xlu0 %2383, %v1048
        %v2385 = vpop.permute.xlu0 %2384
        %v2388 = vsel %vm661, %v1047, 0
        %v2391 = vsel %vm665, %v2381, 0
        %2393 = vmatpush.bf16.msra.mxu0 0
        %2394 = vmatpush.bf16.msra.mxu0 0
        %2395 = vmatpush.bf16.msra.mxu0 0
        %2396 = vmatpush.bf16.msra.mxu0 0
        %2397 = vmatpush.bf16.msra.mxu0 0
        %2398 = vmatpush.bf16.msra.mxu0 %v2391
        %2399 = vmatpush.bf16.msra.mxu0 %v2380
        %2400 = vmatpush.bf16.msra.mxu0 %v2379
        %2401 = vmatmul.bf16.gmra.mxu0 %v2388
        %v2402 = vpop.f32.mrf.mxu0
        %v2403 = vadd.f32 %v2385, %v2402
        %v2404 = vpop.f32.mrf.mxu0
        %2405 = vdwg.mxu0
        %vm2406 = vcmask 199680
        %2407 = vst.msk [vmem:[%s374] sm:$0xf] %vm2406, %v2403
        %p2408 = scmp.lt.s32.totalorder %s22, 1
        %s2409 = scalar_select %p2408, %s22, 1
        %s2410 = smul.addr %s2409, 4
        %s2411 = scalar_lea.vmem %s10, %s2410
        // Predicated region
        $region65: #{mamba_cnn_mol_forward.3} parent=59 // pred_check
          %p2412 = pneg %p255
        $region66: #{mamba_cnn_mol_forward.3} parent=59 // pred_check_branch
          %2414 = sbr.rel (%p2412) target = $region68
        $region67: #{mamba_cnn_mol_forward.3} parent=59 // pred_region
          _
        $region68: #{mamba_cnn_mol_forward.3} parent=59 // pred_fallthru
          _
      $region60: #{mamba_cnn_mol_forward.3} parent=5 // pred_fallthru
        _
      %p2415 = scmp.le.s32.totalorder 2, %s17
      // Predicated region
      $region69: #{mamba_cnn_mol_forward.3} parent=5 // pred_check
        %p2416 = pneg %p2415
      $region70: #{mamba_cnn_mol_forward.3} parent=5 // pred_check_branch
        %2418 = sbr.rel (%p2416) target = $region72
      $region71: #{mamba_cnn_mol_forward.3} parent=5 // pred_region
        %s2419 = ssub.s32 %s17, 2
        // Predicated region
        $region73: #{mamba_cnn_mol_forward.3} parent=71 // pred_check
          %p2420 = pneg %p261
        $region74: #{mamba_cnn_mol_forward.3} parent=71 // pred_check_branch
          %2422 = sbr.rel (%p2420) target = $region76
        $region75: #{mamba_cnn_mol_forward.3} parent=71 // pred_region
          %p2423 = scmp.lt.s32.totalorder %s23, 1
          %s2424 = scalar_select %p2423, %s23, 1
          %s2425 = smul.addr %s2424, 4
          %s2426 = scalar_lea.vmem %s10, %s2425
        $region76: #{mamba_cnn_mol_forward.3} parent=71 // pred_fallthru
          _
      $region72: #{mamba_cnn_mol_forward.3} parent=5 // pred_fallthru
        _
    $region6: #{mamba_cnn_mol_forward.3} parent=1 // loop_footer
      %s21 = sadd.s32 1, %s17
    $region7: #{mamba_cnn_mol_forward.3} parent=1 // loop_footer_branch
      %16 = sbr.rel target = $region3
    $region8: #{mamba_cnn_mol_forward.3} parent=1 // loop_exit
      _
    %2427 = vsyncpa [#allocation3], 1
    %s2428 = scalar_lea.sflag [#allocation3], 1
    %2429 = vsyncpa %s2428, 1

</llo_original>
